<compile_context>
chip_gen: v6e
topology: v6e:2x2x1
jax: 0.10.0
libtpu: 0.0.40
codegen_flags: <defaults>
</compile_context>

<pallas_src>
import functools
import math
import warnings

import jax
import jax.numpy as jnp
from jax.experimental import pallas as pl
from jax.experimental.pallas import tpu as pltpu

_HAS_BUFFERED = hasattr(pl, "Buffered")


def _round_up(x, m):
    return (x + m - 1) // m * m


def _generator_kernel(x_ref, w1_ref, b1_ref, w2_ref, b2_ref, w3_ref, b3_ref,
                      o_ref, h1_ref, h2_ref):
    # Layer 1: bf16 x bf16 -> f32 MXU accumulate, bias + ReLU in f32,
    # round to bf16 scratch (matches reference numerics, halves VMEM traffic).
    x = x_ref[...].astype(jnp.bfloat16)
    h1 = jnp.dot(x, w1_ref[...], preferred_element_type=jnp.float32) + b1_ref[...]
    h1_ref[...] = jnp.maximum(h1, 0.0).astype(jnp.bfloat16)

    # Layer 2.
    h2 = jnp.dot(h1_ref[...], w2_ref[...],
                 preferred_element_type=jnp.float32) + b2_ref[...]
    h2_ref[...] = jnp.maximum(h2, 0.0).astype(jnp.bfloat16)

    # Layer 3 + Tanh (EUP) in f32, store f32.
    y = jnp.dot(h2_ref[...], w3_ref[...],
                preferred_element_type=jnp.float32) + b3_ref[...]
    o_ref[...] = jnp.tanh(y).astype(o_ref.dtype)


def _resident_spec(block_shape):
    """BlockSpec for a grid-invariant (weight/bias) block, single-buffered."""
    index_map = lambda i: (0, 0)
    if _HAS_BUFFERED:
        return pl.BlockSpec(block_shape, index_map, pipeline_mode=pl.Buffered(1))
    warnings.warn("Pallas without pipeline_mode: resident weights will be "
                  "double-buffered (~2x weight VMEM residency).")
    return pl.BlockSpec(block_shape, index_map)


@functools.partial(jax.jit, static_argnames=("batch_tile",))
def _generator_pallas(noise_pad, w1, b1, w2, b2, w3, b3, *, batch_tile):
    B, in_pad = noise_pad.shape
    hid_pad = w1.shape[1]
    out_pad = w3.shape[1]
    assert B % batch_tile == 0

    grid = (B // batch_tile,)

    in_specs = [
        pl.BlockSpec((batch_tile, in_pad), lambda i: (i, 0)),   # noise tile
        _resident_spec((in_pad, hid_pad)),                      # W1 (bf16)
        _resident_spec((1, hid_pad)),                           # b1 (f32)
        _resident_spec((hid_pad, hid_pad)),                     # W2 (bf16)
        _resident_spec((1, hid_pad)),                           # b2 (f32)
        _resident_spec((hid_pad, out_pad)),                     # W3 (bf16)
        _resident_spec((1, out_pad)),                           # b3 (f32)
    ]
    out_specs = pl.BlockSpec((batch_tile, out_pad), lambda i: (i, 0))

    # ~9 MiB actual residency at tile 256 with single-buffered weights;
    # leave headroom if the pipeline_mode fallback double-buffers the weights.
    vmem_limit = (16 << 20) if _HAS_BUFFERED else (32 << 20)

    return pl.pallas_call(
        _generator_kernel,
        out_shape=jax.ShapeDtypeStruct((B, out_pad), jnp.float32),
        grid=grid,
        in_specs=in_specs,
        out_specs=out_specs,
        scratch_shapes=[
            pltpu.VMEM((batch_tile, hid_pad), jnp.bfloat16),    # h1
            pltpu.VMEM((batch_tile, hid_pad), jnp.bfloat16),    # h2
        ],
        compiler_params=pltpu.CompilerParams(
            dimension_semantics=("parallel",),
            vmem_limit_bytes=vmem_limit,
        ),
    )(noise_pad, w1, b1, w2, b2, w3, b3)


def _pick_batch_tile(batch):
    """Single step for small batches; 256-row MXU-filling tile for large ones."""
    if batch <= 256:
        return batch                      # one grid step: no duplicated weight DMA
    for tile in (256, 128, 64, 32, 16, 8):
        if batch % tile == 0:
            return tile
    return 256                            # caller pads batch to a tile multiple


def generator_forward(noise, params, *, batch_tile=None):
    """Runs the fused Generator forward. `noise` is (B, input_dim) f32."""
    w1, b1, w2, b2, w3, b3 = (params[k] for k in ("w1", "b1", "w2", "b2", "w3", "b3"))
    B, in_dim = noise.shape
    in_pad = w1.shape[0]

    if batch_tile is None:
        batch_tile = _pick_batch_tile(B)

    # Pad feature dim to the lane-dense width and (if needed) batch to a tile
    # multiple; pad rows compute garbage and are sliced off below.
    B_pad = _round_up(B, batch_tile)
    noise_pad = noise
    if in_dim < in_pad or B_pad > B:
        noise_pad = jnp.pad(noise, ((0, B_pad - B), (0, in_pad - in_dim)))

    out_pad = _generator_pallas(noise_pad, w1, b1, w2, b2, w3, b3,
                                batch_tile=batch_tile)
    return out_pad[:B, :params["output_dim"]]


def init_generator_params(key, input_dim=100, hidden_dim=1200, output_dim=28 * 28,
                          weight_dtype=jnp.bfloat16):
    """nn.Linear-style U(-1/sqrt(fan_in), 1/sqrt(fan_in)) init.

    Weights are stored transposed as (in, out) and zero-padded to multiples of
    128 lanes; weights in bf16, biases in f32."""
    in_pad = _round_up(input_dim, 128)
    hid_pad = _round_up(hidden_dim, 128)
    out_pad = _round_up(output_dim, 128)

    def linear(k, fan_in, fan_out, rows_pad, cols_pad):
        kw, kb = jax.random.split(k)
        bound = 1.0 / math.sqrt(float(fan_in))
        w = jax.random.uniform(kw, (fan_in, fan_out), jnp.float32, -bound, bound)
        b = jax.random.uniform(kb, (1, fan_out), jnp.float32, -bound, bound)
        w_pad = jnp.zeros((rows_pad, cols_pad), weight_dtype)
        w_pad = w_pad.at[:fan_in, :fan_out].set(w.astype(weight_dtype))
        b_pad = jnp.zeros((1, cols_pad), jnp.float32).at[:, :fan_out].set(b)
        return w_pad, b_pad

    k1, k2, k3 = jax.random.split(key, 3)
    w1, b1 = linear(k1, input_dim, hidden_dim, in_pad, hid_pad)
    w2, b2 = linear(k2, hidden_dim, hidden_dim, hid_pad, hid_pad)
    w3, b3 = linear(k3, hidden_dim, output_dim, hid_pad, out_pad)
    return {"w1": w1, "b1": b1, "w2": w2, "b2": b2, "w3": w3, "b3": b3,
            "output_dim": output_dim}


def _reference_forward(noise, params):
    """Pure-JAX reference mirroring the kernel's bf16 weight / f32 accum path."""
    f32 = jnp.float32
    w1 = params["w1"].astype(f32)
    w2 = params["w2"].astype(f32)
    w3 = params["w3"].astype(f32)
    b1, b2, b3 = params["b1"], params["b2"], params["b3"]

    in_pad = w1.shape[0]
    x = jnp.pad(noise, ((0, 0), (0, in_pad - noise.shape[1])))
    x = x.astype(jnp.bfloat16).astype(f32)
    h1 = jnp.maximum(x @ w1 + b1, 0.0)
    h1 = h1.astype(jnp.bfloat16).astype(f32)
    h2 = jnp.maximum(h1 @ w2 + b2, 0.0)
    h2 = h2.astype(jnp.bfloat16).astype(f32)
    y = jnp.tanh(h2 @ w3 + b3)
    return y[:, :params["output_dim"]]


if __name__ == "__main__":
    # Module defaults: input_dim=100, hidden_dim=1200, output_dim=28*28=784.
    input_dim, hidden_dim, output_dim = 100, 1200, 28 * 28
    batch = 16

    key = jax.random.PRNGKey(0)
    k_noise, k_params = jax.random.split(key)

    noise = jax.random.normal(k_noise, (batch, input_dim), dtype=jnp.float32)
    params = init_generator_params(k_params, input_dim, hidden_dim, output_dim)

    out = generator_forward(noise, params)          # auto batch_tile -> 16, grid=(1,)
    out = jax.block_until_ready(out)

    ref = _reference_forward(noise, params)
    assert out.shape == (batch, output_dim)
    max_err = float(jnp.max(jnp.abs(out - ref)))
    assert max_err < 5e-3, f"mismatch vs JAX reference: max abs err {max_err}"

    print("KERNEL_OK")
</pallas_src>

<mosaic_0001>
module attributes {stable_mosaic.version = 11 : i64} {
  func.func @_generator_kernel(%arg0: i32, %arg1: memref<16x128xf32, #tpu.memory_space<vmem>>, %arg2: memref<128x1280xbf16, #tpu.memory_space<vmem>>, %arg3: memref<1x1280xf32, #tpu.memory_space<vmem>>, %arg4: memref<1280x1280xbf16, #tpu.memory_space<vmem>>, %arg5: memref<1x1280xf32, #tpu.memory_space<vmem>>, %arg6: memref<1280x896xbf16, #tpu.memory_space<vmem>>, %arg7: memref<1x896xf32, #tpu.memory_space<vmem>>, %arg8: memref<16x896xf32, #tpu.memory_space<vmem>>, %arg9: memref<16x1280xbf16, #tpu.memory_space<vmem>>, %arg10: memref<16x1280xbf16, #tpu.memory_space<vmem>>) attributes {dimension_semantics = [#tpu.dimension_semantics<parallel>], iteration_bounds = array<i64: 1>, scalar_prefetch = 0 : i64, scratch_operands = 2 : i64, tpu.core_type = #tpu.core_type<tc>, window_params = [{transform_indices = @transform_0, window_bounds = array<i64: 16, 128>}, {pipeline_mode = #tpu.pipeline_mode<synchronous>, transform_indices = @transform_1, window_bounds = array<i64: 128, 1280>}, {pipeline_mode = #tpu.pipeline_mode<synchronous>, transform_indices = @transform_2, window_bounds = array<i64: 1, 1280>}, {pipeline_mode = #tpu.pipeline_mode<synchronous>, transform_indices = @transform_3, window_bounds = array<i64: 1280, 1280>}, {pipeline_mode = #tpu.pipeline_mode<synchronous>, transform_indices = @transform_4, window_bounds = array<i64: 1, 1280>}, {pipeline_mode = #tpu.pipeline_mode<synchronous>, transform_indices = @transform_5, window_bounds = array<i64: 1280, 896>}, {pipeline_mode = #tpu.pipeline_mode<synchronous>, transform_indices = @transform_6, window_bounds = array<i64: 1, 896>}, {transform_indices = @transform_7, window_bounds = array<i64: 16, 896>}]} {
    %c0 = arith.constant 0 : index
    %c0_0 = arith.constant 0 : index
    %0 = vector.load %arg1[%c0, %c0_0] : memref<16x128xf32, #tpu.memory_space<vmem>>, vector<16x128xf32>
    %1 = arith.truncf %0 : vector<16x128xf32> to vector<16x128xbf16>
    %c0_1 = arith.constant 0 : index
    %c0_2 = arith.constant 0 : index
    %2 = vector.load %arg2[%c0_1, %c0_2] : memref<128x1280xbf16, #tpu.memory_space<vmem>>, vector<128x1280xbf16>
    %cst = arith.constant dense<0.000000e+00> : vector<16x1280xf32>
    %3 = tpu.matmul %1, %2, %cst {dimension_numbers = #tpu.dot_dimension_numbers<[1], [0], [0], [1], [0, 0, 1, 1], [], []>} : vector<16x128xbf16>, vector<128x1280xbf16>, vector<16x1280xf32> -> vector<16x1280xf32>
    %c0_3 = arith.constant 0 : index
    %c0_4 = arith.constant 0 : index
    %4 = vector.load %arg3[%c0_3, %c0_4] : memref<1x1280xf32, #tpu.memory_space<vmem>>, vector<1x1280xf32>
    %5 = vector.broadcast %4 : vector<1x1280xf32> to vector<16x1280xf32>
    %6 = arith.addf %3, %5 : vector<16x1280xf32>
    %cst_5 = arith.constant 0.000000e+00 : f32
    %7 = vector.broadcast %cst_5 : f32 to vector<16x1280xf32>
    %8 = arith.maximumf %6, %7 : vector<16x1280xf32>
    %9 = arith.truncf %8 : vector<16x1280xf32> to vector<16x1280xbf16>
    %c0_6 = arith.constant 0 : index
    %c0_7 = arith.constant 0 : index
    %10 = vector.load %arg9[%c0_6, %c0_7] : memref<16x1280xbf16, #tpu.memory_space<vmem>>, vector<16x1280xbf16>
    tpu.vector_store %arg9[%c0_6, %c0_7], %9 {strides = array<i32>} : memref<16x1280xbf16, #tpu.memory_space<vmem>>, vector<16x1280xbf16>,
    %c0_8 = arith.constant 0 : index
    %c0_9 = arith.constant 0 : index
    %11 = vector.load %arg9[%c0_8, %c0_9] : memref<16x1280xbf16, #tpu.memory_space<vmem>>, vector<16x1280xbf16>
    %c0_10 = arith.constant 0 : index
    %c0_11 = arith.constant 0 : index
    %12 = vector.load %arg4[%c0_10, %c0_11] : memref<1280x1280xbf16, #tpu.memory_space<vmem>>, vector<1280x1280xbf16>
    %cst_12 = arith.constant dense<0.000000e+00> : vector<16x1280xf32>
    %13 = tpu.matmul %11, %12, %cst_12 {dimension_numbers = #tpu.dot_dimension_numbers<[1], [0], [0], [1], [0, 0, 1, 1], [], []>} : vector<16x1280xbf16>, vector<1280x1280xbf16>, vector<16x1280xf32> -> vector<16x1280xf32>
    %c0_13 = arith.constant 0 : index
    %c0_14 = arith.constant 0 : index
    %14 = vector.load %arg5[%c0_13, %c0_14] : memref<1x1280xf32, #tpu.memory_space<vmem>>, vector<1x1280xf32>
    %15 = vector.broadcast %14 : vector<1x1280xf32> to vector<16x1280xf32>
    %16 = arith.addf %13, %15 : vector<16x1280xf32>
    %cst_15 = arith.constant 0.000000e+00 : f32
    %17 = vector.broadcast %cst_15 : f32 to vector<16x1280xf32>
    %18 = arith.maximumf %16, %17 : vector<16x1280xf32>
    %19 = arith.truncf %18 : vector<16x1280xf32> to vector<16x1280xbf16>
    %c0_16 = arith.constant 0 : index
    %c0_17 = arith.constant 0 : index
    %20 = vector.load %arg10[%c0_16, %c0_17] : memref<16x1280xbf16, #tpu.memory_space<vmem>>, vector<16x1280xbf16>
    tpu.vector_store %arg10[%c0_16, %c0_17], %19 {strides = array<i32>} : memref<16x1280xbf16, #tpu.memory_space<vmem>>, vector<16x1280xbf16>,
    %c0_18 = arith.constant 0 : index
    %c0_19 = arith.constant 0 : index
    %21 = vector.load %arg10[%c0_18, %c0_19] : memref<16x1280xbf16, #tpu.memory_space<vmem>>, vector<16x1280xbf16>
    %c0_20 = arith.constant 0 : index
    %c0_21 = arith.constant 0 : index
    %22 = vector.load %arg6[%c0_20, %c0_21] : memref<1280x896xbf16, #tpu.memory_space<vmem>>, vector<1280x896xbf16>
    %cst_22 = arith.constant dense<0.000000e+00> : vector<16x896xf32>
    %23 = tpu.matmul %21, %22, %cst_22 {dimension_numbers = #tpu.dot_dimension_numbers<[1], [0], [0], [1], [0, 0, 1, 1], [], []>} : vector<16x1280xbf16>, vector<1280x896xbf16>, vector<16x896xf32> -> vector<16x896xf32>
    %c0_23 = arith.constant 0 : index
    %c0_24 = arith.constant 0 : index
    %24 = vector.load %arg7[%c0_23, %c0_24] : memref<1x896xf32, #tpu.memory_space<vmem>>, vector<1x896xf32>
    %25 = vector.broadcast %24 : vector<1x896xf32> to vector<16x896xf32>
    %26 = arith.addf %23, %25 : vector<16x896xf32>
    %27 = math.tanh %26 : vector<16x896xf32>
    %c0_25 = arith.constant 0 : index
    %c0_26 = arith.constant 0 : index
    %28 = vector.load %arg8[%c0_25, %c0_26] : memref<16x896xf32, #tpu.memory_space<vmem>>, vector<16x896xf32>
    tpu.vector_store %arg8[%c0_25, %c0_26], %27 {strides = array<i32>} : memref<16x896xf32, #tpu.memory_space<vmem>>, vector<16x896xf32>,
    return
  }
  func.func @transform_0(%arg0: i32) -> (i32, i32) {
    %c0_i32 = arith.constant 0 : i32
    %c0_i32_0 = arith.constant 0 : i32
    return %arg0, %c0_i32 : i32, i32
  }
  func.func @transform_1(%arg0: i32) -> (i32, i32) {
    %c0_i32 = arith.constant 0 : i32
    %c0_i32_0 = arith.constant 0 : i32
    %c0_i32_1 = arith.constant 0 : i32
    return %c0_i32, %c0_i32_0 : i32, i32
  }
  func.func @transform_2(%arg0: i32) -> (i32, i32) {
    %c0_i32 = arith.constant 0 : i32
    %c0_i32_0 = arith.constant 0 : i32
    %c0_i32_1 = arith.constant 0 : i32
    return %c0_i32, %c0_i32_0 : i32, i32
  }
  func.func @transform_3(%arg0: i32) -> (i32, i32) {
    %c0_i32 = arith.constant 0 : i32
    %c0_i32_0 = arith.constant 0 : i32
    %c0_i32_1 = arith.constant 0 : i32
    return %c0_i32, %c0_i32_0 : i32, i32
  }
  func.func @transform_4(%arg0: i32) -> (i32, i32) {
    %c0_i32 = arith.constant 0 : i32
    %c0_i32_0 = arith.constant 0 : i32
    %c0_i32_1 = arith.constant 0 : i32
    return %c0_i32, %c0_i32_0 : i32, i32
  }
  func.func @transform_5(%arg0: i32) -> (i32, i32) {
    %c0_i32 = arith.constant 0 : i32
    %c0_i32_0 = arith.constant 0 : i32
    %c0_i32_1 = arith.constant 0 : i32
    return %c0_i32, %c0_i32_0 : i32, i32
  }
  func.func @transform_6(%arg0: i32) -> (i32, i32) {
    %c0_i32 = arith.constant 0 : i32
    %c0_i32_0 = arith.constant 0 : i32
    %c0_i32_1 = arith.constant 0 : i32
    return %c0_i32, %c0_i32_0 : i32, i32
  }
  func.func @transform_7(%arg0: i32) -> (i32, i32) {
    %c0_i32 = arith.constant 0 : i32
    %c0_i32_0 = arith.constant 0 : i32
    return %arg0, %c0_i32 : i32, i32
  }
}

</mosaic_0001>

<llo_original>
// kernel: _generator_pallas.1
$region0: #{_generator_pallas.1}
  #allocation0 [shape = 'u32[]', space=smem, size = 0x4, offset = 0x4, fixed_abs, tag = 'smem constant byte address 0x4 - core index']
  #allocation1 [shape = 'u32[144,128]{1,0:T(1,128)}', space=vmem, size = 0x12000, scoped, tag = 'internal scratch']
  #allocation2 [shape = 'bf16[16,1280]{1,0:T(8,128)(2,1)}', space=vmem, size = 0xa000, scoped, tag = 'scratch operand']
  #allocation3 [shape = 'bf16[16,1280]{1,0:T(8,128)(2,1)}', space=vmem, size = 0xa000, scoped, tag = 'scratch operand']
  %s0 = inlined_call_operand.hbm [shape: f32[16,128], index: 0, kind: input, shape index: {}]
  %s1 = inlined_call_operand.hbm [shape: bf16[128,1280], index: 1, kind: input, shape index: {}]
  %s2 = inlined_call_operand.hbm [shape: f32[1,1280], index: 2, kind: input, shape index: {}]
  %s3 = inlined_call_operand.hbm [shape: bf16[1280,1280], index: 3, kind: input, shape index: {}]
  %s4 = inlined_call_operand.hbm [shape: f32[1,1280], index: 4, kind: input, shape index: {}]
  %s5 = inlined_call_operand.hbm [shape: bf16[1280,896], index: 5, kind: input, shape index: {}]
  %s6 = inlined_call_operand.hbm [shape: f32[1,896], index: 6, kind: input, shape index: {}]
  %s7 = inlined_call_operand.hbm [shape: f32[16,896], index: 7, kind: output, shape index: {}]
  %s8 = sld [smem:[#allocation0]]
  $region66: #{_generator_pallas.1} parent=0
    _
  %s10 = ssub.s32 1, %s8
  %s11 = scalar_select 0, %s10, %s8
  $region1: #{_generator_pallas.1} parent=0
    #allocation4 [shape = 'u8[8192]{0}', space=vmem, size = 0x2000, scoped, tag = 'input window, operand 0, single buffered']
    #allocation5 [shape = 's32[1]{0}', space=sflag, size = 0x4, scoped, tag = 'scoped memory for _generator_pallas.1']
    #allocation6 [shape = 's32[1]{0}', space=sflag, size = 0x4, scoped, tag = 'scoped memory for _generator_pallas.1']
    #allocation7 [shape = 'u8[327680]{0}', space=vmem, size = 0x50000, scoped, tag = 'input window, operand 1, single buffered']
    #allocation8 [shape = 's32[1]{0}', space=sflag, size = 0x4, scoped, tag = 'scoped memory for _generator_pallas.1']
    #allocation9 [shape = 'u8[5120]{0}', space=vmem, size = 0x1400, scoped, tag = 'input window, operand 2, single buffered']
    #allocation10 [shape = 'u8[3276800]{0}', space=vmem, size = 0x320000, scoped, tag = 'input window, operand 3, single buffered']
    #allocation11 [shape = 's32[1]{0}', space=sflag, size = 0x4, scoped, tag = 'scoped memory for _generator_pallas.1']
    #allocation12 [shape = 'u8[5120]{0}', space=vmem, size = 0x1400, scoped, tag = 'input window, operand 4, single buffered']
    #allocation13 [shape = 'u8[2293760]{0}', space=vmem, size = 0x230000, scoped, tag = 'input window, operand 5, single buffered']
    #allocation14 [shape = 's32[1]{0}', space=sflag, size = 0x4, scoped, tag = 'scoped memory for _generator_pallas.1']
    #allocation15 [shape = 'u8[3584]{0}', space=vmem, size = 0x1000, scoped, tag = 'input window, operand 6, single buffered']
    #allocation16 [shape = 'u8[57344]{0}', space=vmem, size = 0xe000, scoped, tag = 'output window, operand 0, single buffered']
    %12 = vsyncpa [#allocation5], 0
    %13 = vsyncpa [#allocation8], 0
    %14 = vsyncpa [#allocation11], 0
    %15 = vsyncpa [#allocation14], 0
    %16 = vsyncpa [#allocation6], 0
    // Predicated region
    $region2: #{_generator_pallas.1} parent=1 // pred_check
      _
    $region3: #{_generator_pallas.1} parent=1 // pred_check_branch
      %18 = sbr.rel (0) target = $region5
    $region4: #{_generator_pallas.1} parent=1 // pred_region
      %s20 = ssub.s32 256, 256
      %21 = vsyncadd [#allocation5], %s20
      %s22 = sshll.u32 [#allocation4], 4
      %s23 = int_to_ptr.vmem [resolvable:$true] %s22
      %28 = dma.hbm_to_vmem [thread:$0]  %s0, 256, %s23, [#allocation5], 128, 128, 8
    $region5: #{_generator_pallas.1} parent=1 // pred_fallthru
      _
    // Predicated region
    $region6: #{_generator_pallas.1} parent=1 // pred_check
      _
    $region7: #{_generator_pallas.1} parent=1 // pred_check_branch
      %30 = sbr.rel (0) target = $region9
    $region8: #{_generator_pallas.1} parent=1 // pred_region
      %s32 = ssub.s32 10240, 10240
      %33 = vsyncadd [#allocation8], %s32
      %s34 = sshll.u32 [#allocation7], 4
      %s35 = int_to_ptr.vmem [resolvable:$true] %s34
      %40 = dma.hbm_to_vmem [thread:$0]  %s1, 10240, %s35, [#allocation8], 640, 640, 40
    $region9: #{_generator_pallas.1} parent=1 // pred_fallthru
      _
    // Predicated region
    $region10: #{_generator_pallas.1} parent=1 // pred_check
      _
    $region11: #{_generator_pallas.1} parent=1 // pred_check_branch
      %42 = sbr.rel (0) target = $region13
    $region12: #{_generator_pallas.1} parent=1 // pred_region
      %s44 = ssub.s32 160, 160
      %45 = vsyncadd [#allocation8], %s44
      %s47 = sshll.u32 [#allocation9], 4
      %s48 = int_to_ptr.vmem [resolvable:$true] %s47
      %50 = dma.hbm_to_vmem [thread:$0]  %s2, 160, %s48, [#allocation8]
    $region13: #{_generator_pallas.1} parent=1 // pred_fallthru
      _
    // Predicated region
    $region14: #{_generator_pallas.1} parent=1 // pred_check
      _
    $region15: #{_generator_pallas.1} parent=1 // pred_check_branch
      %52 = sbr.rel (0) target = $region17
    $region16: #{_generator_pallas.1} parent=1 // pred_region
      %s54 = ssub.s32 102400, 102400
      %55 = vsyncadd [#allocation11], %s54
      %s56 = sshll.u32 [#allocation10], 4
      %s57 = int_to_ptr.vmem [resolvable:$true] %s56
      %62 = dma.hbm_to_vmem [thread:$0]  %s3, 102400, %s57, [#allocation11], 640, 640, 40
    $region17: #{_generator_pallas.1} parent=1 // pred_fallthru
      _
    // Predicated region
    $region18: #{_generator_pallas.1} parent=1 // pred_check
      _
    $region19: #{_generator_pallas.1} parent=1 // pred_check_branch
      %64 = sbr.rel (0) target = $region21
    $region20: #{_generator_pallas.1} parent=1 // pred_region
      %s66 = ssub.s32 160, 160
      %67 = vsyncadd [#allocation11], %s66
      %s69 = sshll.u32 [#allocation12], 4
      %s70 = int_to_ptr.vmem [resolvable:$true] %s69
      %72 = dma.hbm_to_vmem [thread:$0]  %s4, 160, %s70, [#allocation11]
    $region21: #{_generator_pallas.1} parent=1 // pred_fallthru
      _
    // Predicated region
    $region22: #{_generator_pallas.1} parent=1 // pred_check
      _
    $region23: #{_generator_pallas.1} parent=1 // pred_check_branch
      %74 = sbr.rel (0) target = $region25
    $region24: #{_generator_pallas.1} parent=1 // pred_region
      %s76 = ssub.s32 71680, 71680
      %77 = vsyncadd [#allocation14], %s76
      %s78 = sshll.u32 [#allocation13], 4
      %s79 = int_to_ptr.vmem [resolvable:$true] %s78
      %84 = dma.hbm_to_vmem [thread:$0]  %s5, 71680, %s79, [#allocation14], 448, 448, 28
    $region25: #{_generator_pallas.1} parent=1 // pred_fallthru
      _
    // Predicated region
    $region26: #{_generator_pallas.1} parent=1 // pred_check
      _
    $region27: #{_generator_pallas.1} parent=1 // pred_check_branch
      %86 = sbr.rel (0) target = $region29
    $region28: #{_generator_pallas.1} parent=1 // pred_region
      %s88 = ssub.s32 112, 112
      %89 = vsyncadd [#allocation14], %s88
      %s91 = sshll.u32 [#allocation15], 4
      %s92 = int_to_ptr.vmem [resolvable:$true] %s91
      %94 = dma.hbm_to_vmem [thread:$0]  %s6, 112, %s92, [#allocation14]
    $region29: #{_generator_pallas.1} parent=1 // pred_fallthru
      _
    // Predicated region
    $region30: #{_generator_pallas.1} parent=1 // pred_check
      _
    $region31: #{_generator_pallas.1} parent=1 // pred_check_branch
      %96 = sbr.rel (0) target = $region33
    $region32: #{_generator_pallas.1} parent=1 // pred_region
      %97 = dma.done [#allocation5], 256
    $region33: #{_generator_pallas.1} parent=1 // pred_fallthru
      _
    // Predicated region
    $region34: #{_generator_pallas.1} parent=1 // pred_check
      _
    $region35: #{_generator_pallas.1} parent=1 // pred_check_branch
      %99 = sbr.rel (0) target = $region37
    $region36: #{_generator_pallas.1} parent=1 // pred_region
      %100 = dma.done [#allocation8], 10240
    $region37: #{_generator_pallas.1} parent=1 // pred_fallthru
      _
    // Predicated region
    $region38: #{_generator_pallas.1} parent=1 // pred_check
      _
    $region39: #{_generator_pallas.1} parent=1 // pred_check_branch
      %102 = sbr.rel (0) target = $region41
    $region40: #{_generator_pallas.1} parent=1 // pred_region
      %103 = dma.done [#allocation8], 160
    $region41: #{_generator_pallas.1} parent=1 // pred_fallthru
      _
    // Predicated region
    $region42: #{_generator_pallas.1} parent=1 // pred_check
      _
    $region43: #{_generator_pallas.1} parent=1 // pred_check_branch
      %105 = sbr.rel (0) target = $region45
    $region44: #{_generator_pallas.1} parent=1 // pred_region
      %106 = dma.done [#allocation11], 102400
    $region45: #{_generator_pallas.1} parent=1 // pred_fallthru
      _
    // Predicated region
    $region46: #{_generator_pallas.1} parent=1 // pred_check
      _
    $region47: #{_generator_pallas.1} parent=1 // pred_check_branch
      %108 = sbr.rel (0) target = $region49
    $region48: #{_generator_pallas.1} parent=1 // pred_region
      %109 = dma.done [#allocation11], 160
    $region49: #{_generator_pallas.1} parent=1 // pred_fallthru
      _
    // Predicated region
    $region50: #{_generator_pallas.1} parent=1 // pred_check
      _
    $region51: #{_generator_pallas.1} parent=1 // pred_check_branch
      %111 = sbr.rel (0) target = $region53
    $region52: #{_generator_pallas.1} parent=1 // pred_region
      %112 = dma.done [#allocation14], 71680
    $region53: #{_generator_pallas.1} parent=1 // pred_fallthru
      _
    // Predicated region
    $region54: #{_generator_pallas.1} parent=1 // pred_check
      _
    $region55: #{_generator_pallas.1} parent=1 // pred_check_branch
      %114 = sbr.rel (0) target = $region57
    $region56: #{_generator_pallas.1} parent=1 // pred_region
      %115 = dma.done [#allocation14], 112
    $region57: #{_generator_pallas.1} parent=1 // pred_fallthru
      _
    %v117 = vld [vmem:[#allocation4] sm:$0xff]
    %v118 = vld [vmem:[#allocation4 + $0x8] sm:$0xff]
    %v119 = vpack.c.bf16 %v118, %v117
    %v120 = vld [vmem:[#allocation7] sm:$0xff]
    %v121 = vld [vmem:[#allocation7 + $0x8] sm:$0xff]
    %v122 = vld [vmem:[#allocation7 + $0x10] sm:$0xff]
    %v123 = vld [vmem:[#allocation7 + $0x18] sm:$0xff]
    %v124 = vld [vmem:[#allocation7 + $0x20] sm:$0xff]
    %v125 = vld [vmem:[#allocation7 + $0x28] sm:$0xff]
    %v126 = vld [vmem:[#allocation7 + $0x30] sm:$0xff]
    %v127 = vld [vmem:[#allocation7 + $0x38] sm:$0xff]
    %v128 = vld [vmem:[#allocation7 + $0x40] sm:$0xff]
    %v129 = vld [vmem:[#allocation7 + $0x48] sm:$0xff]
    %v130 = vld [vmem:[#allocation7 + $0x50] sm:$0xff]
    %v131 = vld [vmem:[#allocation7 + $0x58] sm:$0xff]
    %v132 = vld [vmem:[#allocation7 + $0x60] sm:$0xff]
    %v133 = vld [vmem:[#allocation7 + $0x68] sm:$0xff]
    %v134 = vld [vmem:[#allocation7 + $0x70] sm:$0xff]
    %v135 = vld [vmem:[#allocation7 + $0x78] sm:$0xff]
    %v136 = vld [vmem:[#allocation7 + $0x80] sm:$0xff]
    %v137 = vld [vmem:[#allocation7 + $0x88] sm:$0xff]
    %v138 = vld [vmem:[#allocation7 + $0x90] sm:$0xff]
    %v139 = vld [vmem:[#allocation7 + $0x98] sm:$0xff]
    %v140 = vld [vmem:[#allocation7 + $0xa0] sm:$0xff]
    %v141 = vld [vmem:[#allocation7 + $0xa8] sm:$0xff]
    %v142 = vld [vmem:[#allocation7 + $0xb0] sm:$0xff]
    %v143 = vld [vmem:[#allocation7 + $0xb8] sm:$0xff]
    %v144 = vld [vmem:[#allocation7 + $0xc0] sm:$0xff]
    %v145 = vld [vmem:[#allocation7 + $0xc8] sm:$0xff]
    %v146 = vld [vmem:[#allocation7 + $0xd0] sm:$0xff]
    %v147 = vld [vmem:[#allocation7 + $0xd8] sm:$0xff]
    %v148 = vld [vmem:[#allocation7 + $0xe0] sm:$0xff]
    %v149 = vld [vmem:[#allocation7 + $0xe8] sm:$0xff]
    %v150 = vld [vmem:[#allocation7 + $0xf0] sm:$0xff]
    %v151 = vld [vmem:[#allocation7 + $0xf8] sm:$0xff]
    %v152 = vld [vmem:[#allocation7 + $0x100] sm:$0xff]
    %v153 = vld [vmem:[#allocation7 + $0x108] sm:$0xff]
    %v154 = vld [vmem:[#allocation7 + $0x110] sm:$0xff]
    %v155 = vld [vmem:[#allocation7 + $0x118] sm:$0xff]
    %v156 = vld [vmem:[#allocation7 + $0x120] sm:$0xff]
    %v157 = vld [vmem:[#allocation7 + $0x128] sm:$0xff]
    %v158 = vld [vmem:[#allocation7 + $0x130] sm:$0xff]
    %v159 = vld [vmem:[#allocation7 + $0x138] sm:$0xff]
    %v160 = vld [vmem:[#allocation7 + $0x140] sm:$0xff]
    %v161 = vld [vmem:[#allocation7 + $0x148] sm:$0xff]
    %v162 = vld [vmem:[#allocation7 + $0x150] sm:$0xff]
    %v163 = vld [vmem:[#allocation7 + $0x158] sm:$0xff]
    %v164 = vld [vmem:[#allocation7 + $0x160] sm:$0xff]
    %v165 = vld [vmem:[#allocation7 + $0x168] sm:$0xff]
    %v166 = vld [vmem:[#allocation7 + $0x170] sm:$0xff]
    %v167 = vld [vmem:[#allocation7 + $0x178] sm:$0xff]
    %v168 = vld [vmem:[#allocation7 + $0x180] sm:$0xff]
    %v169 = vld [vmem:[#allocation7 + $0x188] sm:$0xff]
    %v170 = vld [vmem:[#allocation7 + $0x190] sm:$0xff]
    %v171 = vld [vmem:[#allocation7 + $0x198] sm:$0xff]
    %v172 = vld [vmem:[#allocation7 + $0x1a0] sm:$0xff]
    %v173 = vld [vmem:[#allocation7 + $0x1a8] sm:$0xff]
    %v174 = vld [vmem:[#allocation7 + $0x1b0] sm:$0xff]
    %v175 = vld [vmem:[#allocation7 + $0x1b8] sm:$0xff]
    %v176 = vld [vmem:[#allocation7 + $0x1c0] sm:$0xff]
    %v177 = vld [vmem:[#allocation7 + $0x1c8] sm:$0xff]
    %v178 = vld [vmem:[#allocation7 + $0x1d0] sm:$0xff]
    %v179 = vld [vmem:[#allocation7 + $0x1d8] sm:$0xff]
    %v180 = vld [vmem:[#allocation7 + $0x1e0] sm:$0xff]
    %v181 = vld [vmem:[#allocation7 + $0x1e8] sm:$0xff]
    %v182 = vld [vmem:[#allocation7 + $0x1f0] sm:$0xff]
    %v183 = vld [vmem:[#allocation7 + $0x1f8] sm:$0xff]
    %v184 = vld [vmem:[#allocation7 + $0x200] sm:$0xff]
    %v185 = vld [vmem:[#allocation7 + $0x208] sm:$0xff]
    %v186 = vld [vmem:[#allocation7 + $0x210] sm:$0xff]
    %v187 = vld [vmem:[#allocation7 + $0x218] sm:$0xff]
    %v188 = vld [vmem:[#allocation7 + $0x220] sm:$0xff]
    %v189 = vld [vmem:[#allocation7 + $0x228] sm:$0xff]
    %v190 = vld [vmem:[#allocation7 + $0x230] sm:$0xff]
    %v191 = vld [vmem:[#allocation7 + $0x238] sm:$0xff]
    %v192 = vld [vmem:[#allocation7 + $0x240] sm:$0xff]
    %v193 = vld [vmem:[#allocation7 + $0x248] sm:$0xff]
    %v194 = vld [vmem:[#allocation7 + $0x250] sm:$0xff]
    %v195 = vld [vmem:[#allocation7 + $0x258] sm:$0xff]
    %v196 = vld [vmem:[#allocation7 + $0x260] sm:$0xff]
    %v197 = vld [vmem:[#allocation7 + $0x268] sm:$0xff]
    %v198 = vld [vmem:[#allocation7 + $0x270] sm:$0xff]
    %v199 = vld [vmem:[#allocation7 + $0x278] sm:$0xff]
    %v200 = vld [vmem:[#allocation9] sm:$0xff]
    %v201 = vld [vmem:[#allocation9 + $0x8] sm:$0x3]
    %v204 = vlaneseq
    %v205 = vshrl.u32 %v204, 7
    %v206 = vsub.s32 0, %v205
    %v207 = vrot.slane %v200, %v206
    %v208 = vlaneseq
    %v209 = vshrl.u32 %v208, 7
    %v210 = vsub.s32 1, %v209
    %v211 = vrot.slane %v200, %v210
    %v212 = vlaneseq
    %v213 = vshrl.u32 %v212, 7
    %v214 = vsub.s32 2, %v213
    %v215 = vrot.slane %v200, %v214
    %v216 = vlaneseq
    %v217 = vshrl.u32 %v216, 7
    %v218 = vsub.s32 3, %v217
    %v219 = vrot.slane %v200, %v218
    %v220 = vlaneseq
    %v221 = vshrl.u32 %v220, 7
    %v222 = vsub.s32 4, %v221
    %v223 = vrot.slane %v200, %v222
    %v224 = vlaneseq
    %v225 = vshrl.u32 %v224, 7
    %v226 = vsub.s32 5, %v225
    %v227 = vrot.slane %v200, %v226
    %v228 = vlaneseq
    %v229 = vshrl.u32 %v228, 7
    %v230 = vsub.s32 6, %v229
    %v231 = vrot.slane %v200, %v230
    %v232 = vlaneseq
    %v233 = vshrl.u32 %v232, 7
    %v234 = vsub.s32 7, %v233
    %v235 = vrot.slane %v200, %v234
    %v236 = vlaneseq
    %v237 = vshrl.u32 %v236, 7
    %v238 = vsub.s32 0, %v237
    %v239 = vrot.slane %v201, %v238
    %v240 = vlaneseq
    %v241 = vshrl.u32 %v240, 7
    %v242 = vsub.s32 1, %v241
    %v243 = vrot.slane %v201, %v242
    %v334 = vunpack.c.l.b16 %v120
    %v335 = vunpack.c.h.b16 %v120
    %v336 = vunpack.c.l.b16 %v121
    %v337 = vunpack.c.h.b16 %v121
    %v338 = vunpack.c.l.b16 %v122
    %v339 = vunpack.c.h.b16 %v122
    %v340 = vunpack.c.l.b16 %v123
    %v341 = vunpack.c.h.b16 %v123
    %v342 = vunpack.c.l.b16 %v124
    %v343 = vunpack.c.h.b16 %v124
    %v344 = vunpack.c.l.b16 %v125
    %v345 = vunpack.c.h.b16 %v125
    %v346 = vunpack.c.l.b16 %v126
    %v347 = vunpack.c.h.b16 %v126
    %v348 = vunpack.c.l.b16 %v127
    %v349 = vunpack.c.h.b16 %v127
    %v350 = vunpack.c.l.b16 %v128
    %v351 = vunpack.c.h.b16 %v128
    %v352 = vunpack.c.l.b16 %v129
    %v353 = vunpack.c.h.b16 %v129
    %v354 = vunpack.c.l.b16 %v130
    %v355 = vunpack.c.h.b16 %v130
    %v356 = vunpack.c.l.b16 %v131
    %v357 = vunpack.c.h.b16 %v131
    %v358 = vunpack.c.l.b16 %v132
    %v359 = vunpack.c.h.b16 %v132
    %v360 = vunpack.c.l.b16 %v133
    %v361 = vunpack.c.h.b16 %v133
    %v362 = vunpack.c.l.b16 %v134
    %v363 = vunpack.c.h.b16 %v134
    %v364 = vunpack.c.l.b16 %v135
    %v365 = vunpack.c.h.b16 %v135
    %v366 = vunpack.c.l.b16 %v136
    %v367 = vunpack.c.h.b16 %v136
    %v368 = vunpack.c.l.b16 %v137
    %v369 = vunpack.c.h.b16 %v137
    %v370 = vunpack.c.l.b16 %v138
    %v371 = vunpack.c.h.b16 %v138
    %v372 = vunpack.c.l.b16 %v139
    %v373 = vunpack.c.h.b16 %v139
    %v374 = vunpack.c.l.b16 %v140
    %v375 = vunpack.c.h.b16 %v140
    %v376 = vunpack.c.l.b16 %v141
    %v377 = vunpack.c.h.b16 %v141
    %v378 = vunpack.c.l.b16 %v142
    %v379 = vunpack.c.h.b16 %v142
    %v380 = vunpack.c.l.b16 %v143
    %v381 = vunpack.c.h.b16 %v143
    %v382 = vunpack.c.l.b16 %v144
    %v383 = vunpack.c.h.b16 %v144
    %v384 = vunpack.c.l.b16 %v145
    %v385 = vunpack.c.h.b16 %v145
    %v386 = vunpack.c.l.b16 %v146
    %v387 = vunpack.c.h.b16 %v146
    %v388 = vunpack.c.l.b16 %v147
    %v389 = vunpack.c.h.b16 %v147
    %v390 = vunpack.c.l.b16 %v148
    %v391 = vunpack.c.h.b16 %v148
    %v392 = vunpack.c.l.b16 %v149
    %v393 = vunpack.c.h.b16 %v149
    %v394 = vunpack.c.l.b16 %v150
    %v395 = vunpack.c.h.b16 %v150
    %v396 = vunpack.c.l.b16 %v151
    %v397 = vunpack.c.h.b16 %v151
    %v398 = vunpack.c.l.b16 %v152
    %v399 = vunpack.c.h.b16 %v152
    %v400 = vunpack.c.l.b16 %v153
    %v401 = vunpack.c.h.b16 %v153
    %v402 = vunpack.c.l.b16 %v154
    %v403 = vunpack.c.h.b16 %v154
    %v404 = vunpack.c.l.b16 %v155
    %v405 = vunpack.c.h.b16 %v155
    %v406 = vunpack.c.l.b16 %v156
    %v407 = vunpack.c.h.b16 %v156
    %v408 = vunpack.c.l.b16 %v157
    %v409 = vunpack.c.h.b16 %v157
    %v410 = vunpack.c.l.b16 %v158
    %v411 = vunpack.c.h.b16 %v158
    %v412 = vunpack.c.l.b16 %v159
    %v413 = vunpack.c.h.b16 %v159
    %v414 = vunpack.c.l.b16 %v160
    %v415 = vunpack.c.h.b16 %v160
    %v416 = vunpack.c.l.b16 %v161
    %v417 = vunpack.c.h.b16 %v161
    %v418 = vunpack.c.l.b16 %v162
    %v419 = vunpack.c.h.b16 %v162
    %v420 = vunpack.c.l.b16 %v163
    %v421 = vunpack.c.h.b16 %v163
    %v422 = vunpack.c.l.b16 %v164
    %v423 = vunpack.c.h.b16 %v164
    %v424 = vunpack.c.l.b16 %v165
    %v425 = vunpack.c.h.b16 %v165
    %v426 = vunpack.c.l.b16 %v166
    %v427 = vunpack.c.h.b16 %v166
    %v428 = vunpack.c.l.b16 %v167
    %v429 = vunpack.c.h.b16 %v167
    %v430 = vunpack.c.l.b16 %v168
    %v431 = vunpack.c.h.b16 %v168
    %v432 = vunpack.c.l.b16 %v169
    %v433 = vunpack.c.h.b16 %v169
    %v434 = vunpack.c.l.b16 %v170
    %v435 = vunpack.c.h.b16 %v170
    %v436 = vunpack.c.l.b16 %v171
    %v437 = vunpack.c.h.b16 %v171
    %v438 = vunpack.c.l.b16 %v172
    %v439 = vunpack.c.h.b16 %v172
    %v440 = vunpack.c.l.b16 %v173
    %v441 = vunpack.c.h.b16 %v173
    %v442 = vunpack.c.l.b16 %v174
    %v443 = vunpack.c.h.b16 %v174
    %v444 = vunpack.c.l.b16 %v175
    %v445 = vunpack.c.h.b16 %v175
    %v446 = vunpack.c.l.b16 %v176
    %v447 = vunpack.c.h.b16 %v176
    %v448 = vunpack.c.l.b16 %v177
    %v449 = vunpack.c.h.b16 %v177
    %v450 = vunpack.c.l.b16 %v178
    %v451 = vunpack.c.h.b16 %v178
    %v452 = vunpack.c.l.b16 %v179
    %v453 = vunpack.c.h.b16 %v179
    %v454 = vunpack.c.l.b16 %v180
    %v455 = vunpack.c.h.b16 %v180
    %v456 = vunpack.c.l.b16 %v181
    %v457 = vunpack.c.h.b16 %v181
    %v458 = vunpack.c.l.b16 %v182
    %v459 = vunpack.c.h.b16 %v182
    %v460 = vunpack.c.l.b16 %v183
    %v461 = vunpack.c.h.b16 %v183
    %v462 = vunpack.c.l.b16 %v184
    %v463 = vunpack.c.h.b16 %v184
    %v464 = vunpack.c.l.b16 %v185
    %v465 = vunpack.c.h.b16 %v185
    %v466 = vunpack.c.l.b16 %v186
    %v467 = vunpack.c.h.b16 %v186
    %v468 = vunpack.c.l.b16 %v187
    %v469 = vunpack.c.h.b16 %v187
    %v470 = vunpack.c.l.b16 %v188
    %v471 = vunpack.c.h.b16 %v188
    %v472 = vunpack.c.l.b16 %v189
    %v473 = vunpack.c.h.b16 %v189
    %v474 = vunpack.c.l.b16 %v190
    %v475 = vunpack.c.h.b16 %v190
    %v476 = vunpack.c.l.b16 %v191
    %v477 = vunpack.c.h.b16 %v191
    %v478 = vunpack.c.l.b16 %v192
    %v479 = vunpack.c.h.b16 %v192
    %v480 = vunpack.c.l.b16 %v193
    %v481 = vunpack.c.h.b16 %v193
    %v482 = vunpack.c.l.b16 %v194
    %v483 = vunpack.c.h.b16 %v194
    %v484 = vunpack.c.l.b16 %v195
    %v485 = vunpack.c.h.b16 %v195
    %v486 = vunpack.c.l.b16 %v196
    %v487 = vunpack.c.h.b16 %v196
    %v488 = vunpack.c.l.b16 %v197
    %v489 = vunpack.c.h.b16 %v197
    %v490 = vunpack.c.l.b16 %v198
    %v491 = vunpack.c.h.b16 %v198
    %v492 = vunpack.c.l.b16 %v199
    %v493 = vunpack.c.h.b16 %v199
    %v494 = vpack.c.b16 %v344, %v334
    %v495 = vpack.c.b16 %v345, %v335
    %v496 = vpack.c.b16 %v346, %v336
    %v497 = vpack.c.b16 %v347, %v337
    %v498 = vpack.c.b16 %v348, %v338
    %v499 = vpack.c.b16 %v349, %v339
    %v500 = vpack.c.b16 %v350, %v340
    %v501 = vpack.c.b16 %v351, %v341
    %v502 = vpack.c.b16 %v352, %v342
    %v503 = vpack.c.b16 %v353, %v343
    %v504 = vpack.c.b16 %v364, %v354
    %v505 = vpack.c.b16 %v365, %v355
    %v506 = vpack.c.b16 %v366, %v356
    %v507 = vpack.c.b16 %v367, %v357
    %v508 = vpack.c.b16 %v368, %v358
    %v509 = vpack.c.b16 %v369, %v359
    %v510 = vpack.c.b16 %v370, %v360
    %v511 = vpack.c.b16 %v371, %v361
    %v512 = vpack.c.b16 %v372, %v362
    %v513 = vpack.c.b16 %v373, %v363
    %v514 = vpack.c.b16 %v384, %v374
    %v515 = vpack.c.b16 %v385, %v375
    %v516 = vpack.c.b16 %v386, %v376
    %v517 = vpack.c.b16 %v387, %v377
    %v518 = vpack.c.b16 %v388, %v378
    %v519 = vpack.c.b16 %v389, %v379
    %v520 = vpack.c.b16 %v390, %v380
    %v521 = vpack.c.b16 %v391, %v381
    %v522 = vpack.c.b16 %v392, %v382
    %v523 = vpack.c.b16 %v393, %v383
    %v524 = vpack.c.b16 %v404, %v394
    %v525 = vpack.c.b16 %v405, %v395
    %v526 = vpack.c.b16 %v406, %v396
    %v527 = vpack.c.b16 %v407, %v397
    %v528 = vpack.c.b16 %v408, %v398
    %v529 = vpack.c.b16 %v409, %v399
    %v530 = vpack.c.b16 %v410, %v400
    %v531 = vpack.c.b16 %v411, %v401
    %v532 = vpack.c.b16 %v412, %v402
    %v533 = vpack.c.b16 %v413, %v403
    %v534 = vpack.c.b16 %v424, %v414
    %v535 = vpack.c.b16 %v425, %v415
    %v536 = vpack.c.b16 %v426, %v416
    %v537 = vpack.c.b16 %v427, %v417
    %v538 = vpack.c.b16 %v428, %v418
    %v539 = vpack.c.b16 %v429, %v419
    %v540 = vpack.c.b16 %v430, %v420
    %v541 = vpack.c.b16 %v431, %v421
    %v542 = vpack.c.b16 %v432, %v422
    %v543 = vpack.c.b16 %v433, %v423
    %v544 = vpack.c.b16 %v444, %v434
    %v545 = vpack.c.b16 %v445, %v435
    %v546 = vpack.c.b16 %v446, %v436
    %v547 = vpack.c.b16 %v447, %v437
    %v548 = vpack.c.b16 %v448, %v438
    %v549 = vpack.c.b16 %v449, %v439
    %v550 = vpack.c.b16 %v450, %v440
    %v551 = vpack.c.b16 %v451, %v441
    %v552 = vpack.c.b16 %v452, %v442
    %v553 = vpack.c.b16 %v453, %v443
    %v554 = vpack.c.b16 %v464, %v454
    %v555 = vpack.c.b16 %v465, %v455
    %v556 = vpack.c.b16 %v466, %v456
    %v557 = vpack.c.b16 %v467, %v457
    %v558 = vpack.c.b16 %v468, %v458
    %v559 = vpack.c.b16 %v469, %v459
    %v560 = vpack.c.b16 %v470, %v460
    %v561 = vpack.c.b16 %v471, %v461
    %v562 = vpack.c.b16 %v472, %v462
    %v563 = vpack.c.b16 %v473, %v463
    %v564 = vpack.c.b16 %v484, %v474
    %v565 = vpack.c.b16 %v485, %v475
    %v566 = vpack.c.b16 %v486, %v476
    %v567 = vpack.c.b16 %v487, %v477
    %v568 = vpack.c.b16 %v488, %v478
    %v569 = vpack.c.b16 %v489, %v479
    %v570 = vpack.c.b16 %v490, %v480
    %v571 = vpack.c.b16 %v491, %v481
    %v572 = vpack.c.b16 %v492, %v482
    %v573 = vpack.c.b16 %v493, %v483
    %654 = vmatprep.subr.bf16.mxu0 %v565
    %655 = vmatpush1.bf16.msra.mxu0 %v564
    %656 = vmatprep.subr.bf16.mxu0 %v555
    %657 = vmatpush1.bf16.msra.mxu0 %v554
    %658 = vmatprep.subr.bf16.mxu0 %v545
    %659 = vmatpush1.bf16.msra.mxu0 %v544
    %660 = vmatprep.subr.bf16.mxu0 %v535
    %661 = vmatpush1.bf16.msra.mxu0 %v534
    %662 = vmatprep.subr.bf16.mxu0 %v525
    %663 = vmatpush1.bf16.msra.mxu0 %v524
    %664 = vmatprep.subr.bf16.mxu0 %v515
    %665 = vmatpush1.bf16.msra.mxu0 %v514
    %666 = vmatprep.subr.bf16.mxu0 %v505
    %667 = vmatpush1.bf16.msra.mxu0 %v504
    %668 = vmatprep.subr.bf16.mxu0 %v495
    %669 = vmatpush1.bf16.msra.mxu0 %v494
    %670 = vmatprep.subr.bf16.mxu0 0
    %671 = vmatpush2.bf16.msra.mxu0 0
    %672 = vmatprep.subr.bf16.mxu0 0
    %673 = vmatpush2.bf16.msra.mxu0 0
    %674 = vmatprep.subr.bf16.mxu0 0
    %675 = vmatpush2.bf16.msra.mxu0 0
    %676 = vmatprep.subr.bf16.mxu0 0
    %677 = vmatpush2.bf16.msra.mxu0 0
    %678 = vmatprep.subr.bf16.mxu0 0
    %679 = vmatpush2.bf16.msra.mxu0 0
    %680 = vmatprep.subr.bf16.mxu0 0
    %681 = vmatpush2.bf16.msra.mxu0 0
    %682 = vmatprep.subr.bf16.mxu0 0
    %683 = vmatpush2.bf16.msra.mxu0 0
    %684 = vmatprep.subr.bf16.mxu0 0
    %685 = vmatpush2.bf16.msra.mxu0 0
    %686 = vmatprep.mubr.bf16.mxu0 0
    %687 = vmatmul.mubr.bf16.gmra.mxu0 %v119
    %v688 = vpop.f32.mrf.mxu0
    %v689 = vadd.f32 %v207, %v688
    %v690 = vpop.f32.mrf.mxu0
    %v691 = vadd.f32 %v211, %v690
    %v692 = vpop.f32.mrf.mxu0
    %v693 = vadd.f32 %v207, %v692
    %v694 = vpop.f32.mrf.mxu0
    %v695 = vadd.f32 %v211, %v694
    %696 = vdwg.mxu0
    %697 = vmatprep.subr.bf16.mxu0 %v567
    %698 = vmatpush1.bf16.msra.mxu0 %v566
    %699 = vmatprep.subr.bf16.mxu0 %v557
    %700 = vmatpush1.bf16.msra.mxu0 %v556
    %701 = vmatprep.subr.bf16.mxu0 %v547
    %702 = vmatpush1.bf16.msra.mxu0 %v546
    %703 = vmatprep.subr.bf16.mxu0 %v537
    %704 = vmatpush1.bf16.msra.mxu0 %v536
    %705 = vmatprep.subr.bf16.mxu0 %v527
    %706 = vmatpush1.bf16.msra.mxu0 %v526
    %707 = vmatprep.subr.bf16.mxu0 %v517
    %708 = vmatpush1.bf16.msra.mxu0 %v516
    %709 = vmatprep.subr.bf16.mxu0 %v507
    %710 = vmatpush1.bf16.msra.mxu0 %v506
    %711 = vmatprep.subr.bf16.mxu0 %v497
    %712 = vmatpush1.bf16.msra.mxu0 %v496
    %713 = vmatprep.subr.bf16.mxu0 0
    %714 = vmatpush2.bf16.msra.mxu0 0
    %715 = vmatprep.subr.bf16.mxu0 0
    %716 = vmatpush2.bf16.msra.mxu0 0
    %717 = vmatprep.subr.bf16.mxu0 0
    %718 = vmatpush2.bf16.msra.mxu0 0
    %719 = vmatprep.subr.bf16.mxu0 0
    %720 = vmatpush2.bf16.msra.mxu0 0
    %721 = vmatprep.subr.bf16.mxu0 0
    %722 = vmatpush2.bf16.msra.mxu0 0
    %723 = vmatprep.subr.bf16.mxu0 0
    %724 = vmatpush2.bf16.msra.mxu0 0
    %725 = vmatprep.subr.bf16.mxu0 0
    %726 = vmatpush2.bf16.msra.mxu0 0
    %727 = vmatprep.subr.bf16.mxu0 0
    %728 = vmatpush2.bf16.msra.mxu0 0
    %729 = vmatprep.mubr.bf16.mxu0 0
    %730 = vmatmul.mubr.bf16.gmra.mxu0 %v119
    %v731 = vpop.f32.mrf.mxu0
    %v732 = vadd.f32 %v215, %v731
    %v733 = vpop.f32.mrf.mxu0
    %v734 = vadd.f32 %v219, %v733
    %v735 = vpop.f32.mrf.mxu0
    %v736 = vadd.f32 %v215, %v735
    %v737 = vpop.f32.mrf.mxu0
    %v738 = vadd.f32 %v219, %v737
    %739 = vdwg.mxu0
    %740 = vmatprep.subr.bf16.mxu0 %v569
    %741 = vmatpush1.bf16.msra.mxu0 %v568
    %742 = vmatprep.subr.bf16.mxu0 %v559
    %743 = vmatpush1.bf16.msra.mxu0 %v558
    %744 = vmatprep.subr.bf16.mxu0 %v549
    %745 = vmatpush1.bf16.msra.mxu0 %v548
    %746 = vmatprep.subr.bf16.mxu0 %v539
    %747 = vmatpush1.bf16.msra.mxu0 %v538
    %748 = vmatprep.subr.bf16.mxu0 %v529
    %749 = vmatpush1.bf16.msra.mxu0 %v528
    %750 = vmatprep.subr.bf16.mxu0 %v519
    %751 = vmatpush1.bf16.msra.mxu0 %v518
    %752 = vmatprep.subr.bf16.mxu0 %v509
    %753 = vmatpush1.bf16.msra.mxu0 %v508
    %754 = vmatprep.subr.bf16.mxu0 %v499
    %755 = vmatpush1.bf16.msra.mxu0 %v498
    %756 = vmatprep.subr.bf16.mxu0 0
    %757 = vmatpush2.bf16.msra.mxu0 0
    %758 = vmatprep.subr.bf16.mxu0 0
    %759 = vmatpush2.bf16.msra.mxu0 0
    %760 = vmatprep.subr.bf16.mxu0 0
    %761 = vmatpush2.bf16.msra.mxu0 0
    %762 = vmatprep.subr.bf16.mxu0 0
    %763 = vmatpush2.bf16.msra.mxu0 0
    %764 = vmatprep.subr.bf16.mxu0 0
    %765 = vmatpush2.bf16.msra.mxu0 0
    %766 = vmatprep.subr.bf16.mxu0 0
    %767 = vmatpush2.bf16.msra.mxu0 0
    %768 = vmatprep.subr.bf16.mxu0 0
    %769 = vmatpush2.bf16.msra.mxu0 0
    %770 = vmatprep.subr.bf16.mxu0 0
    %771 = vmatpush2.bf16.msra.mxu0 0
    %772 = vmatprep.mubr.bf16.mxu0 0
    %773 = vmatmul.mubr.bf16.gmra.mxu0 %v119
    %v774 = vpop.f32.mrf.mxu0
    %v775 = vadd.f32 %v223, %v774
    %v776 = vpop.f32.mrf.mxu0
    %v777 = vadd.f32 %v227, %v776
    %v778 = vpop.f32.mrf.mxu0
    %v779 = vadd.f32 %v223, %v778
    %v780 = vpop.f32.mrf.mxu0
    %v781 = vadd.f32 %v227, %v780
    %782 = vdwg.mxu0
    %783 = vmatprep.subr.bf16.mxu0 %v571
    %784 = vmatpush1.bf16.msra.mxu0 %v570
    %785 = vmatprep.subr.bf16.mxu0 %v561
    %786 = vmatpush1.bf16.msra.mxu0 %v560
    %787 = vmatprep.subr.bf16.mxu0 %v551
    %788 = vmatpush1.bf16.msra.mxu0 %v550
    %789 = vmatprep.subr.bf16.mxu0 %v541
    %790 = vmatpush1.bf16.msra.mxu0 %v540
    %791 = vmatprep.subr.bf16.mxu0 %v531
    %792 = vmatpush1.bf16.msra.mxu0 %v530
    %793 = vmatprep.subr.bf16.mxu0 %v521
    %794 = vmatpush1.bf16.msra.mxu0 %v520
    %795 = vmatprep.subr.bf16.mxu0 %v511
    %796 = vmatpush1.bf16.msra.mxu0 %v510
    %797 = vmatprep.subr.bf16.mxu0 %v501
    %798 = vmatpush1.bf16.msra.mxu0 %v500
    %799 = vmatprep.subr.bf16.mxu0 0
    %800 = vmatpush2.bf16.msra.mxu0 0
    %801 = vmatprep.subr.bf16.mxu0 0
    %802 = vmatpush2.bf16.msra.mxu0 0
    %803 = vmatprep.subr.bf16.mxu0 0
    %804 = vmatpush2.bf16.msra.mxu0 0
    %805 = vmatprep.subr.bf16.mxu0 0
    %806 = vmatpush2.bf16.msra.mxu0 0
    %807 = vmatprep.subr.bf16.mxu0 0
    %808 = vmatpush2.bf16.msra.mxu0 0
    %809 = vmatprep.subr.bf16.mxu0 0
    %810 = vmatpush2.bf16.msra.mxu0 0
    %811 = vmatprep.subr.bf16.mxu0 0
    %812 = vmatpush2.bf16.msra.mxu0 0
    %813 = vmatprep.subr.bf16.mxu0 0
    %814 = vmatpush2.bf16.msra.mxu0 0
    %815 = vmatprep.mubr.bf16.mxu0 0
    %816 = vmatmul.mubr.bf16.gmra.mxu0 %v119
    %v817 = vpop.f32.mrf.mxu0
    %v818 = vadd.f32 %v231, %v817
    %v819 = vpop.f32.mrf.mxu0
    %v820 = vadd.f32 %v235, %v819
    %v821 = vpop.f32.mrf.mxu0
    %v822 = vadd.f32 %v231, %v821
    %v823 = vpop.f32.mrf.mxu0
    %v824 = vadd.f32 %v235, %v823
    %825 = vdwg.mxu0
    %826 = vmatprep.subr.bf16.mxu0 %v573
    %827 = vmatpush1.bf16.msra.mxu0 %v572
    %828 = vmatprep.subr.bf16.mxu0 %v563
    %829 = vmatpush1.bf16.msra.mxu0 %v562
    %830 = vmatprep.subr.bf16.mxu0 %v553
    %831 = vmatpush1.bf16.msra.mxu0 %v552
    %832 = vmatprep.subr.bf16.mxu0 %v543
    %833 = vmatpush1.bf16.msra.mxu0 %v542
    %834 = vmatprep.subr.bf16.mxu0 %v533
    %835 = vmatpush1.bf16.msra.mxu0 %v532
    %836 = vmatprep.subr.bf16.mxu0 %v523
    %837 = vmatpush1.bf16.msra.mxu0 %v522
    %838 = vmatprep.subr.bf16.mxu0 %v513
    %839 = vmatpush1.bf16.msra.mxu0 %v512
    %840 = vmatprep.subr.bf16.mxu0 %v503
    %841 = vmatpush1.bf16.msra.mxu0 %v502
    %842 = vmatprep.subr.bf16.mxu0 0
    %843 = vmatpush2.bf16.msra.mxu0 0
    %844 = vmatprep.subr.bf16.mxu0 0
    %845 = vmatpush2.bf16.msra.mxu0 0
    %846 = vmatprep.subr.bf16.mxu0 0
    %847 = vmatpush2.bf16.msra.mxu0 0
    %848 = vmatprep.subr.bf16.mxu0 0
    %849 = vmatpush2.bf16.msra.mxu0 0
    %850 = vmatprep.subr.bf16.mxu0 0
    %851 = vmatpush2.bf16.msra.mxu0 0
    %852 = vmatprep.subr.bf16.mxu0 0
    %853 = vmatpush2.bf16.msra.mxu0 0
    %854 = vmatprep.subr.bf16.mxu0 0
    %855 = vmatpush2.bf16.msra.mxu0 0
    %856 = vmatprep.subr.bf16.mxu0 0
    %857 = vmatpush2.bf16.msra.mxu0 0
    %858 = vmatprep.mubr.bf16.mxu0 0
    %859 = vmatmul.mubr.bf16.gmra.mxu0 %v119
    %v860 = vpop.f32.mrf.mxu0
    %v861 = vadd.f32 %v239, %v860
    %v862 = vpop.f32.mrf.mxu0
    %v863 = vadd.f32 %v243, %v862
    %v864 = vpop.f32.mrf.mxu0
    %v865 = vadd.f32 %v239, %v864
    %v866 = vpop.f32.mrf.mxu0
    %v867 = vadd.f32 %v243, %v866
    %868 = vdwg.mxu0
    %v869 = vmax.f32 %v689, 0.0
    %v870 = vmax.f32 %v691, 0.0
    %v871 = vmax.f32 %v732, 0.0
    %v872 = vmax.f32 %v734, 0.0
    %v873 = vmax.f32 %v775, 0.0
    %v874 = vmax.f32 %v777, 0.0
    %v875 = vmax.f32 %v818, 0.0
    %v876 = vmax.f32 %v820, 0.0
    %v877 = vmax.f32 %v861, 0.0
    %v878 = vmax.f32 %v863, 0.0
    %v879 = vmax.f32 %v693, 0.0
    %v880 = vmax.f32 %v695, 0.0
    %v881 = vmax.f32 %v736, 0.0
    %v882 = vmax.f32 %v738, 0.0
    %v883 = vmax.f32 %v779, 0.0
    %v884 = vmax.f32 %v781, 0.0
    %v885 = vmax.f32 %v822, 0.0
    %v886 = vmax.f32 %v824, 0.0
    %v887 = vmax.f32 %v865, 0.0
    %v888 = vmax.f32 %v867, 0.0
    %v889 = vpack.c.bf16 %v879, %v869
    %v890 = vpack.c.bf16 %v880, %v870
    %v891 = vpack.c.bf16 %v881, %v871
    %v892 = vpack.c.bf16 %v882, %v872
    %v893 = vpack.c.bf16 %v883, %v873
    %v894 = vpack.c.bf16 %v884, %v874
    %v895 = vpack.c.bf16 %v885, %v875
    %v896 = vpack.c.bf16 %v886, %v876
    %v897 = vpack.c.bf16 %v887, %v877
    %v898 = vpack.c.bf16 %v888, %v878
    %v909 = vunpack.c.l.b16 %v889
    %v910 = vunpack.c.l.b16 %v890
    %v911 = vunpack.c.l.b16 %v891
    %v912 = vunpack.c.l.b16 %v892
    %v913 = vunpack.c.l.b16 %v893
    %v914 = vunpack.c.l.b16 %v894
    %v915 = vunpack.c.l.b16 %v895
    %v916 = vunpack.c.l.b16 %v896
    %v917 = vunpack.c.l.b16 %v897
    %v918 = vunpack.c.l.b16 %v898
    %v919 = vunpack.c.h.b16 %v889
    %v920 = vunpack.c.h.b16 %v890
    %v921 = vunpack.c.h.b16 %v891
    %v922 = vunpack.c.h.b16 %v892
    %v923 = vunpack.c.h.b16 %v893
    %v924 = vunpack.c.h.b16 %v894
    %v925 = vunpack.c.h.b16 %v895
    %v926 = vunpack.c.h.b16 %v896
    %v927 = vunpack.c.h.b16 %v897
    %v928 = vunpack.c.h.b16 %v898
    %v929 = vpack.c.b16 %v910, %v909
    %v930 = vpack.c.b16 %v912, %v911
    %v931 = vpack.c.b16 %v914, %v913
    %v932 = vpack.c.b16 %v916, %v915
    %v933 = vpack.c.b16 %v918, %v917
    %v934 = vpack.c.b16 %v920, %v919
    %v935 = vpack.c.b16 %v922, %v921
    %v936 = vpack.c.b16 %v924, %v923
    %v937 = vpack.c.b16 %v926, %v925
    %v938 = vpack.c.b16 %v928, %v927
    %949 = vst [vmem:[#allocation2] sm:$0xff] %v929
    %950 = vst [vmem:[#allocation2 + $0x8] sm:$0xff] %v930
    %951 = vst [vmem:[#allocation2 + $0x10] sm:$0xff] %v931
    %952 = vst [vmem:[#allocation2 + $0x18] sm:$0xff] %v932
    %953 = vst [vmem:[#allocation2 + $0x20] sm:$0xff] %v933
    %954 = vst [vmem:[#allocation2 + $0x28] sm:$0xff] %v934
    %955 = vst [vmem:[#allocation2 + $0x30] sm:$0xff] %v935
    %956 = vst [vmem:[#allocation2 + $0x38] sm:$0xff] %v936
    %957 = vst [vmem:[#allocation2 + $0x40] sm:$0xff] %v937
    %958 = vst [vmem:[#allocation2 + $0x48] sm:$0xff] %v938
    %v959 = vld [vmem:[#allocation2] sm:$0xff]
    %v960 = vld [vmem:[#allocation2 + $0x8] sm:$0xff]
    %v961 = vld [vmem:[#allocation2 + $0x10] sm:$0xff]
    %v962 = vld [vmem:[#allocation2 + $0x18] sm:$0xff]
    %v963 = vld [vmem:[#allocation2 + $0x20] sm:$0xff]
    %v964 = vld [vmem:[#allocation2 + $0x28] sm:$0xff]
    %v965 = vld [vmem:[#allocation2 + $0x30] sm:$0xff]
    %v966 = vld [vmem:[#allocation2 + $0x38] sm:$0xff]
    %v967 = vld [vmem:[#allocation2 + $0x40] sm:$0xff]
    %v968 = vld [vmem:[#allocation2 + $0x48] sm:$0xff]
    %v969 = vld [vmem:[#allocation10] sm:$0xff]
    %v970 = vld [vmem:[#allocation10 + $0x8] sm:$0xff]
    %v971 = vld [vmem:[#allocation10 + $0x10] sm:$0xff]
    %v972 = vld [vmem:[#allocation10 + $0x18] sm:$0xff]
    %v973 = vld [vmem:[#allocation10 + $0x20] sm:$0xff]
    %v974 = vld [vmem:[#allocation10 + $0x28] sm:$0xff]
    %v975 = vld [vmem:[#allocation10 + $0x30] sm:$0xff]
    %v976 = vld [vmem:[#allocation10 + $0x38] sm:$0xff]
    %v977 = vld [vmem:[#allocation10 + $0x40] sm:$0xff]
    %v978 = vld [vmem:[#allocation10 + $0x48] sm:$0xff]
    %v979 = vld [vmem:[#allocation10 + $0x50] sm:$0xff]
    %v980 = vld [vmem:[#allocation10 + $0x58] sm:$0xff]
    %v981 = vld [vmem:[#allocation10 + $0x60] sm:$0xff]
    %v982 = vld [vmem:[#allocation10 + $0x68] sm:$0xff]
    %v983 = vld [vmem:[#allocation10 + $0x70] sm:$0xff]
    %v984 = vld [vmem:[#allocation10 + $0x78] sm:$0xff]
    %v985 = vld [vmem:[#allocation10 + $0x80] sm:$0xff]
    %v986 = vld [vmem:[#allocation10 + $0x88] sm:$0xff]
    %v987 = vld [vmem:[#allocation10 + $0x90] sm:$0xff]
    %v988 = vld [vmem:[#allocation10 + $0x98] sm:$0xff]
    %v989 = vld [vmem:[#allocation10 + $0xa0] sm:$0xff]
    %v990 = vld [vmem:[#allocation10 + $0xa8] sm:$0xff]
    %v991 = vld [vmem:[#allocation10 + $0xb0] sm:$0xff]
    %v992 = vld [vmem:[#allocation10 + $0xb8] sm:$0xff]
    %v993 = vld [vmem:[#allocation10 + $0xc0] sm:$0xff]
    %v994 = vld [vmem:[#allocation10 + $0xc8] sm:$0xff]
    %v995 = vld [vmem:[#allocation10 + $0xd0] sm:$0xff]
    %v996 = vld [vmem:[#allocation10 + $0xd8] sm:$0xff]
    %v997 = vld [vmem:[#allocation10 + $0xe0] sm:$0xff]
    %v998 = vld [vmem:[#allocation10 + $0xe8] sm:$0xff]
    %v999 = vld [vmem:[#allocation10 + $0xf0] sm:$0xff]
    %v1000 = vld [vmem:[#allocation10 + $0xf8] sm:$0xff]
    %v1001 = vld [vmem:[#allocation10 + $0x100] sm:$0xff]
    %v1002 = vld [vmem:[#allocation10 + $0x108] sm:$0xff]
    %v1003 = vld [vmem:[#allocation10 + $0x110] sm:$0xff]
    %v1004 = vld [vmem:[#allocation10 + $0x118] sm:$0xff]
    %v1005 = vld [vmem:[#allocation10 + $0x120] sm:$0xff]
    %v1006 = vld [vmem:[#allocation10 + $0x128] sm:$0xff]
    %v1007 = vld [vmem:[#allocation10 + $0x130] sm:$0xff]
    %v1008 = vld [vmem:[#allocation10 + $0x138] sm:$0xff]
    %v1009 = vld [vmem:[#allocation10 + $0x140] sm:$0xff]
    %v1010 = vld [vmem:[#allocation10 + $0x148] sm:$0xff]
    %v1011 = vld [vmem:[#allocation10 + $0x150] sm:$0xff]
    %v1012 = vld [vmem:[#allocation10 + $0x158] sm:$0xff]
    %v1013 = vld [vmem:[#allocation10 + $0x160] sm:$0xff]
    %v1014 = vld [vmem:[#allocation10 + $0x168] sm:$0xff]
    %v1015 = vld [vmem:[#allocation10 + $0x170] sm:$0xff]
    %v1016 = vld [vmem:[#allocation10 + $0x178] sm:$0xff]
    %v1017 = vld [vmem:[#allocation10 + $0x180] sm:$0xff]
    %v1018 = vld [vmem:[#allocation10 + $0x188] sm:$0xff]
    %v1019 = vld [vmem:[#allocation10 + $0x190] sm:$0xff]
    %v1020 = vld [vmem:[#allocation10 + $0x198] sm:$0xff]
    %v1021 = vld [vmem:[#allocation10 + $0x1a0] sm:$0xff]
    %v1022 = vld [vmem:[#allocation10 + $0x1a8] sm:$0xff]
    %v1023 = vld [vmem:[#allocation10 + $0x1b0] sm:$0xff]
    %v1024 = vld [vmem:[#allocation10 + $0x1b8] sm:$0xff]
    %v1025 = vld [vmem:[#allocation10 + $0x1c0] sm:$0xff]
    %v1026 = vld [vmem:[#allocation10 + $0x1c8] sm:$0xff]
    %v1027 = vld [vmem:[#allocation10 + $0x1d0] sm:$0xff]
    %v1028 = vld [vmem:[#allocation10 + $0x1d8] sm:$0xff]
    %v1029 = vld [vmem:[#allocation10 + $0x1e0] sm:$0xff]
    %v1030 = vld [vmem:[#allocation10 + $0x1e8] sm:$0xff]
    %v1031 = vld [vmem:[#allocation10 + $0x1f0] sm:$0xff]
    %v1032 = vld [vmem:[#allocation10 + $0x1f8] sm:$0xff]
    %v1033 = vld [vmem:[#allocation10 + $0x200] sm:$0xff]
    %v1034 = vld [vmem:[#allocation10 + $0x208] sm:$0xff]
    %v1035 = vld [vmem:[#allocation10 + $0x210] sm:$0xff]
    %v1036 = vld [vmem:[#allocation10 + $0x218] sm:$0xff]
    %v1037 = vld [vmem:[#allocation10 + $0x220] sm:$0xff]
    %v1038 = vld [vmem:[#allocation10 + $0x228] sm:$0xff]
    %v1039 = vld [vmem:[#allocation10 + $0x230] sm:$0xff]
    %v1040 = vld [vmem:[#allocation10 + $0x238] sm:$0xff]
    %v1041 = vld [vmem:[#allocation10 + $0x240] sm:$0xff]
    %v1042 = vld [vmem:[#allocation10 + $0x248] sm:$0xff]
    %v1043 = vld [vmem:[#allocation10 + $0x250] sm:$0xff]
    %v1044 = vld [vmem:[#allocation10 + $0x258] sm:$0xff]
    %v1045 = vld [vmem:[#allocation10 + $0x260] sm:$0xff]
    %v1046 = vld [vmem:[#allocation10 + $0x268] sm:$0xff]
    %v1047 = vld [vmem:[#allocation10 + $0x270] sm:$0xff]
    %v1048 = vld [vmem:[#allocation10 + $0x278] sm:$0xff]
    %v1049 = vld [vmem:[#allocation10 + $0x280] sm:$0xff]
    %v1050 = vld [vmem:[#allocation10 + $0x288] sm:$0xff]
    %v1051 = vld [vmem:[#allocation10 + $0x290] sm:$0xff]
    %v1052 = vld [vmem:[#allocation10 + $0x298] sm:$0xff]
    %v1053 = vld [vmem:[#allocation10 + $0x2a0] sm:$0xff]
    %v1054 = vld [vmem:[#allocation10 + $0x2a8] sm:$0xff]
    %v1055 = vld [vmem:[#allocation10 + $0x2b0] sm:$0xff]
    %v1056 = vld [vmem:[#allocation10 + $0x2b8] sm:$0xff]
    %v1057 = vld [vmem:[#allocation10 + $0x2c0] sm:$0xff]
    %v1058 = vld [vmem:[#allocation10 + $0x2c8] sm:$0xff]
    %v1059 = vld [vmem:[#allocation10 + $0x2d0] sm:$0xff]
    %v1060 = vld [vmem:[#allocation10 + $0x2d8] sm:$0xff]
    %v1061 = vld [vmem:[#allocation10 + $0x2e0] sm:$0xff]
    %v1062 = vld [vmem:[#allocation10 + $0x2e8] sm:$0xff]
    %v1063 = vld [vmem:[#allocation10 + $0x2f0] sm:$0xff]
    %v1064 = vld [vmem:[#allocation10 + $0x2f8] sm:$0xff]
    %v1065 = vld [vmem:[#allocation10 + $0x300] sm:$0xff]
    %v1066 = vld [vmem:[#allocation10 + $0x308] sm:$0xff]
    %v1067 = vld [vmem:[#allocation10 + $0x310] sm:$0xff]
    %v1068 = vld [vmem:[#allocation10 + $0x318] sm:$0xff]
    %v1069 = vld [vmem:[#allocation10 + $0x320] sm:$0xff]
    %v1070 = vld [vmem:[#allocation10 + $0x328] sm:$0xff]
    %v1071 = vld [vmem:[#allocation10 + $0x330] sm:$0xff]
    %v1072 = vld [vmem:[#allocation10 + $0x338] sm:$0xff]
    %v1073 = vld [vmem:[#allocation10 + $0x340] sm:$0xff]
    %v1074 = vld [vmem:[#allocation10 + $0x348] sm:$0xff]
    %v1075 = vld [vmem:[#allocation10 + $0x350] sm:$0xff]
    %v1076 = vld [vmem:[#allocation10 + $0x358] sm:$0xff]
    %v1077 = vld [vmem:[#allocation10 + $0x360] sm:$0xff]
    %v1078 = vld [vmem:[#allocation10 + $0x368] sm:$0xff]
    %v1079 = vld [vmem:[#allocation10 + $0x370] sm:$0xff]
    %v1080 = vld [vmem:[#allocation10 + $0x378] sm:$0xff]
    %v1081 = vld [vmem:[#allocation10 + $0x380] sm:$0xff]
    %v1082 = vld [vmem:[#allocation10 + $0x388] sm:$0xff]
    %v1083 = vld [vmem:[#allocation10 + $0x390] sm:$0xff]
    %v1084 = vld [vmem:[#allocation10 + $0x398] sm:$0xff]
    %v1085 = vld [vmem:[#allocation10 + $0x3a0] sm:$0xff]
    %v1086 = vld [vmem:[#allocation10 + $0x3a8] sm:$0xff]
    %v1087 = vld [vmem:[#allocation10 + $0x3b0] sm:$0xff]
    %v1088 = vld [vmem:[#allocation10 + $0x3b8] sm:$0xff]
    %v1089 = vld [vmem:[#allocation10 + $0x3c0] sm:$0xff]
    %v1090 = vld [vmem:[#allocation10 + $0x3c8] sm:$0xff]
    %v1091 = vld [vmem:[#allocation10 + $0x3d0] sm:$0xff]
    %v1092 = vld [vmem:[#allocation10 + $0x3d8] sm:$0xff]
    %v1093 = vld [vmem:[#allocation10 + $0x3e0] sm:$0xff]
    %v1094 = vld [vmem:[#allocation10 + $0x3e8] sm:$0xff]
    %v1095 = vld [vmem:[#allocation10 + $0x3f0] sm:$0xff]
    %v1096 = vld [vmem:[#allocation10 + $0x3f8] sm:$0xff]
    %v1097 = vld [vmem:[#allocation10 + $0x400] sm:$0xff]
    %v1098 = vld [vmem:[#allocation10 + $0x408] sm:$0xff]
    %v1099 = vld [vmem:[#allocation10 + $0x410] sm:$0xff]
    %v1100 = vld [vmem:[#allocation10 + $0x418] sm:$0xff]
    %v1101 = vld [vmem:[#allocation10 + $0x420] sm:$0xff]
    %v1102 = vld [vmem:[#allocation10 + $0x428] sm:$0xff]
    %v1103 = vld [vmem:[#allocation10 + $0x430] sm:$0xff]
    %v1104 = vld [vmem:[#allocation10 + $0x438] sm:$0xff]
    %v1105 = vld [vmem:[#allocation10 + $0x440] sm:$0xff]
    %v1106 = vld [vmem:[#allocation10 + $0x448] sm:$0xff]
    %v1107 = vld [vmem:[#allocation10 + $0x450] sm:$0xff]
    %v1108 = vld [vmem:[#allocation10 + $0x458] sm:$0xff]
    %v1109 = vld [vmem:[#allocation10 + $0x460] sm:$0xff]
    %v1110 = vld [vmem:[#allocation10 + $0x468] sm:$0xff]
    %v1111 = vld [vmem:[#allocation10 + $0x470] sm:$0xff]
    %v1112 = vld [vmem:[#allocation10 + $0x478] sm:$0xff]
    %v1113 = vld [vmem:[#allocation10 + $0x480] sm:$0xff]
    %v1114 = vld [vmem:[#allocation10 + $0x488] sm:$0xff]
    %v1115 = vld [vmem:[#allocation10 + $0x490] sm:$0xff]
    %v1116 = vld [vmem:[#allocation10 + $0x498] sm:$0xff]
    %v1117 = vld [vmem:[#allocation10 + $0x4a0] sm:$0xff]
    %v1118 = vld [vmem:[#allocation10 + $0x4a8] sm:$0xff]
    %v1119 = vld [vmem:[#allocation10 + $0x4b0] sm:$0xff]
    %v1120 = vld [vmem:[#allocation10 + $0x4b8] sm:$0xff]
    %v1121 = vld [vmem:[#allocation10 + $0x4c0] sm:$0xff]
    %v1122 = vld [vmem:[#allocation10 + $0x4c8] sm:$0xff]
    %v1123 = vld [vmem:[#allocation10 + $0x4d0] sm:$0xff]
    %v1124 = vld [vmem:[#allocation10 + $0x4d8] sm:$0xff]
    %v1125 = vld [vmem:[#allocation10 + $0x4e0] sm:$0xff]
    %v1126 = vld [vmem:[#allocation10 + $0x4e8] sm:$0xff]
    %v1127 = vld [vmem:[#allocation10 + $0x4f0] sm:$0xff]
    %v1128 = vld [vmem:[#allocation10 + $0x4f8] sm:$0xff]
    %v1129 = vld [vmem:[#allocation10 + $0x500] sm:$0xff]
    %v1130 = vld [vmem:[#allocation10 + $0x508] sm:$0xff]
    %v1131 = vld [vmem:[#allocation10 + $0x510] sm:$0xff]
    %v1132 = vld [vmem:[#allocation10 + $0x518] sm:$0xff]
    %v1133 = vld [vmem:[#allocation10 + $0x520] sm:$0xff]
    %v1134 = vld [vmem:[#allocation10 + $0x528] sm:$0xff]
    %v1135 = vld [vmem:[#allocation10 + $0x530] sm:$0xff]
    %v1136 = vld [vmem:[#allocation10 + $0x538] sm:$0xff]
    %v1137 = vld [vmem:[#allocation10 + $0x540] sm:$0xff]
    %v1138 = vld [vmem:[#allocation10 + $0x548] sm:$0xff]
    %v1139 = vld [vmem:[#allocation10 + $0x550] sm:$0xff]
    %v1140 = vld [vmem:[#allocation10 + $0x558] sm:$0xff]
    %v1141 = vld [vmem:[#allocation10 + $0x560] sm:$0xff]
    %v1142 = vld [vmem:[#allocation10 + $0x568] sm:$0xff]
    %v1143 = vld [vmem:[#allocation10 + $0x570] sm:$0xff]
    %v1144 = vld [vmem:[#allocation10 + $0x578] sm:$0xff]
    %v1145 = vld [vmem:[#allocation10 + $0x580] sm:$0xff]
    %v1146 = vld [vmem:[#allocation10 + $0x588] sm:$0xff]
    %v1147 = vld [vmem:[#allocation10 + $0x590] sm:$0xff]
    %v1148 = vld [vmem:[#allocation10 + $0x598] sm:$0xff]
    %v1149 = vld [vmem:[#allocation10 + $0x5a0] sm:$0xff]
    %v1150 = vld [vmem:[#allocation10 + $0x5a8] sm:$0xff]
    %v1151 = vld [vmem:[#allocation10 + $0x5b0] sm:$0xff]
    %v1152 = vld [vmem:[#allocation10 + $0x5b8] sm:$0xff]
    %v1153 = vld [vmem:[#allocation10 + $0x5c0] sm:$0xff]
    %v1154 = vld [vmem:[#allocation10 + $0x5c8] sm:$0xff]
    %v1155 = vld [vmem:[#allocation10 + $0x5d0] sm:$0xff]
    %v1156 = vld [vmem:[#allocation10 + $0x5d8] sm:$0xff]
    %v1157 = vld [vmem:[#allocation10 + $0x5e0] sm:$0xff]
    %v1158 = vld [vmem:[#allocation10 + $0x5e8] sm:$0xff]
    %v1159 = vld [vmem:[#allocation10 + $0x5f0] sm:$0xff]
    %v1160 = vld [vmem:[#allocation10 + $0x5f8] sm:$0xff]
    %v1161 = vld [vmem:[#allocation10 + $0x600] sm:$0xff]
    %v1162 = vld [vmem:[#allocation10 + $0x608] sm:$0xff]
    %v1163 = vld [vmem:[#allocation10 + $0x610] sm:$0xff]
    %v1164 = vld [vmem:[#allocation10 + $0x618] sm:$0xff]
    %v1165 = vld [vmem:[#allocation10 + $0x620] sm:$0xff]
    %v1166 = vld [vmem:[#allocation10 + $0x628] sm:$0xff]
    %v1167 = vld [vmem:[#allocation10 + $0x630] sm:$0xff]
    %v1168 = vld [vmem:[#allocation10 + $0x638] sm:$0xff]
    %v1169 = vld [vmem:[#allocation10 + $0x640] sm:$0xff]
    %v1170 = vld [vmem:[#allocation10 + $0x648] sm:$0xff]
    %v1171 = vld [vmem:[#allocation10 + $0x650] sm:$0xff]
    %v1172 = vld [vmem:[#allocation10 + $0x658] sm:$0xff]
    %v1173 = vld [vmem:[#allocation10 + $0x660] sm:$0xff]
    %v1174 = vld [vmem:[#allocation10 + $0x668] sm:$0xff]
    %v1175 = vld [vmem:[#allocation10 + $0x670] sm:$0xff]
    %v1176 = vld [vmem:[#allocation10 + $0x678] sm:$0xff]
    %v1177 = vld [vmem:[#allocation10 + $0x680] sm:$0xff]
    %v1178 = vld [vmem:[#allocation10 + $0x688] sm:$0xff]
    %v1179 = vld [vmem:[#allocation10 + $0x690] sm:$0xff]
    %v1180 = vld [vmem:[#allocation10 + $0x698] sm:$0xff]
    %v1181 = vld [vmem:[#allocation10 + $0x6a0] sm:$0xff]
    %v1182 = vld [vmem:[#allocation10 + $0x6a8] sm:$0xff]
    %v1183 = vld [vmem:[#allocation10 + $0x6b0] sm:$0xff]
    %v1184 = vld [vmem:[#allocation10 + $0x6b8] sm:$0xff]
    %v1185 = vld [vmem:[#allocation10 + $0x6c0] sm:$0xff]
    %v1186 = vld [vmem:[#allocation10 + $0x6c8] sm:$0xff]
    %v1187 = vld [vmem:[#allocation10 + $0x6d0] sm:$0xff]
    %v1188 = vld [vmem:[#allocation10 + $0x6d8] sm:$0xff]
    %v1189 = vld [vmem:[#allocation10 + $0x6e0] sm:$0xff]
    %v1190 = vld [vmem:[#allocation10 + $0x6e8] sm:$0xff]
    %v1191 = vld [vmem:[#allocation10 + $0x6f0] sm:$0xff]
    %v1192 = vld [vmem:[#allocation10 + $0x6f8] sm:$0xff]
    %v1193 = vld [vmem:[#allocation10 + $0x700] sm:$0xff]
    %v1194 = vld [vmem:[#allocation10 + $0x708] sm:$0xff]
    %v1195 = vld [vmem:[#allocation10 + $0x710] sm:$0xff]
    %v1196 = vld [vmem:[#allocation10 + $0x718] sm:$0xff]
    %v1197 = vld [vmem:[#allocation10 + $0x720] sm:$0xff]
    %v1198 = vld [vmem:[#allocation10 + $0x728] sm:$0xff]
    %v1199 = vld [vmem:[#allocation10 + $0x730] sm:$0xff]
    %v1200 = vld [vmem:[#allocation10 + $0x738] sm:$0xff]
    %v1201 = vld [vmem:[#allocation10 + $0x740] sm:$0xff]
    %v1202 = vld [vmem:[#allocation10 + $0x748] sm:$0xff]
    %v1203 = vld [vmem:[#allocation10 + $0x750] sm:$0xff]
    %v1204 = vld [vmem:[#allocation10 + $0x758] sm:$0xff]
    %v1205 = vld [vmem:[#allocation10 + $0x760] sm:$0xff]
    %v1206 = vld [vmem:[#allocation10 + $0x768] sm:$0xff]
    %v1207 = vld [vmem:[#allocation10 + $0x770] sm:$0xff]
    %v1208 = vld [vmem:[#allocation10 + $0x778] sm:$0xff]
    %v1209 = vld [vmem:[#allocation10 + $0x780] sm:$0xff]
    %v1210 = vld [vmem:[#allocation10 + $0x788] sm:$0xff]
    %v1211 = vld [vmem:[#allocation10 + $0x790] sm:$0xff]
    %v1212 = vld [vmem:[#allocation10 + $0x798] sm:$0xff]
    %v1213 = vld [vmem:[#allocation10 + $0x7a0] sm:$0xff]
    %v1214 = vld [vmem:[#allocation10 + $0x7a8] sm:$0xff]
    %v1215 = vld [vmem:[#allocation10 + $0x7b0] sm:$0xff]
    %v1216 = vld [vmem:[#allocation10 + $0x7b8] sm:$0xff]
    %v1217 = vld [vmem:[#allocation10 + $0x7c0] sm:$0xff]
    %v1218 = vld [vmem:[#allocation10 + $0x7c8] sm:$0xff]
    %v1219 = vld [vmem:[#allocation10 + $0x7d0] sm:$0xff]
    %v1220 = vld [vmem:[#allocation10 + $0x7d8] sm:$0xff]
    %v1221 = vld [vmem:[#allocation10 + $0x7e0] sm:$0xff]
    %v1222 = vld [vmem:[#allocation10 + $0x7e8] sm:$0xff]
    %v1223 = vld [vmem:[#allocation10 + $0x7f0] sm:$0xff]
    %v1224 = vld [vmem:[#allocation10 + $0x7f8] sm:$0xff]
    %v1225 = vld [vmem:[#allocation10 + $0x800] sm:$0xff]
    %v1226 = vld [vmem:[#allocation10 + $0x808] sm:$0xff]
    %v1227 = vld [vmem:[#allocation10 + $0x810] sm:$0xff]
    %v1228 = vld [vmem:[#allocation10 + $0x818] sm:$0xff]
    %v1229 = vld [vmem:[#allocation10 + $0x820] sm:$0xff]
    %v1230 = vld [vmem:[#allocation10 + $0x828] sm:$0xff]
    %v1231 = vld [vmem:[#allocation10 + $0x830] sm:$0xff]
    %v1232 = vld [vmem:[#allocation10 + $0x838] sm:$0xff]
    %v1233 = vld [vmem:[#allocation10 + $0x840] sm:$0xff]
    %v1234 = vld [vmem:[#allocation10 + $0x848] sm:$0xff]
    %v1235 = vld [vmem:[#allocation10 + $0x850] sm:$0xff]
    %v1236 = vld [vmem:[#allocation10 + $0x858] sm:$0xff]
    %v1237 = vld [vmem:[#allocation10 + $0x860] sm:$0xff]
    %v1238 = vld [vmem:[#allocation10 + $0x868] sm:$0xff]
    %v1239 = vld [vmem:[#allocation10 + $0x870] sm:$0xff]
    %v1240 = vld [vmem:[#allocation10 + $0x878] sm:$0xff]
    %v1241 = vld [vmem:[#allocation10 + $0x880] sm:$0xff]
    %v1242 = vld [vmem:[#allocation10 + $0x888] sm:$0xff]
    %v1243 = vld [vmem:[#allocation10 + $0x890] sm:$0xff]
    %v1244 = vld [vmem:[#allocation10 + $0x898] sm:$0xff]
    %v1245 = vld [vmem:[#allocation10 + $0x8a0] sm:$0xff]
    %v1246 = vld [vmem:[#allocation10 + $0x8a8] sm:$0xff]
    %v1247 = vld [vmem:[#allocation10 + $0x8b0] sm:$0xff]
    %v1248 = vld [vmem:[#allocation10 + $0x8b8] sm:$0xff]
    %v1249 = vld [vmem:[#allocation10 + $0x8c0] sm:$0xff]
    %v1250 = vld [vmem:[#allocation10 + $0x8c8] sm:$0xff]
    %v1251 = vld [vmem:[#allocation10 + $0x8d0] sm:$0xff]
    %v1252 = vld [vmem:[#allocation10 + $0x8d8] sm:$0xff]
    %v1253 = vld [vmem:[#allocation10 + $0x8e0] sm:$0xff]
    %v1254 = vld [vmem:[#allocation10 + $0x8e8] sm:$0xff]
    %v1255 = vld [vmem:[#allocation10 + $0x8f0] sm:$0xff]
    %v1256 = vld [vmem:[#allocation10 + $0x8f8] sm:$0xff]
    %v1257 = vld [vmem:[#allocation10 + $0x900] sm:$0xff]
    %v1258 = vld [vmem:[#allocation10 + $0x908] sm:$0xff]
    %v1259 = vld [vmem:[#allocation10 + $0x910] sm:$0xff]
    %v1260 = vld [vmem:[#allocation10 + $0x918] sm:$0xff]
    %v1261 = vld [vmem:[#allocation10 + $0x920] sm:$0xff]
    %v1262 = vld [vmem:[#allocation10 + $0x928] sm:$0xff]
    %v1263 = vld [vmem:[#allocation10 + $0x930] sm:$0xff]
    %v1264 = vld [vmem:[#allocation10 + $0x938] sm:$0xff]
    %v1265 = vld [vmem:[#allocation10 + $0x940] sm:$0xff]
    %v1266 = vld [vmem:[#allocation10 + $0x948] sm:$0xff]
    %v1267 = vld [vmem:[#allocation10 + $0x950] sm:$0xff]
    %v1268 = vld [vmem:[#allocation10 + $0x958] sm:$0xff]
    %v1269 = vld [vmem:[#allocation10 + $0x960] sm:$0xff]
    %v1270 = vld [vmem:[#allocation10 + $0x968] sm:$0xff]
    %v1271 = vld [vmem:[#allocation10 + $0x970] sm:$0xff]
    %v1272 = vld [vmem:[#allocation10 + $0x978] sm:$0xff]
    %v1273 = vld [vmem:[#allocation10 + $0x980] sm:$0xff]
    %v1274 = vld [vmem:[#allocation10 + $0x988] sm:$0xff]
    %v1275 = vld [vmem:[#allocation10 + $0x990] sm:$0xff]
    %v1276 = vld [vmem:[#allocation10 + $0x998] sm:$0xff]
    %v1277 = vld [vmem:[#allocation10 + $0x9a0] sm:$0xff]
    %v1278 = vld [vmem:[#allocation10 + $0x9a8] sm:$0xff]
    %v1279 = vld [vmem:[#allocation10 + $0x9b0] sm:$0xff]
    %v1280 = vld [vmem:[#allocation10 + $0x9b8] sm:$0xff]
    %v1281 = vld [vmem:[#allocation10 + $0x9c0] sm:$0xff]
    %v1282 = vld [vmem:[#allocation10 + $0x9c8] sm:$0xff]
    %v1283 = vld [vmem:[#allocation10 + $0x9d0] sm:$0xff]
    %v1284 = vld [vmem:[#allocation10 + $0x9d8] sm:$0xff]
    %v1285 = vld [vmem:[#allocation10 + $0x9e0] sm:$0xff]
    %v1286 = vld [vmem:[#allocation10 + $0x9e8] sm:$0xff]
    %v1287 = vld [vmem:[#allocation10 + $0x9f0] sm:$0xff]
    %v1288 = vld [vmem:[#allocation10 + $0x9f8] sm:$0xff]
    %v1289 = vld [vmem:[#allocation10 + $0xa00] sm:$0xff]
    %v1290 = vld [vmem:[#allocation10 + $0xa08] sm:$0xff]
    %v1291 = vld [vmem:[#allocation10 + $0xa10] sm:$0xff]
    %v1292 = vld [vmem:[#allocation10 + $0xa18] sm:$0xff]
    %v1293 = vld [vmem:[#allocation10 + $0xa20] sm:$0xff]
    %v1294 = vld [vmem:[#allocation10 + $0xa28] sm:$0xff]
    %v1295 = vld [vmem:[#allocation10 + $0xa30] sm:$0xff]
    %v1296 = vld [vmem:[#allocation10 + $0xa38] sm:$0xff]
    %v1297 = vld [vmem:[#allocation10 + $0xa40] sm:$0xff]
    %v1298 = vld [vmem:[#allocation10 + $0xa48] sm:$0xff]
    %v1299 = vld [vmem:[#allocation10 + $0xa50] sm:$0xff]
    %v1300 = vld [vmem:[#allocation10 + $0xa58] sm:$0xff]
    %v1301 = vld [vmem:[#allocation10 + $0xa60] sm:$0xff]
    %v1302 = vld [vmem:[#allocation10 + $0xa68] sm:$0xff]
    %v1303 = vld [vmem:[#allocation10 + $0xa70] sm:$0xff]
    %v1304 = vld [vmem:[#allocation10 + $0xa78] sm:$0xff]
    %v1305 = vld [vmem:[#allocation10 + $0xa80] sm:$0xff]
    %v1306 = vld [vmem:[#allocation10 + $0xa88] sm:$0xff]
    %v1307 = vld [vmem:[#allocation10 + $0xa90] sm:$0xff]
    %v1308 = vld [vmem:[#allocation10 + $0xa98] sm:$0xff]
    %v1309 = vld [vmem:[#allocation10 + $0xaa0] sm:$0xff]
    %v1310 = vld [vmem:[#allocation10 + $0xaa8] sm:$0xff]
    %v1311 = vld [vmem:[#allocation10 + $0xab0] sm:$0xff]
    %v1312 = vld [vmem:[#allocation10 + $0xab8] sm:$0xff]
    %v1313 = vld [vmem:[#allocation10 + $0xac0] sm:$0xff]
    %v1314 = vld [vmem:[#allocation10 + $0xac8] sm:$0xff]
    %v1315 = vld [vmem:[#allocation10 + $0xad0] sm:$0xff]
    %v1316 = vld [vmem:[#allocation10 + $0xad8] sm:$0xff]
    %v1317 = vld [vmem:[#allocation10 + $0xae0] sm:$0xff]
    %v1318 = vld [vmem:[#allocation10 + $0xae8] sm:$0xff]
    %v1319 = vld [vmem:[#allocation10 + $0xaf0] sm:$0xff]
    %v1320 = vld [vmem:[#allocation10 + $0xaf8] sm:$0xff]
    %v1321 = vld [vmem:[#allocation10 + $0xb00] sm:$0xff]
    %v1322 = vld [vmem:[#allocation10 + $0xb08] sm:$0xff]
    %v1323 = vld [vmem:[#allocation10 + $0xb10] sm:$0xff]
    %v1324 = vld [vmem:[#allocation10 + $0xb18] sm:$0xff]
    %v1325 = vld [vmem:[#allocation10 + $0xb20] sm:$0xff]
    %v1326 = vld [vmem:[#allocation10 + $0xb28] sm:$0xff]
    %v1327 = vld [vmem:[#allocation10 + $0xb30] sm:$0xff]
    %v1328 = vld [vmem:[#allocation10 + $0xb38] sm:$0xff]
    %v1329 = vld [vmem:[#allocation10 + $0xb40] sm:$0xff]
    %v1330 = vld [vmem:[#allocation10 + $0xb48] sm:$0xff]
    %v1331 = vld [vmem:[#allocation10 + $0xb50] sm:$0xff]
    %v1332 = vld [vmem:[#allocation10 + $0xb58] sm:$0xff]
    %v1333 = vld [vmem:[#allocation10 + $0xb60] sm:$0xff]
    %v1334 = vld [vmem:[#allocation10 + $0xb68] sm:$0xff]
    %v1335 = vld [vmem:[#allocation10 + $0xb70] sm:$0xff]
    %v1336 = vld [vmem:[#allocation10 + $0xb78] sm:$0xff]
    %v1337 = vld [vmem:[#allocation10 + $0xb80] sm:$0xff]
    %v1338 = vld [vmem:[#allocation10 + $0xb88] sm:$0xff]
    %v1339 = vld [vmem:[#allocation10 + $0xb90] sm:$0xff]
    %v1340 = vld [vmem:[#allocation10 + $0xb98] sm:$0xff]
    %v1341 = vld [vmem:[#allocation10 + $0xba0] sm:$0xff]
    %v1342 = vld [vmem:[#allocation10 + $0xba8] sm:$0xff]
    %v1343 = vld [vmem:[#allocation10 + $0xbb0] sm:$0xff]
    %v1344 = vld [vmem:[#allocation10 + $0xbb8] sm:$0xff]
    %v1345 = vld [vmem:[#allocation10 + $0xbc0] sm:$0xff]
    %v1346 = vld [vmem:[#allocation10 + $0xbc8] sm:$0xff]
    %v1347 = vld [vmem:[#allocation10 + $0xbd0] sm:$0xff]
    %v1348 = vld [vmem:[#allocation10 + $0xbd8] sm:$0xff]
    %v1349 = vld [vmem:[#allocation10 + $0xbe0] sm:$0xff]
    %v1350 = vld [vmem:[#allocation10 + $0xbe8] sm:$0xff]
    %v1351 = vld [vmem:[#allocation10 + $0xbf0] sm:$0xff]
    %v1352 = vld [vmem:[#allocation10 + $0xbf8] sm:$0xff]
    %v1353 = vld [vmem:[#allocation10 + $0xc00] sm:$0xff]
    %v1354 = vld [vmem:[#allocation10 + $0xc08] sm:$0xff]
    %v1355 = vld [vmem:[#allocation10 + $0xc10] sm:$0xff]
    %v1356 = vld [vmem:[#allocation10 + $0xc18] sm:$0xff]
    %v1357 = vld [vmem:[#allocation10 + $0xc20] sm:$0xff]
    %v1358 = vld [vmem:[#allocation10 + $0xc28] sm:$0xff]
    %v1359 = vld [vmem:[#allocation10 + $0xc30] sm:$0xff]
    %v1360 = vld [vmem:[#allocation10 + $0xc38] sm:$0xff]
    %v1361 = vld [vmem:[#allocation10 + $0xc40] sm:$0xff]
    %v1362 = vld [vmem:[#allocation10 + $0xc48] sm:$0xff]
    %v1363 = vld [vmem:[#allocation10 + $0xc50] sm:$0xff]
    %v1364 = vld [vmem:[#allocation10 + $0xc58] sm:$0xff]
    %v1365 = vld [vmem:[#allocation10 + $0xc60] sm:$0xff]
    %v1366 = vld [vmem:[#allocation10 + $0xc68] sm:$0xff]
    %v1367 = vld [vmem:[#allocation10 + $0xc70] sm:$0xff]
    %v1368 = vld [vmem:[#allocation10 + $0xc78] sm:$0xff]
    %v1369 = vld [vmem:[#allocation10 + $0xc80] sm:$0xff]
    %v1370 = vld [vmem:[#allocation10 + $0xc88] sm:$0xff]
    %v1371 = vld [vmem:[#allocation10 + $0xc90] sm:$0xff]
    %v1372 = vld [vmem:[#allocation10 + $0xc98] sm:$0xff]
    %v1373 = vld [vmem:[#allocation10 + $0xca0] sm:$0xff]
    %v1374 = vld [vmem:[#allocation10 + $0xca8] sm:$0xff]
    %v1375 = vld [vmem:[#allocation10 + $0xcb0] sm:$0xff]
    %v1376 = vld [vmem:[#allocation10 + $0xcb8] sm:$0xff]
    %v1377 = vld [vmem:[#allocation10 + $0xcc0] sm:$0xff]
    %v1378 = vld [vmem:[#allocation10 + $0xcc8] sm:$0xff]
    %v1379 = vld [vmem:[#allocation10 + $0xcd0] sm:$0xff]
    %v1380 = vld [vmem:[#allocation10 + $0xcd8] sm:$0xff]
    %v1381 = vld [vmem:[#allocation10 + $0xce0] sm:$0xff]
    %v1382 = vld [vmem:[#allocation10 + $0xce8] sm:$0xff]
    %v1383 = vld [vmem:[#allocation10 + $0xcf0] sm:$0xff]
    %v1384 = vld [vmem:[#allocation10 + $0xcf8] sm:$0xff]
    %v1385 = vld [vmem:[#allocation10 + $0xd00] sm:$0xff]
    %v1386 = vld [vmem:[#allocation10 + $0xd08] sm:$0xff]
    %v1387 = vld [vmem:[#allocation10 + $0xd10] sm:$0xff]
    %v1388 = vld [vmem:[#allocation10 + $0xd18] sm:$0xff]
    %v1389 = vld [vmem:[#allocation10 + $0xd20] sm:$0xff]
    %v1390 = vld [vmem:[#allocation10 + $0xd28] sm:$0xff]
    %v1391 = vld [vmem:[#allocation10 + $0xd30] sm:$0xff]
    %v1392 = vld [vmem:[#allocation10 + $0xd38] sm:$0xff]
    %v1393 = vld [vmem:[#allocation10 + $0xd40] sm:$0xff]
    %v1394 = vld [vmem:[#allocation10 + $0xd48] sm:$0xff]
    %v1395 = vld [vmem:[#allocation10 + $0xd50] sm:$0xff]
    %v1396 = vld [vmem:[#allocation10 + $0xd58] sm:$0xff]
    %v1397 = vld [vmem:[#allocation10 + $0xd60] sm:$0xff]
    %v1398 = vld [vmem:[#allocation10 + $0xd68] sm:$0xff]
    %v1399 = vld [vmem:[#allocation10 + $0xd70] sm:$0xff]
    %v1400 = vld [vmem:[#allocation10 + $0xd78] sm:$0xff]
    %v1401 = vld [vmem:[#allocation10 + $0xd80] sm:$0xff]
    %v1402 = vld [vmem:[#allocation10 + $0xd88] sm:$0xff]
    %v1403 = vld [vmem:[#allocation10 + $0xd90] sm:$0xff]
    %v1404 = vld [vmem:[#allocation10 + $0xd98] sm:$0xff]
    %v1405 = vld [vmem:[#allocation10 + $0xda0] sm:$0xff]
    %v1406 = vld [vmem:[#allocation10 + $0xda8] sm:$0xff]
    %v1407 = vld [vmem:[#allocation10 + $0xdb0] sm:$0xff]
    %v1408 = vld [vmem:[#allocation10 + $0xdb8] sm:$0xff]
    %v1409 = vld [vmem:[#allocation10 + $0xdc0] sm:$0xff]
    %v1410 = vld [vmem:[#allocation10 + $0xdc8] sm:$0xff]
    %v1411 = vld [vmem:[#allocation10 + $0xdd0] sm:$0xff]
    %v1412 = vld [vmem:[#allocation10 + $0xdd8] sm:$0xff]
    %v1413 = vld [vmem:[#allocation10 + $0xde0] sm:$0xff]
    %v1414 = vld [vmem:[#allocation10 + $0xde8] sm:$0xff]
    %v1415 = vld [vmem:[#allocation10 + $0xdf0] sm:$0xff]
    %v1416 = vld [vmem:[#allocation10 + $0xdf8] sm:$0xff]
    %v1417 = vld [vmem:[#allocation10 + $0xe00] sm:$0xff]
    %v1418 = vld [vmem:[#allocation10 + $0xe08] sm:$0xff]
    %v1419 = vld [vmem:[#allocation10 + $0xe10] sm:$0xff]
    %v1420 = vld [vmem:[#allocation10 + $0xe18] sm:$0xff]
    %v1421 = vld [vmem:[#allocation10 + $0xe20] sm:$0xff]
    %v1422 = vld [vmem:[#allocation10 + $0xe28] sm:$0xff]
    %v1423 = vld [vmem:[#allocation10 + $0xe30] sm:$0xff]
    %v1424 = vld [vmem:[#allocation10 + $0xe38] sm:$0xff]
    %v1425 = vld [vmem:[#allocation10 + $0xe40] sm:$0xff]
    %v1426 = vld [vmem:[#allocation10 + $0xe48] sm:$0xff]
    %v1427 = vld [vmem:[#allocation10 + $0xe50] sm:$0xff]
    %v1428 = vld [vmem:[#allocation10 + $0xe58] sm:$0xff]
    %v1429 = vld [vmem:[#allocation10 + $0xe60] sm:$0xff]
    %v1430 = vld [vmem:[#allocation10 + $0xe68] sm:$0xff]
    %v1431 = vld [vmem:[#allocation10 + $0xe70] sm:$0xff]
    %v1432 = vld [vmem:[#allocation10 + $0xe78] sm:$0xff]
    %v1433 = vld [vmem:[#allocation10 + $0xe80] sm:$0xff]
    %v1434 = vld [vmem:[#allocation10 + $0xe88] sm:$0xff]
    %v1435 = vld [vmem:[#allocation10 + $0xe90] sm:$0xff]
    %v1436 = vld [vmem:[#allocation10 + $0xe98] sm:$0xff]
    %v1437 = vld [vmem:[#allocation10 + $0xea0] sm:$0xff]
    %v1438 = vld [vmem:[#allocation10 + $0xea8] sm:$0xff]
    %v1439 = vld [vmem:[#allocation10 + $0xeb0] sm:$0xff]
    %v1440 = vld [vmem:[#allocation10 + $0xeb8] sm:$0xff]
    %v1441 = vld [vmem:[#allocation10 + $0xec0] sm:$0xff]
    %v1442 = vld [vmem:[#allocation10 + $0xec8] sm:$0xff]
    %v1443 = vld [vmem:[#allocation10 + $0xed0] sm:$0xff]
    %v1444 = vld [vmem:[#allocation10 + $0xed8] sm:$0xff]
    %v1445 = vld [vmem:[#allocation10 + $0xee0] sm:$0xff]
    %v1446 = vld [vmem:[#allocation10 + $0xee8] sm:$0xff]
    %v1447 = vld [vmem:[#allocation10 + $0xef0] sm:$0xff]
    %v1448 = vld [vmem:[#allocation10 + $0xef8] sm:$0xff]
    %v1449 = vld [vmem:[#allocation10 + $0xf00] sm:$0xff]
    %v1450 = vld [vmem:[#allocation10 + $0xf08] sm:$0xff]
    %v1451 = vld [vmem:[#allocation10 + $0xf10] sm:$0xff]
    %v1452 = vld [vmem:[#allocation10 + $0xf18] sm:$0xff]
    %v1453 = vld [vmem:[#allocation10 + $0xf20] sm:$0xff]
    %v1454 = vld [vmem:[#allocation10 + $0xf28] sm:$0xff]
    %v1455 = vld [vmem:[#allocation10 + $0xf30] sm:$0xff]
    %v1456 = vld [vmem:[#allocation10 + $0xf38] sm:$0xff]
    %v1457 = vld [vmem:[#allocation10 + $0xf40] sm:$0xff]
    %v1458 = vld [vmem:[#allocation10 + $0xf48] sm:$0xff]
    %v1459 = vld [vmem:[#allocation10 + $0xf50] sm:$0xff]
    %v1460 = vld [vmem:[#allocation10 + $0xf58] sm:$0xff]
    %v1461 = vld [vmem:[#allocation10 + $0xf60] sm:$0xff]
    %v1462 = vld [vmem:[#allocation10 + $0xf68] sm:$0xff]
    %v1463 = vld [vmem:[#allocation10 + $0xf70] sm:$0xff]
    %v1464 = vld [vmem:[#allocation10 + $0xf78] sm:$0xff]
    %v1465 = vld [vmem:[#allocation10 + $0xf80] sm:$0xff]
    %v1466 = vld [vmem:[#allocation10 + $0xf88] sm:$0xff]
    %v1467 = vld [vmem:[#allocation10 + $0xf90] sm:$0xff]
    %v1468 = vld [vmem:[#allocation10 + $0xf98] sm:$0xff]
    %v1469 = vld [vmem:[#allocation10 + $0xfa0] sm:$0xff]
    %v1470 = vld [vmem:[#allocation10 + $0xfa8] sm:$0xff]
    %v1471 = vld [vmem:[#allocation10 + $0xfb0] sm:$0xff]
    %v1472 = vld [vmem:[#allocation10 + $0xfb8] sm:$0xff]
    %v1473 = vld [vmem:[#allocation10 + $0xfc0] sm:$0xff]
    %v1474 = vld [vmem:[#allocation10 + $0xfc8] sm:$0xff]
    %v1475 = vld [vmem:[#allocation10 + $0xfd0] sm:$0xff]
    %v1476 = vld [vmem:[#allocation10 + $0xfd8] sm:$0xff]
    %v1477 = vld [vmem:[#allocation10 + $0xfe0] sm:$0xff]
    %v1478 = vld [vmem:[#allocation10 + $0xfe8] sm:$0xff]
    %v1479 = vld [vmem:[#allocation10 + $0xff0] sm:$0xff]
    %v1480 = vld [vmem:[#allocation10 + $0xff8] sm:$0xff]
    %v1481 = vld [vmem:[#allocation10 + $0x1000] sm:$0xff]
    %v1482 = vld [vmem:[#allocation10 + $0x1008] sm:$0xff]
    %v1483 = vld [vmem:[#allocation10 + $0x1010] sm:$0xff]
    %v1484 = vld [vmem:[#allocation10 + $0x1018] sm:$0xff]
    %v1485 = vld [vmem:[#allocation10 + $0x1020] sm:$0xff]
    %v1486 = vld [vmem:[#allocation10 + $0x1028] sm:$0xff]
    %v1487 = vld [vmem:[#allocation10 + $0x1030] sm:$0xff]
    %v1488 = vld [vmem:[#allocation10 + $0x1038] sm:$0xff]
    %v1489 = vld [vmem:[#allocation10 + $0x1040] sm:$0xff]
    %v1490 = vld [vmem:[#allocation10 + $0x1048] sm:$0xff]
    %v1491 = vld [vmem:[#allocation10 + $0x1050] sm:$0xff]
    %v1492 = vld [vmem:[#allocation10 + $0x1058] sm:$0xff]
    %v1493 = vld [vmem:[#allocation10 + $0x1060] sm:$0xff]
    %v1494 = vld [vmem:[#allocation10 + $0x1068] sm:$0xff]
    %v1495 = vld [vmem:[#allocation10 + $0x1070] sm:$0xff]
    %v1496 = vld [vmem:[#allocation10 + $0x1078] sm:$0xff]
    %v1497 = vld [vmem:[#allocation10 + $0x1080] sm:$0xff]
    %v1498 = vld [vmem:[#allocation10 + $0x1088] sm:$0xff]
    %v1499 = vld [vmem:[#allocation10 + $0x1090] sm:$0xff]
    %v1500 = vld [vmem:[#allocation10 + $0x1098] sm:$0xff]
    %v1501 = vld [vmem:[#allocation10 + $0x10a0] sm:$0xff]
    %v1502 = vld [vmem:[#allocation10 + $0x10a8] sm:$0xff]
    %v1503 = vld [vmem:[#allocation10 + $0x10b0] sm:$0xff]
    %v1504 = vld [vmem:[#allocation10 + $0x10b8] sm:$0xff]
    %v1505 = vld [vmem:[#allocation10 + $0x10c0] sm:$0xff]
    %v1506 = vld [vmem:[#allocation10 + $0x10c8] sm:$0xff]
    %v1507 = vld [vmem:[#allocation10 + $0x10d0] sm:$0xff]
    %v1508 = vld [vmem:[#allocation10 + $0x10d8] sm:$0xff]
    %v1509 = vld [vmem:[#allocation10 + $0x10e0] sm:$0xff]
    %v1510 = vld [vmem:[#allocation10 + $0x10e8] sm:$0xff]
    %v1511 = vld [vmem:[#allocation10 + $0x10f0] sm:$0xff]
    %v1512 = vld [vmem:[#allocation10 + $0x10f8] sm:$0xff]
    %v1513 = vld [vmem:[#allocation10 + $0x1100] sm:$0xff]
    %v1514 = vld [vmem:[#allocation10 + $0x1108] sm:$0xff]
    %v1515 = vld [vmem:[#allocation10 + $0x1110] sm:$0xff]
    %v1516 = vld [vmem:[#allocation10 + $0x1118] sm:$0xff]
    %v1517 = vld [vmem:[#allocation10 + $0x1120] sm:$0xff]
    %v1518 = vld [vmem:[#allocation10 + $0x1128] sm:$0xff]
    %v1519 = vld [vmem:[#allocation10 + $0x1130] sm:$0xff]
    %v1520 = vld [vmem:[#allocation10 + $0x1138] sm:$0xff]
    %v1521 = vld [vmem:[#allocation10 + $0x1140] sm:$0xff]
    %v1522 = vld [vmem:[#allocation10 + $0x1148] sm:$0xff]
    %v1523 = vld [vmem:[#allocation10 + $0x1150] sm:$0xff]
    %v1524 = vld [vmem:[#allocation10 + $0x1158] sm:$0xff]
    %v1525 = vld [vmem:[#allocation10 + $0x1160] sm:$0xff]
    %v1526 = vld [vmem:[#allocation10 + $0x1168] sm:$0xff]
    %v1527 = vld [vmem:[#allocation10 + $0x1170] sm:$0xff]
    %v1528 = vld [vmem:[#allocation10 + $0x1178] sm:$0xff]
    %v1529 = vld [vmem:[#allocation10 + $0x1180] sm:$0xff]
    %v1530 = vld [vmem:[#allocation10 + $0x1188] sm:$0xff]
    %v1531 = vld [vmem:[#allocation10 + $0x1190] sm:$0xff]
    %v1532 = vld [vmem:[#allocation10 + $0x1198] sm:$0xff]
    %v1533 = vld [vmem:[#allocation10 + $0x11a0] sm:$0xff]
    %v1534 = vld [vmem:[#allocation10 + $0x11a8] sm:$0xff]
    %v1535 = vld [vmem:[#allocation10 + $0x11b0] sm:$0xff]
    %v1536 = vld [vmem:[#allocation10 + $0x11b8] sm:$0xff]
    %v1537 = vld [vmem:[#allocation10 + $0x11c0] sm:$0xff]
    %v1538 = vld [vmem:[#allocation10 + $0x11c8] sm:$0xff]
    %v1539 = vld [vmem:[#allocation10 + $0x11d0] sm:$0xff]
    %v1540 = vld [vmem:[#allocation10 + $0x11d8] sm:$0xff]
    %v1541 = vld [vmem:[#allocation10 + $0x11e0] sm:$0xff]
    %v1542 = vld [vmem:[#allocation10 + $0x11e8] sm:$0xff]
    %v1543 = vld [vmem:[#allocation10 + $0x11f0] sm:$0xff]
    %v1544 = vld [vmem:[#allocation10 + $0x11f8] sm:$0xff]
    %v1545 = vld [vmem:[#allocation10 + $0x1200] sm:$0xff]
    %v1546 = vld [vmem:[#allocation10 + $0x1208] sm:$0xff]
    %v1547 = vld [vmem:[#allocation10 + $0x1210] sm:$0xff]
    %v1548 = vld [vmem:[#allocation10 + $0x1218] sm:$0xff]
    %v1549 = vld [vmem:[#allocation10 + $0x1220] sm:$0xff]
    %v1550 = vld [vmem:[#allocation10 + $0x1228] sm:$0xff]
    %v1551 = vld [vmem:[#allocation10 + $0x1230] sm:$0xff]
    %v1552 = vld [vmem:[#allocation10 + $0x1238] sm:$0xff]
    %v1553 = vld [vmem:[#allocation10 + $0x1240] sm:$0xff]
    %v1554 = vld [vmem:[#allocation10 + $0x1248] sm:$0xff]
    %v1555 = vld [vmem:[#allocation10 + $0x1250] sm:$0xff]
    %v1556 = vld [vmem:[#allocation10 + $0x1258] sm:$0xff]
    %v1557 = vld [vmem:[#allocation10 + $0x1260] sm:$0xff]
    %v1558 = vld [vmem:[#allocation10 + $0x1268] sm:$0xff]
    %v1559 = vld [vmem:[#allocation10 + $0x1270] sm:$0xff]
    %v1560 = vld [vmem:[#allocation10 + $0x1278] sm:$0xff]
    %v1561 = vld [vmem:[#allocation10 + $0x1280] sm:$0xff]
    %v1562 = vld [vmem:[#allocation10 + $0x1288] sm:$0xff]
    %v1563 = vld [vmem:[#allocation10 + $0x1290] sm:$0xff]
    %v1564 = vld [vmem:[#allocation10 + $0x1298] sm:$0xff]
    %v1565 = vld [vmem:[#allocation10 + $0x12a0] sm:$0xff]
    %v1566 = vld [vmem:[#allocation10 + $0x12a8] sm:$0xff]
    %v1567 = vld [vmem:[#allocation10 + $0x12b0] sm:$0xff]
    %v1568 = vld [vmem:[#allocation10 + $0x12b8] sm:$0xff]
    %v1569 = vld [vmem:[#allocation10 + $0x12c0] sm:$0xff]
    %v1570 = vld [vmem:[#allocation10 + $0x12c8] sm:$0xff]
    %v1571 = vld [vmem:[#allocation10 + $0x12d0] sm:$0xff]
    %v1572 = vld [vmem:[#allocation10 + $0x12d8] sm:$0xff]
    %v1573 = vld [vmem:[#allocation10 + $0x12e0] sm:$0xff]
    %v1574 = vld [vmem:[#allocation10 + $0x12e8] sm:$0xff]
    %v1575 = vld [vmem:[#allocation10 + $0x12f0] sm:$0xff]
    %v1576 = vld [vmem:[#allocation10 + $0x12f8] sm:$0xff]
    %v1577 = vld [vmem:[#allocation10 + $0x1300] sm:$0xff]
    %v1578 = vld [vmem:[#allocation10 + $0x1308] sm:$0xff]
    %v1579 = vld [vmem:[#allocation10 + $0x1310] sm:$0xff]
    %v1580 = vld [vmem:[#allocation10 + $0x1318] sm:$0xff]
    %v1581 = vld [vmem:[#allocation10 + $0x1320] sm:$0xff]
    %v1582 = vld [vmem:[#allocation10 + $0x1328] sm:$0xff]
    %v1583 = vld [vmem:[#allocation10 + $0x1330] sm:$0xff]
    %v1584 = vld [vmem:[#allocation10 + $0x1338] sm:$0xff]
    %v1585 = vld [vmem:[#allocation10 + $0x1340] sm:$0xff]
    %v1586 = vld [vmem:[#allocation10 + $0x1348] sm:$0xff]
    %v1587 = vld [vmem:[#allocation10 + $0x1350] sm:$0xff]
    %v1588 = vld [vmem:[#allocation10 + $0x1358] sm:$0xff]
    %v1589 = vld [vmem:[#allocation10 + $0x1360] sm:$0xff]
    %v1590 = vld [vmem:[#allocation10 + $0x1368] sm:$0xff]
    %v1591 = vld [vmem:[#allocation10 + $0x1370] sm:$0xff]
    %v1592 = vld [vmem:[#allocation10 + $0x1378] sm:$0xff]
    %v1593 = vld [vmem:[#allocation10 + $0x1380] sm:$0xff]
    %v1594 = vld [vmem:[#allocation10 + $0x1388] sm:$0xff]
    %v1595 = vld [vmem:[#allocation10 + $0x1390] sm:$0xff]
    %v1596 = vld [vmem:[#allocation10 + $0x1398] sm:$0xff]
    %v1597 = vld [vmem:[#allocation10 + $0x13a0] sm:$0xff]
    %v1598 = vld [vmem:[#allocation10 + $0x13a8] sm:$0xff]
    %v1599 = vld [vmem:[#allocation10 + $0x13b0] sm:$0xff]
    %v1600 = vld [vmem:[#allocation10 + $0x13b8] sm:$0xff]
    %v1601 = vld [vmem:[#allocation10 + $0x13c0] sm:$0xff]
    %v1602 = vld [vmem:[#allocation10 + $0x13c8] sm:$0xff]
    %v1603 = vld [vmem:[#allocation10 + $0x13d0] sm:$0xff]
    %v1604 = vld [vmem:[#allocation10 + $0x13d8] sm:$0xff]
    %v1605 = vld [vmem:[#allocation10 + $0x13e0] sm:$0xff]
    %v1606 = vld [vmem:[#allocation10 + $0x13e8] sm:$0xff]
    %v1607 = vld [vmem:[#allocation10 + $0x13f0] sm:$0xff]
    %v1608 = vld [vmem:[#allocation10 + $0x13f8] sm:$0xff]
    %v1609 = vld [vmem:[#allocation10 + $0x1400] sm:$0xff]
    %v1610 = vld [vmem:[#allocation10 + $0x1408] sm:$0xff]
    %v1611 = vld [vmem:[#allocation10 + $0x1410] sm:$0xff]
    %v1612 = vld [vmem:[#allocation10 + $0x1418] sm:$0xff]
    %v1613 = vld [vmem:[#allocation10 + $0x1420] sm:$0xff]
    %v1614 = vld [vmem:[#allocation10 + $0x1428] sm:$0xff]
    %v1615 = vld [vmem:[#allocation10 + $0x1430] sm:$0xff]
    %v1616 = vld [vmem:[#allocation10 + $0x1438] sm:$0xff]
    %v1617 = vld [vmem:[#allocation10 + $0x1440] sm:$0xff]
    %v1618 = vld [vmem:[#allocation10 + $0x1448] sm:$0xff]
    %v1619 = vld [vmem:[#allocation10 + $0x1450] sm:$0xff]
    %v1620 = vld [vmem:[#allocation10 + $0x1458] sm:$0xff]
    %v1621 = vld [vmem:[#allocation10 + $0x1460] sm:$0xff]
    %v1622 = vld [vmem:[#allocation10 + $0x1468] sm:$0xff]
    %v1623 = vld [vmem:[#allocation10 + $0x1470] sm:$0xff]
    %v1624 = vld [vmem:[#allocation10 + $0x1478] sm:$0xff]
    %v1625 = vld [vmem:[#allocation10 + $0x1480] sm:$0xff]
    %v1626 = vld [vmem:[#allocation10 + $0x1488] sm:$0xff]
    %v1627 = vld [vmem:[#allocation10 + $0x1490] sm:$0xff]
    %v1628 = vld [vmem:[#allocation10 + $0x1498] sm:$0xff]
    %v1629 = vld [vmem:[#allocation10 + $0x14a0] sm:$0xff]
    %v1630 = vld [vmem:[#allocation10 + $0x14a8] sm:$0xff]
    %v1631 = vld [vmem:[#allocation10 + $0x14b0] sm:$0xff]
    %v1632 = vld [vmem:[#allocation10 + $0x14b8] sm:$0xff]
    %v1633 = vld [vmem:[#allocation10 + $0x14c0] sm:$0xff]
    %v1634 = vld [vmem:[#allocation10 + $0x14c8] sm:$0xff]
    %v1635 = vld [vmem:[#allocation10 + $0x14d0] sm:$0xff]
    %v1636 = vld [vmem:[#allocation10 + $0x14d8] sm:$0xff]
    %v1637 = vld [vmem:[#allocation10 + $0x14e0] sm:$0xff]
    %v1638 = vld [vmem:[#allocation10 + $0x14e8] sm:$0xff]
    %v1639 = vld [vmem:[#allocation10 + $0x14f0] sm:$0xff]
    %v1640 = vld [vmem:[#allocation10 + $0x14f8] sm:$0xff]
    %v1641 = vld [vmem:[#allocation10 + $0x1500] sm:$0xff]
    %v1642 = vld [vmem:[#allocation10 + $0x1508] sm:$0xff]
    %v1643 = vld [vmem:[#allocation10 + $0x1510] sm:$0xff]
    %v1644 = vld [vmem:[#allocation10 + $0x1518] sm:$0xff]
    %v1645 = vld [vmem:[#allocation10 + $0x1520] sm:$0xff]
    %v1646 = vld [vmem:[#allocation10 + $0x1528] sm:$0xff]
    %v1647 = vld [vmem:[#allocation10 + $0x1530] sm:$0xff]
    %v1648 = vld [vmem:[#allocation10 + $0x1538] sm:$0xff]
    %v1649 = vld [vmem:[#allocation10 + $0x1540] sm:$0xff]
    %v1650 = vld [vmem:[#allocation10 + $0x1548] sm:$0xff]
    %v1651 = vld [vmem:[#allocation10 + $0x1550] sm:$0xff]
    %v1652 = vld [vmem:[#allocation10 + $0x1558] sm:$0xff]
    %v1653 = vld [vmem:[#allocation10 + $0x1560] sm:$0xff]
    %v1654 = vld [vmem:[#allocation10 + $0x1568] sm:$0xff]
    %v1655 = vld [vmem:[#allocation10 + $0x1570] sm:$0xff]
    %v1656 = vld [vmem:[#allocation10 + $0x1578] sm:$0xff]
    %v1657 = vld [vmem:[#allocation10 + $0x1580] sm:$0xff]
    %v1658 = vld [vmem:[#allocation10 + $0x1588] sm:$0xff]
    %v1659 = vld [vmem:[#allocation10 + $0x1590] sm:$0xff]
    %v1660 = vld [vmem:[#allocation10 + $0x1598] sm:$0xff]
    %v1661 = vld [vmem:[#allocation10 + $0x15a0] sm:$0xff]
    %v1662 = vld [vmem:[#allocation10 + $0x15a8] sm:$0xff]
    %v1663 = vld [vmem:[#allocation10 + $0x15b0] sm:$0xff]
    %v1664 = vld [vmem:[#allocation10 + $0x15b8] sm:$0xff]
    %v1665 = vld [vmem:[#allocation10 + $0x15c0] sm:$0xff]
    %v1666 = vld [vmem:[#allocation10 + $0x15c8] sm:$0xff]
    %v1667 = vld [vmem:[#allocation10 + $0x15d0] sm:$0xff]
    %v1668 = vld [vmem:[#allocation10 + $0x15d8] sm:$0xff]
    %v1669 = vld [vmem:[#allocation10 + $0x15e0] sm:$0xff]
    %v1670 = vld [vmem:[#allocation10 + $0x15e8] sm:$0xff]
    %v1671 = vld [vmem:[#allocation10 + $0x15f0] sm:$0xff]
    %v1672 = vld [vmem:[#allocation10 + $0x15f8] sm:$0xff]
    %v1673 = vld [vmem:[#allocation10 + $0x1600] sm:$0xff]
    %v1674 = vld [vmem:[#allocation10 + $0x1608] sm:$0xff]
    %v1675 = vld [vmem:[#allocation10 + $0x1610] sm:$0xff]
    %v1676 = vld [vmem:[#allocation10 + $0x1618] sm:$0xff]
    %v1677 = vld [vmem:[#allocation10 + $0x1620] sm:$0xff]
    %v1678 = vld [vmem:[#allocation10 + $0x1628] sm:$0xff]
    %v1679 = vld [vmem:[#allocation10 + $0x1630] sm:$0xff]
    %v1680 = vld [vmem:[#allocation10 + $0x1638] sm:$0xff]
    %v1681 = vld [vmem:[#allocation10 + $0x1640] sm:$0xff]
    %v1682 = vld [vmem:[#allocation10 + $0x1648] sm:$0xff]
    %v1683 = vld [vmem:[#allocation10 + $0x1650] sm:$0xff]
    %v1684 = vld [vmem:[#allocation10 + $0x1658] sm:$0xff]
    %v1685 = vld [vmem:[#allocation10 + $0x1660] sm:$0xff]
    %v1686 = vld [vmem:[#allocation10 + $0x1668] sm:$0xff]
    %v1687 = vld [vmem:[#allocation10 + $0x1670] sm:$0xff]
    %v1688 = vld [vmem:[#allocation10 + $0x1678] sm:$0xff]
    %v1689 = vld [vmem:[#allocation10 + $0x1680] sm:$0xff]
    %v1690 = vld [vmem:[#allocation10 + $0x1688] sm:$0xff]
    %v1691 = vld [vmem:[#allocation10 + $0x1690] sm:$0xff]
    %v1692 = vld [vmem:[#allocation10 + $0x1698] sm:$0xff]
    %v1693 = vld [vmem:[#allocation10 + $0x16a0] sm:$0xff]
    %v1694 = vld [vmem:[#allocation10 + $0x16a8] sm:$0xff]
    %v1695 = vld [vmem:[#allocation10 + $0x16b0] sm:$0xff]
    %v1696 = vld [vmem:[#allocation10 + $0x16b8] sm:$0xff]
    %v1697 = vld [vmem:[#allocation10 + $0x16c0] sm:$0xff]
    %v1698 = vld [vmem:[#allocation10 + $0x16c8] sm:$0xff]
    %v1699 = vld [vmem:[#allocation10 + $0x16d0] sm:$0xff]
    %v1700 = vld [vmem:[#allocation10 + $0x16d8] sm:$0xff]
    %v1701 = vld [vmem:[#allocation10 + $0x16e0] sm:$0xff]
    %v1702 = vld [vmem:[#allocation10 + $0x16e8] sm:$0xff]
    %v1703 = vld [vmem:[#allocation10 + $0x16f0] sm:$0xff]
    %v1704 = vld [vmem:[#allocation10 + $0x16f8] sm:$0xff]
    %v1705 = vld [vmem:[#allocation10 + $0x1700] sm:$0xff]
    %v1706 = vld [vmem:[#allocation10 + $0x1708] sm:$0xff]
    %v1707 = vld [vmem:[#allocation10 + $0x1710] sm:$0xff]
    %v1708 = vld [vmem:[#allocation10 + $0x1718] sm:$0xff]
    %v1709 = vld [vmem:[#allocation10 + $0x1720] sm:$0xff]
    %v1710 = vld [vmem:[#allocation10 + $0x1728] sm:$0xff]
    %v1711 = vld [vmem:[#allocation10 + $0x1730] sm:$0xff]
    %v1712 = vld [vmem:[#allocation10 + $0x1738] sm:$0xff]
    %v1713 = vld [vmem:[#allocation10 + $0x1740] sm:$0xff]
    %v1714 = vld [vmem:[#allocation10 + $0x1748] sm:$0xff]
    %v1715 = vld [vmem:[#allocation10 + $0x1750] sm:$0xff]
    %v1716 = vld [vmem:[#allocation10 + $0x1758] sm:$0xff]
    %v1717 = vld [vmem:[#allocation10 + $0x1760] sm:$0xff]
    %v1718 = vld [vmem:[#allocation10 + $0x1768] sm:$0xff]
    %v1719 = vld [vmem:[#allocation10 + $0x1770] sm:$0xff]
    %v1720 = vld [vmem:[#allocation10 + $0x1778] sm:$0xff]
    %v1721 = vld [vmem:[#allocation10 + $0x1780] sm:$0xff]
    %v1722 = vld [vmem:[#allocation10 + $0x1788] sm:$0xff]
    %v1723 = vld [vmem:[#allocation10 + $0x1790] sm:$0xff]
    %v1724 = vld [vmem:[#allocation10 + $0x1798] sm:$0xff]
    %v1725 = vld [vmem:[#allocation10 + $0x17a0] sm:$0xff]
    %v1726 = vld [vmem:[#allocation10 + $0x17a8] sm:$0xff]
    %v1727 = vld [vmem:[#allocation10 + $0x17b0] sm:$0xff]
    %v1728 = vld [vmem:[#allocation10 + $0x17b8] sm:$0xff]
    %v1729 = vld [vmem:[#allocation10 + $0x17c0] sm:$0xff]
    %v1730 = vld [vmem:[#allocation10 + $0x17c8] sm:$0xff]
    %v1731 = vld [vmem:[#allocation10 + $0x17d0] sm:$0xff]
    %v1732 = vld [vmem:[#allocation10 + $0x17d8] sm:$0xff]
    %v1733 = vld [vmem:[#allocation10 + $0x17e0] sm:$0xff]
    %v1734 = vld [vmem:[#allocation10 + $0x17e8] sm:$0xff]
    %v1735 = vld [vmem:[#allocation10 + $0x17f0] sm:$0xff]
    %v1736 = vld [vmem:[#allocation10 + $0x17f8] sm:$0xff]
    %v1737 = vld [vmem:[#allocation10 + $0x1800] sm:$0xff]
    %v1738 = vld [vmem:[#allocation10 + $0x1808] sm:$0xff]
    %v1739 = vld [vmem:[#allocation10 + $0x1810] sm:$0xff]
    %v1740 = vld [vmem:[#allocation10 + $0x1818] sm:$0xff]
    %v1741 = vld [vmem:[#allocation10 + $0x1820] sm:$0xff]
    %v1742 = vld [vmem:[#allocation10 + $0x1828] sm:$0xff]
    %v1743 = vld [vmem:[#allocation10 + $0x1830] sm:$0xff]
    %v1744 = vld [vmem:[#allocation10 + $0x1838] sm:$0xff]
    %v1745 = vld [vmem:[#allocation10 + $0x1840] sm:$0xff]
    %v1746 = vld [vmem:[#allocation10 + $0x1848] sm:$0xff]
    %v1747 = vld [vmem:[#allocation10 + $0x1850] sm:$0xff]
    %v1748 = vld [vmem:[#allocation10 + $0x1858] sm:$0xff]
    %v1749 = vld [vmem:[#allocation10 + $0x1860] sm:$0xff]
    %v1750 = vld [vmem:[#allocation10 + $0x1868] sm:$0xff]
    %v1751 = vld [vmem:[#allocation10 + $0x1870] sm:$0xff]
    %v1752 = vld [vmem:[#allocation10 + $0x1878] sm:$0xff]
    %v1753 = vld [vmem:[#allocation10 + $0x1880] sm:$0xff]
    %v1754 = vld [vmem:[#allocation10 + $0x1888] sm:$0xff]
    %v1755 = vld [vmem:[#allocation10 + $0x1890] sm:$0xff]
    %v1756 = vld [vmem:[#allocation10 + $0x1898] sm:$0xff]
    %v1757 = vld [vmem:[#allocation10 + $0x18a0] sm:$0xff]
    %v1758 = vld [vmem:[#allocation10 + $0x18a8] sm:$0xff]
    %v1759 = vld [vmem:[#allocation10 + $0x18b0] sm:$0xff]
    %v1760 = vld [vmem:[#allocation10 + $0x18b8] sm:$0xff]
    %v1761 = vld [vmem:[#allocation10 + $0x18c0] sm:$0xff]
    %v1762 = vld [vmem:[#allocation10 + $0x18c8] sm:$0xff]
    %v1763 = vld [vmem:[#allocation10 + $0x18d0] sm:$0xff]
    %v1764 = vld [vmem:[#allocation10 + $0x18d8] sm:$0xff]
    %v1765 = vld [vmem:[#allocation10 + $0x18e0] sm:$0xff]
    %v1766 = vld [vmem:[#allocation10 + $0x18e8] sm:$0xff]
    %v1767 = vld [vmem:[#allocation10 + $0x18f0] sm:$0xff]
    %v1768 = vld [vmem:[#allocation10 + $0x18f8] sm:$0xff]
    %v1769 = vld [vmem:[#allocation12] sm:$0xff]
    %v1770 = vld [vmem:[#allocation12 + $0x8] sm:$0x3]
    %v1773 = vlaneseq
    %v1774 = vshrl.u32 %v1773, 7
    %v1775 = vsub.s32 0, %v1774
    %v1776 = vrot.slane %v1769, %v1775
    %v1777 = vlaneseq
    %v1778 = vshrl.u32 %v1777, 7
    %v1779 = vsub.s32 1, %v1778
    %v1780 = vrot.slane %v1769, %v1779
    %v1781 = vlaneseq
    %v1782 = vshrl.u32 %v1781, 7
    %v1783 = vsub.s32 2, %v1782
    %v1784 = vrot.slane %v1769, %v1783
    %v1785 = vlaneseq
    %v1786 = vshrl.u32 %v1785, 7
    %v1787 = vsub.s32 3, %v1786
    %v1788 = vrot.slane %v1769, %v1787
    %v1789 = vlaneseq
    %v1790 = vshrl.u32 %v1789, 7
    %v1791 = vsub.s32 4, %v1790
    %v1792 = vrot.slane %v1769, %v1791
    %v1793 = vlaneseq
    %v1794 = vshrl.u32 %v1793, 7
    %v1795 = vsub.s32 5, %v1794
    %v1796 = vrot.slane %v1769, %v1795
    %v1797 = vlaneseq
    %v1798 = vshrl.u32 %v1797, 7
    %v1799 = vsub.s32 6, %v1798
    %v1800 = vrot.slane %v1769, %v1799
    %v1801 = vlaneseq
    %v1802 = vshrl.u32 %v1801, 7
    %v1803 = vsub.s32 7, %v1802
    %v1804 = vrot.slane %v1769, %v1803
    %v1805 = vlaneseq
    %v1806 = vshrl.u32 %v1805, 7
    %v1807 = vsub.s32 0, %v1806
    %v1808 = vrot.slane %v1770, %v1807
    %v1809 = vlaneseq
    %v1810 = vshrl.u32 %v1809, 7
    %v1811 = vsub.s32 1, %v1810
    %v1812 = vrot.slane %v1770, %v1811
    %v1833 = vunpack.c.l.b16 %v959
    %v1834 = vunpack.c.h.b16 %v959
    %v1835 = vunpack.c.l.b16 %v960
    %v1836 = vunpack.c.h.b16 %v960
    %v1837 = vunpack.c.l.b16 %v961
    %v1838 = vunpack.c.h.b16 %v961
    %v1839 = vunpack.c.l.b16 %v962
    %v1840 = vunpack.c.h.b16 %v962
    %v1841 = vunpack.c.l.b16 %v963
    %v1842 = vunpack.c.h.b16 %v963
    %v1843 = vunpack.c.l.b16 %v964
    %v1844 = vunpack.c.h.b16 %v964
    %v1845 = vunpack.c.l.b16 %v965
    %v1846 = vunpack.c.h.b16 %v965
    %v1847 = vunpack.c.l.b16 %v966
    %v1848 = vunpack.c.h.b16 %v966
    %v1849 = vunpack.c.l.b16 %v967
    %v1850 = vunpack.c.h.b16 %v967
    %v1851 = vunpack.c.l.b16 %v968
    %v1852 = vunpack.c.h.b16 %v968
    %v1853 = vpack.c.b16 %v1843, %v1833
    %v1854 = vpack.c.b16 %v1844, %v1834
    %v1855 = vpack.c.b16 %v1845, %v1835
    %v1856 = vpack.c.b16 %v1846, %v1836
    %v1857 = vpack.c.b16 %v1847, %v1837
    %v1858 = vpack.c.b16 %v1848, %v1838
    %v1859 = vpack.c.b16 %v1849, %v1839
    %v1860 = vpack.c.b16 %v1850, %v1840
    %v1861 = vpack.c.b16 %v1851, %v1841
    %v1862 = vpack.c.b16 %v1852, %v1842
    %v2673 = vunpack.c.l.b16 %v969
    %v2674 = vunpack.c.h.b16 %v969
    %v2675 = vunpack.c.l.b16 %v970
    %v2676 = vunpack.c.h.b16 %v970
    %v2677 = vunpack.c.l.b16 %v971
    %v2678 = vunpack.c.h.b16 %v971
    %v2679 = vunpack.c.l.b16 %v972
    %v2680 = vunpack.c.h.b16 %v972
    %v2681 = vunpack.c.l.b16 %v973
    %v2682 = vunpack.c.h.b16 %v973
    %v2683 = vunpack.c.l.b16 %v974
    %v2684 = vunpack.c.h.b16 %v974
    %v2685 = vunpack.c.l.b16 %v975
    %v2686 = vunpack.c.h.b16 %v975
    %v2687 = vunpack.c.l.b16 %v976
    %v2688 = vunpack.c.h.b16 %v976
    %v2689 = vunpack.c.l.b16 %v977
    %v2690 = vunpack.c.h.b16 %v977
    %v2691 = vunpack.c.l.b16 %v978
    %v2692 = vunpack.c.h.b16 %v978
    %v2693 = vunpack.c.l.b16 %v979
    %v2694 = vunpack.c.h.b16 %v979
    %v2695 = vunpack.c.l.b16 %v980
    %v2696 = vunpack.c.h.b16 %v980
    %v2697 = vunpack.c.l.b16 %v981
    %v2698 = vunpack.c.h.b16 %v981
    %v2699 = vunpack.c.l.b16 %v982
    %v2700 = vunpack.c.h.b16 %v982
    %v2701 = vunpack.c.l.b16 %v983
    %v2702 = vunpack.c.h.b16 %v983
    %v2703 = vunpack.c.l.b16 %v984
    %v2704 = vunpack.c.h.b16 %v984
    %v2705 = vunpack.c.l.b16 %v985
    %v2706 = vunpack.c.h.b16 %v985
    %v2707 = vunpack.c.l.b16 %v986
    %v2708 = vunpack.c.h.b16 %v986
    %v2709 = vunpack.c.l.b16 %v987
    %v2710 = vunpack.c.h.b16 %v987
    %v2711 = vunpack.c.l.b16 %v988
    %v2712 = vunpack.c.h.b16 %v988
    %v2713 = vunpack.c.l.b16 %v989
    %v2714 = vunpack.c.h.b16 %v989
    %v2715 = vunpack.c.l.b16 %v990
    %v2716 = vunpack.c.h.b16 %v990
    %v2717 = vunpack.c.l.b16 %v991
    %v2718 = vunpack.c.h.b16 %v991
    %v2719 = vunpack.c.l.b16 %v992
    %v2720 = vunpack.c.h.b16 %v992
    %v2721 = vunpack.c.l.b16 %v993
    %v2722 = vunpack.c.h.b16 %v993
    %v2723 = vunpack.c.l.b16 %v994
    %v2724 = vunpack.c.h.b16 %v994
    %v2725 = vunpack.c.l.b16 %v995
    %v2726 = vunpack.c.h.b16 %v995
    %v2727 = vunpack.c.l.b16 %v996
    %v2728 = vunpack.c.h.b16 %v996
    %v2729 = vunpack.c.l.b16 %v997
    %v2730 = vunpack.c.h.b16 %v997
    %v2731 = vunpack.c.l.b16 %v998
    %v2732 = vunpack.c.h.b16 %v998
    %v2733 = vunpack.c.l.b16 %v999
    %v2734 = vunpack.c.h.b16 %v999
    %v2735 = vunpack.c.l.b16 %v1000
    %v2736 = vunpack.c.h.b16 %v1000
    %v2737 = vunpack.c.l.b16 %v1001
    %v2738 = vunpack.c.h.b16 %v1001
    %v2739 = vunpack.c.l.b16 %v1002
    %v2740 = vunpack.c.h.b16 %v1002
    %v2741 = vunpack.c.l.b16 %v1003
    %v2742 = vunpack.c.h.b16 %v1003
    %v2743 = vunpack.c.l.b16 %v1004
    %v2744 = vunpack.c.h.b16 %v1004
    %v2745 = vunpack.c.l.b16 %v1005
    %v2746 = vunpack.c.h.b16 %v1005
    %v2747 = vunpack.c.l.b16 %v1006
    %v2748 = vunpack.c.h.b16 %v1006
    %v2749 = vunpack.c.l.b16 %v1007
    %v2750 = vunpack.c.h.b16 %v1007
    %v2751 = vunpack.c.l.b16 %v1008
    %v2752 = vunpack.c.h.b16 %v1008
    %v2753 = vunpack.c.l.b16 %v1009
    %v2754 = vunpack.c.h.b16 %v1009
    %v2755 = vunpack.c.l.b16 %v1010
    %v2756 = vunpack.c.h.b16 %v1010
    %v2757 = vunpack.c.l.b16 %v1011
    %v2758 = vunpack.c.h.b16 %v1011
    %v2759 = vunpack.c.l.b16 %v1012
    %v2760 = vunpack.c.h.b16 %v1012
    %v2761 = vunpack.c.l.b16 %v1013
    %v2762 = vunpack.c.h.b16 %v1013
    %v2763 = vunpack.c.l.b16 %v1014
    %v2764 = vunpack.c.h.b16 %v1014
    %v2765 = vunpack.c.l.b16 %v1015
    %v2766 = vunpack.c.h.b16 %v1015
    %v2767 = vunpack.c.l.b16 %v1016
    %v2768 = vunpack.c.h.b16 %v1016
    %v2769 = vunpack.c.l.b16 %v1017
    %v2770 = vunpack.c.h.b16 %v1017
    %v2771 = vunpack.c.l.b16 %v1018
    %v2772 = vunpack.c.h.b16 %v1018
    %v2773 = vunpack.c.l.b16 %v1019
    %v2774 = vunpack.c.h.b16 %v1019
    %v2775 = vunpack.c.l.b16 %v1020
    %v2776 = vunpack.c.h.b16 %v1020
    %v2777 = vunpack.c.l.b16 %v1021
    %v2778 = vunpack.c.h.b16 %v1021
    %v2779 = vunpack.c.l.b16 %v1022
    %v2780 = vunpack.c.h.b16 %v1022
    %v2781 = vunpack.c.l.b16 %v1023
    %v2782 = vunpack.c.h.b16 %v1023
    %v2783 = vunpack.c.l.b16 %v1024
    %v2784 = vunpack.c.h.b16 %v1024
    %v2785 = vunpack.c.l.b16 %v1025
    %v2786 = vunpack.c.h.b16 %v1025
    %v2787 = vunpack.c.l.b16 %v1026
    %v2788 = vunpack.c.h.b16 %v1026
    %v2789 = vunpack.c.l.b16 %v1027
    %v2790 = vunpack.c.h.b16 %v1027
    %v2791 = vunpack.c.l.b16 %v1028
    %v2792 = vunpack.c.h.b16 %v1028
    %v2793 = vunpack.c.l.b16 %v1029
    %v2794 = vunpack.c.h.b16 %v1029
    %v2795 = vunpack.c.l.b16 %v1030
    %v2796 = vunpack.c.h.b16 %v1030
    %v2797 = vunpack.c.l.b16 %v1031
    %v2798 = vunpack.c.h.b16 %v1031
    %v2799 = vunpack.c.l.b16 %v1032
    %v2800 = vunpack.c.h.b16 %v1032
    %v2801 = vunpack.c.l.b16 %v1033
    %v2802 = vunpack.c.h.b16 %v1033
    %v2803 = vunpack.c.l.b16 %v1034
    %v2804 = vunpack.c.h.b16 %v1034
    %v2805 = vunpack.c.l.b16 %v1035
    %v2806 = vunpack.c.h.b16 %v1035
    %v2807 = vunpack.c.l.b16 %v1036
    %v2808 = vunpack.c.h.b16 %v1036
    %v2809 = vunpack.c.l.b16 %v1037
    %v2810 = vunpack.c.h.b16 %v1037
    %v2811 = vunpack.c.l.b16 %v1038
    %v2812 = vunpack.c.h.b16 %v1038
    %v2813 = vunpack.c.l.b16 %v1039
    %v2814 = vunpack.c.h.b16 %v1039
    %v2815 = vunpack.c.l.b16 %v1040
    %v2816 = vunpack.c.h.b16 %v1040
    %v2817 = vunpack.c.l.b16 %v1041
    %v2818 = vunpack.c.h.b16 %v1041
    %v2819 = vunpack.c.l.b16 %v1042
    %v2820 = vunpack.c.h.b16 %v1042
    %v2821 = vunpack.c.l.b16 %v1043
    %v2822 = vunpack.c.h.b16 %v1043
    %v2823 = vunpack.c.l.b16 %v1044
    %v2824 = vunpack.c.h.b16 %v1044
    %v2825 = vunpack.c.l.b16 %v1045
    %v2826 = vunpack.c.h.b16 %v1045
    %v2827 = vunpack.c.l.b16 %v1046
    %v2828 = vunpack.c.h.b16 %v1046
    %v2829 = vunpack.c.l.b16 %v1047
    %v2830 = vunpack.c.h.b16 %v1047
    %v2831 = vunpack.c.l.b16 %v1048
    %v2832 = vunpack.c.h.b16 %v1048
    %v2833 = vunpack.c.l.b16 %v1049
    %v2834 = vunpack.c.h.b16 %v1049
    %v2835 = vunpack.c.l.b16 %v1050
    %v2836 = vunpack.c.h.b16 %v1050
    %v2837 = vunpack.c.l.b16 %v1051
    %v2838 = vunpack.c.h.b16 %v1051
    %v2839 = vunpack.c.l.b16 %v1052
    %v2840 = vunpack.c.h.b16 %v1052
    %v2841 = vunpack.c.l.b16 %v1053
    %v2842 = vunpack.c.h.b16 %v1053
    %v2843 = vunpack.c.l.b16 %v1054
    %v2844 = vunpack.c.h.b16 %v1054
    %v2845 = vunpack.c.l.b16 %v1055
    %v2846 = vunpack.c.h.b16 %v1055
    %v2847 = vunpack.c.l.b16 %v1056
    %v2848 = vunpack.c.h.b16 %v1056
    %v2849 = vunpack.c.l.b16 %v1057
    %v2850 = vunpack.c.h.b16 %v1057
    %v2851 = vunpack.c.l.b16 %v1058
    %v2852 = vunpack.c.h.b16 %v1058
    %v2853 = vunpack.c.l.b16 %v1059
    %v2854 = vunpack.c.h.b16 %v1059
    %v2855 = vunpack.c.l.b16 %v1060
    %v2856 = vunpack.c.h.b16 %v1060
    %v2857 = vunpack.c.l.b16 %v1061
    %v2858 = vunpack.c.h.b16 %v1061
    %v2859 = vunpack.c.l.b16 %v1062
    %v2860 = vunpack.c.h.b16 %v1062
    %v2861 = vunpack.c.l.b16 %v1063
    %v2862 = vunpack.c.h.b16 %v1063
    %v2863 = vunpack.c.l.b16 %v1064
    %v2864 = vunpack.c.h.b16 %v1064
    %v2865 = vunpack.c.l.b16 %v1065
    %v2866 = vunpack.c.h.b16 %v1065
    %v2867 = vunpack.c.l.b16 %v1066
    %v2868 = vunpack.c.h.b16 %v1066
    %v2869 = vunpack.c.l.b16 %v1067
    %v2870 = vunpack.c.h.b16 %v1067
    %v2871 = vunpack.c.l.b16 %v1068
    %v2872 = vunpack.c.h.b16 %v1068
    %v2873 = vunpack.c.l.b16 %v1069
    %v2874 = vunpack.c.h.b16 %v1069
    %v2875 = vunpack.c.l.b16 %v1070
    %v2876 = vunpack.c.h.b16 %v1070
    %v2877 = vunpack.c.l.b16 %v1071
    %v2878 = vunpack.c.h.b16 %v1071
    %v2879 = vunpack.c.l.b16 %v1072
    %v2880 = vunpack.c.h.b16 %v1072
    %v2881 = vunpack.c.l.b16 %v1073
    %v2882 = vunpack.c.h.b16 %v1073
    %v2883 = vunpack.c.l.b16 %v1074
    %v2884 = vunpack.c.h.b16 %v1074
    %v2885 = vunpack.c.l.b16 %v1075
    %v2886 = vunpack.c.h.b16 %v1075
    %v2887 = vunpack.c.l.b16 %v1076
    %v2888 = vunpack.c.h.b16 %v1076
    %v2889 = vunpack.c.l.b16 %v1077
    %v2890 = vunpack.c.h.b16 %v1077
    %v2891 = vunpack.c.l.b16 %v1078
    %v2892 = vunpack.c.h.b16 %v1078
    %v2893 = vunpack.c.l.b16 %v1079
    %v2894 = vunpack.c.h.b16 %v1079
    %v2895 = vunpack.c.l.b16 %v1080
    %v2896 = vunpack.c.h.b16 %v1080
    %v2897 = vunpack.c.l.b16 %v1081
    %v2898 = vunpack.c.h.b16 %v1081
    %v2899 = vunpack.c.l.b16 %v1082
    %v2900 = vunpack.c.h.b16 %v1082
    %v2901 = vunpack.c.l.b16 %v1083
    %v2902 = vunpack.c.h.b16 %v1083
    %v2903 = vunpack.c.l.b16 %v1084
    %v2904 = vunpack.c.h.b16 %v1084
    %v2905 = vunpack.c.l.b16 %v1085
    %v2906 = vunpack.c.h.b16 %v1085
    %v2907 = vunpack.c.l.b16 %v1086
    %v2908 = vunpack.c.h.b16 %v1086
    %v2909 = vunpack.c.l.b16 %v1087
    %v2910 = vunpack.c.h.b16 %v1087
    %v2911 = vunpack.c.l.b16 %v1088
    %v2912 = vunpack.c.h.b16 %v1088
    %v2913 = vunpack.c.l.b16 %v1089
    %v2914 = vunpack.c.h.b16 %v1089
    %v2915 = vunpack.c.l.b16 %v1090
    %v2916 = vunpack.c.h.b16 %v1090
    %v2917 = vunpack.c.l.b16 %v1091
    %v2918 = vunpack.c.h.b16 %v1091
    %v2919 = vunpack.c.l.b16 %v1092
    %v2920 = vunpack.c.h.b16 %v1092
    %v2921 = vunpack.c.l.b16 %v1093
    %v2922 = vunpack.c.h.b16 %v1093
    %v2923 = vunpack.c.l.b16 %v1094
    %v2924 = vunpack.c.h.b16 %v1094
    %v2925 = vunpack.c.l.b16 %v1095
    %v2926 = vunpack.c.h.b16 %v1095
    %v2927 = vunpack.c.l.b16 %v1096
    %v2928 = vunpack.c.h.b16 %v1096
    %v2929 = vunpack.c.l.b16 %v1097
    %v2930 = vunpack.c.h.b16 %v1097
    %v2931 = vunpack.c.l.b16 %v1098
    %v2932 = vunpack.c.h.b16 %v1098
    %v2933 = vunpack.c.l.b16 %v1099
    %v2934 = vunpack.c.h.b16 %v1099
    %v2935 = vunpack.c.l.b16 %v1100
    %v2936 = vunpack.c.h.b16 %v1100
    %v2937 = vunpack.c.l.b16 %v1101
    %v2938 = vunpack.c.h.b16 %v1101
    %v2939 = vunpack.c.l.b16 %v1102
    %v2940 = vunpack.c.h.b16 %v1102
    %v2941 = vunpack.c.l.b16 %v1103
    %v2942 = vunpack.c.h.b16 %v1103
    %v2943 = vunpack.c.l.b16 %v1104
    %v2944 = vunpack.c.h.b16 %v1104
    %v2945 = vunpack.c.l.b16 %v1105
    %v2946 = vunpack.c.h.b16 %v1105
    %v2947 = vunpack.c.l.b16 %v1106
    %v2948 = vunpack.c.h.b16 %v1106
    %v2949 = vunpack.c.l.b16 %v1107
    %v2950 = vunpack.c.h.b16 %v1107
    %v2951 = vunpack.c.l.b16 %v1108
    %v2952 = vunpack.c.h.b16 %v1108
    %v2953 = vunpack.c.l.b16 %v1109
    %v2954 = vunpack.c.h.b16 %v1109
    %v2955 = vunpack.c.l.b16 %v1110
    %v2956 = vunpack.c.h.b16 %v1110
    %v2957 = vunpack.c.l.b16 %v1111
    %v2958 = vunpack.c.h.b16 %v1111
    %v2959 = vunpack.c.l.b16 %v1112
    %v2960 = vunpack.c.h.b16 %v1112
    %v2961 = vunpack.c.l.b16 %v1113
    %v2962 = vunpack.c.h.b16 %v1113
    %v2963 = vunpack.c.l.b16 %v1114
    %v2964 = vunpack.c.h.b16 %v1114
    %v2965 = vunpack.c.l.b16 %v1115
    %v2966 = vunpack.c.h.b16 %v1115
    %v2967 = vunpack.c.l.b16 %v1116
    %v2968 = vunpack.c.h.b16 %v1116
    %v2969 = vunpack.c.l.b16 %v1117
    %v2970 = vunpack.c.h.b16 %v1117
    %v2971 = vunpack.c.l.b16 %v1118
    %v2972 = vunpack.c.h.b16 %v1118
    %v2973 = vunpack.c.l.b16 %v1119
    %v2974 = vunpack.c.h.b16 %v1119
    %v2975 = vunpack.c.l.b16 %v1120
    %v2976 = vunpack.c.h.b16 %v1120
    %v2977 = vunpack.c.l.b16 %v1121
    %v2978 = vunpack.c.h.b16 %v1121
    %v2979 = vunpack.c.l.b16 %v1122
    %v2980 = vunpack.c.h.b16 %v1122
    %v2981 = vunpack.c.l.b16 %v1123
    %v2982 = vunpack.c.h.b16 %v1123
    %v2983 = vunpack.c.l.b16 %v1124
    %v2984 = vunpack.c.h.b16 %v1124
    %v2985 = vunpack.c.l.b16 %v1125
    %v2986 = vunpack.c.h.b16 %v1125
    %v2987 = vunpack.c.l.b16 %v1126
    %v2988 = vunpack.c.h.b16 %v1126
    %v2989 = vunpack.c.l.b16 %v1127
    %v2990 = vunpack.c.h.b16 %v1127
    %v2991 = vunpack.c.l.b16 %v1128
    %v2992 = vunpack.c.h.b16 %v1128
    %v2993 = vunpack.c.l.b16 %v1129
    %v2994 = vunpack.c.h.b16 %v1129
    %v2995 = vunpack.c.l.b16 %v1130
    %v2996 = vunpack.c.h.b16 %v1130
    %v2997 = vunpack.c.l.b16 %v1131
    %v2998 = vunpack.c.h.b16 %v1131
    %v2999 = vunpack.c.l.b16 %v1132
    %v3000 = vunpack.c.h.b16 %v1132
    %v3001 = vunpack.c.l.b16 %v1133
    %v3002 = vunpack.c.h.b16 %v1133
    %v3003 = vunpack.c.l.b16 %v1134
    %v3004 = vunpack.c.h.b16 %v1134
    %v3005 = vunpack.c.l.b16 %v1135
    %v3006 = vunpack.c.h.b16 %v1135
    %v3007 = vunpack.c.l.b16 %v1136
    %v3008 = vunpack.c.h.b16 %v1136
    %v3009 = vunpack.c.l.b16 %v1137
    %v3010 = vunpack.c.h.b16 %v1137
    %v3011 = vunpack.c.l.b16 %v1138
    %v3012 = vunpack.c.h.b16 %v1138
    %v3013 = vunpack.c.l.b16 %v1139
    %v3014 = vunpack.c.h.b16 %v1139
    %v3015 = vunpack.c.l.b16 %v1140
    %v3016 = vunpack.c.h.b16 %v1140
    %v3017 = vunpack.c.l.b16 %v1141
    %v3018 = vunpack.c.h.b16 %v1141
    %v3019 = vunpack.c.l.b16 %v1142
    %v3020 = vunpack.c.h.b16 %v1142
    %v3021 = vunpack.c.l.b16 %v1143
    %v3022 = vunpack.c.h.b16 %v1143
    %v3023 = vunpack.c.l.b16 %v1144
    %v3024 = vunpack.c.h.b16 %v1144
    %v3025 = vunpack.c.l.b16 %v1145
    %v3026 = vunpack.c.h.b16 %v1145
    %v3027 = vunpack.c.l.b16 %v1146
    %v3028 = vunpack.c.h.b16 %v1146
    %v3029 = vunpack.c.l.b16 %v1147
    %v3030 = vunpack.c.h.b16 %v1147
    %v3031 = vunpack.c.l.b16 %v1148
    %v3032 = vunpack.c.h.b16 %v1148
    %v3033 = vunpack.c.l.b16 %v1149
    %v3034 = vunpack.c.h.b16 %v1149
    %v3035 = vunpack.c.l.b16 %v1150
    %v3036 = vunpack.c.h.b16 %v1150
    %v3037 = vunpack.c.l.b16 %v1151
    %v3038 = vunpack.c.h.b16 %v1151
    %v3039 = vunpack.c.l.b16 %v1152
    %v3040 = vunpack.c.h.b16 %v1152
    %v3041 = vunpack.c.l.b16 %v1153
    %v3042 = vunpack.c.h.b16 %v1153
    %v3043 = vunpack.c.l.b16 %v1154
    %v3044 = vunpack.c.h.b16 %v1154
    %v3045 = vunpack.c.l.b16 %v1155
    %v3046 = vunpack.c.h.b16 %v1155
    %v3047 = vunpack.c.l.b16 %v1156
    %v3048 = vunpack.c.h.b16 %v1156
    %v3049 = vunpack.c.l.b16 %v1157
    %v3050 = vunpack.c.h.b16 %v1157
    %v3051 = vunpack.c.l.b16 %v1158
    %v3052 = vunpack.c.h.b16 %v1158
    %v3053 = vunpack.c.l.b16 %v1159
    %v3054 = vunpack.c.h.b16 %v1159
    %v3055 = vunpack.c.l.b16 %v1160
    %v3056 = vunpack.c.h.b16 %v1160
    %v3057 = vunpack.c.l.b16 %v1161
    %v3058 = vunpack.c.h.b16 %v1161
    %v3059 = vunpack.c.l.b16 %v1162
    %v3060 = vunpack.c.h.b16 %v1162
    %v3061 = vunpack.c.l.b16 %v1163
    %v3062 = vunpack.c.h.b16 %v1163
    %v3063 = vunpack.c.l.b16 %v1164
    %v3064 = vunpack.c.h.b16 %v1164
    %v3065 = vunpack.c.l.b16 %v1165
    %v3066 = vunpack.c.h.b16 %v1165
    %v3067 = vunpack.c.l.b16 %v1166
    %v3068 = vunpack.c.h.b16 %v1166
    %v3069 = vunpack.c.l.b16 %v1167
    %v3070 = vunpack.c.h.b16 %v1167
    %v3071 = vunpack.c.l.b16 %v1168
    %v3072 = vunpack.c.h.b16 %v1168
    %v3073 = vunpack.c.l.b16 %v1169
    %v3074 = vunpack.c.h.b16 %v1169
    %v3075 = vunpack.c.l.b16 %v1170
    %v3076 = vunpack.c.h.b16 %v1170
    %v3077 = vunpack.c.l.b16 %v1171
    %v3078 = vunpack.c.h.b16 %v1171
    %v3079 = vunpack.c.l.b16 %v1172
    %v3080 = vunpack.c.h.b16 %v1172
    %v3081 = vunpack.c.l.b16 %v1173
    %v3082 = vunpack.c.h.b16 %v1173
    %v3083 = vunpack.c.l.b16 %v1174
    %v3084 = vunpack.c.h.b16 %v1174
    %v3085 = vunpack.c.l.b16 %v1175
    %v3086 = vunpack.c.h.b16 %v1175
    %v3087 = vunpack.c.l.b16 %v1176
    %v3088 = vunpack.c.h.b16 %v1176
    %v3089 = vunpack.c.l.b16 %v1177
    %v3090 = vunpack.c.h.b16 %v1177
    %v3091 = vunpack.c.l.b16 %v1178
    %v3092 = vunpack.c.h.b16 %v1178
    %v3093 = vunpack.c.l.b16 %v1179
    %v3094 = vunpack.c.h.b16 %v1179
    %v3095 = vunpack.c.l.b16 %v1180
    %v3096 = vunpack.c.h.b16 %v1180
    %v3097 = vunpack.c.l.b16 %v1181
    %v3098 = vunpack.c.h.b16 %v1181
    %v3099 = vunpack.c.l.b16 %v1182
    %v3100 = vunpack.c.h.b16 %v1182
    %v3101 = vunpack.c.l.b16 %v1183
    %v3102 = vunpack.c.h.b16 %v1183
    %v3103 = vunpack.c.l.b16 %v1184
    %v3104 = vunpack.c.h.b16 %v1184
    %v3105 = vunpack.c.l.b16 %v1185
    %v3106 = vunpack.c.h.b16 %v1185
    %v3107 = vunpack.c.l.b16 %v1186
    %v3108 = vunpack.c.h.b16 %v1186
    %v3109 = vunpack.c.l.b16 %v1187
    %v3110 = vunpack.c.h.b16 %v1187
    %v3111 = vunpack.c.l.b16 %v1188
    %v3112 = vunpack.c.h.b16 %v1188
    %v3113 = vunpack.c.l.b16 %v1189
    %v3114 = vunpack.c.h.b16 %v1189
    %v3115 = vunpack.c.l.b16 %v1190
    %v3116 = vunpack.c.h.b16 %v1190
    %v3117 = vunpack.c.l.b16 %v1191
    %v3118 = vunpack.c.h.b16 %v1191
    %v3119 = vunpack.c.l.b16 %v1192
    %v3120 = vunpack.c.h.b16 %v1192
    %v3121 = vunpack.c.l.b16 %v1193
    %v3122 = vunpack.c.h.b16 %v1193
    %v3123 = vunpack.c.l.b16 %v1194
    %v3124 = vunpack.c.h.b16 %v1194
    %v3125 = vunpack.c.l.b16 %v1195
    %v3126 = vunpack.c.h.b16 %v1195
    %v3127 = vunpack.c.l.b16 %v1196
    %v3128 = vunpack.c.h.b16 %v1196
    %v3129 = vunpack.c.l.b16 %v1197
    %v3130 = vunpack.c.h.b16 %v1197
    %v3131 = vunpack.c.l.b16 %v1198
    %v3132 = vunpack.c.h.b16 %v1198
    %v3133 = vunpack.c.l.b16 %v1199
    %v3134 = vunpack.c.h.b16 %v1199
    %v3135 = vunpack.c.l.b16 %v1200
    %v3136 = vunpack.c.h.b16 %v1200
    %v3137 = vunpack.c.l.b16 %v1201
    %v3138 = vunpack.c.h.b16 %v1201
    %v3139 = vunpack.c.l.b16 %v1202
    %v3140 = vunpack.c.h.b16 %v1202
    %v3141 = vunpack.c.l.b16 %v1203
    %v3142 = vunpack.c.h.b16 %v1203
    %v3143 = vunpack.c.l.b16 %v1204
    %v3144 = vunpack.c.h.b16 %v1204
    %v3145 = vunpack.c.l.b16 %v1205
    %v3146 = vunpack.c.h.b16 %v1205
    %v3147 = vunpack.c.l.b16 %v1206
    %v3148 = vunpack.c.h.b16 %v1206
    %v3149 = vunpack.c.l.b16 %v1207
    %v3150 = vunpack.c.h.b16 %v1207
    %v3151 = vunpack.c.l.b16 %v1208
    %v3152 = vunpack.c.h.b16 %v1208
    %v3153 = vunpack.c.l.b16 %v1209
    %v3154 = vunpack.c.h.b16 %v1209
    %v3155 = vunpack.c.l.b16 %v1210
    %v3156 = vunpack.c.h.b16 %v1210
    %v3157 = vunpack.c.l.b16 %v1211
    %v3158 = vunpack.c.h.b16 %v1211
    %v3159 = vunpack.c.l.b16 %v1212
    %v3160 = vunpack.c.h.b16 %v1212
    %v3161 = vunpack.c.l.b16 %v1213
    %v3162 = vunpack.c.h.b16 %v1213
    %v3163 = vunpack.c.l.b16 %v1214
    %v3164 = vunpack.c.h.b16 %v1214
    %v3165 = vunpack.c.l.b16 %v1215
    %v3166 = vunpack.c.h.b16 %v1215
    %v3167 = vunpack.c.l.b16 %v1216
    %v3168 = vunpack.c.h.b16 %v1216
    %v3169 = vunpack.c.l.b16 %v1217
    %v3170 = vunpack.c.h.b16 %v1217
    %v3171 = vunpack.c.l.b16 %v1218
    %v3172 = vunpack.c.h.b16 %v1218
    %v3173 = vunpack.c.l.b16 %v1219
    %v3174 = vunpack.c.h.b16 %v1219
    %v3175 = vunpack.c.l.b16 %v1220
    %v3176 = vunpack.c.h.b16 %v1220
    %v3177 = vunpack.c.l.b16 %v1221
    %v3178 = vunpack.c.h.b16 %v1221
    %v3179 = vunpack.c.l.b16 %v1222
    %v3180 = vunpack.c.h.b16 %v1222
    %v3181 = vunpack.c.l.b16 %v1223
    %v3182 = vunpack.c.h.b16 %v1223
    %v3183 = vunpack.c.l.b16 %v1224
    %v3184 = vunpack.c.h.b16 %v1224
    %v3185 = vunpack.c.l.b16 %v1225
    %v3186 = vunpack.c.h.b16 %v1225
    %v3187 = vunpack.c.l.b16 %v1226
    %v3188 = vunpack.c.h.b16 %v1226
    %v3189 = vunpack.c.l.b16 %v1227
    %v3190 = vunpack.c.h.b16 %v1227
    %v3191 = vunpack.c.l.b16 %v1228
    %v3192 = vunpack.c.h.b16 %v1228
    %v3193 = vunpack.c.l.b16 %v1229
    %v3194 = vunpack.c.h.b16 %v1229
    %v3195 = vunpack.c.l.b16 %v1230
    %v3196 = vunpack.c.h.b16 %v1230
    %v3197 = vunpack.c.l.b16 %v1231
    %v3198 = vunpack.c.h.b16 %v1231
    %v3199 = vunpack.c.l.b16 %v1232
    %v3200 = vunpack.c.h.b16 %v1232
    %v3201 = vunpack.c.l.b16 %v1233
    %v3202 = vunpack.c.h.b16 %v1233
    %v3203 = vunpack.c.l.b16 %v1234
    %v3204 = vunpack.c.h.b16 %v1234
    %v3205 = vunpack.c.l.b16 %v1235
    %v3206 = vunpack.c.h.b16 %v1235
    %v3207 = vunpack.c.l.b16 %v1236
    %v3208 = vunpack.c.h.b16 %v1236
    %v3209 = vunpack.c.l.b16 %v1237
    %v3210 = vunpack.c.h.b16 %v1237
    %v3211 = vunpack.c.l.b16 %v1238
    %v3212 = vunpack.c.h.b16 %v1238
    %v3213 = vunpack.c.l.b16 %v1239
    %v3214 = vunpack.c.h.b16 %v1239
    %v3215 = vunpack.c.l.b16 %v1240
    %v3216 = vunpack.c.h.b16 %v1240
    %v3217 = vunpack.c.l.b16 %v1241
    %v3218 = vunpack.c.h.b16 %v1241
    %v3219 = vunpack.c.l.b16 %v1242
    %v3220 = vunpack.c.h.b16 %v1242
    %v3221 = vunpack.c.l.b16 %v1243
    %v3222 = vunpack.c.h.b16 %v1243
    %v3223 = vunpack.c.l.b16 %v1244
    %v3224 = vunpack.c.h.b16 %v1244
    %v3225 = vunpack.c.l.b16 %v1245
    %v3226 = vunpack.c.h.b16 %v1245
    %v3227 = vunpack.c.l.b16 %v1246
    %v3228 = vunpack.c.h.b16 %v1246
    %v3229 = vunpack.c.l.b16 %v1247
    %v3230 = vunpack.c.h.b16 %v1247
    %v3231 = vunpack.c.l.b16 %v1248
    %v3232 = vunpack.c.h.b16 %v1248
    %v3233 = vunpack.c.l.b16 %v1249
    %v3234 = vunpack.c.h.b16 %v1249
    %v3235 = vunpack.c.l.b16 %v1250
    %v3236 = vunpack.c.h.b16 %v1250
    %v3237 = vunpack.c.l.b16 %v1251
    %v3238 = vunpack.c.h.b16 %v1251
    %v3239 = vunpack.c.l.b16 %v1252
    %v3240 = vunpack.c.h.b16 %v1252
    %v3241 = vunpack.c.l.b16 %v1253
    %v3242 = vunpack.c.h.b16 %v1253
    %v3243 = vunpack.c.l.b16 %v1254
    %v3244 = vunpack.c.h.b16 %v1254
    %v3245 = vunpack.c.l.b16 %v1255
    %v3246 = vunpack.c.h.b16 %v1255
    %v3247 = vunpack.c.l.b16 %v1256
    %v3248 = vunpack.c.h.b16 %v1256
    %v3249 = vunpack.c.l.b16 %v1257
    %v3250 = vunpack.c.h.b16 %v1257
    %v3251 = vunpack.c.l.b16 %v1258
    %v3252 = vunpack.c.h.b16 %v1258
    %v3253 = vunpack.c.l.b16 %v1259
    %v3254 = vunpack.c.h.b16 %v1259
    %v3255 = vunpack.c.l.b16 %v1260
    %v3256 = vunpack.c.h.b16 %v1260
    %v3257 = vunpack.c.l.b16 %v1261
    %v3258 = vunpack.c.h.b16 %v1261
    %v3259 = vunpack.c.l.b16 %v1262
    %v3260 = vunpack.c.h.b16 %v1262
    %v3261 = vunpack.c.l.b16 %v1263
    %v3262 = vunpack.c.h.b16 %v1263
    %v3263 = vunpack.c.l.b16 %v1264
    %v3264 = vunpack.c.h.b16 %v1264
    %v3265 = vunpack.c.l.b16 %v1265
    %v3266 = vunpack.c.h.b16 %v1265
    %v3267 = vunpack.c.l.b16 %v1266
    %v3268 = vunpack.c.h.b16 %v1266
    %v3269 = vunpack.c.l.b16 %v1267
    %v3270 = vunpack.c.h.b16 %v1267
    %v3271 = vunpack.c.l.b16 %v1268
    %v3272 = vunpack.c.h.b16 %v1268
    %v3273 = vunpack.c.l.b16 %v1269
    %v3274 = vunpack.c.h.b16 %v1269
    %v3275 = vunpack.c.l.b16 %v1270
    %v3276 = vunpack.c.h.b16 %v1270
    %v3277 = vunpack.c.l.b16 %v1271
    %v3278 = vunpack.c.h.b16 %v1271
    %v3279 = vunpack.c.l.b16 %v1272
    %v3280 = vunpack.c.h.b16 %v1272
    %v3281 = vunpack.c.l.b16 %v1273
    %v3282 = vunpack.c.h.b16 %v1273
    %v3283 = vunpack.c.l.b16 %v1274
    %v3284 = vunpack.c.h.b16 %v1274
    %v3285 = vunpack.c.l.b16 %v1275
    %v3286 = vunpack.c.h.b16 %v1275
    %v3287 = vunpack.c.l.b16 %v1276
    %v3288 = vunpack.c.h.b16 %v1276
    %v3289 = vunpack.c.l.b16 %v1277
    %v3290 = vunpack.c.h.b16 %v1277
    %v3291 = vunpack.c.l.b16 %v1278
    %v3292 = vunpack.c.h.b16 %v1278
    %v3293 = vunpack.c.l.b16 %v1279
    %v3294 = vunpack.c.h.b16 %v1279
    %v3295 = vunpack.c.l.b16 %v1280
    %v3296 = vunpack.c.h.b16 %v1280
    %v3297 = vunpack.c.l.b16 %v1281
    %v3298 = vunpack.c.h.b16 %v1281
    %v3299 = vunpack.c.l.b16 %v1282
    %v3300 = vunpack.c.h.b16 %v1282
    %v3301 = vunpack.c.l.b16 %v1283
    %v3302 = vunpack.c.h.b16 %v1283
    %v3303 = vunpack.c.l.b16 %v1284
    %v3304 = vunpack.c.h.b16 %v1284
    %v3305 = vunpack.c.l.b16 %v1285
    %v3306 = vunpack.c.h.b16 %v1285
    %v3307 = vunpack.c.l.b16 %v1286
    %v3308 = vunpack.c.h.b16 %v1286
    %v3309 = vunpack.c.l.b16 %v1287
    %v3310 = vunpack.c.h.b16 %v1287
    %v3311 = vunpack.c.l.b16 %v1288
    %v3312 = vunpack.c.h.b16 %v1288
    %v3313 = vunpack.c.l.b16 %v1289
    %v3314 = vunpack.c.h.b16 %v1289
    %v3315 = vunpack.c.l.b16 %v1290
    %v3316 = vunpack.c.h.b16 %v1290
    %v3317 = vunpack.c.l.b16 %v1291
    %v3318 = vunpack.c.h.b16 %v1291
    %v3319 = vunpack.c.l.b16 %v1292
    %v3320 = vunpack.c.h.b16 %v1292
    %v3321 = vunpack.c.l.b16 %v1293
    %v3322 = vunpack.c.h.b16 %v1293
    %v3323 = vunpack.c.l.b16 %v1294
    %v3324 = vunpack.c.h.b16 %v1294
    %v3325 = vunpack.c.l.b16 %v1295
    %v3326 = vunpack.c.h.b16 %v1295
    %v3327 = vunpack.c.l.b16 %v1296
    %v3328 = vunpack.c.h.b16 %v1296
    %v3329 = vunpack.c.l.b16 %v1297
    %v3330 = vunpack.c.h.b16 %v1297
    %v3331 = vunpack.c.l.b16 %v1298
    %v3332 = vunpack.c.h.b16 %v1298
    %v3333 = vunpack.c.l.b16 %v1299
    %v3334 = vunpack.c.h.b16 %v1299
    %v3335 = vunpack.c.l.b16 %v1300
    %v3336 = vunpack.c.h.b16 %v1300
    %v3337 = vunpack.c.l.b16 %v1301
    %v3338 = vunpack.c.h.b16 %v1301
    %v3339 = vunpack.c.l.b16 %v1302
    %v3340 = vunpack.c.h.b16 %v1302
    %v3341 = vunpack.c.l.b16 %v1303
    %v3342 = vunpack.c.h.b16 %v1303
    %v3343 = vunpack.c.l.b16 %v1304
    %v3344 = vunpack.c.h.b16 %v1304
    %v3345 = vunpack.c.l.b16 %v1305
    %v3346 = vunpack.c.h.b16 %v1305
    %v3347 = vunpack.c.l.b16 %v1306
    %v3348 = vunpack.c.h.b16 %v1306
    %v3349 = vunpack.c.l.b16 %v1307
    %v3350 = vunpack.c.h.b16 %v1307
    %v3351 = vunpack.c.l.b16 %v1308
    %v3352 = vunpack.c.h.b16 %v1308
    %v3353 = vunpack.c.l.b16 %v1309
    %v3354 = vunpack.c.h.b16 %v1309
    %v3355 = vunpack.c.l.b16 %v1310
    %v3356 = vunpack.c.h.b16 %v1310
    %v3357 = vunpack.c.l.b16 %v1311
    %v3358 = vunpack.c.h.b16 %v1311
    %v3359 = vunpack.c.l.b16 %v1312
    %v3360 = vunpack.c.h.b16 %v1312
    %v3361 = vunpack.c.l.b16 %v1313
    %v3362 = vunpack.c.h.b16 %v1313
    %v3363 = vunpack.c.l.b16 %v1314
    %v3364 = vunpack.c.h.b16 %v1314
    %v3365 = vunpack.c.l.b16 %v1315
    %v3366 = vunpack.c.h.b16 %v1315
    %v3367 = vunpack.c.l.b16 %v1316
    %v3368 = vunpack.c.h.b16 %v1316
    %v3369 = vunpack.c.l.b16 %v1317
    %v3370 = vunpack.c.h.b16 %v1317
    %v3371 = vunpack.c.l.b16 %v1318
    %v3372 = vunpack.c.h.b16 %v1318
    %v3373 = vunpack.c.l.b16 %v1319
    %v3374 = vunpack.c.h.b16 %v1319
    %v3375 = vunpack.c.l.b16 %v1320
    %v3376 = vunpack.c.h.b16 %v1320
    %v3377 = vunpack.c.l.b16 %v1321
    %v3378 = vunpack.c.h.b16 %v1321
    %v3379 = vunpack.c.l.b16 %v1322
    %v3380 = vunpack.c.h.b16 %v1322
    %v3381 = vunpack.c.l.b16 %v1323
    %v3382 = vunpack.c.h.b16 %v1323
    %v3383 = vunpack.c.l.b16 %v1324
    %v3384 = vunpack.c.h.b16 %v1324
    %v3385 = vunpack.c.l.b16 %v1325
    %v3386 = vunpack.c.h.b16 %v1325
    %v3387 = vunpack.c.l.b16 %v1326
    %v3388 = vunpack.c.h.b16 %v1326
    %v3389 = vunpack.c.l.b16 %v1327
    %v3390 = vunpack.c.h.b16 %v1327
    %v3391 = vunpack.c.l.b16 %v1328
    %v3392 = vunpack.c.h.b16 %v1328
    %v3393 = vunpack.c.l.b16 %v1329
    %v3394 = vunpack.c.h.b16 %v1329
    %v3395 = vunpack.c.l.b16 %v1330
    %v3396 = vunpack.c.h.b16 %v1330
    %v3397 = vunpack.c.l.b16 %v1331
    %v3398 = vunpack.c.h.b16 %v1331
    %v3399 = vunpack.c.l.b16 %v1332
    %v3400 = vunpack.c.h.b16 %v1332
    %v3401 = vunpack.c.l.b16 %v1333
    %v3402 = vunpack.c.h.b16 %v1333
    %v3403 = vunpack.c.l.b16 %v1334
    %v3404 = vunpack.c.h.b16 %v1334
    %v3405 = vunpack.c.l.b16 %v1335
    %v3406 = vunpack.c.h.b16 %v1335
    %v3407 = vunpack.c.l.b16 %v1336
    %v3408 = vunpack.c.h.b16 %v1336
    %v3409 = vunpack.c.l.b16 %v1337
    %v3410 = vunpack.c.h.b16 %v1337
    %v3411 = vunpack.c.l.b16 %v1338
    %v3412 = vunpack.c.h.b16 %v1338
    %v3413 = vunpack.c.l.b16 %v1339
    %v3414 = vunpack.c.h.b16 %v1339
    %v3415 = vunpack.c.l.b16 %v1340
    %v3416 = vunpack.c.h.b16 %v1340
    %v3417 = vunpack.c.l.b16 %v1341
    %v3418 = vunpack.c.h.b16 %v1341
    %v3419 = vunpack.c.l.b16 %v1342
    %v3420 = vunpack.c.h.b16 %v1342
    %v3421 = vunpack.c.l.b16 %v1343
    %v3422 = vunpack.c.h.b16 %v1343
    %v3423 = vunpack.c.l.b16 %v1344
    %v3424 = vunpack.c.h.b16 %v1344
    %v3425 = vunpack.c.l.b16 %v1345
    %v3426 = vunpack.c.h.b16 %v1345
    %v3427 = vunpack.c.l.b16 %v1346
    %v3428 = vunpack.c.h.b16 %v1346
    %v3429 = vunpack.c.l.b16 %v1347
    %v3430 = vunpack.c.h.b16 %v1347
    %v3431 = vunpack.c.l.b16 %v1348
    %v3432 = vunpack.c.h.b16 %v1348
    %v3433 = vunpack.c.l.b16 %v1349
    %v3434 = vunpack.c.h.b16 %v1349
    %v3435 = vunpack.c.l.b16 %v1350
    %v3436 = vunpack.c.h.b16 %v1350
    %v3437 = vunpack.c.l.b16 %v1351
    %v3438 = vunpack.c.h.b16 %v1351
    %v3439 = vunpack.c.l.b16 %v1352
    %v3440 = vunpack.c.h.b16 %v1352
    %v3441 = vunpack.c.l.b16 %v1353
    %v3442 = vunpack.c.h.b16 %v1353
    %v3443 = vunpack.c.l.b16 %v1354
    %v3444 = vunpack.c.h.b16 %v1354
    %v3445 = vunpack.c.l.b16 %v1355
    %v3446 = vunpack.c.h.b16 %v1355
    %v3447 = vunpack.c.l.b16 %v1356
    %v3448 = vunpack.c.h.b16 %v1356
    %v3449 = vunpack.c.l.b16 %v1357
    %v3450 = vunpack.c.h.b16 %v1357
    %v3451 = vunpack.c.l.b16 %v1358
    %v3452 = vunpack.c.h.b16 %v1358
    %v3453 = vunpack.c.l.b16 %v1359
    %v3454 = vunpack.c.h.b16 %v1359
    %v3455 = vunpack.c.l.b16 %v1360
    %v3456 = vunpack.c.h.b16 %v1360
    %v3457 = vunpack.c.l.b16 %v1361
    %v3458 = vunpack.c.h.b16 %v1361
    %v3459 = vunpack.c.l.b16 %v1362
    %v3460 = vunpack.c.h.b16 %v1362
    %v3461 = vunpack.c.l.b16 %v1363
    %v3462 = vunpack.c.h.b16 %v1363
    %v3463 = vunpack.c.l.b16 %v1364
    %v3464 = vunpack.c.h.b16 %v1364
    %v3465 = vunpack.c.l.b16 %v1365
    %v3466 = vunpack.c.h.b16 %v1365
    %v3467 = vunpack.c.l.b16 %v1366
    %v3468 = vunpack.c.h.b16 %v1366
    %v3469 = vunpack.c.l.b16 %v1367
    %v3470 = vunpack.c.h.b16 %v1367
    %v3471 = vunpack.c.l.b16 %v1368
    %v3472 = vunpack.c.h.b16 %v1368
    %v3473 = vunpack.c.l.b16 %v1369
    %v3474 = vunpack.c.h.b16 %v1369
    %v3475 = vunpack.c.l.b16 %v1370
    %v3476 = vunpack.c.h.b16 %v1370
    %v3477 = vunpack.c.l.b16 %v1371
    %v3478 = vunpack.c.h.b16 %v1371
    %v3479 = vunpack.c.l.b16 %v1372
    %v3480 = vunpack.c.h.b16 %v1372
    %v3481 = vunpack.c.l.b16 %v1373
    %v3482 = vunpack.c.h.b16 %v1373
    %v3483 = vunpack.c.l.b16 %v1374
    %v3484 = vunpack.c.h.b16 %v1374
    %v3485 = vunpack.c.l.b16 %v1375
    %v3486 = vunpack.c.h.b16 %v1375
    %v3487 = vunpack.c.l.b16 %v1376
    %v3488 = vunpack.c.h.b16 %v1376
    %v3489 = vunpack.c.l.b16 %v1377
    %v3490 = vunpack.c.h.b16 %v1377
    %v3491 = vunpack.c.l.b16 %v1378
    %v3492 = vunpack.c.h.b16 %v1378
    %v3493 = vunpack.c.l.b16 %v1379
    %v3494 = vunpack.c.h.b16 %v1379
    %v3495 = vunpack.c.l.b16 %v1380
    %v3496 = vunpack.c.h.b16 %v1380
    %v3497 = vunpack.c.l.b16 %v1381
    %v3498 = vunpack.c.h.b16 %v1381
    %v3499 = vunpack.c.l.b16 %v1382
    %v3500 = vunpack.c.h.b16 %v1382
    %v3501 = vunpack.c.l.b16 %v1383
    %v3502 = vunpack.c.h.b16 %v1383
    %v3503 = vunpack.c.l.b16 %v1384
    %v3504 = vunpack.c.h.b16 %v1384
    %v3505 = vunpack.c.l.b16 %v1385
    %v3506 = vunpack.c.h.b16 %v1385
    %v3507 = vunpack.c.l.b16 %v1386
    %v3508 = vunpack.c.h.b16 %v1386
    %v3509 = vunpack.c.l.b16 %v1387
    %v3510 = vunpack.c.h.b16 %v1387
    %v3511 = vunpack.c.l.b16 %v1388
    %v3512 = vunpack.c.h.b16 %v1388
    %v3513 = vunpack.c.l.b16 %v1389
    %v3514 = vunpack.c.h.b16 %v1389
    %v3515 = vunpack.c.l.b16 %v1390
    %v3516 = vunpack.c.h.b16 %v1390
    %v3517 = vunpack.c.l.b16 %v1391
    %v3518 = vunpack.c.h.b16 %v1391
    %v3519 = vunpack.c.l.b16 %v1392
    %v3520 = vunpack.c.h.b16 %v1392
    %v3521 = vunpack.c.l.b16 %v1393
    %v3522 = vunpack.c.h.b16 %v1393
    %v3523 = vunpack.c.l.b16 %v1394
    %v3524 = vunpack.c.h.b16 %v1394
    %v3525 = vunpack.c.l.b16 %v1395
    %v3526 = vunpack.c.h.b16 %v1395
    %v3527 = vunpack.c.l.b16 %v1396
    %v3528 = vunpack.c.h.b16 %v1396
    %v3529 = vunpack.c.l.b16 %v1397
    %v3530 = vunpack.c.h.b16 %v1397
    %v3531 = vunpack.c.l.b16 %v1398
    %v3532 = vunpack.c.h.b16 %v1398
    %v3533 = vunpack.c.l.b16 %v1399
    %v3534 = vunpack.c.h.b16 %v1399
    %v3535 = vunpack.c.l.b16 %v1400
    %v3536 = vunpack.c.h.b16 %v1400
    %v3537 = vunpack.c.l.b16 %v1401
    %v3538 = vunpack.c.h.b16 %v1401
    %v3539 = vunpack.c.l.b16 %v1402
    %v3540 = vunpack.c.h.b16 %v1402
    %v3541 = vunpack.c.l.b16 %v1403
    %v3542 = vunpack.c.h.b16 %v1403
    %v3543 = vunpack.c.l.b16 %v1404
    %v3544 = vunpack.c.h.b16 %v1404
    %v3545 = vunpack.c.l.b16 %v1405
    %v3546 = vunpack.c.h.b16 %v1405
    %v3547 = vunpack.c.l.b16 %v1406
    %v3548 = vunpack.c.h.b16 %v1406
    %v3549 = vunpack.c.l.b16 %v1407
    %v3550 = vunpack.c.h.b16 %v1407
    %v3551 = vunpack.c.l.b16 %v1408
    %v3552 = vunpack.c.h.b16 %v1408
    %v3553 = vunpack.c.l.b16 %v1409
    %v3554 = vunpack.c.h.b16 %v1409
    %v3555 = vunpack.c.l.b16 %v1410
    %v3556 = vunpack.c.h.b16 %v1410
    %v3557 = vunpack.c.l.b16 %v1411
    %v3558 = vunpack.c.h.b16 %v1411
    %v3559 = vunpack.c.l.b16 %v1412
    %v3560 = vunpack.c.h.b16 %v1412
    %v3561 = vunpack.c.l.b16 %v1413
    %v3562 = vunpack.c.h.b16 %v1413
    %v3563 = vunpack.c.l.b16 %v1414
    %v3564 = vunpack.c.h.b16 %v1414
    %v3565 = vunpack.c.l.b16 %v1415
    %v3566 = vunpack.c.h.b16 %v1415
    %v3567 = vunpack.c.l.b16 %v1416
    %v3568 = vunpack.c.h.b16 %v1416
    %v3569 = vunpack.c.l.b16 %v1417
    %v3570 = vunpack.c.h.b16 %v1417
    %v3571 = vunpack.c.l.b16 %v1418
    %v3572 = vunpack.c.h.b16 %v1418
    %v3573 = vunpack.c.l.b16 %v1419
    %v3574 = vunpack.c.h.b16 %v1419
    %v3575 = vunpack.c.l.b16 %v1420
    %v3576 = vunpack.c.h.b16 %v1420
    %v3577 = vunpack.c.l.b16 %v1421
    %v3578 = vunpack.c.h.b16 %v1421
    %v3579 = vunpack.c.l.b16 %v1422
    %v3580 = vunpack.c.h.b16 %v1422
    %v3581 = vunpack.c.l.b16 %v1423
    %v3582 = vunpack.c.h.b16 %v1423
    %v3583 = vunpack.c.l.b16 %v1424
    %v3584 = vunpack.c.h.b16 %v1424
    %v3585 = vunpack.c.l.b16 %v1425
    %v3586 = vunpack.c.h.b16 %v1425
    %v3587 = vunpack.c.l.b16 %v1426
    %v3588 = vunpack.c.h.b16 %v1426
    %v3589 = vunpack.c.l.b16 %v1427
    %v3590 = vunpack.c.h.b16 %v1427
    %v3591 = vunpack.c.l.b16 %v1428
    %v3592 = vunpack.c.h.b16 %v1428
    %v3593 = vunpack.c.l.b16 %v1429
    %v3594 = vunpack.c.h.b16 %v1429
    %v3595 = vunpack.c.l.b16 %v1430
    %v3596 = vunpack.c.h.b16 %v1430
    %v3597 = vunpack.c.l.b16 %v1431
    %v3598 = vunpack.c.h.b16 %v1431
    %v3599 = vunpack.c.l.b16 %v1432
    %v3600 = vunpack.c.h.b16 %v1432
    %v3601 = vunpack.c.l.b16 %v1433
    %v3602 = vunpack.c.h.b16 %v1433
    %v3603 = vunpack.c.l.b16 %v1434
    %v3604 = vunpack.c.h.b16 %v1434
    %v3605 = vunpack.c.l.b16 %v1435
    %v3606 = vunpack.c.h.b16 %v1435
    %v3607 = vunpack.c.l.b16 %v1436
    %v3608 = vunpack.c.h.b16 %v1436
    %v3609 = vunpack.c.l.b16 %v1437
    %v3610 = vunpack.c.h.b16 %v1437
    %v3611 = vunpack.c.l.b16 %v1438
    %v3612 = vunpack.c.h.b16 %v1438
    %v3613 = vunpack.c.l.b16 %v1439
    %v3614 = vunpack.c.h.b16 %v1439
    %v3615 = vunpack.c.l.b16 %v1440
    %v3616 = vunpack.c.h.b16 %v1440
    %v3617 = vunpack.c.l.b16 %v1441
    %v3618 = vunpack.c.h.b16 %v1441
    %v3619 = vunpack.c.l.b16 %v1442
    %v3620 = vunpack.c.h.b16 %v1442
    %v3621 = vunpack.c.l.b16 %v1443
    %v3622 = vunpack.c.h.b16 %v1443
    %v3623 = vunpack.c.l.b16 %v1444
    %v3624 = vunpack.c.h.b16 %v1444
    %v3625 = vunpack.c.l.b16 %v1445
    %v3626 = vunpack.c.h.b16 %v1445
    %v3627 = vunpack.c.l.b16 %v1446
    %v3628 = vunpack.c.h.b16 %v1446
    %v3629 = vunpack.c.l.b16 %v1447
    %v3630 = vunpack.c.h.b16 %v1447
    %v3631 = vunpack.c.l.b16 %v1448
    %v3632 = vunpack.c.h.b16 %v1448
    %v3633 = vunpack.c.l.b16 %v1449
    %v3634 = vunpack.c.h.b16 %v1449
    %v3635 = vunpack.c.l.b16 %v1450
    %v3636 = vunpack.c.h.b16 %v1450
    %v3637 = vunpack.c.l.b16 %v1451
    %v3638 = vunpack.c.h.b16 %v1451
    %v3639 = vunpack.c.l.b16 %v1452
    %v3640 = vunpack.c.h.b16 %v1452
    %v3641 = vunpack.c.l.b16 %v1453
    %v3642 = vunpack.c.h.b16 %v1453
    %v3643 = vunpack.c.l.b16 %v1454
    %v3644 = vunpack.c.h.b16 %v1454
    %v3645 = vunpack.c.l.b16 %v1455
    %v3646 = vunpack.c.h.b16 %v1455
    %v3647 = vunpack.c.l.b16 %v1456
    %v3648 = vunpack.c.h.b16 %v1456
    %v3649 = vunpack.c.l.b16 %v1457
    %v3650 = vunpack.c.h.b16 %v1457
    %v3651 = vunpack.c.l.b16 %v1458
    %v3652 = vunpack.c.h.b16 %v1458
    %v3653 = vunpack.c.l.b16 %v1459
    %v3654 = vunpack.c.h.b16 %v1459
    %v3655 = vunpack.c.l.b16 %v1460
    %v3656 = vunpack.c.h.b16 %v1460
    %v3657 = vunpack.c.l.b16 %v1461
    %v3658 = vunpack.c.h.b16 %v1461
    %v3659 = vunpack.c.l.b16 %v1462
    %v3660 = vunpack.c.h.b16 %v1462
    %v3661 = vunpack.c.l.b16 %v1463
    %v3662 = vunpack.c.h.b16 %v1463
    %v3663 = vunpack.c.l.b16 %v1464
    %v3664 = vunpack.c.h.b16 %v1464
    %v3665 = vunpack.c.l.b16 %v1465
    %v3666 = vunpack.c.h.b16 %v1465
    %v3667 = vunpack.c.l.b16 %v1466
    %v3668 = vunpack.c.h.b16 %v1466
    %v3669 = vunpack.c.l.b16 %v1467
    %v3670 = vunpack.c.h.b16 %v1467
    %v3671 = vunpack.c.l.b16 %v1468
    %v3672 = vunpack.c.h.b16 %v1468
    %v3673 = vunpack.c.l.b16 %v1469
    %v3674 = vunpack.c.h.b16 %v1469
    %v3675 = vunpack.c.l.b16 %v1470
    %v3676 = vunpack.c.h.b16 %v1470
    %v3677 = vunpack.c.l.b16 %v1471
    %v3678 = vunpack.c.h.b16 %v1471
    %v3679 = vunpack.c.l.b16 %v1472
    %v3680 = vunpack.c.h.b16 %v1472
    %v3681 = vunpack.c.l.b16 %v1473
    %v3682 = vunpack.c.h.b16 %v1473
    %v3683 = vunpack.c.l.b16 %v1474
    %v3684 = vunpack.c.h.b16 %v1474
    %v3685 = vunpack.c.l.b16 %v1475
    %v3686 = vunpack.c.h.b16 %v1475
    %v3687 = vunpack.c.l.b16 %v1476
    %v3688 = vunpack.c.h.b16 %v1476
    %v3689 = vunpack.c.l.b16 %v1477
    %v3690 = vunpack.c.h.b16 %v1477
    %v3691 = vunpack.c.l.b16 %v1478
    %v3692 = vunpack.c.h.b16 %v1478
    %v3693 = vunpack.c.l.b16 %v1479
    %v3694 = vunpack.c.h.b16 %v1479
    %v3695 = vunpack.c.l.b16 %v1480
    %v3696 = vunpack.c.h.b16 %v1480
    %v3697 = vunpack.c.l.b16 %v1481
    %v3698 = vunpack.c.h.b16 %v1481
    %v3699 = vunpack.c.l.b16 %v1482
    %v3700 = vunpack.c.h.b16 %v1482
    %v3701 = vunpack.c.l.b16 %v1483
    %v3702 = vunpack.c.h.b16 %v1483
    %v3703 = vunpack.c.l.b16 %v1484
    %v3704 = vunpack.c.h.b16 %v1484
    %v3705 = vunpack.c.l.b16 %v1485
    %v3706 = vunpack.c.h.b16 %v1485
    %v3707 = vunpack.c.l.b16 %v1486
    %v3708 = vunpack.c.h.b16 %v1486
    %v3709 = vunpack.c.l.b16 %v1487
    %v3710 = vunpack.c.h.b16 %v1487
    %v3711 = vunpack.c.l.b16 %v1488
    %v3712 = vunpack.c.h.b16 %v1488
    %v3713 = vunpack.c.l.b16 %v1489
    %v3714 = vunpack.c.h.b16 %v1489
    %v3715 = vunpack.c.l.b16 %v1490
    %v3716 = vunpack.c.h.b16 %v1490
    %v3717 = vunpack.c.l.b16 %v1491
    %v3718 = vunpack.c.h.b16 %v1491
    %v3719 = vunpack.c.l.b16 %v1492
    %v3720 = vunpack.c.h.b16 %v1492
    %v3721 = vunpack.c.l.b16 %v1493
    %v3722 = vunpack.c.h.b16 %v1493
    %v3723 = vunpack.c.l.b16 %v1494
    %v3724 = vunpack.c.h.b16 %v1494
    %v3725 = vunpack.c.l.b16 %v1495
    %v3726 = vunpack.c.h.b16 %v1495
    %v3727 = vunpack.c.l.b16 %v1496
    %v3728 = vunpack.c.h.b16 %v1496
    %v3729 = vunpack.c.l.b16 %v1497
    %v3730 = vunpack.c.h.b16 %v1497
    %v3731 = vunpack.c.l.b16 %v1498
    %v3732 = vunpack.c.h.b16 %v1498
    %v3733 = vunpack.c.l.b16 %v1499
    %v3734 = vunpack.c.h.b16 %v1499
    %v3735 = vunpack.c.l.b16 %v1500
    %v3736 = vunpack.c.h.b16 %v1500
    %v3737 = vunpack.c.l.b16 %v1501
    %v3738 = vunpack.c.h.b16 %v1501
    %v3739 = vunpack.c.l.b16 %v1502
    %v3740 = vunpack.c.h.b16 %v1502
    %v3741 = vunpack.c.l.b16 %v1503
    %v3742 = vunpack.c.h.b16 %v1503
    %v3743 = vunpack.c.l.b16 %v1504
    %v3744 = vunpack.c.h.b16 %v1504
    %v3745 = vunpack.c.l.b16 %v1505
    %v3746 = vunpack.c.h.b16 %v1505
    %v3747 = vunpack.c.l.b16 %v1506
    %v3748 = vunpack.c.h.b16 %v1506
    %v3749 = vunpack.c.l.b16 %v1507
    %v3750 = vunpack.c.h.b16 %v1507
    %v3751 = vunpack.c.l.b16 %v1508
    %v3752 = vunpack.c.h.b16 %v1508
    %v3753 = vunpack.c.l.b16 %v1509
    %v3754 = vunpack.c.h.b16 %v1509
    %v3755 = vunpack.c.l.b16 %v1510
    %v3756 = vunpack.c.h.b16 %v1510
    %v3757 = vunpack.c.l.b16 %v1511
    %v3758 = vunpack.c.h.b16 %v1511
    %v3759 = vunpack.c.l.b16 %v1512
    %v3760 = vunpack.c.h.b16 %v1512
    %v3761 = vunpack.c.l.b16 %v1513
    %v3762 = vunpack.c.h.b16 %v1513
    %v3763 = vunpack.c.l.b16 %v1514
    %v3764 = vunpack.c.h.b16 %v1514
    %v3765 = vunpack.c.l.b16 %v1515
    %v3766 = vunpack.c.h.b16 %v1515
    %v3767 = vunpack.c.l.b16 %v1516
    %v3768 = vunpack.c.h.b16 %v1516
    %v3769 = vunpack.c.l.b16 %v1517
    %v3770 = vunpack.c.h.b16 %v1517
    %v3771 = vunpack.c.l.b16 %v1518
    %v3772 = vunpack.c.h.b16 %v1518
    %v3773 = vunpack.c.l.b16 %v1519
    %v3774 = vunpack.c.h.b16 %v1519
    %v3775 = vunpack.c.l.b16 %v1520
    %v3776 = vunpack.c.h.b16 %v1520
    %v3777 = vunpack.c.l.b16 %v1521
    %v3778 = vunpack.c.h.b16 %v1521
    %v3779 = vunpack.c.l.b16 %v1522
    %v3780 = vunpack.c.h.b16 %v1522
    %v3781 = vunpack.c.l.b16 %v1523
    %v3782 = vunpack.c.h.b16 %v1523
    %v3783 = vunpack.c.l.b16 %v1524
    %v3784 = vunpack.c.h.b16 %v1524
    %v3785 = vunpack.c.l.b16 %v1525
    %v3786 = vunpack.c.h.b16 %v1525
    %v3787 = vunpack.c.l.b16 %v1526
    %v3788 = vunpack.c.h.b16 %v1526
    %v3789 = vunpack.c.l.b16 %v1527
    %v3790 = vunpack.c.h.b16 %v1527
    %v3791 = vunpack.c.l.b16 %v1528
    %v3792 = vunpack.c.h.b16 %v1528
    %v3793 = vunpack.c.l.b16 %v1529
    %v3794 = vunpack.c.h.b16 %v1529
    %v3795 = vunpack.c.l.b16 %v1530
    %v3796 = vunpack.c.h.b16 %v1530
    %v3797 = vunpack.c.l.b16 %v1531
    %v3798 = vunpack.c.h.b16 %v1531
    %v3799 = vunpack.c.l.b16 %v1532
    %v3800 = vunpack.c.h.b16 %v1532
    %v3801 = vunpack.c.l.b16 %v1533
    %v3802 = vunpack.c.h.b16 %v1533
    %v3803 = vunpack.c.l.b16 %v1534
    %v3804 = vunpack.c.h.b16 %v1534
    %v3805 = vunpack.c.l.b16 %v1535
    %v3806 = vunpack.c.h.b16 %v1535
    %v3807 = vunpack.c.l.b16 %v1536
    %v3808 = vunpack.c.h.b16 %v1536
    %v3809 = vunpack.c.l.b16 %v1537
    %v3810 = vunpack.c.h.b16 %v1537
    %v3811 = vunpack.c.l.b16 %v1538
    %v3812 = vunpack.c.h.b16 %v1538
    %v3813 = vunpack.c.l.b16 %v1539
    %v3814 = vunpack.c.h.b16 %v1539
    %v3815 = vunpack.c.l.b16 %v1540
    %v3816 = vunpack.c.h.b16 %v1540
    %v3817 = vunpack.c.l.b16 %v1541
    %v3818 = vunpack.c.h.b16 %v1541
    %v3819 = vunpack.c.l.b16 %v1542
    %v3820 = vunpack.c.h.b16 %v1542
    %v3821 = vunpack.c.l.b16 %v1543
    %v3822 = vunpack.c.h.b16 %v1543
    %v3823 = vunpack.c.l.b16 %v1544
    %v3824 = vunpack.c.h.b16 %v1544
    %v3825 = vunpack.c.l.b16 %v1545
    %v3826 = vunpack.c.h.b16 %v1545
    %v3827 = vunpack.c.l.b16 %v1546
    %v3828 = vunpack.c.h.b16 %v1546
    %v3829 = vunpack.c.l.b16 %v1547
    %v3830 = vunpack.c.h.b16 %v1547
    %v3831 = vunpack.c.l.b16 %v1548
    %v3832 = vunpack.c.h.b16 %v1548
    %v3833 = vunpack.c.l.b16 %v1549
    %v3834 = vunpack.c.h.b16 %v1549
    %v3835 = vunpack.c.l.b16 %v1550
    %v3836 = vunpack.c.h.b16 %v1550
    %v3837 = vunpack.c.l.b16 %v1551
    %v3838 = vunpack.c.h.b16 %v1551
    %v3839 = vunpack.c.l.b16 %v1552
    %v3840 = vunpack.c.h.b16 %v1552
    %v3841 = vunpack.c.l.b16 %v1553
    %v3842 = vunpack.c.h.b16 %v1553
    %v3843 = vunpack.c.l.b16 %v1554
    %v3844 = vunpack.c.h.b16 %v1554
    %v3845 = vunpack.c.l.b16 %v1555
    %v3846 = vunpack.c.h.b16 %v1555
    %v3847 = vunpack.c.l.b16 %v1556
    %v3848 = vunpack.c.h.b16 %v1556
    %v3849 = vunpack.c.l.b16 %v1557
    %v3850 = vunpack.c.h.b16 %v1557
    %v3851 = vunpack.c.l.b16 %v1558
    %v3852 = vunpack.c.h.b16 %v1558
    %v3853 = vunpack.c.l.b16 %v1559
    %v3854 = vunpack.c.h.b16 %v1559
    %v3855 = vunpack.c.l.b16 %v1560
    %v3856 = vunpack.c.h.b16 %v1560
    %v3857 = vunpack.c.l.b16 %v1561
    %v3858 = vunpack.c.h.b16 %v1561
    %v3859 = vunpack.c.l.b16 %v1562
    %v3860 = vunpack.c.h.b16 %v1562
    %v3861 = vunpack.c.l.b16 %v1563
    %v3862 = vunpack.c.h.b16 %v1563
    %v3863 = vunpack.c.l.b16 %v1564
    %v3864 = vunpack.c.h.b16 %v1564
    %v3865 = vunpack.c.l.b16 %v1565
    %v3866 = vunpack.c.h.b16 %v1565
    %v3867 = vunpack.c.l.b16 %v1566
    %v3868 = vunpack.c.h.b16 %v1566
    %v3869 = vunpack.c.l.b16 %v1567
    %v3870 = vunpack.c.h.b16 %v1567
    %v3871 = vunpack.c.l.b16 %v1568
    %v3872 = vunpack.c.h.b16 %v1568
    %v3873 = vunpack.c.l.b16 %v1569
    %v3874 = vunpack.c.h.b16 %v1569
    %v3875 = vunpack.c.l.b16 %v1570
    %v3876 = vunpack.c.h.b16 %v1570
    %v3877 = vunpack.c.l.b16 %v1571
    %v3878 = vunpack.c.h.b16 %v1571
    %v3879 = vunpack.c.l.b16 %v1572
    %v3880 = vunpack.c.h.b16 %v1572
    %v3881 = vunpack.c.l.b16 %v1573
    %v3882 = vunpack.c.h.b16 %v1573
    %v3883 = vunpack.c.l.b16 %v1574
    %v3884 = vunpack.c.h.b16 %v1574
    %v3885 = vunpack.c.l.b16 %v1575
    %v3886 = vunpack.c.h.b16 %v1575
    %v3887 = vunpack.c.l.b16 %v1576
    %v3888 = vunpack.c.h.b16 %v1576
    %v3889 = vunpack.c.l.b16 %v1577
    %v3890 = vunpack.c.h.b16 %v1577
    %v3891 = vunpack.c.l.b16 %v1578
    %v3892 = vunpack.c.h.b16 %v1578
    %v3893 = vunpack.c.l.b16 %v1579
    %v3894 = vunpack.c.h.b16 %v1579
    %v3895 = vunpack.c.l.b16 %v1580
    %v3896 = vunpack.c.h.b16 %v1580
    %v3897 = vunpack.c.l.b16 %v1581
    %v3898 = vunpack.c.h.b16 %v1581
    %v3899 = vunpack.c.l.b16 %v1582
    %v3900 = vunpack.c.h.b16 %v1582
    %v3901 = vunpack.c.l.b16 %v1583
    %v3902 = vunpack.c.h.b16 %v1583
    %v3903 = vunpack.c.l.b16 %v1584
    %v3904 = vunpack.c.h.b16 %v1584
    %v3905 = vunpack.c.l.b16 %v1585
    %v3906 = vunpack.c.h.b16 %v1585
    %v3907 = vunpack.c.l.b16 %v1586
    %v3908 = vunpack.c.h.b16 %v1586
    %v3909 = vunpack.c.l.b16 %v1587
    %v3910 = vunpack.c.h.b16 %v1587
    %v3911 = vunpack.c.l.b16 %v1588
    %v3912 = vunpack.c.h.b16 %v1588
    %v3913 = vunpack.c.l.b16 %v1589
    %v3914 = vunpack.c.h.b16 %v1589
    %v3915 = vunpack.c.l.b16 %v1590
    %v3916 = vunpack.c.h.b16 %v1590
    %v3917 = vunpack.c.l.b16 %v1591
    %v3918 = vunpack.c.h.b16 %v1591
    %v3919 = vunpack.c.l.b16 %v1592
    %v3920 = vunpack.c.h.b16 %v1592
    %v3921 = vunpack.c.l.b16 %v1593
    %v3922 = vunpack.c.h.b16 %v1593
    %v3923 = vunpack.c.l.b16 %v1594
    %v3924 = vunpack.c.h.b16 %v1594
    %v3925 = vunpack.c.l.b16 %v1595
    %v3926 = vunpack.c.h.b16 %v1595
    %v3927 = vunpack.c.l.b16 %v1596
    %v3928 = vunpack.c.h.b16 %v1596
    %v3929 = vunpack.c.l.b16 %v1597
    %v3930 = vunpack.c.h.b16 %v1597
    %v3931 = vunpack.c.l.b16 %v1598
    %v3932 = vunpack.c.h.b16 %v1598
    %v3933 = vunpack.c.l.b16 %v1599
    %v3934 = vunpack.c.h.b16 %v1599
    %v3935 = vunpack.c.l.b16 %v1600
    %v3936 = vunpack.c.h.b16 %v1600
    %v3937 = vunpack.c.l.b16 %v1601
    %v3938 = vunpack.c.h.b16 %v1601
    %v3939 = vunpack.c.l.b16 %v1602
    %v3940 = vunpack.c.h.b16 %v1602
    %v3941 = vunpack.c.l.b16 %v1603
    %v3942 = vunpack.c.h.b16 %v1603
    %v3943 = vunpack.c.l.b16 %v1604
    %v3944 = vunpack.c.h.b16 %v1604
    %v3945 = vunpack.c.l.b16 %v1605
    %v3946 = vunpack.c.h.b16 %v1605
    %v3947 = vunpack.c.l.b16 %v1606
    %v3948 = vunpack.c.h.b16 %v1606
    %v3949 = vunpack.c.l.b16 %v1607
    %v3950 = vunpack.c.h.b16 %v1607
    %v3951 = vunpack.c.l.b16 %v1608
    %v3952 = vunpack.c.h.b16 %v1608
    %v3953 = vunpack.c.l.b16 %v1609
    %v3954 = vunpack.c.h.b16 %v1609
    %v3955 = vunpack.c.l.b16 %v1610
    %v3956 = vunpack.c.h.b16 %v1610
    %v3957 = vunpack.c.l.b16 %v1611
    %v3958 = vunpack.c.h.b16 %v1611
    %v3959 = vunpack.c.l.b16 %v1612
    %v3960 = vunpack.c.h.b16 %v1612
    %v3961 = vunpack.c.l.b16 %v1613
    %v3962 = vunpack.c.h.b16 %v1613
    %v3963 = vunpack.c.l.b16 %v1614
    %v3964 = vunpack.c.h.b16 %v1614
    %v3965 = vunpack.c.l.b16 %v1615
    %v3966 = vunpack.c.h.b16 %v1615
    %v3967 = vunpack.c.l.b16 %v1616
    %v3968 = vunpack.c.h.b16 %v1616
    %v3969 = vunpack.c.l.b16 %v1617
    %v3970 = vunpack.c.h.b16 %v1617
    %v3971 = vunpack.c.l.b16 %v1618
    %v3972 = vunpack.c.h.b16 %v1618
    %v3973 = vunpack.c.l.b16 %v1619
    %v3974 = vunpack.c.h.b16 %v1619
    %v3975 = vunpack.c.l.b16 %v1620
    %v3976 = vunpack.c.h.b16 %v1620
    %v3977 = vunpack.c.l.b16 %v1621
    %v3978 = vunpack.c.h.b16 %v1621
    %v3979 = vunpack.c.l.b16 %v1622
    %v3980 = vunpack.c.h.b16 %v1622
    %v3981 = vunpack.c.l.b16 %v1623
    %v3982 = vunpack.c.h.b16 %v1623
    %v3983 = vunpack.c.l.b16 %v1624
    %v3984 = vunpack.c.h.b16 %v1624
    %v3985 = vunpack.c.l.b16 %v1625
    %v3986 = vunpack.c.h.b16 %v1625
    %v3987 = vunpack.c.l.b16 %v1626
    %v3988 = vunpack.c.h.b16 %v1626
    %v3989 = vunpack.c.l.b16 %v1627
    %v3990 = vunpack.c.h.b16 %v1627
    %v3991 = vunpack.c.l.b16 %v1628
    %v3992 = vunpack.c.h.b16 %v1628
    %v3993 = vunpack.c.l.b16 %v1629
    %v3994 = vunpack.c.h.b16 %v1629
    %v3995 = vunpack.c.l.b16 %v1630
    %v3996 = vunpack.c.h.b16 %v1630
    %v3997 = vunpack.c.l.b16 %v1631
    %v3998 = vunpack.c.h.b16 %v1631
    %v3999 = vunpack.c.l.b16 %v1632
    %v4000 = vunpack.c.h.b16 %v1632
    %v4001 = vunpack.c.l.b16 %v1633
    %v4002 = vunpack.c.h.b16 %v1633
    %v4003 = vunpack.c.l.b16 %v1634
    %v4004 = vunpack.c.h.b16 %v1634
    %v4005 = vunpack.c.l.b16 %v1635
    %v4006 = vunpack.c.h.b16 %v1635
    %v4007 = vunpack.c.l.b16 %v1636
    %v4008 = vunpack.c.h.b16 %v1636
    %v4009 = vunpack.c.l.b16 %v1637
    %v4010 = vunpack.c.h.b16 %v1637
    %v4011 = vunpack.c.l.b16 %v1638
    %v4012 = vunpack.c.h.b16 %v1638
    %v4013 = vunpack.c.l.b16 %v1639
    %v4014 = vunpack.c.h.b16 %v1639
    %v4015 = vunpack.c.l.b16 %v1640
    %v4016 = vunpack.c.h.b16 %v1640
    %v4017 = vunpack.c.l.b16 %v1641
    %v4018 = vunpack.c.h.b16 %v1641
    %v4019 = vunpack.c.l.b16 %v1642
    %v4020 = vunpack.c.h.b16 %v1642
    %v4021 = vunpack.c.l.b16 %v1643
    %v4022 = vunpack.c.h.b16 %v1643
    %v4023 = vunpack.c.l.b16 %v1644
    %v4024 = vunpack.c.h.b16 %v1644
    %v4025 = vunpack.c.l.b16 %v1645
    %v4026 = vunpack.c.h.b16 %v1645
    %v4027 = vunpack.c.l.b16 %v1646
    %v4028 = vunpack.c.h.b16 %v1646
    %v4029 = vunpack.c.l.b16 %v1647
    %v4030 = vunpack.c.h.b16 %v1647
    %v4031 = vunpack.c.l.b16 %v1648
    %v4032 = vunpack.c.h.b16 %v1648
    %v4033 = vunpack.c.l.b16 %v1649
    %v4034 = vunpack.c.h.b16 %v1649
    %v4035 = vunpack.c.l.b16 %v1650
    %v4036 = vunpack.c.h.b16 %v1650
    %v4037 = vunpack.c.l.b16 %v1651
    %v4038 = vunpack.c.h.b16 %v1651
    %v4039 = vunpack.c.l.b16 %v1652
    %v4040 = vunpack.c.h.b16 %v1652
    %v4041 = vunpack.c.l.b16 %v1653
    %v4042 = vunpack.c.h.b16 %v1653
    %v4043 = vunpack.c.l.b16 %v1654
    %v4044 = vunpack.c.h.b16 %v1654
    %v4045 = vunpack.c.l.b16 %v1655
    %v4046 = vunpack.c.h.b16 %v1655
    %v4047 = vunpack.c.l.b16 %v1656
    %v4048 = vunpack.c.h.b16 %v1656
    %v4049 = vunpack.c.l.b16 %v1657
    %v4050 = vunpack.c.h.b16 %v1657
    %v4051 = vunpack.c.l.b16 %v1658
    %v4052 = vunpack.c.h.b16 %v1658
    %v4053 = vunpack.c.l.b16 %v1659
    %v4054 = vunpack.c.h.b16 %v1659
    %v4055 = vunpack.c.l.b16 %v1660
    %v4056 = vunpack.c.h.b16 %v1660
    %v4057 = vunpack.c.l.b16 %v1661
    %v4058 = vunpack.c.h.b16 %v1661
    %v4059 = vunpack.c.l.b16 %v1662
    %v4060 = vunpack.c.h.b16 %v1662
    %v4061 = vunpack.c.l.b16 %v1663
    %v4062 = vunpack.c.h.b16 %v1663
    %v4063 = vunpack.c.l.b16 %v1664
    %v4064 = vunpack.c.h.b16 %v1664
    %v4065 = vunpack.c.l.b16 %v1665
    %v4066 = vunpack.c.h.b16 %v1665
    %v4067 = vunpack.c.l.b16 %v1666
    %v4068 = vunpack.c.h.b16 %v1666
    %v4069 = vunpack.c.l.b16 %v1667
    %v4070 = vunpack.c.h.b16 %v1667
    %v4071 = vunpack.c.l.b16 %v1668
    %v4072 = vunpack.c.h.b16 %v1668
    %v4073 = vunpack.c.l.b16 %v1669
    %v4074 = vunpack.c.h.b16 %v1669
    %v4075 = vunpack.c.l.b16 %v1670
    %v4076 = vunpack.c.h.b16 %v1670
    %v4077 = vunpack.c.l.b16 %v1671
    %v4078 = vunpack.c.h.b16 %v1671
    %v4079 = vunpack.c.l.b16 %v1672
    %v4080 = vunpack.c.h.b16 %v1672
    %v4081 = vunpack.c.l.b16 %v1673
    %v4082 = vunpack.c.h.b16 %v1673
    %v4083 = vunpack.c.l.b16 %v1674
    %v4084 = vunpack.c.h.b16 %v1674
    %v4085 = vunpack.c.l.b16 %v1675
    %v4086 = vunpack.c.h.b16 %v1675
    %v4087 = vunpack.c.l.b16 %v1676
    %v4088 = vunpack.c.h.b16 %v1676
    %v4089 = vunpack.c.l.b16 %v1677
    %v4090 = vunpack.c.h.b16 %v1677
    %v4091 = vunpack.c.l.b16 %v1678
    %v4092 = vunpack.c.h.b16 %v1678
    %v4093 = vunpack.c.l.b16 %v1679
    %v4094 = vunpack.c.h.b16 %v1679
    %v4095 = vunpack.c.l.b16 %v1680
    %v4096 = vunpack.c.h.b16 %v1680
    %v4097 = vunpack.c.l.b16 %v1681
    %v4098 = vunpack.c.h.b16 %v1681
    %v4099 = vunpack.c.l.b16 %v1682
    %v4100 = vunpack.c.h.b16 %v1682
    %v4101 = vunpack.c.l.b16 %v1683
    %v4102 = vunpack.c.h.b16 %v1683
    %v4103 = vunpack.c.l.b16 %v1684
    %v4104 = vunpack.c.h.b16 %v1684
    %v4105 = vunpack.c.l.b16 %v1685
    %v4106 = vunpack.c.h.b16 %v1685
    %v4107 = vunpack.c.l.b16 %v1686
    %v4108 = vunpack.c.h.b16 %v1686
    %v4109 = vunpack.c.l.b16 %v1687
    %v4110 = vunpack.c.h.b16 %v1687
    %v4111 = vunpack.c.l.b16 %v1688
    %v4112 = vunpack.c.h.b16 %v1688
    %v4113 = vunpack.c.l.b16 %v1689
    %v4114 = vunpack.c.h.b16 %v1689
    %v4115 = vunpack.c.l.b16 %v1690
    %v4116 = vunpack.c.h.b16 %v1690
    %v4117 = vunpack.c.l.b16 %v1691
    %v4118 = vunpack.c.h.b16 %v1691
    %v4119 = vunpack.c.l.b16 %v1692
    %v4120 = vunpack.c.h.b16 %v1692
    %v4121 = vunpack.c.l.b16 %v1693
    %v4122 = vunpack.c.h.b16 %v1693
    %v4123 = vunpack.c.l.b16 %v1694
    %v4124 = vunpack.c.h.b16 %v1694
    %v4125 = vunpack.c.l.b16 %v1695
    %v4126 = vunpack.c.h.b16 %v1695
    %v4127 = vunpack.c.l.b16 %v1696
    %v4128 = vunpack.c.h.b16 %v1696
    %v4129 = vunpack.c.l.b16 %v1697
    %v4130 = vunpack.c.h.b16 %v1697
    %v4131 = vunpack.c.l.b16 %v1698
    %v4132 = vunpack.c.h.b16 %v1698
    %v4133 = vunpack.c.l.b16 %v1699
    %v4134 = vunpack.c.h.b16 %v1699
    %v4135 = vunpack.c.l.b16 %v1700
    %v4136 = vunpack.c.h.b16 %v1700
    %v4137 = vunpack.c.l.b16 %v1701
    %v4138 = vunpack.c.h.b16 %v1701
    %v4139 = vunpack.c.l.b16 %v1702
    %v4140 = vunpack.c.h.b16 %v1702
    %v4141 = vunpack.c.l.b16 %v1703
    %v4142 = vunpack.c.h.b16 %v1703
    %v4143 = vunpack.c.l.b16 %v1704
    %v4144 = vunpack.c.h.b16 %v1704
    %v4145 = vunpack.c.l.b16 %v1705
    %v4146 = vunpack.c.h.b16 %v1705
    %v4147 = vunpack.c.l.b16 %v1706
    %v4148 = vunpack.c.h.b16 %v1706
    %v4149 = vunpack.c.l.b16 %v1707
    %v4150 = vunpack.c.h.b16 %v1707
    %v4151 = vunpack.c.l.b16 %v1708
    %v4152 = vunpack.c.h.b16 %v1708
    %v4153 = vunpack.c.l.b16 %v1709
    %v4154 = vunpack.c.h.b16 %v1709
    %v4155 = vunpack.c.l.b16 %v1710
    %v4156 = vunpack.c.h.b16 %v1710
    %v4157 = vunpack.c.l.b16 %v1711
    %v4158 = vunpack.c.h.b16 %v1711
    %v4159 = vunpack.c.l.b16 %v1712
    %v4160 = vunpack.c.h.b16 %v1712
    %v4161 = vunpack.c.l.b16 %v1713
    %v4162 = vunpack.c.h.b16 %v1713
    %v4163 = vunpack.c.l.b16 %v1714
    %v4164 = vunpack.c.h.b16 %v1714
    %v4165 = vunpack.c.l.b16 %v1715
    %v4166 = vunpack.c.h.b16 %v1715
    %v4167 = vunpack.c.l.b16 %v1716
    %v4168 = vunpack.c.h.b16 %v1716
    %v4169 = vunpack.c.l.b16 %v1717
    %v4170 = vunpack.c.h.b16 %v1717
    %v4171 = vunpack.c.l.b16 %v1718
    %v4172 = vunpack.c.h.b16 %v1718
    %v4173 = vunpack.c.l.b16 %v1719
    %v4174 = vunpack.c.h.b16 %v1719
    %v4175 = vunpack.c.l.b16 %v1720
    %v4176 = vunpack.c.h.b16 %v1720
    %v4177 = vunpack.c.l.b16 %v1721
    %v4178 = vunpack.c.h.b16 %v1721
    %v4179 = vunpack.c.l.b16 %v1722
    %v4180 = vunpack.c.h.b16 %v1722
    %v4181 = vunpack.c.l.b16 %v1723
    %v4182 = vunpack.c.h.b16 %v1723
    %v4183 = vunpack.c.l.b16 %v1724
    %v4184 = vunpack.c.h.b16 %v1724
    %v4185 = vunpack.c.l.b16 %v1725
    %v4186 = vunpack.c.h.b16 %v1725
    %v4187 = vunpack.c.l.b16 %v1726
    %v4188 = vunpack.c.h.b16 %v1726
    %v4189 = vunpack.c.l.b16 %v1727
    %v4190 = vunpack.c.h.b16 %v1727
    %v4191 = vunpack.c.l.b16 %v1728
    %v4192 = vunpack.c.h.b16 %v1728
    %v4193 = vunpack.c.l.b16 %v1729
    %v4194 = vunpack.c.h.b16 %v1729
    %v4195 = vunpack.c.l.b16 %v1730
    %v4196 = vunpack.c.h.b16 %v1730
    %v4197 = vunpack.c.l.b16 %v1731
    %v4198 = vunpack.c.h.b16 %v1731
    %v4199 = vunpack.c.l.b16 %v1732
    %v4200 = vunpack.c.h.b16 %v1732
    %v4201 = vunpack.c.l.b16 %v1733
    %v4202 = vunpack.c.h.b16 %v1733
    %v4203 = vunpack.c.l.b16 %v1734
    %v4204 = vunpack.c.h.b16 %v1734
    %v4205 = vunpack.c.l.b16 %v1735
    %v4206 = vunpack.c.h.b16 %v1735
    %v4207 = vunpack.c.l.b16 %v1736
    %v4208 = vunpack.c.h.b16 %v1736
    %v4209 = vunpack.c.l.b16 %v1737
    %v4210 = vunpack.c.h.b16 %v1737
    %v4211 = vunpack.c.l.b16 %v1738
    %v4212 = vunpack.c.h.b16 %v1738
    %v4213 = vunpack.c.l.b16 %v1739
    %v4214 = vunpack.c.h.b16 %v1739
    %v4215 = vunpack.c.l.b16 %v1740
    %v4216 = vunpack.c.h.b16 %v1740
    %v4217 = vunpack.c.l.b16 %v1741
    %v4218 = vunpack.c.h.b16 %v1741
    %v4219 = vunpack.c.l.b16 %v1742
    %v4220 = vunpack.c.h.b16 %v1742
    %v4221 = vunpack.c.l.b16 %v1743
    %v4222 = vunpack.c.h.b16 %v1743
    %v4223 = vunpack.c.l.b16 %v1744
    %v4224 = vunpack.c.h.b16 %v1744
    %v4225 = vunpack.c.l.b16 %v1745
    %v4226 = vunpack.c.h.b16 %v1745
    %v4227 = vunpack.c.l.b16 %v1746
    %v4228 = vunpack.c.h.b16 %v1746
    %v4229 = vunpack.c.l.b16 %v1747
    %v4230 = vunpack.c.h.b16 %v1747
    %v4231 = vunpack.c.l.b16 %v1748
    %v4232 = vunpack.c.h.b16 %v1748
    %v4233 = vunpack.c.l.b16 %v1749
    %v4234 = vunpack.c.h.b16 %v1749
    %v4235 = vunpack.c.l.b16 %v1750
    %v4236 = vunpack.c.h.b16 %v1750
    %v4237 = vunpack.c.l.b16 %v1751
    %v4238 = vunpack.c.h.b16 %v1751
    %v4239 = vunpack.c.l.b16 %v1752
    %v4240 = vunpack.c.h.b16 %v1752
    %v4241 = vunpack.c.l.b16 %v1753
    %v4242 = vunpack.c.h.b16 %v1753
    %v4243 = vunpack.c.l.b16 %v1754
    %v4244 = vunpack.c.h.b16 %v1754
    %v4245 = vunpack.c.l.b16 %v1755
    %v4246 = vunpack.c.h.b16 %v1755
    %v4247 = vunpack.c.l.b16 %v1756
    %v4248 = vunpack.c.h.b16 %v1756
    %v4249 = vunpack.c.l.b16 %v1757
    %v4250 = vunpack.c.h.b16 %v1757
    %v4251 = vunpack.c.l.b16 %v1758
    %v4252 = vunpack.c.h.b16 %v1758
    %v4253 = vunpack.c.l.b16 %v1759
    %v4254 = vunpack.c.h.b16 %v1759
    %v4255 = vunpack.c.l.b16 %v1760
    %v4256 = vunpack.c.h.b16 %v1760
    %v4257 = vunpack.c.l.b16 %v1761
    %v4258 = vunpack.c.h.b16 %v1761
    %v4259 = vunpack.c.l.b16 %v1762
    %v4260 = vunpack.c.h.b16 %v1762
    %v4261 = vunpack.c.l.b16 %v1763
    %v4262 = vunpack.c.h.b16 %v1763
    %v4263 = vunpack.c.l.b16 %v1764
    %v4264 = vunpack.c.h.b16 %v1764
    %v4265 = vunpack.c.l.b16 %v1765
    %v4266 = vunpack.c.h.b16 %v1765
    %v4267 = vunpack.c.l.b16 %v1766
    %v4268 = vunpack.c.h.b16 %v1766
    %v4269 = vunpack.c.l.b16 %v1767
    %v4270 = vunpack.c.h.b16 %v1767
    %v4271 = vunpack.c.l.b16 %v1768
    %v4272 = vunpack.c.h.b16 %v1768
    %v4273 = vpack.c.b16 %v2683, %v2673
    %v4274 = vpack.c.b16 %v2684, %v2674
    %v4275 = vpack.c.b16 %v2685, %v2675
    %v4276 = vpack.c.b16 %v2686, %v2676
    %v4277 = vpack.c.b16 %v2687, %v2677
    %v4278 = vpack.c.b16 %v2688, %v2678
    %v4279 = vpack.c.b16 %v2689, %v2679
    %v4280 = vpack.c.b16 %v2690, %v2680
    %v4281 = vpack.c.b16 %v2691, %v2681
    %v4282 = vpack.c.b16 %v2692, %v2682
    %v4283 = vpack.c.b16 %v2703, %v2693
    %v4284 = vpack.c.b16 %v2704, %v2694
    %v4285 = vpack.c.b16 %v2705, %v2695
    %v4286 = vpack.c.b16 %v2706, %v2696
    %v4287 = vpack.c.b16 %v2707, %v2697
    %v4288 = vpack.c.b16 %v2708, %v2698
    %v4289 = vpack.c.b16 %v2709, %v2699
    %v4290 = vpack.c.b16 %v2710, %v2700
    %v4291 = vpack.c.b16 %v2711, %v2701
    %v4292 = vpack.c.b16 %v2712, %v2702
    %v4293 = vpack.c.b16 %v2723, %v2713
    %v4294 = vpack.c.b16 %v2724, %v2714
    %v4295 = vpack.c.b16 %v2725, %v2715
    %v4296 = vpack.c.b16 %v2726, %v2716
    %v4297 = vpack.c.b16 %v2727, %v2717
    %v4298 = vpack.c.b16 %v2728, %v2718
    %v4299 = vpack.c.b16 %v2729, %v2719
    %v4300 = vpack.c.b16 %v2730, %v2720
    %v4301 = vpack.c.b16 %v2731, %v2721
    %v4302 = vpack.c.b16 %v2732, %v2722
    %v4303 = vpack.c.b16 %v2743, %v2733
    %v4304 = vpack.c.b16 %v2744, %v2734
    %v4305 = vpack.c.b16 %v2745, %v2735
    %v4306 = vpack.c.b16 %v2746, %v2736
    %v4307 = vpack.c.b16 %v2747, %v2737
    %v4308 = vpack.c.b16 %v2748, %v2738
    %v4309 = vpack.c.b16 %v2749, %v2739
    %v4310 = vpack.c.b16 %v2750, %v2740
    %v4311 = vpack.c.b16 %v2751, %v2741
    %v4312 = vpack.c.b16 %v2752, %v2742
    %v4313 = vpack.c.b16 %v2763, %v2753
    %v4314 = vpack.c.b16 %v2764, %v2754
    %v4315 = vpack.c.b16 %v2765, %v2755
    %v4316 = vpack.c.b16 %v2766, %v2756
    %v4317 = vpack.c.b16 %v2767, %v2757
    %v4318 = vpack.c.b16 %v2768, %v2758
    %v4319 = vpack.c.b16 %v2769, %v2759
    %v4320 = vpack.c.b16 %v2770, %v2760
    %v4321 = vpack.c.b16 %v2771, %v2761
    %v4322 = vpack.c.b16 %v2772, %v2762
    %v4323 = vpack.c.b16 %v2783, %v2773
    %v4324 = vpack.c.b16 %v2784, %v2774
    %v4325 = vpack.c.b16 %v2785, %v2775
    %v4326 = vpack.c.b16 %v2786, %v2776
    %v4327 = vpack.c.b16 %v2787, %v2777
    %v4328 = vpack.c.b16 %v2788, %v2778
    %v4329 = vpack.c.b16 %v2789, %v2779
    %v4330 = vpack.c.b16 %v2790, %v2780
    %v4331 = vpack.c.b16 %v2791, %v2781
    %v4332 = vpack.c.b16 %v2792, %v2782
    %v4333 = vpack.c.b16 %v2803, %v2793
    %v4334 = vpack.c.b16 %v2804, %v2794
    %v4335 = vpack.c.b16 %v2805, %v2795
    %v4336 = vpack.c.b16 %v2806, %v2796
    %v4337 = vpack.c.b16 %v2807, %v2797
    %v4338 = vpack.c.b16 %v2808, %v2798
    %v4339 = vpack.c.b16 %v2809, %v2799
    %v4340 = vpack.c.b16 %v2810, %v2800
    %v4341 = vpack.c.b16 %v2811, %v2801
    %v4342 = vpack.c.b16 %v2812, %v2802
    %v4343 = vpack.c.b16 %v2823, %v2813
    %v4344 = vpack.c.b16 %v2824, %v2814
    %v4345 = vpack.c.b16 %v2825, %v2815
    %v4346 = vpack.c.b16 %v2826, %v2816
    %v4347 = vpack.c.b16 %v2827, %v2817
    %v4348 = vpack.c.b16 %v2828, %v2818
    %v4349 = vpack.c.b16 %v2829, %v2819
    %v4350 = vpack.c.b16 %v2830, %v2820
    %v4351 = vpack.c.b16 %v2831, %v2821
    %v4352 = vpack.c.b16 %v2832, %v2822
    %v4353 = vpack.c.b16 %v2843, %v2833
    %v4354 = vpack.c.b16 %v2844, %v2834
    %v4355 = vpack.c.b16 %v2845, %v2835
    %v4356 = vpack.c.b16 %v2846, %v2836
    %v4357 = vpack.c.b16 %v2847, %v2837
    %v4358 = vpack.c.b16 %v2848, %v2838
    %v4359 = vpack.c.b16 %v2849, %v2839
    %v4360 = vpack.c.b16 %v2850, %v2840
    %v4361 = vpack.c.b16 %v2851, %v2841
    %v4362 = vpack.c.b16 %v2852, %v2842
    %v4363 = vpack.c.b16 %v2863, %v2853
    %v4364 = vpack.c.b16 %v2864, %v2854
    %v4365 = vpack.c.b16 %v2865, %v2855
    %v4366 = vpack.c.b16 %v2866, %v2856
    %v4367 = vpack.c.b16 %v2867, %v2857
    %v4368 = vpack.c.b16 %v2868, %v2858
    %v4369 = vpack.c.b16 %v2869, %v2859
    %v4370 = vpack.c.b16 %v2870, %v2860
    %v4371 = vpack.c.b16 %v2871, %v2861
    %v4372 = vpack.c.b16 %v2872, %v2862
    %v4373 = vpack.c.b16 %v2883, %v2873
    %v4374 = vpack.c.b16 %v2884, %v2874
    %v4375 = vpack.c.b16 %v2885, %v2875
    %v4376 = vpack.c.b16 %v2886, %v2876
    %v4377 = vpack.c.b16 %v2887, %v2877
    %v4378 = vpack.c.b16 %v2888, %v2878
    %v4379 = vpack.c.b16 %v2889, %v2879
    %v4380 = vpack.c.b16 %v2890, %v2880
    %v4381 = vpack.c.b16 %v2891, %v2881
    %v4382 = vpack.c.b16 %v2892, %v2882
    %v4383 = vpack.c.b16 %v2903, %v2893
    %v4384 = vpack.c.b16 %v2904, %v2894
    %v4385 = vpack.c.b16 %v2905, %v2895
    %v4386 = vpack.c.b16 %v2906, %v2896
    %v4387 = vpack.c.b16 %v2907, %v2897
    %v4388 = vpack.c.b16 %v2908, %v2898
    %v4389 = vpack.c.b16 %v2909, %v2899
    %v4390 = vpack.c.b16 %v2910, %v2900
    %v4391 = vpack.c.b16 %v2911, %v2901
    %v4392 = vpack.c.b16 %v2912, %v2902
    %v4393 = vpack.c.b16 %v2923, %v2913
    %v4394 = vpack.c.b16 %v2924, %v2914
    %v4395 = vpack.c.b16 %v2925, %v2915
    %v4396 = vpack.c.b16 %v2926, %v2916
    %v4397 = vpack.c.b16 %v2927, %v2917
    %v4398 = vpack.c.b16 %v2928, %v2918
    %v4399 = vpack.c.b16 %v2929, %v2919
    %v4400 = vpack.c.b16 %v2930, %v2920
    %v4401 = vpack.c.b16 %v2931, %v2921
    %v4402 = vpack.c.b16 %v2932, %v2922
    %v4403 = vpack.c.b16 %v2943, %v2933
    %v4404 = vpack.c.b16 %v2944, %v2934
    %v4405 = vpack.c.b16 %v2945, %v2935
    %v4406 = vpack.c.b16 %v2946, %v2936
    %v4407 = vpack.c.b16 %v2947, %v2937
    %v4408 = vpack.c.b16 %v2948, %v2938
    %v4409 = vpack.c.b16 %v2949, %v2939
    %v4410 = vpack.c.b16 %v2950, %v2940
    %v4411 = vpack.c.b16 %v2951, %v2941
    %v4412 = vpack.c.b16 %v2952, %v2942
    %v4413 = vpack.c.b16 %v2963, %v2953
    %v4414 = vpack.c.b16 %v2964, %v2954
    %v4415 = vpack.c.b16 %v2965, %v2955
    %v4416 = vpack.c.b16 %v2966, %v2956
    %v4417 = vpack.c.b16 %v2967, %v2957
    %v4418 = vpack.c.b16 %v2968, %v2958
    %v4419 = vpack.c.b16 %v2969, %v2959
    %v4420 = vpack.c.b16 %v2970, %v2960
    %v4421 = vpack.c.b16 %v2971, %v2961
    %v4422 = vpack.c.b16 %v2972, %v2962
    %v4423 = vpack.c.b16 %v2983, %v2973
    %v4424 = vpack.c.b16 %v2984, %v2974
    %v4425 = vpack.c.b16 %v2985, %v2975
    %v4426 = vpack.c.b16 %v2986, %v2976
    %v4427 = vpack.c.b16 %v2987, %v2977
    %v4428 = vpack.c.b16 %v2988, %v2978
    %v4429 = vpack.c.b16 %v2989, %v2979
    %v4430 = vpack.c.b16 %v2990, %v2980
    %v4431 = vpack.c.b16 %v2991, %v2981
    %v4432 = vpack.c.b16 %v2992, %v2982
    %v4433 = vpack.c.b16 %v3003, %v2993
    %v4434 = vpack.c.b16 %v3004, %v2994
    %v4435 = vpack.c.b16 %v3005, %v2995
    %v4436 = vpack.c.b16 %v3006, %v2996
    %v4437 = vpack.c.b16 %v3007, %v2997
    %v4438 = vpack.c.b16 %v3008, %v2998
    %v4439 = vpack.c.b16 %v3009, %v2999
    %v4440 = vpack.c.b16 %v3010, %v3000
    %v4441 = vpack.c.b16 %v3011, %v3001
    %v4442 = vpack.c.b16 %v3012, %v3002
    %v4443 = vpack.c.b16 %v3023, %v3013
    %v4444 = vpack.c.b16 %v3024, %v3014
    %v4445 = vpack.c.b16 %v3025, %v3015
    %v4446 = vpack.c.b16 %v3026, %v3016
    %v4447 = vpack.c.b16 %v3027, %v3017
    %v4448 = vpack.c.b16 %v3028, %v3018
    %v4449 = vpack.c.b16 %v3029, %v3019
    %v4450 = vpack.c.b16 %v3030, %v3020
    %v4451 = vpack.c.b16 %v3031, %v3021
    %v4452 = vpack.c.b16 %v3032, %v3022
    %v4453 = vpack.c.b16 %v3043, %v3033
    %v4454 = vpack.c.b16 %v3044, %v3034
    %v4455 = vpack.c.b16 %v3045, %v3035
    %v4456 = vpack.c.b16 %v3046, %v3036
    %v4457 = vpack.c.b16 %v3047, %v3037
    %v4458 = vpack.c.b16 %v3048, %v3038
    %v4459 = vpack.c.b16 %v3049, %v3039
    %v4460 = vpack.c.b16 %v3050, %v3040
    %v4461 = vpack.c.b16 %v3051, %v3041
    %v4462 = vpack.c.b16 %v3052, %v3042
    %v4463 = vpack.c.b16 %v3063, %v3053
    %v4464 = vpack.c.b16 %v3064, %v3054
    %v4465 = vpack.c.b16 %v3065, %v3055
    %v4466 = vpack.c.b16 %v3066, %v3056
    %v4467 = vpack.c.b16 %v3067, %v3057
    %v4468 = vpack.c.b16 %v3068, %v3058
    %v4469 = vpack.c.b16 %v3069, %v3059
    %v4470 = vpack.c.b16 %v3070, %v3060
    %v4471 = vpack.c.b16 %v3071, %v3061
    %v4472 = vpack.c.b16 %v3072, %v3062
    %v4473 = vpack.c.b16 %v3083, %v3073
    %v4474 = vpack.c.b16 %v3084, %v3074
    %v4475 = vpack.c.b16 %v3085, %v3075
    %v4476 = vpack.c.b16 %v3086, %v3076
    %v4477 = vpack.c.b16 %v3087, %v3077
    %v4478 = vpack.c.b16 %v3088, %v3078
    %v4479 = vpack.c.b16 %v3089, %v3079
    %v4480 = vpack.c.b16 %v3090, %v3080
    %v4481 = vpack.c.b16 %v3091, %v3081
    %v4482 = vpack.c.b16 %v3092, %v3082
    %v4483 = vpack.c.b16 %v3103, %v3093
    %v4484 = vpack.c.b16 %v3104, %v3094
    %v4485 = vpack.c.b16 %v3105, %v3095
    %v4486 = vpack.c.b16 %v3106, %v3096
    %v4487 = vpack.c.b16 %v3107, %v3097
    %v4488 = vpack.c.b16 %v3108, %v3098
    %v4489 = vpack.c.b16 %v3109, %v3099
    %v4490 = vpack.c.b16 %v3110, %v3100
    %v4491 = vpack.c.b16 %v3111, %v3101
    %v4492 = vpack.c.b16 %v3112, %v3102
    %v4493 = vpack.c.b16 %v3123, %v3113
    %v4494 = vpack.c.b16 %v3124, %v3114
    %v4495 = vpack.c.b16 %v3125, %v3115
    %v4496 = vpack.c.b16 %v3126, %v3116
    %v4497 = vpack.c.b16 %v3127, %v3117
    %v4498 = vpack.c.b16 %v3128, %v3118
    %v4499 = vpack.c.b16 %v3129, %v3119
    %v4500 = vpack.c.b16 %v3130, %v3120
    %v4501 = vpack.c.b16 %v3131, %v3121
    %v4502 = vpack.c.b16 %v3132, %v3122
    %v4503 = vpack.c.b16 %v3143, %v3133
    %v4504 = vpack.c.b16 %v3144, %v3134
    %v4505 = vpack.c.b16 %v3145, %v3135
    %v4506 = vpack.c.b16 %v3146, %v3136
    %v4507 = vpack.c.b16 %v3147, %v3137
    %v4508 = vpack.c.b16 %v3148, %v3138
    %v4509 = vpack.c.b16 %v3149, %v3139
    %v4510 = vpack.c.b16 %v3150, %v3140
    %v4511 = vpack.c.b16 %v3151, %v3141
    %v4512 = vpack.c.b16 %v3152, %v3142
    %v4513 = vpack.c.b16 %v3163, %v3153
    %v4514 = vpack.c.b16 %v3164, %v3154
    %v4515 = vpack.c.b16 %v3165, %v3155
    %v4516 = vpack.c.b16 %v3166, %v3156
    %v4517 = vpack.c.b16 %v3167, %v3157
    %v4518 = vpack.c.b16 %v3168, %v3158
    %v4519 = vpack.c.b16 %v3169, %v3159
    %v4520 = vpack.c.b16 %v3170, %v3160
    %v4521 = vpack.c.b16 %v3171, %v3161
    %v4522 = vpack.c.b16 %v3172, %v3162
    %v4523 = vpack.c.b16 %v3183, %v3173
    %v4524 = vpack.c.b16 %v3184, %v3174
    %v4525 = vpack.c.b16 %v3185, %v3175
    %v4526 = vpack.c.b16 %v3186, %v3176
    %v4527 = vpack.c.b16 %v3187, %v3177
    %v4528 = vpack.c.b16 %v3188, %v3178
    %v4529 = vpack.c.b16 %v3189, %v3179
    %v4530 = vpack.c.b16 %v3190, %v3180
    %v4531 = vpack.c.b16 %v3191, %v3181
    %v4532 = vpack.c.b16 %v3192, %v3182
    %v4533 = vpack.c.b16 %v3203, %v3193
    %v4534 = vpack.c.b16 %v3204, %v3194
    %v4535 = vpack.c.b16 %v3205, %v3195
    %v4536 = vpack.c.b16 %v3206, %v3196
    %v4537 = vpack.c.b16 %v3207, %v3197
    %v4538 = vpack.c.b16 %v3208, %v3198
    %v4539 = vpack.c.b16 %v3209, %v3199
    %v4540 = vpack.c.b16 %v3210, %v3200
    %v4541 = vpack.c.b16 %v3211, %v3201
    %v4542 = vpack.c.b16 %v3212, %v3202
    %v4543 = vpack.c.b16 %v3223, %v3213
    %v4544 = vpack.c.b16 %v3224, %v3214
    %v4545 = vpack.c.b16 %v3225, %v3215
    %v4546 = vpack.c.b16 %v3226, %v3216
    %v4547 = vpack.c.b16 %v3227, %v3217
    %v4548 = vpack.c.b16 %v3228, %v3218
    %v4549 = vpack.c.b16 %v3229, %v3219
    %v4550 = vpack.c.b16 %v3230, %v3220
    %v4551 = vpack.c.b16 %v3231, %v3221
    %v4552 = vpack.c.b16 %v3232, %v3222
    %v4553 = vpack.c.b16 %v3243, %v3233
    %v4554 = vpack.c.b16 %v3244, %v3234
    %v4555 = vpack.c.b16 %v3245, %v3235
    %v4556 = vpack.c.b16 %v3246, %v3236
    %v4557 = vpack.c.b16 %v3247, %v3237
    %v4558 = vpack.c.b16 %v3248, %v3238
    %v4559 = vpack.c.b16 %v3249, %v3239
    %v4560 = vpack.c.b16 %v3250, %v3240
    %v4561 = vpack.c.b16 %v3251, %v3241
    %v4562 = vpack.c.b16 %v3252, %v3242
    %v4563 = vpack.c.b16 %v3263, %v3253
    %v4564 = vpack.c.b16 %v3264, %v3254
    %v4565 = vpack.c.b16 %v3265, %v3255
    %v4566 = vpack.c.b16 %v3266, %v3256
    %v4567 = vpack.c.b16 %v3267, %v3257
    %v4568 = vpack.c.b16 %v3268, %v3258
    %v4569 = vpack.c.b16 %v3269, %v3259
    %v4570 = vpack.c.b16 %v3270, %v3260
    %v4571 = vpack.c.b16 %v3271, %v3261
    %v4572 = vpack.c.b16 %v3272, %v3262
    %v4573 = vpack.c.b16 %v3283, %v3273
    %v4574 = vpack.c.b16 %v3284, %v3274
    %v4575 = vpack.c.b16 %v3285, %v3275
    %v4576 = vpack.c.b16 %v3286, %v3276
    %v4577 = vpack.c.b16 %v3287, %v3277
    %v4578 = vpack.c.b16 %v3288, %v3278
    %v4579 = vpack.c.b16 %v3289, %v3279
    %v4580 = vpack.c.b16 %v3290, %v3280
    %v4581 = vpack.c.b16 %v3291, %v3281
    %v4582 = vpack.c.b16 %v3292, %v3282
    %v4583 = vpack.c.b16 %v3303, %v3293
    %v4584 = vpack.c.b16 %v3304, %v3294
    %v4585 = vpack.c.b16 %v3305, %v3295
    %v4586 = vpack.c.b16 %v3306, %v3296
    %v4587 = vpack.c.b16 %v3307, %v3297
    %v4588 = vpack.c.b16 %v3308, %v3298
    %v4589 = vpack.c.b16 %v3309, %v3299
    %v4590 = vpack.c.b16 %v3310, %v3300
    %v4591 = vpack.c.b16 %v3311, %v3301
    %v4592 = vpack.c.b16 %v3312, %v3302
    %v4593 = vpack.c.b16 %v3323, %v3313
    %v4594 = vpack.c.b16 %v3324, %v3314
    %v4595 = vpack.c.b16 %v3325, %v3315
    %v4596 = vpack.c.b16 %v3326, %v3316
    %v4597 = vpack.c.b16 %v3327, %v3317
    %v4598 = vpack.c.b16 %v3328, %v3318
    %v4599 = vpack.c.b16 %v3329, %v3319
    %v4600 = vpack.c.b16 %v3330, %v3320
    %v4601 = vpack.c.b16 %v3331, %v3321
    %v4602 = vpack.c.b16 %v3332, %v3322
    %v4603 = vpack.c.b16 %v3343, %v3333
    %v4604 = vpack.c.b16 %v3344, %v3334
    %v4605 = vpack.c.b16 %v3345, %v3335
    %v4606 = vpack.c.b16 %v3346, %v3336
    %v4607 = vpack.c.b16 %v3347, %v3337
    %v4608 = vpack.c.b16 %v3348, %v3338
    %v4609 = vpack.c.b16 %v3349, %v3339
    %v4610 = vpack.c.b16 %v3350, %v3340
    %v4611 = vpack.c.b16 %v3351, %v3341
    %v4612 = vpack.c.b16 %v3352, %v3342
    %v4613 = vpack.c.b16 %v3363, %v3353
    %v4614 = vpack.c.b16 %v3364, %v3354
    %v4615 = vpack.c.b16 %v3365, %v3355
    %v4616 = vpack.c.b16 %v3366, %v3356
    %v4617 = vpack.c.b16 %v3367, %v3357
    %v4618 = vpack.c.b16 %v3368, %v3358
    %v4619 = vpack.c.b16 %v3369, %v3359
    %v4620 = vpack.c.b16 %v3370, %v3360
    %v4621 = vpack.c.b16 %v3371, %v3361
    %v4622 = vpack.c.b16 %v3372, %v3362
    %v4623 = vpack.c.b16 %v3383, %v3373
    %v4624 = vpack.c.b16 %v3384, %v3374
    %v4625 = vpack.c.b16 %v3385, %v3375
    %v4626 = vpack.c.b16 %v3386, %v3376
    %v4627 = vpack.c.b16 %v3387, %v3377
    %v4628 = vpack.c.b16 %v3388, %v3378
    %v4629 = vpack.c.b16 %v3389, %v3379
    %v4630 = vpack.c.b16 %v3390, %v3380
    %v4631 = vpack.c.b16 %v3391, %v3381
    %v4632 = vpack.c.b16 %v3392, %v3382
    %v4633 = vpack.c.b16 %v3403, %v3393
    %v4634 = vpack.c.b16 %v3404, %v3394
    %v4635 = vpack.c.b16 %v3405, %v3395
    %v4636 = vpack.c.b16 %v3406, %v3396
    %v4637 = vpack.c.b16 %v3407, %v3397
    %v4638 = vpack.c.b16 %v3408, %v3398
    %v4639 = vpack.c.b16 %v3409, %v3399
    %v4640 = vpack.c.b16 %v3410, %v3400
    %v4641 = vpack.c.b16 %v3411, %v3401
    %v4642 = vpack.c.b16 %v3412, %v3402
    %v4643 = vpack.c.b16 %v3423, %v3413
    %v4644 = vpack.c.b16 %v3424, %v3414
    %v4645 = vpack.c.b16 %v3425, %v3415
    %v4646 = vpack.c.b16 %v3426, %v3416
    %v4647 = vpack.c.b16 %v3427, %v3417
    %v4648 = vpack.c.b16 %v3428, %v3418
    %v4649 = vpack.c.b16 %v3429, %v3419
    %v4650 = vpack.c.b16 %v3430, %v3420
    %v4651 = vpack.c.b16 %v3431, %v3421
    %v4652 = vpack.c.b16 %v3432, %v3422
    %v4653 = vpack.c.b16 %v3443, %v3433
    %v4654 = vpack.c.b16 %v3444, %v3434
    %v4655 = vpack.c.b16 %v3445, %v3435
    %v4656 = vpack.c.b16 %v3446, %v3436
    %v4657 = vpack.c.b16 %v3447, %v3437
    %v4658 = vpack.c.b16 %v3448, %v3438
    %v4659 = vpack.c.b16 %v3449, %v3439
    %v4660 = vpack.c.b16 %v3450, %v3440
    %v4661 = vpack.c.b16 %v3451, %v3441
    %v4662 = vpack.c.b16 %v3452, %v3442
    %v4663 = vpack.c.b16 %v3463, %v3453
    %v4664 = vpack.c.b16 %v3464, %v3454
    %v4665 = vpack.c.b16 %v3465, %v3455
    %v4666 = vpack.c.b16 %v3466, %v3456
    %v4667 = vpack.c.b16 %v3467, %v3457
    %v4668 = vpack.c.b16 %v3468, %v3458
    %v4669 = vpack.c.b16 %v3469, %v3459
    %v4670 = vpack.c.b16 %v3470, %v3460
    %v4671 = vpack.c.b16 %v3471, %v3461
    %v4672 = vpack.c.b16 %v3472, %v3462
    %v4673 = vpack.c.b16 %v3483, %v3473
    %v4674 = vpack.c.b16 %v3484, %v3474
    %v4675 = vpack.c.b16 %v3485, %v3475
    %v4676 = vpack.c.b16 %v3486, %v3476
    %v4677 = vpack.c.b16 %v3487, %v3477
    %v4678 = vpack.c.b16 %v3488, %v3478
    %v4679 = vpack.c.b16 %v3489, %v3479
    %v4680 = vpack.c.b16 %v3490, %v3480
    %v4681 = vpack.c.b16 %v3491, %v3481
    %v4682 = vpack.c.b16 %v3492, %v3482
    %v4683 = vpack.c.b16 %v3503, %v3493
    %v4684 = vpack.c.b16 %v3504, %v3494
    %v4685 = vpack.c.b16 %v3505, %v3495
    %v4686 = vpack.c.b16 %v3506, %v3496
    %v4687 = vpack.c.b16 %v3507, %v3497
    %v4688 = vpack.c.b16 %v3508, %v3498
    %v4689 = vpack.c.b16 %v3509, %v3499
    %v4690 = vpack.c.b16 %v3510, %v3500
    %v4691 = vpack.c.b16 %v3511, %v3501
    %v4692 = vpack.c.b16 %v3512, %v3502
    %v4693 = vpack.c.b16 %v3523, %v3513
    %v4694 = vpack.c.b16 %v3524, %v3514
    %v4695 = vpack.c.b16 %v3525, %v3515
    %v4696 = vpack.c.b16 %v3526, %v3516
    %v4697 = vpack.c.b16 %v3527, %v3517
    %v4698 = vpack.c.b16 %v3528, %v3518
    %v4699 = vpack.c.b16 %v3529, %v3519
    %v4700 = vpack.c.b16 %v3530, %v3520
    %v4701 = vpack.c.b16 %v3531, %v3521
    %v4702 = vpack.c.b16 %v3532, %v3522
    %v4703 = vpack.c.b16 %v3543, %v3533
    %v4704 = vpack.c.b16 %v3544, %v3534
    %v4705 = vpack.c.b16 %v3545, %v3535
    %v4706 = vpack.c.b16 %v3546, %v3536
    %v4707 = vpack.c.b16 %v3547, %v3537
    %v4708 = vpack.c.b16 %v3548, %v3538
    %v4709 = vpack.c.b16 %v3549, %v3539
    %v4710 = vpack.c.b16 %v3550, %v3540
    %v4711 = vpack.c.b16 %v3551, %v3541
    %v4712 = vpack.c.b16 %v3552, %v3542
    %v4713 = vpack.c.b16 %v3563, %v3553
    %v4714 = vpack.c.b16 %v3564, %v3554
    %v4715 = vpack.c.b16 %v3565, %v3555
    %v4716 = vpack.c.b16 %v3566, %v3556
    %v4717 = vpack.c.b16 %v3567, %v3557
    %v4718 = vpack.c.b16 %v3568, %v3558
    %v4719 = vpack.c.b16 %v3569, %v3559
    %v4720 = vpack.c.b16 %v3570, %v3560
    %v4721 = vpack.c.b16 %v3571, %v3561
    %v4722 = vpack.c.b16 %v3572, %v3562
    %v4723 = vpack.c.b16 %v3583, %v3573
    %v4724 = vpack.c.b16 %v3584, %v3574
    %v4725 = vpack.c.b16 %v3585, %v3575
    %v4726 = vpack.c.b16 %v3586, %v3576
    %v4727 = vpack.c.b16 %v3587, %v3577
    %v4728 = vpack.c.b16 %v3588, %v3578
    %v4729 = vpack.c.b16 %v3589, %v3579
    %v4730 = vpack.c.b16 %v3590, %v3580
    %v4731 = vpack.c.b16 %v3591, %v3581
    %v4732 = vpack.c.b16 %v3592, %v3582
    %v4733 = vpack.c.b16 %v3603, %v3593
    %v4734 = vpack.c.b16 %v3604, %v3594
    %v4735 = vpack.c.b16 %v3605, %v3595
    %v4736 = vpack.c.b16 %v3606, %v3596
    %v4737 = vpack.c.b16 %v3607, %v3597
    %v4738 = vpack.c.b16 %v3608, %v3598
    %v4739 = vpack.c.b16 %v3609, %v3599
    %v4740 = vpack.c.b16 %v3610, %v3600
    %v4741 = vpack.c.b16 %v3611, %v3601
    %v4742 = vpack.c.b16 %v3612, %v3602
    %v4743 = vpack.c.b16 %v3623, %v3613
    %v4744 = vpack.c.b16 %v3624, %v3614
    %v4745 = vpack.c.b16 %v3625, %v3615
    %v4746 = vpack.c.b16 %v3626, %v3616
    %v4747 = vpack.c.b16 %v3627, %v3617
    %v4748 = vpack.c.b16 %v3628, %v3618
    %v4749 = vpack.c.b16 %v3629, %v3619
    %v4750 = vpack.c.b16 %v3630, %v3620
    %v4751 = vpack.c.b16 %v3631, %v3621
    %v4752 = vpack.c.b16 %v3632, %v3622
    %v4753 = vpack.c.b16 %v3643, %v3633
    %v4754 = vpack.c.b16 %v3644, %v3634
    %v4755 = vpack.c.b16 %v3645, %v3635
    %v4756 = vpack.c.b16 %v3646, %v3636
    %v4757 = vpack.c.b16 %v3647, %v3637
    %v4758 = vpack.c.b16 %v3648, %v3638
    %v4759 = vpack.c.b16 %v3649, %v3639
    %v4760 = vpack.c.b16 %v3650, %v3640
    %v4761 = vpack.c.b16 %v3651, %v3641
    %v4762 = vpack.c.b16 %v3652, %v3642
    %v4763 = vpack.c.b16 %v3663, %v3653
    %v4764 = vpack.c.b16 %v3664, %v3654
    %v4765 = vpack.c.b16 %v3665, %v3655
    %v4766 = vpack.c.b16 %v3666, %v3656
    %v4767 = vpack.c.b16 %v3667, %v3657
    %v4768 = vpack.c.b16 %v3668, %v3658
    %v4769 = vpack.c.b16 %v3669, %v3659
    %v4770 = vpack.c.b16 %v3670, %v3660
    %v4771 = vpack.c.b16 %v3671, %v3661
    %v4772 = vpack.c.b16 %v3672, %v3662
    %v4773 = vpack.c.b16 %v3683, %v3673
    %v4774 = vpack.c.b16 %v3684, %v3674
    %v4775 = vpack.c.b16 %v3685, %v3675
    %v4776 = vpack.c.b16 %v3686, %v3676
    %v4777 = vpack.c.b16 %v3687, %v3677
    %v4778 = vpack.c.b16 %v3688, %v3678
    %v4779 = vpack.c.b16 %v3689, %v3679
    %v4780 = vpack.c.b16 %v3690, %v3680
    %v4781 = vpack.c.b16 %v3691, %v3681
    %v4782 = vpack.c.b16 %v3692, %v3682
    %v4783 = vpack.c.b16 %v3703, %v3693
    %v4784 = vpack.c.b16 %v3704, %v3694
    %v4785 = vpack.c.b16 %v3705, %v3695
    %v4786 = vpack.c.b16 %v3706, %v3696
    %v4787 = vpack.c.b16 %v3707, %v3697
    %v4788 = vpack.c.b16 %v3708, %v3698
    %v4789 = vpack.c.b16 %v3709, %v3699
    %v4790 = vpack.c.b16 %v3710, %v3700
    %v4791 = vpack.c.b16 %v3711, %v3701
    %v4792 = vpack.c.b16 %v3712, %v3702
    %v4793 = vpack.c.b16 %v3723, %v3713
    %v4794 = vpack.c.b16 %v3724, %v3714
    %v4795 = vpack.c.b16 %v3725, %v3715
    %v4796 = vpack.c.b16 %v3726, %v3716
    %v4797 = vpack.c.b16 %v3727, %v3717
    %v4798 = vpack.c.b16 %v3728, %v3718
    %v4799 = vpack.c.b16 %v3729, %v3719
    %v4800 = vpack.c.b16 %v3730, %v3720
    %v4801 = vpack.c.b16 %v3731, %v3721
    %v4802 = vpack.c.b16 %v3732, %v3722
    %v4803 = vpack.c.b16 %v3743, %v3733
    %v4804 = vpack.c.b16 %v3744, %v3734
    %v4805 = vpack.c.b16 %v3745, %v3735
    %v4806 = vpack.c.b16 %v3746, %v3736
    %v4807 = vpack.c.b16 %v3747, %v3737
    %v4808 = vpack.c.b16 %v3748, %v3738
    %v4809 = vpack.c.b16 %v3749, %v3739
    %v4810 = vpack.c.b16 %v3750, %v3740
    %v4811 = vpack.c.b16 %v3751, %v3741
    %v4812 = vpack.c.b16 %v3752, %v3742
    %v4813 = vpack.c.b16 %v3763, %v3753
    %v4814 = vpack.c.b16 %v3764, %v3754
    %v4815 = vpack.c.b16 %v3765, %v3755
    %v4816 = vpack.c.b16 %v3766, %v3756
    %v4817 = vpack.c.b16 %v3767, %v3757
    %v4818 = vpack.c.b16 %v3768, %v3758
    %v4819 = vpack.c.b16 %v3769, %v3759
    %v4820 = vpack.c.b16 %v3770, %v3760
    %v4821 = vpack.c.b16 %v3771, %v3761
    %v4822 = vpack.c.b16 %v3772, %v3762
    %v4823 = vpack.c.b16 %v3783, %v3773
    %v4824 = vpack.c.b16 %v3784, %v3774
    %v4825 = vpack.c.b16 %v3785, %v3775
    %v4826 = vpack.c.b16 %v3786, %v3776
    %v4827 = vpack.c.b16 %v3787, %v3777
    %v4828 = vpack.c.b16 %v3788, %v3778
    %v4829 = vpack.c.b16 %v3789, %v3779
    %v4830 = vpack.c.b16 %v3790, %v3780
    %v4831 = vpack.c.b16 %v3791, %v3781
    %v4832 = vpack.c.b16 %v3792, %v3782
    %v4833 = vpack.c.b16 %v3803, %v3793
    %v4834 = vpack.c.b16 %v3804, %v3794
    %v4835 = vpack.c.b16 %v3805, %v3795
    %v4836 = vpack.c.b16 %v3806, %v3796
    %v4837 = vpack.c.b16 %v3807, %v3797
    %v4838 = vpack.c.b16 %v3808, %v3798
    %v4839 = vpack.c.b16 %v3809, %v3799
    %v4840 = vpack.c.b16 %v3810, %v3800
    %v4841 = vpack.c.b16 %v3811, %v3801
    %v4842 = vpack.c.b16 %v3812, %v3802
    %v4843 = vpack.c.b16 %v3823, %v3813
    %v4844 = vpack.c.b16 %v3824, %v3814
    %v4845 = vpack.c.b16 %v3825, %v3815
    %v4846 = vpack.c.b16 %v3826, %v3816
    %v4847 = vpack.c.b16 %v3827, %v3817
    %v4848 = vpack.c.b16 %v3828, %v3818
    %v4849 = vpack.c.b16 %v3829, %v3819
    %v4850 = vpack.c.b16 %v3830, %v3820
    %v4851 = vpack.c.b16 %v3831, %v3821
    %v4852 = vpack.c.b16 %v3832, %v3822
    %v4853 = vpack.c.b16 %v3843, %v3833
    %v4854 = vpack.c.b16 %v3844, %v3834
    %v4855 = vpack.c.b16 %v3845, %v3835
    %v4856 = vpack.c.b16 %v3846, %v3836
    %v4857 = vpack.c.b16 %v3847, %v3837
    %v4858 = vpack.c.b16 %v3848, %v3838
    %v4859 = vpack.c.b16 %v3849, %v3839
    %v4860 = vpack.c.b16 %v3850, %v3840
    %v4861 = vpack.c.b16 %v3851, %v3841
    %v4862 = vpack.c.b16 %v3852, %v3842
    %v4863 = vpack.c.b16 %v3863, %v3853
    %v4864 = vpack.c.b16 %v3864, %v3854
    %v4865 = vpack.c.b16 %v3865, %v3855
    %v4866 = vpack.c.b16 %v3866, %v3856
    %v4867 = vpack.c.b16 %v3867, %v3857
    %v4868 = vpack.c.b16 %v3868, %v3858
    %v4869 = vpack.c.b16 %v3869, %v3859
    %v4870 = vpack.c.b16 %v3870, %v3860
    %v4871 = vpack.c.b16 %v3871, %v3861
    %v4872 = vpack.c.b16 %v3872, %v3862
    %v4873 = vpack.c.b16 %v3883, %v3873
    %v4874 = vpack.c.b16 %v3884, %v3874
    %v4875 = vpack.c.b16 %v3885, %v3875
    %v4876 = vpack.c.b16 %v3886, %v3876
    %v4877 = vpack.c.b16 %v3887, %v3877
    %v4878 = vpack.c.b16 %v3888, %v3878
    %v4879 = vpack.c.b16 %v3889, %v3879
    %v4880 = vpack.c.b16 %v3890, %v3880
    %v4881 = vpack.c.b16 %v3891, %v3881
    %v4882 = vpack.c.b16 %v3892, %v3882
    %v4883 = vpack.c.b16 %v3903, %v3893
    %v4884 = vpack.c.b16 %v3904, %v3894
    %v4885 = vpack.c.b16 %v3905, %v3895
    %v4886 = vpack.c.b16 %v3906, %v3896
    %v4887 = vpack.c.b16 %v3907, %v3897
    %v4888 = vpack.c.b16 %v3908, %v3898
    %v4889 = vpack.c.b16 %v3909, %v3899
    %v4890 = vpack.c.b16 %v3910, %v3900
    %v4891 = vpack.c.b16 %v3911, %v3901
    %v4892 = vpack.c.b16 %v3912, %v3902
    %v4893 = vpack.c.b16 %v3923, %v3913
    %v4894 = vpack.c.b16 %v3924, %v3914
    %v4895 = vpack.c.b16 %v3925, %v3915
    %v4896 = vpack.c.b16 %v3926, %v3916
    %v4897 = vpack.c.b16 %v3927, %v3917
    %v4898 = vpack.c.b16 %v3928, %v3918
    %v4899 = vpack.c.b16 %v3929, %v3919
    %v4900 = vpack.c.b16 %v3930, %v3920
    %v4901 = vpack.c.b16 %v3931, %v3921
    %v4902 = vpack.c.b16 %v3932, %v3922
    %v4903 = vpack.c.b16 %v3943, %v3933
    %v4904 = vpack.c.b16 %v3944, %v3934
    %v4905 = vpack.c.b16 %v3945, %v3935
    %v4906 = vpack.c.b16 %v3946, %v3936
    %v4907 = vpack.c.b16 %v3947, %v3937
    %v4908 = vpack.c.b16 %v3948, %v3938
    %v4909 = vpack.c.b16 %v3949, %v3939
    %v4910 = vpack.c.b16 %v3950, %v3940
    %v4911 = vpack.c.b16 %v3951, %v3941
    %v4912 = vpack.c.b16 %v3952, %v3942
    %v4913 = vpack.c.b16 %v3963, %v3953
    %v4914 = vpack.c.b16 %v3964, %v3954
    %v4915 = vpack.c.b16 %v3965, %v3955
    %v4916 = vpack.c.b16 %v3966, %v3956
    %v4917 = vpack.c.b16 %v3967, %v3957
    %v4918 = vpack.c.b16 %v3968, %v3958
    %v4919 = vpack.c.b16 %v3969, %v3959
    %v4920 = vpack.c.b16 %v3970, %v3960
    %v4921 = vpack.c.b16 %v3971, %v3961
    %v4922 = vpack.c.b16 %v3972, %v3962
    %v4923 = vpack.c.b16 %v3983, %v3973
    %v4924 = vpack.c.b16 %v3984, %v3974
    %v4925 = vpack.c.b16 %v3985, %v3975
    %v4926 = vpack.c.b16 %v3986, %v3976
    %v4927 = vpack.c.b16 %v3987, %v3977
    %v4928 = vpack.c.b16 %v3988, %v3978
    %v4929 = vpack.c.b16 %v3989, %v3979
    %v4930 = vpack.c.b16 %v3990, %v3980
    %v4931 = vpack.c.b16 %v3991, %v3981
    %v4932 = vpack.c.b16 %v3992, %v3982
    %v4933 = vpack.c.b16 %v4003, %v3993
    %v4934 = vpack.c.b16 %v4004, %v3994
    %v4935 = vpack.c.b16 %v4005, %v3995
    %v4936 = vpack.c.b16 %v4006, %v3996
    %v4937 = vpack.c.b16 %v4007, %v3997
    %v4938 = vpack.c.b16 %v4008, %v3998
    %v4939 = vpack.c.b16 %v4009, %v3999
    %v4940 = vpack.c.b16 %v4010, %v4000
    %v4941 = vpack.c.b16 %v4011, %v4001
    %v4942 = vpack.c.b16 %v4012, %v4002
    %v4943 = vpack.c.b16 %v4023, %v4013
    %v4944 = vpack.c.b16 %v4024, %v4014
    %v4945 = vpack.c.b16 %v4025, %v4015
    %v4946 = vpack.c.b16 %v4026, %v4016
    %v4947 = vpack.c.b16 %v4027, %v4017
    %v4948 = vpack.c.b16 %v4028, %v4018
    %v4949 = vpack.c.b16 %v4029, %v4019
    %v4950 = vpack.c.b16 %v4030, %v4020
    %v4951 = vpack.c.b16 %v4031, %v4021
    %v4952 = vpack.c.b16 %v4032, %v4022
    %v4953 = vpack.c.b16 %v4043, %v4033
    %v4954 = vpack.c.b16 %v4044, %v4034
    %v4955 = vpack.c.b16 %v4045, %v4035
    %v4956 = vpack.c.b16 %v4046, %v4036
    %v4957 = vpack.c.b16 %v4047, %v4037
    %v4958 = vpack.c.b16 %v4048, %v4038
    %v4959 = vpack.c.b16 %v4049, %v4039
    %v4960 = vpack.c.b16 %v4050, %v4040
    %v4961 = vpack.c.b16 %v4051, %v4041
    %v4962 = vpack.c.b16 %v4052, %v4042
    %v4963 = vpack.c.b16 %v4063, %v4053
    %v4964 = vpack.c.b16 %v4064, %v4054
    %v4965 = vpack.c.b16 %v4065, %v4055
    %v4966 = vpack.c.b16 %v4066, %v4056
    %v4967 = vpack.c.b16 %v4067, %v4057
    %v4968 = vpack.c.b16 %v4068, %v4058
    %v4969 = vpack.c.b16 %v4069, %v4059
    %v4970 = vpack.c.b16 %v4070, %v4060
    %v4971 = vpack.c.b16 %v4071, %v4061
    %v4972 = vpack.c.b16 %v4072, %v4062
    %v4973 = vpack.c.b16 %v4083, %v4073
    %v4974 = vpack.c.b16 %v4084, %v4074
    %v4975 = vpack.c.b16 %v4085, %v4075
    %v4976 = vpack.c.b16 %v4086, %v4076
    %v4977 = vpack.c.b16 %v4087, %v4077
    %v4978 = vpack.c.b16 %v4088, %v4078
    %v4979 = vpack.c.b16 %v4089, %v4079
    %v4980 = vpack.c.b16 %v4090, %v4080
    %v4981 = vpack.c.b16 %v4091, %v4081
    %v4982 = vpack.c.b16 %v4092, %v4082
    %v4983 = vpack.c.b16 %v4103, %v4093
    %v4984 = vpack.c.b16 %v4104, %v4094
    %v4985 = vpack.c.b16 %v4105, %v4095
    %v4986 = vpack.c.b16 %v4106, %v4096
    %v4987 = vpack.c.b16 %v4107, %v4097
    %v4988 = vpack.c.b16 %v4108, %v4098
    %v4989 = vpack.c.b16 %v4109, %v4099
    %v4990 = vpack.c.b16 %v4110, %v4100
    %v4991 = vpack.c.b16 %v4111, %v4101
    %v4992 = vpack.c.b16 %v4112, %v4102
    %v4993 = vpack.c.b16 %v4123, %v4113
    %v4994 = vpack.c.b16 %v4124, %v4114
    %v4995 = vpack.c.b16 %v4125, %v4115
    %v4996 = vpack.c.b16 %v4126, %v4116
    %v4997 = vpack.c.b16 %v4127, %v4117
    %v4998 = vpack.c.b16 %v4128, %v4118
    %v4999 = vpack.c.b16 %v4129, %v4119
    %v5000 = vpack.c.b16 %v4130, %v4120
    %v5001 = vpack.c.b16 %v4131, %v4121
    %v5002 = vpack.c.b16 %v4132, %v4122
    %v5003 = vpack.c.b16 %v4143, %v4133
    %v5004 = vpack.c.b16 %v4144, %v4134
    %v5005 = vpack.c.b16 %v4145, %v4135
    %v5006 = vpack.c.b16 %v4146, %v4136
    %v5007 = vpack.c.b16 %v4147, %v4137
    %v5008 = vpack.c.b16 %v4148, %v4138
    %v5009 = vpack.c.b16 %v4149, %v4139
    %v5010 = vpack.c.b16 %v4150, %v4140
    %v5011 = vpack.c.b16 %v4151, %v4141
    %v5012 = vpack.c.b16 %v4152, %v4142
    %v5013 = vpack.c.b16 %v4163, %v4153
    %v5014 = vpack.c.b16 %v4164, %v4154
    %v5015 = vpack.c.b16 %v4165, %v4155
    %v5016 = vpack.c.b16 %v4166, %v4156
    %v5017 = vpack.c.b16 %v4167, %v4157
    %v5018 = vpack.c.b16 %v4168, %v4158
    %v5019 = vpack.c.b16 %v4169, %v4159
    %v5020 = vpack.c.b16 %v4170, %v4160
    %v5021 = vpack.c.b16 %v4171, %v4161
    %v5022 = vpack.c.b16 %v4172, %v4162
    %v5023 = vpack.c.b16 %v4183, %v4173
    %v5024 = vpack.c.b16 %v4184, %v4174
    %v5025 = vpack.c.b16 %v4185, %v4175
    %v5026 = vpack.c.b16 %v4186, %v4176
    %v5027 = vpack.c.b16 %v4187, %v4177
    %v5028 = vpack.c.b16 %v4188, %v4178
    %v5029 = vpack.c.b16 %v4189, %v4179
    %v5030 = vpack.c.b16 %v4190, %v4180
    %v5031 = vpack.c.b16 %v4191, %v4181
    %v5032 = vpack.c.b16 %v4192, %v4182
    %v5033 = vpack.c.b16 %v4203, %v4193
    %v5034 = vpack.c.b16 %v4204, %v4194
    %v5035 = vpack.c.b16 %v4205, %v4195
    %v5036 = vpack.c.b16 %v4206, %v4196
    %v5037 = vpack.c.b16 %v4207, %v4197
    %v5038 = vpack.c.b16 %v4208, %v4198
    %v5039 = vpack.c.b16 %v4209, %v4199
    %v5040 = vpack.c.b16 %v4210, %v4200
    %v5041 = vpack.c.b16 %v4211, %v4201
    %v5042 = vpack.c.b16 %v4212, %v4202
    %v5043 = vpack.c.b16 %v4223, %v4213
    %v5044 = vpack.c.b16 %v4224, %v4214
    %v5045 = vpack.c.b16 %v4225, %v4215
    %v5046 = vpack.c.b16 %v4226, %v4216
    %v5047 = vpack.c.b16 %v4227, %v4217
    %v5048 = vpack.c.b16 %v4228, %v4218
    %v5049 = vpack.c.b16 %v4229, %v4219
    %v5050 = vpack.c.b16 %v4230, %v4220
    %v5051 = vpack.c.b16 %v4231, %v4221
    %v5052 = vpack.c.b16 %v4232, %v4222
    %v5053 = vpack.c.b16 %v4243, %v4233
    %v5054 = vpack.c.b16 %v4244, %v4234
    %v5055 = vpack.c.b16 %v4245, %v4235
    %v5056 = vpack.c.b16 %v4246, %v4236
    %v5057 = vpack.c.b16 %v4247, %v4237
    %v5058 = vpack.c.b16 %v4248, %v4238
    %v5059 = vpack.c.b16 %v4249, %v4239
    %v5060 = vpack.c.b16 %v4250, %v4240
    %v5061 = vpack.c.b16 %v4251, %v4241
    %v5062 = vpack.c.b16 %v4252, %v4242
    %v5063 = vpack.c.b16 %v4263, %v4253
    %v5064 = vpack.c.b16 %v4264, %v4254
    %v5065 = vpack.c.b16 %v4265, %v4255
    %v5066 = vpack.c.b16 %v4266, %v4256
    %v5067 = vpack.c.b16 %v4267, %v4257
    %v5068 = vpack.c.b16 %v4268, %v4258
    %v5069 = vpack.c.b16 %v4269, %v4259
    %v5070 = vpack.c.b16 %v4270, %v4260
    %v5071 = vpack.c.b16 %v4271, %v4261
    %v5072 = vpack.c.b16 %v4272, %v4262
    %5873 = vmatprep.subr.bf16.mxu0 %v4344
    %5874 = vmatpush1.bf16.msra.mxu0 %v4343
    %5875 = vmatprep.subr.bf16.mxu0 %v4334
    %5876 = vmatpush1.bf16.msra.mxu0 %v4333
    %5877 = vmatprep.subr.bf16.mxu0 %v4324
    %5878 = vmatpush1.bf16.msra.mxu0 %v4323
    %5879 = vmatprep.subr.bf16.mxu0 %v4314
    %5880 = vmatpush1.bf16.msra.mxu0 %v4313
    %5881 = vmatprep.subr.bf16.mxu0 %v4304
    %5882 = vmatpush1.bf16.msra.mxu0 %v4303
    %5883 = vmatprep.subr.bf16.mxu0 %v4294
    %5884 = vmatpush1.bf16.msra.mxu0 %v4293
    %5885 = vmatprep.subr.bf16.mxu0 %v4284
    %5886 = vmatpush1.bf16.msra.mxu0 %v4283
    %5887 = vmatprep.subr.bf16.mxu0 %v4274
    %5888 = vmatpush1.bf16.msra.mxu0 %v4273
    %5889 = vmatprep.subr.bf16.mxu0 %v4424
    %5890 = vmatpush2.bf16.msra.mxu0 %v4423
    %5891 = vmatprep.subr.bf16.mxu0 %v4414
    %5892 = vmatpush2.bf16.msra.mxu0 %v4413
    %5893 = vmatprep.subr.bf16.mxu0 %v4404
    %5894 = vmatpush2.bf16.msra.mxu0 %v4403
    %5895 = vmatprep.subr.bf16.mxu0 %v4394
    %5896 = vmatpush2.bf16.msra.mxu0 %v4393
    %5897 = vmatprep.subr.bf16.mxu0 %v4384
    %5898 = vmatpush2.bf16.msra.mxu0 %v4383
    %5899 = vmatprep.subr.bf16.mxu0 %v4374
    %5900 = vmatpush2.bf16.msra.mxu0 %v4373
    %5901 = vmatprep.subr.bf16.mxu0 %v4364
    %5902 = vmatpush2.bf16.msra.mxu0 %v4363
    %5903 = vmatprep.subr.bf16.mxu0 %v4354
    %5904 = vmatpush2.bf16.msra.mxu0 %v4353
    %5905 = vmatprep.mubr.bf16.mxu0 %v1854
    %5906 = vmatmul.mubr.bf16.gmra.mxu0 %v1853
    %v5907 = vpop.f32.mrf.mxu0
    %v5908 = vadd.f32 %v1776, %v5907
    %v5909 = vpop.f32.mrf.mxu0
    %v5910 = vadd.f32 %v1780, %v5909
    %v5911 = vpop.f32.mrf.mxu0
    %v5912 = vadd.f32 %v1776, %v5911
    %v5913 = vpop.f32.mrf.mxu0
    %v5914 = vadd.f32 %v1780, %v5913
    %5915 = vdwg.mxu0
    %5916 = vmatprep.subr.bf16.mxu0 %v4504
    %5917 = vmatpush1.bf16.msra.mxu0 %v4503
    %5918 = vmatprep.subr.bf16.mxu0 %v4494
    %5919 = vmatpush1.bf16.msra.mxu0 %v4493
    %5920 = vmatprep.subr.bf16.mxu0 %v4484
    %5921 = vmatpush1.bf16.msra.mxu0 %v4483
    %5922 = vmatprep.subr.bf16.mxu0 %v4474
    %5923 = vmatpush1.bf16.msra.mxu0 %v4473
    %5924 = vmatprep.subr.bf16.mxu0 %v4464
    %5925 = vmatpush1.bf16.msra.mxu0 %v4463
    %5926 = vmatprep.subr.bf16.mxu0 %v4454
    %5927 = vmatpush1.bf16.msra.mxu0 %v4453
    %5928 = vmatprep.subr.bf16.mxu0 %v4444
    %5929 = vmatpush1.bf16.msra.mxu0 %v4443
    %5930 = vmatprep.subr.bf16.mxu0 %v4434
    %5931 = vmatpush1.bf16.msra.mxu0 %v4433
    %5932 = vmatprep.subr.bf16.mxu0 %v4584
    %5933 = vmatpush2.bf16.msra.mxu0 %v4583
    %5934 = vmatprep.subr.bf16.mxu0 %v4574
    %5935 = vmatpush2.bf16.msra.mxu0 %v4573
    %5936 = vmatprep.subr.bf16.mxu0 %v4564
    %5937 = vmatpush2.bf16.msra.mxu0 %v4563
    %5938 = vmatprep.subr.bf16.mxu0 %v4554
    %5939 = vmatpush2.bf16.msra.mxu0 %v4553
    %5940 = vmatprep.subr.bf16.mxu0 %v4544
    %5941 = vmatpush2.bf16.msra.mxu0 %v4543
    %5942 = vmatprep.subr.bf16.mxu0 %v4534
    %5943 = vmatpush2.bf16.msra.mxu0 %v4533
    %5944 = vmatprep.subr.bf16.mxu0 %v4524
    %5945 = vmatpush2.bf16.msra.mxu0 %v4523
    %5946 = vmatprep.subr.bf16.mxu0 %v4514
    %5947 = vmatpush2.bf16.msra.mxu0 %v4513
    %5948 = vmatprep.mubr.bf16.mxu0 %v1856
    %5949 = vmatmul.mubr.bf16.gmra.mxu0 %v1855
    %v5950 = vpop.f32.mrf.mxu0
    %v5951 = vadd.f32 %v5908, %v5950
    %v5952 = vpop.f32.mrf.mxu0
    %v5953 = vadd.f32 %v5910, %v5952
    %v5954 = vpop.f32.mrf.mxu0
    %v5955 = vadd.f32 %v5912, %v5954
    %v5956 = vpop.f32.mrf.mxu0
    %v5957 = vadd.f32 %v5914, %v5956
    %5958 = vdwg.mxu0
    %5959 = vmatprep.subr.bf16.mxu0 %v4664
    %5960 = vmatpush1.bf16.msra.mxu0 %v4663
    %5961 = vmatprep.subr.bf16.mxu0 %v4654
    %5962 = vmatpush1.bf16.msra.mxu0 %v4653
    %5963 = vmatprep.subr.bf16.mxu0 %v4644
    %5964 = vmatpush1.bf16.msra.mxu0 %v4643
    %5965 = vmatprep.subr.bf16.mxu0 %v4634
    %5966 = vmatpush1.bf16.msra.mxu0 %v4633
    %5967 = vmatprep.subr.bf16.mxu0 %v4624
    %5968 = vmatpush1.bf16.msra.mxu0 %v4623
    %5969 = vmatprep.subr.bf16.mxu0 %v4614
    %5970 = vmatpush1.bf16.msra.mxu0 %v4613
    %5971 = vmatprep.subr.bf16.mxu0 %v4604
    %5972 = vmatpush1.bf16.msra.mxu0 %v4603
    %5973 = vmatprep.subr.bf16.mxu0 %v4594
    %5974 = vmatpush1.bf16.msra.mxu0 %v4593
    %5975 = vmatprep.subr.bf16.mxu0 %v4744
    %5976 = vmatpush2.bf16.msra.mxu0 %v4743
    %5977 = vmatprep.subr.bf16.mxu0 %v4734
    %5978 = vmatpush2.bf16.msra.mxu0 %v4733
    %5979 = vmatprep.subr.bf16.mxu0 %v4724
    %5980 = vmatpush2.bf16.msra.mxu0 %v4723
    %5981 = vmatprep.subr.bf16.mxu0 %v4714
    %5982 = vmatpush2.bf16.msra.mxu0 %v4713
    %5983 = vmatprep.subr.bf16.mxu0 %v4704
    %5984 = vmatpush2.bf16.msra.mxu0 %v4703
    %5985 = vmatprep.subr.bf16.mxu0 %v4694
    %5986 = vmatpush2.bf16.msra.mxu0 %v4693
    %5987 = vmatprep.subr.bf16.mxu0 %v4684
    %5988 = vmatpush2.bf16.msra.mxu0 %v4683
    %5989 = vmatprep.subr.bf16.mxu0 %v4674
    %5990 = vmatpush2.bf16.msra.mxu0 %v4673
    %5991 = vmatprep.mubr.bf16.mxu0 %v1858
    %5992 = vmatmul.mubr.bf16.gmra.mxu0 %v1857
    %v5993 = vpop.f32.mrf.mxu0
    %v5994 = vadd.f32 %v5951, %v5993
    %v5995 = vpop.f32.mrf.mxu0
    %v5996 = vadd.f32 %v5953, %v5995
    %v5997 = vpop.f32.mrf.mxu0
    %v5998 = vadd.f32 %v5955, %v5997
    %v5999 = vpop.f32.mrf.mxu0
    %v6000 = vadd.f32 %v5957, %v5999
    %6001 = vdwg.mxu0
    %6002 = vmatprep.subr.bf16.mxu0 %v4824
    %6003 = vmatpush1.bf16.msra.mxu0 %v4823
    %6004 = vmatprep.subr.bf16.mxu0 %v4814
    %6005 = vmatpush1.bf16.msra.mxu0 %v4813
    %6006 = vmatprep.subr.bf16.mxu0 %v4804
    %6007 = vmatpush1.bf16.msra.mxu0 %v4803
    %6008 = vmatprep.subr.bf16.mxu0 %v4794
    %6009 = vmatpush1.bf16.msra.mxu0 %v4793
    %6010 = vmatprep.subr.bf16.mxu0 %v4784
    %6011 = vmatpush1.bf16.msra.mxu0 %v4783
    %6012 = vmatprep.subr.bf16.mxu0 %v4774
    %6013 = vmatpush1.bf16.msra.mxu0 %v4773
    %6014 = vmatprep.subr.bf16.mxu0 %v4764
    %6015 = vmatpush1.bf16.msra.mxu0 %v4763
    %6016 = vmatprep.subr.bf16.mxu0 %v4754
    %6017 = vmatpush1.bf16.msra.mxu0 %v4753
    %6018 = vmatprep.subr.bf16.mxu0 %v4904
    %6019 = vmatpush2.bf16.msra.mxu0 %v4903
    %6020 = vmatprep.subr.bf16.mxu0 %v4894
    %6021 = vmatpush2.bf16.msra.mxu0 %v4893
    %6022 = vmatprep.subr.bf16.mxu0 %v4884
    %6023 = vmatpush2.bf16.msra.mxu0 %v4883
    %6024 = vmatprep.subr.bf16.mxu0 %v4874
    %6025 = vmatpush2.bf16.msra.mxu0 %v4873
    %6026 = vmatprep.subr.bf16.mxu0 %v4864
    %6027 = vmatpush2.bf16.msra.mxu0 %v4863
    %6028 = vmatprep.subr.bf16.mxu0 %v4854
    %6029 = vmatpush2.bf16.msra.mxu0 %v4853
    %6030 = vmatprep.subr.bf16.mxu0 %v4844
    %6031 = vmatpush2.bf16.msra.mxu0 %v4843
    %6032 = vmatprep.subr.bf16.mxu0 %v4834
    %6033 = vmatpush2.bf16.msra.mxu0 %v4833
    %6034 = vmatprep.mubr.bf16.mxu0 %v1860
    %6035 = vmatmul.mubr.bf16.gmra.mxu0 %v1859
    %v6036 = vpop.f32.mrf.mxu0
    %v6037 = vadd.f32 %v5994, %v6036
    %v6038 = vpop.f32.mrf.mxu0
    %v6039 = vadd.f32 %v5996, %v6038
    %v6040 = vpop.f32.mrf.mxu0
    %v6041 = vadd.f32 %v5998, %v6040
    %v6042 = vpop.f32.mrf.mxu0
    %v6043 = vadd.f32 %v6000, %v6042
    %6044 = vdwg.mxu0
    %6045 = vmatprep.subr.bf16.mxu0 %v4984
    %6046 = vmatpush1.bf16.msra.mxu0 %v4983
    %6047 = vmatprep.subr.bf16.mxu0 %v4974
    %6048 = vmatpush1.bf16.msra.mxu0 %v4973
    %6049 = vmatprep.subr.bf16.mxu0 %v4964
    %6050 = vmatpush1.bf16.msra.mxu0 %v4963
    %6051 = vmatprep.subr.bf16.mxu0 %v4954
    %6052 = vmatpush1.bf16.msra.mxu0 %v4953
    %6053 = vmatprep.subr.bf16.mxu0 %v4944
    %6054 = vmatpush1.bf16.msra.mxu0 %v4943
    %6055 = vmatprep.subr.bf16.mxu0 %v4934
    %6056 = vmatpush1.bf16.msra.mxu0 %v4933
    %6057 = vmatprep.subr.bf16.mxu0 %v4924
    %6058 = vmatpush1.bf16.msra.mxu0 %v4923
    %6059 = vmatprep.subr.bf16.mxu0 %v4914
    %6060 = vmatpush1.bf16.msra.mxu0 %v4913
    %6061 = vmatprep.subr.bf16.mxu0 %v5064
    %6062 = vmatpush2.bf16.msra.mxu0 %v5063
    %6063 = vmatprep.subr.bf16.mxu0 %v5054
    %6064 = vmatpush2.bf16.msra.mxu0 %v5053
    %6065 = vmatprep.subr.bf16.mxu0 %v5044
    %6066 = vmatpush2.bf16.msra.mxu0 %v5043
    %6067 = vmatprep.subr.bf16.mxu0 %v5034
    %6068 = vmatpush2.bf16.msra.mxu0 %v5033
    %6069 = vmatprep.subr.bf16.mxu0 %v5024
    %6070 = vmatpush2.bf16.msra.mxu0 %v5023
    %6071 = vmatprep.subr.bf16.mxu0 %v5014
    %6072 = vmatpush2.bf16.msra.mxu0 %v5013
    %6073 = vmatprep.subr.bf16.mxu0 %v5004
    %6074 = vmatpush2.bf16.msra.mxu0 %v5003
    %6075 = vmatprep.subr.bf16.mxu0 %v4994
    %6076 = vmatpush2.bf16.msra.mxu0 %v4993
    %6077 = vmatprep.mubr.bf16.mxu0 %v1862
    %6078 = vmatmul.mubr.bf16.gmra.mxu0 %v1861
    %v6079 = vpop.f32.mrf.mxu0
    %v6080 = vadd.f32 %v6037, %v6079
    %v6081 = vpop.f32.mrf.mxu0
    %v6082 = vadd.f32 %v6039, %v6081
    %v6083 = vpop.f32.mrf.mxu0
    %v6084 = vadd.f32 %v6041, %v6083
    %v6085 = vpop.f32.mrf.mxu0
    %v6086 = vadd.f32 %v6043, %v6085
    %6087 = vdwg.mxu0
    %6088 = vmatprep.subr.bf16.mxu0 %v4346
    %6089 = vmatpush1.bf16.msra.mxu0 %v4345
    %6090 = vmatprep.subr.bf16.mxu0 %v4336
    %6091 = vmatpush1.bf16.msra.mxu0 %v4335
    %6092 = vmatprep.subr.bf16.mxu0 %v4326
    %6093 = vmatpush1.bf16.msra.mxu0 %v4325
    %6094 = vmatprep.subr.bf16.mxu0 %v4316
    %6095 = vmatpush1.bf16.msra.mxu0 %v4315
    %6096 = vmatprep.subr.bf16.mxu0 %v4306
    %6097 = vmatpush1.bf16.msra.mxu0 %v4305
    %6098 = vmatprep.subr.bf16.mxu0 %v4296
    %6099 = vmatpush1.bf16.msra.mxu0 %v4295
    %6100 = vmatprep.subr.bf16.mxu0 %v4286
    %6101 = vmatpush1.bf16.msra.mxu0 %v4285
    %6102 = vmatprep.subr.bf16.mxu0 %v4276
    %6103 = vmatpush1.bf16.msra.mxu0 %v4275
    %6104 = vmatprep.subr.bf16.mxu0 %v4426
    %6105 = vmatpush2.bf16.msra.mxu0 %v4425
    %6106 = vmatprep.subr.bf16.mxu0 %v4416
    %6107 = vmatpush2.bf16.msra.mxu0 %v4415
    %6108 = vmatprep.subr.bf16.mxu0 %v4406
    %6109 = vmatpush2.bf16.msra.mxu0 %v4405
    %6110 = vmatprep.subr.bf16.mxu0 %v4396
    %6111 = vmatpush2.bf16.msra.mxu0 %v4395
    %6112 = vmatprep.subr.bf16.mxu0 %v4386
    %6113 = vmatpush2.bf16.msra.mxu0 %v4385
    %6114 = vmatprep.subr.bf16.mxu0 %v4376
    %6115 = vmatpush2.bf16.msra.mxu0 %v4375
    %6116 = vmatprep.subr.bf16.mxu0 %v4366
    %6117 = vmatpush2.bf16.msra.mxu0 %v4365
    %6118 = vmatprep.subr.bf16.mxu0 %v4356
    %6119 = vmatpush2.bf16.msra.mxu0 %v4355
    %6120 = vmatprep.mubr.bf16.mxu0 %v1854
    %6121 = vmatmul.mubr.bf16.gmra.mxu0 %v1853
    %v6122 = vpop.f32.mrf.mxu0
    %v6123 = vadd.f32 %v1784, %v6122
    %v6124 = vpop.f32.mrf.mxu0
    %v6125 = vadd.f32 %v1788, %v6124
    %v6126 = vpop.f32.mrf.mxu0
    %v6127 = vadd.f32 %v1784, %v6126
    %v6128 = vpop.f32.mrf.mxu0
    %v6129 = vadd.f32 %v1788, %v6128
    %6130 = vdwg.mxu0
    %6131 = vmatprep.subr.bf16.mxu0 %v4506
    %6132 = vmatpush1.bf16.msra.mxu0 %v4505
    %6133 = vmatprep.subr.bf16.mxu0 %v4496
    %6134 = vmatpush1.bf16.msra.mxu0 %v4495
    %6135 = vmatprep.subr.bf16.mxu0 %v4486
    %6136 = vmatpush1.bf16.msra.mxu0 %v4485
    %6137 = vmatprep.subr.bf16.mxu0 %v4476
    %6138 = vmatpush1.bf16.msra.mxu0 %v4475
    %6139 = vmatprep.subr.bf16.mxu0 %v4466
    %6140 = vmatpush1.bf16.msra.mxu0 %v4465
    %6141 = vmatprep.subr.bf16.mxu0 %v4456
    %6142 = vmatpush1.bf16.msra.mxu0 %v4455
    %6143 = vmatprep.subr.bf16.mxu0 %v4446
    %6144 = vmatpush1.bf16.msra.mxu0 %v4445
    %6145 = vmatprep.subr.bf16.mxu0 %v4436
    %6146 = vmatpush1.bf16.msra.mxu0 %v4435
    %6147 = vmatprep.subr.bf16.mxu0 %v4586
    %6148 = vmatpush2.bf16.msra.mxu0 %v4585
    %6149 = vmatprep.subr.bf16.mxu0 %v4576
    %6150 = vmatpush2.bf16.msra.mxu0 %v4575
    %6151 = vmatprep.subr.bf16.mxu0 %v4566
    %6152 = vmatpush2.bf16.msra.mxu0 %v4565
    %6153 = vmatprep.subr.bf16.mxu0 %v4556
    %6154 = vmatpush2.bf16.msra.mxu0 %v4555
    %6155 = vmatprep.subr.bf16.mxu0 %v4546
    %6156 = vmatpush2.bf16.msra.mxu0 %v4545
    %6157 = vmatprep.subr.bf16.mxu0 %v4536
    %6158 = vmatpush2.bf16.msra.mxu0 %v4535
    %6159 = vmatprep.subr.bf16.mxu0 %v4526
    %6160 = vmatpush2.bf16.msra.mxu0 %v4525
    %6161 = vmatprep.subr.bf16.mxu0 %v4516
    %6162 = vmatpush2.bf16.msra.mxu0 %v4515
    %6163 = vmatprep.mubr.bf16.mxu0 %v1856
    %6164 = vmatmul.mubr.bf16.gmra.mxu0 %v1855
    %v6165 = vpop.f32.mrf.mxu0
    %v6166 = vadd.f32 %v6123, %v6165
    %v6167 = vpop.f32.mrf.mxu0
    %v6168 = vadd.f32 %v6125, %v6167
    %v6169 = vpop.f32.mrf.mxu0
    %v6170 = vadd.f32 %v6127, %v6169
    %v6171 = vpop.f32.mrf.mxu0
    %v6172 = vadd.f32 %v6129, %v6171
    %6173 = vdwg.mxu0
    %6174 = vmatprep.subr.bf16.mxu0 %v4666
    %6175 = vmatpush1.bf16.msra.mxu0 %v4665
    %6176 = vmatprep.subr.bf16.mxu0 %v4656
    %6177 = vmatpush1.bf16.msra.mxu0 %v4655
    %6178 = vmatprep.subr.bf16.mxu0 %v4646
    %6179 = vmatpush1.bf16.msra.mxu0 %v4645
    %6180 = vmatprep.subr.bf16.mxu0 %v4636
    %6181 = vmatpush1.bf16.msra.mxu0 %v4635
    %6182 = vmatprep.subr.bf16.mxu0 %v4626
    %6183 = vmatpush1.bf16.msra.mxu0 %v4625
    %6184 = vmatprep.subr.bf16.mxu0 %v4616
    %6185 = vmatpush1.bf16.msra.mxu0 %v4615
    %6186 = vmatprep.subr.bf16.mxu0 %v4606
    %6187 = vmatpush1.bf16.msra.mxu0 %v4605
    %6188 = vmatprep.subr.bf16.mxu0 %v4596
    %6189 = vmatpush1.bf16.msra.mxu0 %v4595
    %6190 = vmatprep.subr.bf16.mxu0 %v4746
    %6191 = vmatpush2.bf16.msra.mxu0 %v4745
    %6192 = vmatprep.subr.bf16.mxu0 %v4736
    %6193 = vmatpush2.bf16.msra.mxu0 %v4735
    %6194 = vmatprep.subr.bf16.mxu0 %v4726
    %6195 = vmatpush2.bf16.msra.mxu0 %v4725
    %6196 = vmatprep.subr.bf16.mxu0 %v4716
    %6197 = vmatpush2.bf16.msra.mxu0 %v4715
    %6198 = vmatprep.subr.bf16.mxu0 %v4706
    %6199 = vmatpush2.bf16.msra.mxu0 %v4705
    %6200 = vmatprep.subr.bf16.mxu0 %v4696
    %6201 = vmatpush2.bf16.msra.mxu0 %v4695
    %6202 = vmatprep.subr.bf16.mxu0 %v4686
    %6203 = vmatpush2.bf16.msra.mxu0 %v4685
    %6204 = vmatprep.subr.bf16.mxu0 %v4676
    %6205 = vmatpush2.bf16.msra.mxu0 %v4675
    %6206 = vmatprep.mubr.bf16.mxu0 %v1858
    %6207 = vmatmul.mubr.bf16.gmra.mxu0 %v1857
    %v6208 = vpop.f32.mrf.mxu0
    %v6209 = vadd.f32 %v6166, %v6208
    %v6210 = vpop.f32.mrf.mxu0
    %v6211 = vadd.f32 %v6168, %v6210
    %v6212 = vpop.f32.mrf.mxu0
    %v6213 = vadd.f32 %v6170, %v6212
    %v6214 = vpop.f32.mrf.mxu0
    %v6215 = vadd.f32 %v6172, %v6214
    %6216 = vdwg.mxu0
    %6217 = vmatprep.subr.bf16.mxu0 %v4826
    %6218 = vmatpush1.bf16.msra.mxu0 %v4825
    %6219 = vmatprep.subr.bf16.mxu0 %v4816
    %6220 = vmatpush1.bf16.msra.mxu0 %v4815
    %6221 = vmatprep.subr.bf16.mxu0 %v4806
    %6222 = vmatpush1.bf16.msra.mxu0 %v4805
    %6223 = vmatprep.subr.bf16.mxu0 %v4796
    %6224 = vmatpush1.bf16.msra.mxu0 %v4795
    %6225 = vmatprep.subr.bf16.mxu0 %v4786
    %6226 = vmatpush1.bf16.msra.mxu0 %v4785
    %6227 = vmatprep.subr.bf16.mxu0 %v4776
    %6228 = vmatpush1.bf16.msra.mxu0 %v4775
    %6229 = vmatprep.subr.bf16.mxu0 %v4766
    %6230 = vmatpush1.bf16.msra.mxu0 %v4765
    %6231 = vmatprep.subr.bf16.mxu0 %v4756
    %6232 = vmatpush1.bf16.msra.mxu0 %v4755
    %6233 = vmatprep.subr.bf16.mxu0 %v4906
    %6234 = vmatpush2.bf16.msra.mxu0 %v4905
    %6235 = vmatprep.subr.bf16.mxu0 %v4896
    %6236 = vmatpush2.bf16.msra.mxu0 %v4895
    %6237 = vmatprep.subr.bf16.mxu0 %v4886
    %6238 = vmatpush2.bf16.msra.mxu0 %v4885
    %6239 = vmatprep.subr.bf16.mxu0 %v4876
    %6240 = vmatpush2.bf16.msra.mxu0 %v4875
    %6241 = vmatprep.subr.bf16.mxu0 %v4866
    %6242 = vmatpush2.bf16.msra.mxu0 %v4865
    %6243 = vmatprep.subr.bf16.mxu0 %v4856
    %6244 = vmatpush2.bf16.msra.mxu0 %v4855
    %6245 = vmatprep.subr.bf16.mxu0 %v4846
    %6246 = vmatpush2.bf16.msra.mxu0 %v4845
    %6247 = vmatprep.subr.bf16.mxu0 %v4836
    %6248 = vmatpush2.bf16.msra.mxu0 %v4835
    %6249 = vmatprep.mubr.bf16.mxu0 %v1860
    %6250 = vmatmul.mubr.bf16.gmra.mxu0 %v1859
    %v6251 = vpop.f32.mrf.mxu0
    %v6252 = vadd.f32 %v6209, %v6251
    %v6253 = vpop.f32.mrf.mxu0
    %v6254 = vadd.f32 %v6211, %v6253
    %v6255 = vpop.f32.mrf.mxu0
    %v6256 = vadd.f32 %v6213, %v6255
    %v6257 = vpop.f32.mrf.mxu0
    %v6258 = vadd.f32 %v6215, %v6257
    %6259 = vdwg.mxu0
    %6260 = vmatprep.subr.bf16.mxu0 %v4986
    %6261 = vmatpush1.bf16.msra.mxu0 %v4985
    %6262 = vmatprep.subr.bf16.mxu0 %v4976
    %6263 = vmatpush1.bf16.msra.mxu0 %v4975
    %6264 = vmatprep.subr.bf16.mxu0 %v4966
    %6265 = vmatpush1.bf16.msra.mxu0 %v4965
    %6266 = vmatprep.subr.bf16.mxu0 %v4956
    %6267 = vmatpush1.bf16.msra.mxu0 %v4955
    %6268 = vmatprep.subr.bf16.mxu0 %v4946
    %6269 = vmatpush1.bf16.msra.mxu0 %v4945
    %6270 = vmatprep.subr.bf16.mxu0 %v4936
    %6271 = vmatpush1.bf16.msra.mxu0 %v4935
    %6272 = vmatprep.subr.bf16.mxu0 %v4926
    %6273 = vmatpush1.bf16.msra.mxu0 %v4925
    %6274 = vmatprep.subr.bf16.mxu0 %v4916
    %6275 = vmatpush1.bf16.msra.mxu0 %v4915
    %6276 = vmatprep.subr.bf16.mxu0 %v5066
    %6277 = vmatpush2.bf16.msra.mxu0 %v5065
    %6278 = vmatprep.subr.bf16.mxu0 %v5056
    %6279 = vmatpush2.bf16.msra.mxu0 %v5055
    %6280 = vmatprep.subr.bf16.mxu0 %v5046
    %6281 = vmatpush2.bf16.msra.mxu0 %v5045
    %6282 = vmatprep.subr.bf16.mxu0 %v5036
    %6283 = vmatpush2.bf16.msra.mxu0 %v5035
    %6284 = vmatprep.subr.bf16.mxu0 %v5026
    %6285 = vmatpush2.bf16.msra.mxu0 %v5025
    %6286 = vmatprep.subr.bf16.mxu0 %v5016
    %6287 = vmatpush2.bf16.msra.mxu0 %v5015
    %6288 = vmatprep.subr.bf16.mxu0 %v5006
    %6289 = vmatpush2.bf16.msra.mxu0 %v5005
    %6290 = vmatprep.subr.bf16.mxu0 %v4996
    %6291 = vmatpush2.bf16.msra.mxu0 %v4995
    %6292 = vmatprep.mubr.bf16.mxu0 %v1862
    %6293 = vmatmul.mubr.bf16.gmra.mxu0 %v1861
    %v6294 = vpop.f32.mrf.mxu0
    %v6295 = vadd.f32 %v6252, %v6294
    %v6296 = vpop.f32.mrf.mxu0
    %v6297 = vadd.f32 %v6254, %v6296
    %v6298 = vpop.f32.mrf.mxu0
    %v6299 = vadd.f32 %v6256, %v6298
    %v6300 = vpop.f32.mrf.mxu0
    %v6301 = vadd.f32 %v6258, %v6300
    %6302 = vdwg.mxu0
    %6303 = vmatprep.subr.bf16.mxu0 %v4348
    %6304 = vmatpush1.bf16.msra.mxu0 %v4347
    %6305 = vmatprep.subr.bf16.mxu0 %v4338
    %6306 = vmatpush1.bf16.msra.mxu0 %v4337
    %6307 = vmatprep.subr.bf16.mxu0 %v4328
    %6308 = vmatpush1.bf16.msra.mxu0 %v4327
    %6309 = vmatprep.subr.bf16.mxu0 %v4318
    %6310 = vmatpush1.bf16.msra.mxu0 %v4317
    %6311 = vmatprep.subr.bf16.mxu0 %v4308
    %6312 = vmatpush1.bf16.msra.mxu0 %v4307
    %6313 = vmatprep.subr.bf16.mxu0 %v4298
    %6314 = vmatpush1.bf16.msra.mxu0 %v4297
    %6315 = vmatprep.subr.bf16.mxu0 %v4288
    %6316 = vmatpush1.bf16.msra.mxu0 %v4287
    %6317 = vmatprep.subr.bf16.mxu0 %v4278
    %6318 = vmatpush1.bf16.msra.mxu0 %v4277
    %6319 = vmatprep.subr.bf16.mxu0 %v4428
    %6320 = vmatpush2.bf16.msra.mxu0 %v4427
    %6321 = vmatprep.subr.bf16.mxu0 %v4418
    %6322 = vmatpush2.bf16.msra.mxu0 %v4417
    %6323 = vmatprep.subr.bf16.mxu0 %v4408
    %6324 = vmatpush2.bf16.msra.mxu0 %v4407
    %6325 = vmatprep.subr.bf16.mxu0 %v4398
    %6326 = vmatpush2.bf16.msra.mxu0 %v4397
    %6327 = vmatprep.subr.bf16.mxu0 %v4388
    %6328 = vmatpush2.bf16.msra.mxu0 %v4387
    %6329 = vmatprep.subr.bf16.mxu0 %v4378
    %6330 = vmatpush2.bf16.msra.mxu0 %v4377
    %6331 = vmatprep.subr.bf16.mxu0 %v4368
    %6332 = vmatpush2.bf16.msra.mxu0 %v4367
    %6333 = vmatprep.subr.bf16.mxu0 %v4358
    %6334 = vmatpush2.bf16.msra.mxu0 %v4357
    %6335 = vmatprep.mubr.bf16.mxu0 %v1854
    %6336 = vmatmul.mubr.bf16.gmra.mxu0 %v1853
    %v6337 = vpop.f32.mrf.mxu0
    %v6338 = vadd.f32 %v1792, %v6337
    %v6339 = vpop.f32.mrf.mxu0
    %v6340 = vadd.f32 %v1796, %v6339
    %v6341 = vpop.f32.mrf.mxu0
    %v6342 = vadd.f32 %v1792, %v6341
    %v6343 = vpop.f32.mrf.mxu0
    %v6344 = vadd.f32 %v1796, %v6343
    %6345 = vdwg.mxu0
    %6346 = vmatprep.subr.bf16.mxu0 %v4508
    %6347 = vmatpush1.bf16.msra.mxu0 %v4507
    %6348 = vmatprep.subr.bf16.mxu0 %v4498
    %6349 = vmatpush1.bf16.msra.mxu0 %v4497
    %6350 = vmatprep.subr.bf16.mxu0 %v4488
    %6351 = vmatpush1.bf16.msra.mxu0 %v4487
    %6352 = vmatprep.subr.bf16.mxu0 %v4478
    %6353 = vmatpush1.bf16.msra.mxu0 %v4477
    %6354 = vmatprep.subr.bf16.mxu0 %v4468
    %6355 = vmatpush1.bf16.msra.mxu0 %v4467
    %6356 = vmatprep.subr.bf16.mxu0 %v4458
    %6357 = vmatpush1.bf16.msra.mxu0 %v4457
    %6358 = vmatprep.subr.bf16.mxu0 %v4448
    %6359 = vmatpush1.bf16.msra.mxu0 %v4447
    %6360 = vmatprep.subr.bf16.mxu0 %v4438
    %6361 = vmatpush1.bf16.msra.mxu0 %v4437
    %6362 = vmatprep.subr.bf16.mxu0 %v4588
    %6363 = vmatpush2.bf16.msra.mxu0 %v4587
    %6364 = vmatprep.subr.bf16.mxu0 %v4578
    %6365 = vmatpush2.bf16.msra.mxu0 %v4577
    %6366 = vmatprep.subr.bf16.mxu0 %v4568
    %6367 = vmatpush2.bf16.msra.mxu0 %v4567
    %6368 = vmatprep.subr.bf16.mxu0 %v4558
    %6369 = vmatpush2.bf16.msra.mxu0 %v4557
    %6370 = vmatprep.subr.bf16.mxu0 %v4548
    %6371 = vmatpush2.bf16.msra.mxu0 %v4547
    %6372 = vmatprep.subr.bf16.mxu0 %v4538
    %6373 = vmatpush2.bf16.msra.mxu0 %v4537
    %6374 = vmatprep.subr.bf16.mxu0 %v4528
    %6375 = vmatpush2.bf16.msra.mxu0 %v4527
    %6376 = vmatprep.subr.bf16.mxu0 %v4518
    %6377 = vmatpush2.bf16.msra.mxu0 %v4517
    %6378 = vmatprep.mubr.bf16.mxu0 %v1856
    %6379 = vmatmul.mubr.bf16.gmra.mxu0 %v1855
    %v6380 = vpop.f32.mrf.mxu0
    %v6381 = vadd.f32 %v6338, %v6380
    %v6382 = vpop.f32.mrf.mxu0
    %v6383 = vadd.f32 %v6340, %v6382
    %v6384 = vpop.f32.mrf.mxu0
    %v6385 = vadd.f32 %v6342, %v6384
    %v6386 = vpop.f32.mrf.mxu0
    %v6387 = vadd.f32 %v6344, %v6386
    %6388 = vdwg.mxu0
    %6389 = vmatprep.subr.bf16.mxu0 %v4668
    %6390 = vmatpush1.bf16.msra.mxu0 %v4667
    %6391 = vmatprep.subr.bf16.mxu0 %v4658
    %6392 = vmatpush1.bf16.msra.mxu0 %v4657
    %6393 = vmatprep.subr.bf16.mxu0 %v4648
    %6394 = vmatpush1.bf16.msra.mxu0 %v4647
    %6395 = vmatprep.subr.bf16.mxu0 %v4638
    %6396 = vmatpush1.bf16.msra.mxu0 %v4637
    %6397 = vmatprep.subr.bf16.mxu0 %v4628
    %6398 = vmatpush1.bf16.msra.mxu0 %v4627
    %6399 = vmatprep.subr.bf16.mxu0 %v4618
    %6400 = vmatpush1.bf16.msra.mxu0 %v4617
    %6401 = vmatprep.subr.bf16.mxu0 %v4608
    %6402 = vmatpush1.bf16.msra.mxu0 %v4607
    %6403 = vmatprep.subr.bf16.mxu0 %v4598
    %6404 = vmatpush1.bf16.msra.mxu0 %v4597
    %6405 = vmatprep.subr.bf16.mxu0 %v4748
    %6406 = vmatpush2.bf16.msra.mxu0 %v4747
    %6407 = vmatprep.subr.bf16.mxu0 %v4738
    %6408 = vmatpush2.bf16.msra.mxu0 %v4737
    %6409 = vmatprep.subr.bf16.mxu0 %v4728
    %6410 = vmatpush2.bf16.msra.mxu0 %v4727
    %6411 = vmatprep.subr.bf16.mxu0 %v4718
    %6412 = vmatpush2.bf16.msra.mxu0 %v4717
    %6413 = vmatprep.subr.bf16.mxu0 %v4708
    %6414 = vmatpush2.bf16.msra.mxu0 %v4707
    %6415 = vmatprep.subr.bf16.mxu0 %v4698
    %6416 = vmatpush2.bf16.msra.mxu0 %v4697
    %6417 = vmatprep.subr.bf16.mxu0 %v4688
    %6418 = vmatpush2.bf16.msra.mxu0 %v4687
    %6419 = vmatprep.subr.bf16.mxu0 %v4678
    %6420 = vmatpush2.bf16.msra.mxu0 %v4677
    %6421 = vmatprep.mubr.bf16.mxu0 %v1858
    %6422 = vmatmul.mubr.bf16.gmra.mxu0 %v1857
    %v6423 = vpop.f32.mrf.mxu0
    %v6424 = vadd.f32 %v6381, %v6423
    %v6425 = vpop.f32.mrf.mxu0
    %v6426 = vadd.f32 %v6383, %v6425
    %v6427 = vpop.f32.mrf.mxu0
    %v6428 = vadd.f32 %v6385, %v6427
    %v6429 = vpop.f32.mrf.mxu0
    %v6430 = vadd.f32 %v6387, %v6429
    %6431 = vdwg.mxu0
    %6432 = vmatprep.subr.bf16.mxu0 %v4828
    %6433 = vmatpush1.bf16.msra.mxu0 %v4827
    %6434 = vmatprep.subr.bf16.mxu0 %v4818
    %6435 = vmatpush1.bf16.msra.mxu0 %v4817
    %6436 = vmatprep.subr.bf16.mxu0 %v4808
    %6437 = vmatpush1.bf16.msra.mxu0 %v4807
    %6438 = vmatprep.subr.bf16.mxu0 %v4798
    %6439 = vmatpush1.bf16.msra.mxu0 %v4797
    %6440 = vmatprep.subr.bf16.mxu0 %v4788
    %6441 = vmatpush1.bf16.msra.mxu0 %v4787
    %6442 = vmatprep.subr.bf16.mxu0 %v4778
    %6443 = vmatpush1.bf16.msra.mxu0 %v4777
    %6444 = vmatprep.subr.bf16.mxu0 %v4768
    %6445 = vmatpush1.bf16.msra.mxu0 %v4767
    %6446 = vmatprep.subr.bf16.mxu0 %v4758
    %6447 = vmatpush1.bf16.msra.mxu0 %v4757
    %6448 = vmatprep.subr.bf16.mxu0 %v4908
    %6449 = vmatpush2.bf16.msra.mxu0 %v4907
    %6450 = vmatprep.subr.bf16.mxu0 %v4898
    %6451 = vmatpush2.bf16.msra.mxu0 %v4897
    %6452 = vmatprep.subr.bf16.mxu0 %v4888
    %6453 = vmatpush2.bf16.msra.mxu0 %v4887
    %6454 = vmatprep.subr.bf16.mxu0 %v4878
    %6455 = vmatpush2.bf16.msra.mxu0 %v4877
    %6456 = vmatprep.subr.bf16.mxu0 %v4868
    %6457 = vmatpush2.bf16.msra.mxu0 %v4867
    %6458 = vmatprep.subr.bf16.mxu0 %v4858
    %6459 = vmatpush2.bf16.msra.mxu0 %v4857
    %6460 = vmatprep.subr.bf16.mxu0 %v4848
    %6461 = vmatpush2.bf16.msra.mxu0 %v4847
    %6462 = vmatprep.subr.bf16.mxu0 %v4838
    %6463 = vmatpush2.bf16.msra.mxu0 %v4837
    %6464 = vmatprep.mubr.bf16.mxu0 %v1860
    %6465 = vmatmul.mubr.bf16.gmra.mxu0 %v1859
    %v6466 = vpop.f32.mrf.mxu0
    %v6467 = vadd.f32 %v6424, %v6466
    %v6468 = vpop.f32.mrf.mxu0
    %v6469 = vadd.f32 %v6426, %v6468
    %v6470 = vpop.f32.mrf.mxu0
    %v6471 = vadd.f32 %v6428, %v6470
    %v6472 = vpop.f32.mrf.mxu0
    %v6473 = vadd.f32 %v6430, %v6472
    %6474 = vdwg.mxu0
    %6475 = vmatprep.subr.bf16.mxu0 %v4988
    %6476 = vmatpush1.bf16.msra.mxu0 %v4987
    %6477 = vmatprep.subr.bf16.mxu0 %v4978
    %6478 = vmatpush1.bf16.msra.mxu0 %v4977
    %6479 = vmatprep.subr.bf16.mxu0 %v4968
    %6480 = vmatpush1.bf16.msra.mxu0 %v4967
    %6481 = vmatprep.subr.bf16.mxu0 %v4958
    %6482 = vmatpush1.bf16.msra.mxu0 %v4957
    %6483 = vmatprep.subr.bf16.mxu0 %v4948
    %6484 = vmatpush1.bf16.msra.mxu0 %v4947
    %6485 = vmatprep.subr.bf16.mxu0 %v4938
    %6486 = vmatpush1.bf16.msra.mxu0 %v4937
    %6487 = vmatprep.subr.bf16.mxu0 %v4928
    %6488 = vmatpush1.bf16.msra.mxu0 %v4927
    %6489 = vmatprep.subr.bf16.mxu0 %v4918
    %6490 = vmatpush1.bf16.msra.mxu0 %v4917
    %6491 = vmatprep.subr.bf16.mxu0 %v5068
    %6492 = vmatpush2.bf16.msra.mxu0 %v5067
    %6493 = vmatprep.subr.bf16.mxu0 %v5058
    %6494 = vmatpush2.bf16.msra.mxu0 %v5057
    %6495 = vmatprep.subr.bf16.mxu0 %v5048
    %6496 = vmatpush2.bf16.msra.mxu0 %v5047
    %6497 = vmatprep.subr.bf16.mxu0 %v5038
    %6498 = vmatpush2.bf16.msra.mxu0 %v5037
    %6499 = vmatprep.subr.bf16.mxu0 %v5028
    %6500 = vmatpush2.bf16.msra.mxu0 %v5027
    %6501 = vmatprep.subr.bf16.mxu0 %v5018
    %6502 = vmatpush2.bf16.msra.mxu0 %v5017
    %6503 = vmatprep.subr.bf16.mxu0 %v5008
    %6504 = vmatpush2.bf16.msra.mxu0 %v5007
    %6505 = vmatprep.subr.bf16.mxu0 %v4998
    %6506 = vmatpush2.bf16.msra.mxu0 %v4997
    %6507 = vmatprep.mubr.bf16.mxu0 %v1862
    %6508 = vmatmul.mubr.bf16.gmra.mxu0 %v1861
    %v6509 = vpop.f32.mrf.mxu0
    %v6510 = vadd.f32 %v6467, %v6509
    %v6511 = vpop.f32.mrf.mxu0
    %v6512 = vadd.f32 %v6469, %v6511
    %v6513 = vpop.f32.mrf.mxu0
    %v6514 = vadd.f32 %v6471, %v6513
    %v6515 = vpop.f32.mrf.mxu0
    %v6516 = vadd.f32 %v6473, %v6515
    %6517 = vdwg.mxu0
    %6518 = vmatprep.subr.bf16.mxu0 %v4350
    %6519 = vmatpush1.bf16.msra.mxu0 %v4349
    %6520 = vmatprep.subr.bf16.mxu0 %v4340
    %6521 = vmatpush1.bf16.msra.mxu0 %v4339
    %6522 = vmatprep.subr.bf16.mxu0 %v4330
    %6523 = vmatpush1.bf16.msra.mxu0 %v4329
    %6524 = vmatprep.subr.bf16.mxu0 %v4320
    %6525 = vmatpush1.bf16.msra.mxu0 %v4319
    %6526 = vmatprep.subr.bf16.mxu0 %v4310
    %6527 = vmatpush1.bf16.msra.mxu0 %v4309
    %6528 = vmatprep.subr.bf16.mxu0 %v4300
    %6529 = vmatpush1.bf16.msra.mxu0 %v4299
    %6530 = vmatprep.subr.bf16.mxu0 %v4290
    %6531 = vmatpush1.bf16.msra.mxu0 %v4289
    %6532 = vmatprep.subr.bf16.mxu0 %v4280
    %6533 = vmatpush1.bf16.msra.mxu0 %v4279
    %6534 = vmatprep.subr.bf16.mxu0 %v4430
    %6535 = vmatpush2.bf16.msra.mxu0 %v4429
    %6536 = vmatprep.subr.bf16.mxu0 %v4420
    %6537 = vmatpush2.bf16.msra.mxu0 %v4419
    %6538 = vmatprep.subr.bf16.mxu0 %v4410
    %6539 = vmatpush2.bf16.msra.mxu0 %v4409
    %6540 = vmatprep.subr.bf16.mxu0 %v4400
    %6541 = vmatpush2.bf16.msra.mxu0 %v4399
    %6542 = vmatprep.subr.bf16.mxu0 %v4390
    %6543 = vmatpush2.bf16.msra.mxu0 %v4389
    %6544 = vmatprep.subr.bf16.mxu0 %v4380
    %6545 = vmatpush2.bf16.msra.mxu0 %v4379
    %6546 = vmatprep.subr.bf16.mxu0 %v4370
    %6547 = vmatpush2.bf16.msra.mxu0 %v4369
    %6548 = vmatprep.subr.bf16.mxu0 %v4360
    %6549 = vmatpush2.bf16.msra.mxu0 %v4359
    %6550 = vmatprep.mubr.bf16.mxu0 %v1854
    %6551 = vmatmul.mubr.bf16.gmra.mxu0 %v1853
    %v6552 = vpop.f32.mrf.mxu0
    %v6553 = vadd.f32 %v1800, %v6552
    %v6554 = vpop.f32.mrf.mxu0
    %v6555 = vadd.f32 %v1804, %v6554
    %v6556 = vpop.f32.mrf.mxu0
    %v6557 = vadd.f32 %v1800, %v6556
    %v6558 = vpop.f32.mrf.mxu0
    %v6559 = vadd.f32 %v1804, %v6558
    %6560 = vdwg.mxu0
    %6561 = vmatprep.subr.bf16.mxu0 %v4510
    %6562 = vmatpush1.bf16.msra.mxu0 %v4509
    %6563 = vmatprep.subr.bf16.mxu0 %v4500
    %6564 = vmatpush1.bf16.msra.mxu0 %v4499
    %6565 = vmatprep.subr.bf16.mxu0 %v4490
    %6566 = vmatpush1.bf16.msra.mxu0 %v4489
    %6567 = vmatprep.subr.bf16.mxu0 %v4480
    %6568 = vmatpush1.bf16.msra.mxu0 %v4479
    %6569 = vmatprep.subr.bf16.mxu0 %v4470
    %6570 = vmatpush1.bf16.msra.mxu0 %v4469
    %6571 = vmatprep.subr.bf16.mxu0 %v4460
    %6572 = vmatpush1.bf16.msra.mxu0 %v4459
    %6573 = vmatprep.subr.bf16.mxu0 %v4450
    %6574 = vmatpush1.bf16.msra.mxu0 %v4449
    %6575 = vmatprep.subr.bf16.mxu0 %v4440
    %6576 = vmatpush1.bf16.msra.mxu0 %v4439
    %6577 = vmatprep.subr.bf16.mxu0 %v4590
    %6578 = vmatpush2.bf16.msra.mxu0 %v4589
    %6579 = vmatprep.subr.bf16.mxu0 %v4580
    %6580 = vmatpush2.bf16.msra.mxu0 %v4579
    %6581 = vmatprep.subr.bf16.mxu0 %v4570
    %6582 = vmatpush2.bf16.msra.mxu0 %v4569
    %6583 = vmatprep.subr.bf16.mxu0 %v4560
    %6584 = vmatpush2.bf16.msra.mxu0 %v4559
    %6585 = vmatprep.subr.bf16.mxu0 %v4550
    %6586 = vmatpush2.bf16.msra.mxu0 %v4549
    %6587 = vmatprep.subr.bf16.mxu0 %v4540
    %6588 = vmatpush2.bf16.msra.mxu0 %v4539
    %6589 = vmatprep.subr.bf16.mxu0 %v4530
    %6590 = vmatpush2.bf16.msra.mxu0 %v4529
    %6591 = vmatprep.subr.bf16.mxu0 %v4520
    %6592 = vmatpush2.bf16.msra.mxu0 %v4519
    %6593 = vmatprep.mubr.bf16.mxu0 %v1856
    %6594 = vmatmul.mubr.bf16.gmra.mxu0 %v1855
    %v6595 = vpop.f32.mrf.mxu0
    %v6596 = vadd.f32 %v6553, %v6595
    %v6597 = vpop.f32.mrf.mxu0
    %v6598 = vadd.f32 %v6555, %v6597
    %v6599 = vpop.f32.mrf.mxu0
    %v6600 = vadd.f32 %v6557, %v6599
    %v6601 = vpop.f32.mrf.mxu0
    %v6602 = vadd.f32 %v6559, %v6601
    %6603 = vdwg.mxu0
    %6604 = vmatprep.subr.bf16.mxu0 %v4670
    %6605 = vmatpush1.bf16.msra.mxu0 %v4669
    %6606 = vmatprep.subr.bf16.mxu0 %v4660
    %6607 = vmatpush1.bf16.msra.mxu0 %v4659
    %6608 = vmatprep.subr.bf16.mxu0 %v4650
    %6609 = vmatpush1.bf16.msra.mxu0 %v4649
    %6610 = vmatprep.subr.bf16.mxu0 %v4640
    %6611 = vmatpush1.bf16.msra.mxu0 %v4639
    %6612 = vmatprep.subr.bf16.mxu0 %v4630
    %6613 = vmatpush1.bf16.msra.mxu0 %v4629
    %6614 = vmatprep.subr.bf16.mxu0 %v4620
    %6615 = vmatpush1.bf16.msra.mxu0 %v4619
    %6616 = vmatprep.subr.bf16.mxu0 %v4610
    %6617 = vmatpush1.bf16.msra.mxu0 %v4609
    %6618 = vmatprep.subr.bf16.mxu0 %v4600
    %6619 = vmatpush1.bf16.msra.mxu0 %v4599
    %6620 = vmatprep.subr.bf16.mxu0 %v4750
    %6621 = vmatpush2.bf16.msra.mxu0 %v4749
    %6622 = vmatprep.subr.bf16.mxu0 %v4740
    %6623 = vmatpush2.bf16.msra.mxu0 %v4739
    %6624 = vmatprep.subr.bf16.mxu0 %v4730
    %6625 = vmatpush2.bf16.msra.mxu0 %v4729
    %6626 = vmatprep.subr.bf16.mxu0 %v4720
    %6627 = vmatpush2.bf16.msra.mxu0 %v4719
    %6628 = vmatprep.subr.bf16.mxu0 %v4710
    %6629 = vmatpush2.bf16.msra.mxu0 %v4709
    %6630 = vmatprep.subr.bf16.mxu0 %v4700
    %6631 = vmatpush2.bf16.msra.mxu0 %v4699
    %6632 = vmatprep.subr.bf16.mxu0 %v4690
    %6633 = vmatpush2.bf16.msra.mxu0 %v4689
    %6634 = vmatprep.subr.bf16.mxu0 %v4680
    %6635 = vmatpush2.bf16.msra.mxu0 %v4679
    %6636 = vmatprep.mubr.bf16.mxu0 %v1858
    %6637 = vmatmul.mubr.bf16.gmra.mxu0 %v1857
    %v6638 = vpop.f32.mrf.mxu0
    %v6639 = vadd.f32 %v6596, %v6638
    %v6640 = vpop.f32.mrf.mxu0
    %v6641 = vadd.f32 %v6598, %v6640
    %v6642 = vpop.f32.mrf.mxu0
    %v6643 = vadd.f32 %v6600, %v6642
    %v6644 = vpop.f32.mrf.mxu0
    %v6645 = vadd.f32 %v6602, %v6644
    %6646 = vdwg.mxu0
    %6647 = vmatprep.subr.bf16.mxu0 %v4830
    %6648 = vmatpush1.bf16.msra.mxu0 %v4829
    %6649 = vmatprep.subr.bf16.mxu0 %v4820
    %6650 = vmatpush1.bf16.msra.mxu0 %v4819
    %6651 = vmatprep.subr.bf16.mxu0 %v4810
    %6652 = vmatpush1.bf16.msra.mxu0 %v4809
    %6653 = vmatprep.subr.bf16.mxu0 %v4800
    %6654 = vmatpush1.bf16.msra.mxu0 %v4799
    %6655 = vmatprep.subr.bf16.mxu0 %v4790
    %6656 = vmatpush1.bf16.msra.mxu0 %v4789
    %6657 = vmatprep.subr.bf16.mxu0 %v4780
    %6658 = vmatpush1.bf16.msra.mxu0 %v4779
    %6659 = vmatprep.subr.bf16.mxu0 %v4770
    %6660 = vmatpush1.bf16.msra.mxu0 %v4769
    %6661 = vmatprep.subr.bf16.mxu0 %v4760
    %6662 = vmatpush1.bf16.msra.mxu0 %v4759
    %6663 = vmatprep.subr.bf16.mxu0 %v4910
    %6664 = vmatpush2.bf16.msra.mxu0 %v4909
    %6665 = vmatprep.subr.bf16.mxu0 %v4900
    %6666 = vmatpush2.bf16.msra.mxu0 %v4899
    %6667 = vmatprep.subr.bf16.mxu0 %v4890
    %6668 = vmatpush2.bf16.msra.mxu0 %v4889
    %6669 = vmatprep.subr.bf16.mxu0 %v4880
    %6670 = vmatpush2.bf16.msra.mxu0 %v4879
    %6671 = vmatprep.subr.bf16.mxu0 %v4870
    %6672 = vmatpush2.bf16.msra.mxu0 %v4869
    %6673 = vmatprep.subr.bf16.mxu0 %v4860
    %6674 = vmatpush2.bf16.msra.mxu0 %v4859
    %6675 = vmatprep.subr.bf16.mxu0 %v4850
    %6676 = vmatpush2.bf16.msra.mxu0 %v4849
    %6677 = vmatprep.subr.bf16.mxu0 %v4840
    %6678 = vmatpush2.bf16.msra.mxu0 %v4839
    %6679 = vmatprep.mubr.bf16.mxu0 %v1860
    %6680 = vmatmul.mubr.bf16.gmra.mxu0 %v1859
    %v6681 = vpop.f32.mrf.mxu0
    %v6682 = vadd.f32 %v6639, %v6681
    %v6683 = vpop.f32.mrf.mxu0
    %v6684 = vadd.f32 %v6641, %v6683
    %v6685 = vpop.f32.mrf.mxu0
    %v6686 = vadd.f32 %v6643, %v6685
    %v6687 = vpop.f32.mrf.mxu0
    %v6688 = vadd.f32 %v6645, %v6687
    %6689 = vdwg.mxu0
    %6690 = vmatprep.subr.bf16.mxu0 %v4990
    %6691 = vmatpush1.bf16.msra.mxu0 %v4989
    %6692 = vmatprep.subr.bf16.mxu0 %v4980
    %6693 = vmatpush1.bf16.msra.mxu0 %v4979
    %6694 = vmatprep.subr.bf16.mxu0 %v4970
    %6695 = vmatpush1.bf16.msra.mxu0 %v4969
    %6696 = vmatprep.subr.bf16.mxu0 %v4960
    %6697 = vmatpush1.bf16.msra.mxu0 %v4959
    %6698 = vmatprep.subr.bf16.mxu0 %v4950
    %6699 = vmatpush1.bf16.msra.mxu0 %v4949
    %6700 = vmatprep.subr.bf16.mxu0 %v4940
    %6701 = vmatpush1.bf16.msra.mxu0 %v4939
    %6702 = vmatprep.subr.bf16.mxu0 %v4930
    %6703 = vmatpush1.bf16.msra.mxu0 %v4929
    %6704 = vmatprep.subr.bf16.mxu0 %v4920
    %6705 = vmatpush1.bf16.msra.mxu0 %v4919
    %6706 = vmatprep.subr.bf16.mxu0 %v5070
    %6707 = vmatpush2.bf16.msra.mxu0 %v5069
    %6708 = vmatprep.subr.bf16.mxu0 %v5060
    %6709 = vmatpush2.bf16.msra.mxu0 %v5059
    %6710 = vmatprep.subr.bf16.mxu0 %v5050
    %6711 = vmatpush2.bf16.msra.mxu0 %v5049
    %6712 = vmatprep.subr.bf16.mxu0 %v5040
    %6713 = vmatpush2.bf16.msra.mxu0 %v5039
    %6714 = vmatprep.subr.bf16.mxu0 %v5030
    %6715 = vmatpush2.bf16.msra.mxu0 %v5029
    %6716 = vmatprep.subr.bf16.mxu0 %v5020
    %6717 = vmatpush2.bf16.msra.mxu0 %v5019
    %6718 = vmatprep.subr.bf16.mxu0 %v5010
    %6719 = vmatpush2.bf16.msra.mxu0 %v5009
    %6720 = vmatprep.subr.bf16.mxu0 %v5000
    %6721 = vmatpush2.bf16.msra.mxu0 %v4999
    %6722 = vmatprep.mubr.bf16.mxu0 %v1862
    %6723 = vmatmul.mubr.bf16.gmra.mxu0 %v1861
    %v6724 = vpop.f32.mrf.mxu0
    %v6725 = vadd.f32 %v6682, %v6724
    %v6726 = vpop.f32.mrf.mxu0
    %v6727 = vadd.f32 %v6684, %v6726
    %v6728 = vpop.f32.mrf.mxu0
    %v6729 = vadd.f32 %v6686, %v6728
    %v6730 = vpop.f32.mrf.mxu0
    %v6731 = vadd.f32 %v6688, %v6730
    %6732 = vdwg.mxu0
    %6733 = vmatprep.subr.bf16.mxu0 %v4352
    %6734 = vmatpush1.bf16.msra.mxu0 %v4351
    %6735 = vmatprep.subr.bf16.mxu0 %v4342
    %6736 = vmatpush1.bf16.msra.mxu0 %v4341
    %6737 = vmatprep.subr.bf16.mxu0 %v4332
    %6738 = vmatpush1.bf16.msra.mxu0 %v4331
    %6739 = vmatprep.subr.bf16.mxu0 %v4322
    %6740 = vmatpush1.bf16.msra.mxu0 %v4321
    %6741 = vmatprep.subr.bf16.mxu0 %v4312
    %6742 = vmatpush1.bf16.msra.mxu0 %v4311
    %6743 = vmatprep.subr.bf16.mxu0 %v4302
    %6744 = vmatpush1.bf16.msra.mxu0 %v4301
    %6745 = vmatprep.subr.bf16.mxu0 %v4292
    %6746 = vmatpush1.bf16.msra.mxu0 %v4291
    %6747 = vmatprep.subr.bf16.mxu0 %v4282
    %6748 = vmatpush1.bf16.msra.mxu0 %v4281
    %6749 = vmatprep.subr.bf16.mxu0 %v4432
    %6750 = vmatpush2.bf16.msra.mxu0 %v4431
    %6751 = vmatprep.subr.bf16.mxu0 %v4422
    %6752 = vmatpush2.bf16.msra.mxu0 %v4421
    %6753 = vmatprep.subr.bf16.mxu0 %v4412
    %6754 = vmatpush2.bf16.msra.mxu0 %v4411
    %6755 = vmatprep.subr.bf16.mxu0 %v4402
    %6756 = vmatpush2.bf16.msra.mxu0 %v4401
    %6757 = vmatprep.subr.bf16.mxu0 %v4392
    %6758 = vmatpush2.bf16.msra.mxu0 %v4391
    %6759 = vmatprep.subr.bf16.mxu0 %v4382
    %6760 = vmatpush2.bf16.msra.mxu0 %v4381
    %6761 = vmatprep.subr.bf16.mxu0 %v4372
    %6762 = vmatpush2.bf16.msra.mxu0 %v4371
    %6763 = vmatprep.subr.bf16.mxu0 %v4362
    %6764 = vmatpush2.bf16.msra.mxu0 %v4361
    %6765 = vmatprep.mubr.bf16.mxu0 %v1854
    %6766 = vmatmul.mubr.bf16.gmra.mxu0 %v1853
    %v6767 = vpop.f32.mrf.mxu0
    %v6768 = vadd.f32 %v1808, %v6767
    %v6769 = vpop.f32.mrf.mxu0
    %v6770 = vadd.f32 %v1812, %v6769
    %v6771 = vpop.f32.mrf.mxu0
    %v6772 = vadd.f32 %v1808, %v6771
    %v6773 = vpop.f32.mrf.mxu0
    %v6774 = vadd.f32 %v1812, %v6773
    %6775 = vdwg.mxu0
    %6776 = vmatprep.subr.bf16.mxu0 %v4512
    %6777 = vmatpush1.bf16.msra.mxu0 %v4511
    %6778 = vmatprep.subr.bf16.mxu0 %v4502
    %6779 = vmatpush1.bf16.msra.mxu0 %v4501
    %6780 = vmatprep.subr.bf16.mxu0 %v4492
    %6781 = vmatpush1.bf16.msra.mxu0 %v4491
    %6782 = vmatprep.subr.bf16.mxu0 %v4482
    %6783 = vmatpush1.bf16.msra.mxu0 %v4481
    %6784 = vmatprep.subr.bf16.mxu0 %v4472
    %6785 = vmatpush1.bf16.msra.mxu0 %v4471
    %6786 = vmatprep.subr.bf16.mxu0 %v4462
    %6787 = vmatpush1.bf16.msra.mxu0 %v4461
    %6788 = vmatprep.subr.bf16.mxu0 %v4452
    %6789 = vmatpush1.bf16.msra.mxu0 %v4451
    %6790 = vmatprep.subr.bf16.mxu0 %v4442
    %6791 = vmatpush1.bf16.msra.mxu0 %v4441
    %6792 = vmatprep.subr.bf16.mxu0 %v4592
    %6793 = vmatpush2.bf16.msra.mxu0 %v4591
    %6794 = vmatprep.subr.bf16.mxu0 %v4582
    %6795 = vmatpush2.bf16.msra.mxu0 %v4581
    %6796 = vmatprep.subr.bf16.mxu0 %v4572
    %6797 = vmatpush2.bf16.msra.mxu0 %v4571
    %6798 = vmatprep.subr.bf16.mxu0 %v4562
    %6799 = vmatpush2.bf16.msra.mxu0 %v4561
    %6800 = vmatprep.subr.bf16.mxu0 %v4552
    %6801 = vmatpush2.bf16.msra.mxu0 %v4551
    %6802 = vmatprep.subr.bf16.mxu0 %v4542
    %6803 = vmatpush2.bf16.msra.mxu0 %v4541
    %6804 = vmatprep.subr.bf16.mxu0 %v4532
    %6805 = vmatpush2.bf16.msra.mxu0 %v4531
    %6806 = vmatprep.subr.bf16.mxu0 %v4522
    %6807 = vmatpush2.bf16.msra.mxu0 %v4521
    %6808 = vmatprep.mubr.bf16.mxu0 %v1856
    %6809 = vmatmul.mubr.bf16.gmra.mxu0 %v1855
    %v6810 = vpop.f32.mrf.mxu0
    %v6811 = vadd.f32 %v6768, %v6810
    %v6812 = vpop.f32.mrf.mxu0
    %v6813 = vadd.f32 %v6770, %v6812
    %v6814 = vpop.f32.mrf.mxu0
    %v6815 = vadd.f32 %v6772, %v6814
    %v6816 = vpop.f32.mrf.mxu0
    %v6817 = vadd.f32 %v6774, %v6816
    %6818 = vdwg.mxu0
    %6819 = vmatprep.subr.bf16.mxu0 %v4672
    %6820 = vmatpush1.bf16.msra.mxu0 %v4671
    %6821 = vmatprep.subr.bf16.mxu0 %v4662
    %6822 = vmatpush1.bf16.msra.mxu0 %v4661
    %6823 = vmatprep.subr.bf16.mxu0 %v4652
    %6824 = vmatpush1.bf16.msra.mxu0 %v4651
    %6825 = vmatprep.subr.bf16.mxu0 %v4642
    %6826 = vmatpush1.bf16.msra.mxu0 %v4641
    %6827 = vmatprep.subr.bf16.mxu0 %v4632
    %6828 = vmatpush1.bf16.msra.mxu0 %v4631
    %6829 = vmatprep.subr.bf16.mxu0 %v4622
    %6830 = vmatpush1.bf16.msra.mxu0 %v4621
    %6831 = vmatprep.subr.bf16.mxu0 %v4612
    %6832 = vmatpush1.bf16.msra.mxu0 %v4611
    %6833 = vmatprep.subr.bf16.mxu0 %v4602
    %6834 = vmatpush1.bf16.msra.mxu0 %v4601
    %6835 = vmatprep.subr.bf16.mxu0 %v4752
    %6836 = vmatpush2.bf16.msra.mxu0 %v4751
    %6837 = vmatprep.subr.bf16.mxu0 %v4742
    %6838 = vmatpush2.bf16.msra.mxu0 %v4741
    %6839 = vmatprep.subr.bf16.mxu0 %v4732
    %6840 = vmatpush2.bf16.msra.mxu0 %v4731
    %6841 = vmatprep.subr.bf16.mxu0 %v4722
    %6842 = vmatpush2.bf16.msra.mxu0 %v4721
    %6843 = vmatprep.subr.bf16.mxu0 %v4712
    %6844 = vmatpush2.bf16.msra.mxu0 %v4711
    %6845 = vmatprep.subr.bf16.mxu0 %v4702
    %6846 = vmatpush2.bf16.msra.mxu0 %v4701
    %6847 = vmatprep.subr.bf16.mxu0 %v4692
    %6848 = vmatpush2.bf16.msra.mxu0 %v4691
    %6849 = vmatprep.subr.bf16.mxu0 %v4682
    %6850 = vmatpush2.bf16.msra.mxu0 %v4681
    %6851 = vmatprep.mubr.bf16.mxu0 %v1858
    %6852 = vmatmul.mubr.bf16.gmra.mxu0 %v1857
    %v6853 = vpop.f32.mrf.mxu0
    %v6854 = vadd.f32 %v6811, %v6853
    %v6855 = vpop.f32.mrf.mxu0
    %v6856 = vadd.f32 %v6813, %v6855
    %v6857 = vpop.f32.mrf.mxu0
    %v6858 = vadd.f32 %v6815, %v6857
    %v6859 = vpop.f32.mrf.mxu0
    %v6860 = vadd.f32 %v6817, %v6859
    %6861 = vdwg.mxu0
    %6862 = vmatprep.subr.bf16.mxu0 %v4832
    %6863 = vmatpush1.bf16.msra.mxu0 %v4831
    %6864 = vmatprep.subr.bf16.mxu0 %v4822
    %6865 = vmatpush1.bf16.msra.mxu0 %v4821
    %6866 = vmatprep.subr.bf16.mxu0 %v4812
    %6867 = vmatpush1.bf16.msra.mxu0 %v4811
    %6868 = vmatprep.subr.bf16.mxu0 %v4802
    %6869 = vmatpush1.bf16.msra.mxu0 %v4801
    %6870 = vmatprep.subr.bf16.mxu0 %v4792
    %6871 = vmatpush1.bf16.msra.mxu0 %v4791
    %6872 = vmatprep.subr.bf16.mxu0 %v4782
    %6873 = vmatpush1.bf16.msra.mxu0 %v4781
    %6874 = vmatprep.subr.bf16.mxu0 %v4772
    %6875 = vmatpush1.bf16.msra.mxu0 %v4771
    %6876 = vmatprep.subr.bf16.mxu0 %v4762
    %6877 = vmatpush1.bf16.msra.mxu0 %v4761
    %6878 = vmatprep.subr.bf16.mxu0 %v4912
    %6879 = vmatpush2.bf16.msra.mxu0 %v4911
    %6880 = vmatprep.subr.bf16.mxu0 %v4902
    %6881 = vmatpush2.bf16.msra.mxu0 %v4901
    %6882 = vmatprep.subr.bf16.mxu0 %v4892
    %6883 = vmatpush2.bf16.msra.mxu0 %v4891
    %6884 = vmatprep.subr.bf16.mxu0 %v4882
    %6885 = vmatpush2.bf16.msra.mxu0 %v4881
    %6886 = vmatprep.subr.bf16.mxu0 %v4872
    %6887 = vmatpush2.bf16.msra.mxu0 %v4871
    %6888 = vmatprep.subr.bf16.mxu0 %v4862
    %6889 = vmatpush2.bf16.msra.mxu0 %v4861
    %6890 = vmatprep.subr.bf16.mxu0 %v4852
    %6891 = vmatpush2.bf16.msra.mxu0 %v4851
    %6892 = vmatprep.subr.bf16.mxu0 %v4842
    %6893 = vmatpush2.bf16.msra.mxu0 %v4841
    %6894 = vmatprep.mubr.bf16.mxu0 %v1860
    %6895 = vmatmul.mubr.bf16.gmra.mxu0 %v1859
    %v6896 = vpop.f32.mrf.mxu0
    %v6897 = vadd.f32 %v6854, %v6896
    %v6898 = vpop.f32.mrf.mxu0
    %v6899 = vadd.f32 %v6856, %v6898
    %v6900 = vpop.f32.mrf.mxu0
    %v6901 = vadd.f32 %v6858, %v6900
    %v6902 = vpop.f32.mrf.mxu0
    %v6903 = vadd.f32 %v6860, %v6902
    %6904 = vdwg.mxu0
    %6905 = vmatprep.subr.bf16.mxu0 %v4992
    %6906 = vmatpush1.bf16.msra.mxu0 %v4991
    %6907 = vmatprep.subr.bf16.mxu0 %v4982
    %6908 = vmatpush1.bf16.msra.mxu0 %v4981
    %6909 = vmatprep.subr.bf16.mxu0 %v4972
    %6910 = vmatpush1.bf16.msra.mxu0 %v4971
    %6911 = vmatprep.subr.bf16.mxu0 %v4962
    %6912 = vmatpush1.bf16.msra.mxu0 %v4961
    %6913 = vmatprep.subr.bf16.mxu0 %v4952
    %6914 = vmatpush1.bf16.msra.mxu0 %v4951
    %6915 = vmatprep.subr.bf16.mxu0 %v4942
    %6916 = vmatpush1.bf16.msra.mxu0 %v4941
    %6917 = vmatprep.subr.bf16.mxu0 %v4932
    %6918 = vmatpush1.bf16.msra.mxu0 %v4931
    %6919 = vmatprep.subr.bf16.mxu0 %v4922
    %6920 = vmatpush1.bf16.msra.mxu0 %v4921
    %6921 = vmatprep.subr.bf16.mxu0 %v5072
    %6922 = vmatpush2.bf16.msra.mxu0 %v5071
    %6923 = vmatprep.subr.bf16.mxu0 %v5062
    %6924 = vmatpush2.bf16.msra.mxu0 %v5061
    %6925 = vmatprep.subr.bf16.mxu0 %v5052
    %6926 = vmatpush2.bf16.msra.mxu0 %v5051
    %6927 = vmatprep.subr.bf16.mxu0 %v5042
    %6928 = vmatpush2.bf16.msra.mxu0 %v5041
    %6929 = vmatprep.subr.bf16.mxu0 %v5032
    %6930 = vmatpush2.bf16.msra.mxu0 %v5031
    %6931 = vmatprep.subr.bf16.mxu0 %v5022
    %6932 = vmatpush2.bf16.msra.mxu0 %v5021
    %6933 = vmatprep.subr.bf16.mxu0 %v5012
    %6934 = vmatpush2.bf16.msra.mxu0 %v5011
    %6935 = vmatprep.subr.bf16.mxu0 %v5002
    %6936 = vmatpush2.bf16.msra.mxu0 %v5001
    %6937 = vmatprep.mubr.bf16.mxu0 %v1862
    %6938 = vmatmul.mubr.bf16.gmra.mxu0 %v1861
    %v6939 = vpop.f32.mrf.mxu0
    %v6940 = vadd.f32 %v6897, %v6939
    %v6941 = vpop.f32.mrf.mxu0
    %v6942 = vadd.f32 %v6899, %v6941
    %v6943 = vpop.f32.mrf.mxu0
    %v6944 = vadd.f32 %v6901, %v6943
    %v6945 = vpop.f32.mrf.mxu0
    %v6946 = vadd.f32 %v6903, %v6945
    %6947 = vdwg.mxu0
    %v6948 = vmax.f32 %v6080, 0.0
    %v6949 = vmax.f32 %v6082, 0.0
    %v6950 = vmax.f32 %v6295, 0.0
    %v6951 = vmax.f32 %v6297, 0.0
    %v6952 = vmax.f32 %v6510, 0.0
    %v6953 = vmax.f32 %v6512, 0.0
    %v6954 = vmax.f32 %v6725, 0.0
    %v6955 = vmax.f32 %v6727, 0.0
    %v6956 = vmax.f32 %v6940, 0.0
    %v6957 = vmax.f32 %v6942, 0.0
    %v6958 = vmax.f32 %v6084, 0.0
    %v6959 = vmax.f32 %v6086, 0.0
    %v6960 = vmax.f32 %v6299, 0.0
    %v6961 = vmax.f32 %v6301, 0.0
    %v6962 = vmax.f32 %v6514, 0.0
    %v6963 = vmax.f32 %v6516, 0.0
    %v6964 = vmax.f32 %v6729, 0.0
    %v6965 = vmax.f32 %v6731, 0.0
    %v6966 = vmax.f32 %v6944, 0.0
    %v6967 = vmax.f32 %v6946, 0.0
    %v6968 = vpack.c.bf16 %v6958, %v6948
    %v6969 = vpack.c.bf16 %v6959, %v6949
    %v6970 = vpack.c.bf16 %v6960, %v6950
    %v6971 = vpack.c.bf16 %v6961, %v6951
    %v6972 = vpack.c.bf16 %v6962, %v6952
    %v6973 = vpack.c.bf16 %v6963, %v6953
    %v6974 = vpack.c.bf16 %v6964, %v6954
    %v6975 = vpack.c.bf16 %v6965, %v6955
    %v6976 = vpack.c.bf16 %v6966, %v6956
    %v6977 = vpack.c.bf16 %v6967, %v6957
    %v6988 = vunpack.c.l.b16 %v6968
    %v6989 = vunpack.c.l.b16 %v6969
    %v6990 = vunpack.c.l.b16 %v6970
    %v6991 = vunpack.c.l.b16 %v6971
    %v6992 = vunpack.c.l.b16 %v6972
    %v6993 = vunpack.c.l.b16 %v6973
    %v6994 = vunpack.c.l.b16 %v6974
    %v6995 = vunpack.c.l.b16 %v6975
    %v6996 = vunpack.c.l.b16 %v6976
    %v6997 = vunpack.c.l.b16 %v6977
    %v6998 = vunpack.c.h.b16 %v6968
    %v6999 = vunpack.c.h.b16 %v6969
    %v7000 = vunpack.c.h.b16 %v6970
    %v7001 = vunpack.c.h.b16 %v6971
    %v7002 = vunpack.c.h.b16 %v6972
    %v7003 = vunpack.c.h.b16 %v6973
    %v7004 = vunpack.c.h.b16 %v6974
    %v7005 = vunpack.c.h.b16 %v6975
    %v7006 = vunpack.c.h.b16 %v6976
    %v7007 = vunpack.c.h.b16 %v6977
    %v7008 = vpack.c.b16 %v6989, %v6988
    %v7009 = vpack.c.b16 %v6991, %v6990
    %v7010 = vpack.c.b16 %v6993, %v6992
    %v7011 = vpack.c.b16 %v6995, %v6994
    %v7012 = vpack.c.b16 %v6997, %v6996
    %v7013 = vpack.c.b16 %v6999, %v6998
    %v7014 = vpack.c.b16 %v7001, %v7000
    %v7015 = vpack.c.b16 %v7003, %v7002
    %v7016 = vpack.c.b16 %v7005, %v7004
    %v7017 = vpack.c.b16 %v7007, %v7006
    %7028 = vst [vmem:[#allocation3] sm:$0xff] %v7008
    %7029 = vst [vmem:[#allocation3 + $0x8] sm:$0xff] %v7009
    %7030 = vst [vmem:[#allocation3 + $0x10] sm:$0xff] %v7010
    %7031 = vst [vmem:[#allocation3 + $0x18] sm:$0xff] %v7011
    %7032 = vst [vmem:[#allocation3 + $0x20] sm:$0xff] %v7012
    %7033 = vst [vmem:[#allocation3 + $0x28] sm:$0xff] %v7013
    %7034 = vst [vmem:[#allocation3 + $0x30] sm:$0xff] %v7014
    %7035 = vst [vmem:[#allocation3 + $0x38] sm:$0xff] %v7015
    %7036 = vst [vmem:[#allocation3 + $0x40] sm:$0xff] %v7016
    %7037 = vst [vmem:[#allocation3 + $0x48] sm:$0xff] %v7017
    %v7038 = vld [vmem:[#allocation3] sm:$0xff]
    %v7039 = vld [vmem:[#allocation3 + $0x8] sm:$0xff]
    %v7040 = vld [vmem:[#allocation3 + $0x10] sm:$0xff]
    %v7041 = vld [vmem:[#allocation3 + $0x18] sm:$0xff]
    %v7042 = vld [vmem:[#allocation3 + $0x20] sm:$0xff]
    %v7043 = vld [vmem:[#allocation3 + $0x28] sm:$0xff]
    %v7044 = vld [vmem:[#allocation3 + $0x30] sm:$0xff]
    %v7045 = vld [vmem:[#allocation3 + $0x38] sm:$0xff]
    %v7046 = vld [vmem:[#allocation3 + $0x40] sm:$0xff]
    %v7047 = vld [vmem:[#allocation3 + $0x48] sm:$0xff]
    %v7048 = vld [vmem:[#allocation13] sm:$0xff]
    %v7049 = vld [vmem:[#allocation13 + $0x8] sm:$0xff]
    %v7050 = vld [vmem:[#allocation13 + $0x10] sm:$0xff]
    %v7051 = vld [vmem:[#allocation13 + $0x18] sm:$0xf]
    %v7052 = vld [vmem:[#allocation13 + $0x1c] sm:$0xff]
    %v7053 = vld [vmem:[#allocation13 + $0x24] sm:$0xff]
    %v7054 = vld [vmem:[#allocation13 + $0x2c] sm:$0xff]
    %v7055 = vld [vmem:[#allocation13 + $0x34] sm:$0xf]
    %v7056 = vld [vmem:[#allocation13 + $0x38] sm:$0xff]
    %v7057 = vld [vmem:[#allocation13 + $0x40] sm:$0xff]
    %v7058 = vld [vmem:[#allocation13 + $0x48] sm:$0xff]
    %v7059 = vld [vmem:[#allocation13 + $0x50] sm:$0xf]
    %v7060 = vld [vmem:[#allocation13 + $0x54] sm:$0xff]
    %v7061 = vld [vmem:[#allocation13 + $0x5c] sm:$0xff]
    %v7062 = vld [vmem:[#allocation13 + $0x64] sm:$0xff]
    %v7063 = vld [vmem:[#allocation13 + $0x6c] sm:$0xf]
    %v7064 = vld [vmem:[#allocation13 + $0x70] sm:$0xff]
    %v7065 = vld [vmem:[#allocation13 + $0x78] sm:$0xff]
    %v7066 = vld [vmem:[#allocation13 + $0x80] sm:$0xff]
    %v7067 = vld [vmem:[#allocation13 + $0x88] sm:$0xf]
    %v7068 = vld [vmem:[#allocation13 + $0x8c] sm:$0xff]
    %v7069 = vld [vmem:[#allocation13 + $0x94] sm:$0xff]
    %v7070 = vld [vmem:[#allocation13 + $0x9c] sm:$0xff]
    %v7071 = vld [vmem:[#allocation13 + $0xa4] sm:$0xf]
    %v7072 = vld [vmem:[#allocation13 + $0xa8] sm:$0xff]
    %v7073 = vld [vmem:[#allocation13 + $0xb0] sm:$0xff]
    %v7074 = vld [vmem:[#allocation13 + $0xb8] sm:$0xff]
    %v7075 = vld [vmem:[#allocation13 + $0xc0] sm:$0xf]
    %v7076 = vld [vmem:[#allocation13 + $0xc4] sm:$0xff]
    %v7077 = vld [vmem:[#allocation13 + $0xcc] sm:$0xff]
    %v7078 = vld [vmem:[#allocation13 + $0xd4] sm:$0xff]
    %v7079 = vld [vmem:[#allocation13 + $0xdc] sm:$0xf]
    %v7080 = vld [vmem:[#allocation13 + $0xe0] sm:$0xff]
    %v7081 = vld [vmem:[#allocation13 + $0xe8] sm:$0xff]
    %v7082 = vld [vmem:[#allocation13 + $0xf0] sm:$0xff]
    %v7083 = vld [vmem:[#allocation13 + $0xf8] sm:$0xf]
    %v7084 = vld [vmem:[#allocation13 + $0xfc] sm:$0xff]
    %v7085 = vld [vmem:[#allocation13 + $0x104] sm:$0xff]
    %v7086 = vld [vmem:[#allocation13 + $0x10c] sm:$0xff]
    %v7087 = vld [vmem:[#allocation13 + $0x114] sm:$0xf]
    %v7088 = vld [vmem:[#allocation13 + $0x118] sm:$0xff]
    %v7089 = vld [vmem:[#allocation13 + $0x120] sm:$0xff]
    %v7090 = vld [vmem:[#allocation13 + $0x128] sm:$0xff]
    %v7091 = vld [vmem:[#allocation13 + $0x130] sm:$0xf]
    %v7092 = vld [vmem:[#allocation13 + $0x134] sm:$0xff]
    %v7093 = vld [vmem:[#allocation13 + $0x13c] sm:$0xff]
    %v7094 = vld [vmem:[#allocation13 + $0x144] sm:$0xff]
    %v7095 = vld [vmem:[#allocation13 + $0x14c] sm:$0xf]
    %v7096 = vld [vmem:[#allocation13 + $0x150] sm:$0xff]
    %v7097 = vld [vmem:[#allocation13 + $0x158] sm:$0xff]
    %v7098 = vld [vmem:[#allocation13 + $0x160] sm:$0xff]
    %v7099 = vld [vmem:[#allocation13 + $0x168] sm:$0xf]
    %v7100 = vld [vmem:[#allocation13 + $0x16c] sm:$0xff]
    %v7101 = vld [vmem:[#allocation13 + $0x174] sm:$0xff]
    %v7102 = vld [vmem:[#allocation13 + $0x17c] sm:$0xff]
    %v7103 = vld [vmem:[#allocation13 + $0x184] sm:$0xf]
    %v7104 = vld [vmem:[#allocation13 + $0x188] sm:$0xff]
    %v7105 = vld [vmem:[#allocation13 + $0x190] sm:$0xff]
    %v7106 = vld [vmem:[#allocation13 + $0x198] sm:$0xff]
    %v7107 = vld [vmem:[#allocation13 + $0x1a0] sm:$0xf]
    %v7108 = vld [vmem:[#allocation13 + $0x1a4] sm:$0xff]
    %v7109 = vld [vmem:[#allocation13 + $0x1ac] sm:$0xff]
    %v7110 = vld [vmem:[#allocation13 + $0x1b4] sm:$0xff]
    %v7111 = vld [vmem:[#allocation13 + $0x1bc] sm:$0xf]
    %v7112 = vld [vmem:[#allocation13 + $0x1c0] sm:$0xff]
    %v7113 = vld [vmem:[#allocation13 + $0x1c8] sm:$0xff]
    %v7114 = vld [vmem:[#allocation13 + $0x1d0] sm:$0xff]
    %v7115 = vld [vmem:[#allocation13 + $0x1d8] sm:$0xf]
    %v7116 = vld [vmem:[#allocation13 + $0x1dc] sm:$0xff]
    %v7117 = vld [vmem:[#allocation13 + $0x1e4] sm:$0xff]
    %v7118 = vld [vmem:[#allocation13 + $0x1ec] sm:$0xff]
    %v7119 = vld [vmem:[#allocation13 + $0x1f4] sm:$0xf]
    %v7120 = vld [vmem:[#allocation13 + $0x1f8] sm:$0xff]
    %v7121 = vld [vmem:[#allocation13 + $0x200] sm:$0xff]
    %v7122 = vld [vmem:[#allocation13 + $0x208] sm:$0xff]
    %v7123 = vld [vmem:[#allocation13 + $0x210] sm:$0xf]
    %v7124 = vld [vmem:[#allocation13 + $0x214] sm:$0xff]
    %v7125 = vld [vmem:[#allocation13 + $0x21c] sm:$0xff]
    %v7126 = vld [vmem:[#allocation13 + $0x224] sm:$0xff]
    %v7127 = vld [vmem:[#allocation13 + $0x22c] sm:$0xf]
    %v7128 = vld [vmem:[#allocation13 + $0x230] sm:$0xff]
    %v7129 = vld [vmem:[#allocation13 + $0x238] sm:$0xff]
    %v7130 = vld [vmem:[#allocation13 + $0x240] sm:$0xff]
    %v7131 = vld [vmem:[#allocation13 + $0x248] sm:$0xf]
    %v7132 = vld [vmem:[#allocation13 + $0x24c] sm:$0xff]
    %v7133 = vld [vmem:[#allocation13 + $0x254] sm:$0xff]
    %v7134 = vld [vmem:[#allocation13 + $0x25c] sm:$0xff]
    %v7135 = vld [vmem:[#allocation13 + $0x264] sm:$0xf]
    %v7136 = vld [vmem:[#allocation13 + $0x268] sm:$0xff]
    %v7137 = vld [vmem:[#allocation13 + $0x270] sm:$0xff]
    %v7138 = vld [vmem:[#allocation13 + $0x278] sm:$0xff]
    %v7139 = vld [vmem:[#allocation13 + $0x280] sm:$0xf]
    %v7140 = vld [vmem:[#allocation13 + $0x284] sm:$0xff]
    %v7141 = vld [vmem:[#allocation13 + $0x28c] sm:$0xff]
    %v7142 = vld [vmem:[#allocation13 + $0x294] sm:$0xff]
    %v7143 = vld [vmem:[#allocation13 + $0x29c] sm:$0xf]
    %v7144 = vld [vmem:[#allocation13 + $0x2a0] sm:$0xff]
    %v7145 = vld [vmem:[#allocation13 + $0x2a8] sm:$0xff]
    %v7146 = vld [vmem:[#allocation13 + $0x2b0] sm:$0xff]
    %v7147 = vld [vmem:[#allocation13 + $0x2b8] sm:$0xf]
    %v7148 = vld [vmem:[#allocation13 + $0x2bc] sm:$0xff]
    %v7149 = vld [vmem:[#allocation13 + $0x2c4] sm:$0xff]
    %v7150 = vld [vmem:[#allocation13 + $0x2cc] sm:$0xff]
    %v7151 = vld [vmem:[#allocation13 + $0x2d4] sm:$0xf]
    %v7152 = vld [vmem:[#allocation13 + $0x2d8] sm:$0xff]
    %v7153 = vld [vmem:[#allocation13 + $0x2e0] sm:$0xff]
    %v7154 = vld [vmem:[#allocation13 + $0x2e8] sm:$0xff]
    %v7155 = vld [vmem:[#allocation13 + $0x2f0] sm:$0xf]
    %v7156 = vld [vmem:[#allocation13 + $0x2f4] sm:$0xff]
    %v7157 = vld [vmem:[#allocation13 + $0x2fc] sm:$0xff]
    %v7158 = vld [vmem:[#allocation13 + $0x304] sm:$0xff]
    %v7159 = vld [vmem:[#allocation13 + $0x30c] sm:$0xf]
    %v7160 = vld [vmem:[#allocation13 + $0x310] sm:$0xff]
    %v7161 = vld [vmem:[#allocation13 + $0x318] sm:$0xff]
    %v7162 = vld [vmem:[#allocation13 + $0x320] sm:$0xff]
    %v7163 = vld [vmem:[#allocation13 + $0x328] sm:$0xf]
    %v7164 = vld [vmem:[#allocation13 + $0x32c] sm:$0xff]
    %v7165 = vld [vmem:[#allocation13 + $0x334] sm:$0xff]
    %v7166 = vld [vmem:[#allocation13 + $0x33c] sm:$0xff]
    %v7167 = vld [vmem:[#allocation13 + $0x344] sm:$0xf]
    %v7168 = vld [vmem:[#allocation13 + $0x348] sm:$0xff]
    %v7169 = vld [vmem:[#allocation13 + $0x350] sm:$0xff]
    %v7170 = vld [vmem:[#allocation13 + $0x358] sm:$0xff]
    %v7171 = vld [vmem:[#allocation13 + $0x360] sm:$0xf]
    %v7172 = vld [vmem:[#allocation13 + $0x364] sm:$0xff]
    %v7173 = vld [vmem:[#allocation13 + $0x36c] sm:$0xff]
    %v7174 = vld [vmem:[#allocation13 + $0x374] sm:$0xff]
    %v7175 = vld [vmem:[#allocation13 + $0x37c] sm:$0xf]
    %v7176 = vld [vmem:[#allocation13 + $0x380] sm:$0xff]
    %v7177 = vld [vmem:[#allocation13 + $0x388] sm:$0xff]
    %v7178 = vld [vmem:[#allocation13 + $0x390] sm:$0xff]
    %v7179 = vld [vmem:[#allocation13 + $0x398] sm:$0xf]
    %v7180 = vld [vmem:[#allocation13 + $0x39c] sm:$0xff]
    %v7181 = vld [vmem:[#allocation13 + $0x3a4] sm:$0xff]
    %v7182 = vld [vmem:[#allocation13 + $0x3ac] sm:$0xff]
    %v7183 = vld [vmem:[#allocation13 + $0x3b4] sm:$0xf]
    %v7184 = vld [vmem:[#allocation13 + $0x3b8] sm:$0xff]
    %v7185 = vld [vmem:[#allocation13 + $0x3c0] sm:$0xff]
    %v7186 = vld [vmem:[#allocation13 + $0x3c8] sm:$0xff]
    %v7187 = vld [vmem:[#allocation13 + $0x3d0] sm:$0xf]
    %v7188 = vld [vmem:[#allocation13 + $0x3d4] sm:$0xff]
    %v7189 = vld [vmem:[#allocation13 + $0x3dc] sm:$0xff]
    %v7190 = vld [vmem:[#allocation13 + $0x3e4] sm:$0xff]
    %v7191 = vld [vmem:[#allocation13 + $0x3ec] sm:$0xf]
    %v7192 = vld [vmem:[#allocation13 + $0x3f0] sm:$0xff]
    %v7193 = vld [vmem:[#allocation13 + $0x3f8] sm:$0xff]
    %v7194 = vld [vmem:[#allocation13 + $0x400] sm:$0xff]
    %v7195 = vld [vmem:[#allocation13 + $0x408] sm:$0xf]
    %v7196 = vld [vmem:[#allocation13 + $0x40c] sm:$0xff]
    %v7197 = vld [vmem:[#allocation13 + $0x414] sm:$0xff]
    %v7198 = vld [vmem:[#allocation13 + $0x41c] sm:$0xff]
    %v7199 = vld [vmem:[#allocation13 + $0x424] sm:$0xf]
    %v7200 = vld [vmem:[#allocation13 + $0x428] sm:$0xff]
    %v7201 = vld [vmem:[#allocation13 + $0x430] sm:$0xff]
    %v7202 = vld [vmem:[#allocation13 + $0x438] sm:$0xff]
    %v7203 = vld [vmem:[#allocation13 + $0x440] sm:$0xf]
    %v7204 = vld [vmem:[#allocation13 + $0x444] sm:$0xff]
    %v7205 = vld [vmem:[#allocation13 + $0x44c] sm:$0xff]
    %v7206 = vld [vmem:[#allocation13 + $0x454] sm:$0xff]
    %v7207 = vld [vmem:[#allocation13 + $0x45c] sm:$0xf]
    %v7208 = vld [vmem:[#allocation13 + $0x460] sm:$0xff]
    %v7209 = vld [vmem:[#allocation13 + $0x468] sm:$0xff]
    %v7210 = vld [vmem:[#allocation13 + $0x470] sm:$0xff]
    %v7211 = vld [vmem:[#allocation13 + $0x478] sm:$0xf]
    %v7212 = vld [vmem:[#allocation13 + $0x47c] sm:$0xff]
    %v7213 = vld [vmem:[#allocation13 + $0x484] sm:$0xff]
    %v7214 = vld [vmem:[#allocation13 + $0x48c] sm:$0xff]
    %v7215 = vld [vmem:[#allocation13 + $0x494] sm:$0xf]
    %v7216 = vld [vmem:[#allocation13 + $0x498] sm:$0xff]
    %v7217 = vld [vmem:[#allocation13 + $0x4a0] sm:$0xff]
    %v7218 = vld [vmem:[#allocation13 + $0x4a8] sm:$0xff]
    %v7219 = vld [vmem:[#allocation13 + $0x4b0] sm:$0xf]
    %v7220 = vld [vmem:[#allocation13 + $0x4b4] sm:$0xff]
    %v7221 = vld [vmem:[#allocation13 + $0x4bc] sm:$0xff]
    %v7222 = vld [vmem:[#allocation13 + $0x4c4] sm:$0xff]
    %v7223 = vld [vmem:[#allocation13 + $0x4cc] sm:$0xf]
    %v7224 = vld [vmem:[#allocation13 + $0x4d0] sm:$0xff]
    %v7225 = vld [vmem:[#allocation13 + $0x4d8] sm:$0xff]
    %v7226 = vld [vmem:[#allocation13 + $0x4e0] sm:$0xff]
    %v7227 = vld [vmem:[#allocation13 + $0x4e8] sm:$0xf]
    %v7228 = vld [vmem:[#allocation13 + $0x4ec] sm:$0xff]
    %v7229 = vld [vmem:[#allocation13 + $0x4f4] sm:$0xff]
    %v7230 = vld [vmem:[#allocation13 + $0x4fc] sm:$0xff]
    %v7231 = vld [vmem:[#allocation13 + $0x504] sm:$0xf]
    %v7232 = vld [vmem:[#allocation13 + $0x508] sm:$0xff]
    %v7233 = vld [vmem:[#allocation13 + $0x510] sm:$0xff]
    %v7234 = vld [vmem:[#allocation13 + $0x518] sm:$0xff]
    %v7235 = vld [vmem:[#allocation13 + $0x520] sm:$0xf]
    %v7236 = vld [vmem:[#allocation13 + $0x524] sm:$0xff]
    %v7237 = vld [vmem:[#allocation13 + $0x52c] sm:$0xff]
    %v7238 = vld [vmem:[#allocation13 + $0x534] sm:$0xff]
    %v7239 = vld [vmem:[#allocation13 + $0x53c] sm:$0xf]
    %v7240 = vld [vmem:[#allocation13 + $0x540] sm:$0xff]
    %v7241 = vld [vmem:[#allocation13 + $0x548] sm:$0xff]
    %v7242 = vld [vmem:[#allocation13 + $0x550] sm:$0xff]
    %v7243 = vld [vmem:[#allocation13 + $0x558] sm:$0xf]
    %v7244 = vld [vmem:[#allocation13 + $0x55c] sm:$0xff]
    %v7245 = vld [vmem:[#allocation13 + $0x564] sm:$0xff]
    %v7246 = vld [vmem:[#allocation13 + $0x56c] sm:$0xff]
    %v7247 = vld [vmem:[#allocation13 + $0x574] sm:$0xf]
    %v7248 = vld [vmem:[#allocation13 + $0x578] sm:$0xff]
    %v7249 = vld [vmem:[#allocation13 + $0x580] sm:$0xff]
    %v7250 = vld [vmem:[#allocation13 + $0x588] sm:$0xff]
    %v7251 = vld [vmem:[#allocation13 + $0x590] sm:$0xf]
    %v7252 = vld [vmem:[#allocation13 + $0x594] sm:$0xff]
    %v7253 = vld [vmem:[#allocation13 + $0x59c] sm:$0xff]
    %v7254 = vld [vmem:[#allocation13 + $0x5a4] sm:$0xff]
    %v7255 = vld [vmem:[#allocation13 + $0x5ac] sm:$0xf]
    %v7256 = vld [vmem:[#allocation13 + $0x5b0] sm:$0xff]
    %v7257 = vld [vmem:[#allocation13 + $0x5b8] sm:$0xff]
    %v7258 = vld [vmem:[#allocation13 + $0x5c0] sm:$0xff]
    %v7259 = vld [vmem:[#allocation13 + $0x5c8] sm:$0xf]
    %v7260 = vld [vmem:[#allocation13 + $0x5cc] sm:$0xff]
    %v7261 = vld [vmem:[#allocation13 + $0x5d4] sm:$0xff]
    %v7262 = vld [vmem:[#allocation13 + $0x5dc] sm:$0xff]
    %v7263 = vld [vmem:[#allocation13 + $0x5e4] sm:$0xf]
    %v7264 = vld [vmem:[#allocation13 + $0x5e8] sm:$0xff]
    %v7265 = vld [vmem:[#allocation13 + $0x5f0] sm:$0xff]
    %v7266 = vld [vmem:[#allocation13 + $0x5f8] sm:$0xff]
    %v7267 = vld [vmem:[#allocation13 + $0x600] sm:$0xf]
    %v7268 = vld [vmem:[#allocation13 + $0x604] sm:$0xff]
    %v7269 = vld [vmem:[#allocation13 + $0x60c] sm:$0xff]
    %v7270 = vld [vmem:[#allocation13 + $0x614] sm:$0xff]
    %v7271 = vld [vmem:[#allocation13 + $0x61c] sm:$0xf]
    %v7272 = vld [vmem:[#allocation13 + $0x620] sm:$0xff]
    %v7273 = vld [vmem:[#allocation13 + $0x628] sm:$0xff]
    %v7274 = vld [vmem:[#allocation13 + $0x630] sm:$0xff]
    %v7275 = vld [vmem:[#allocation13 + $0x638] sm:$0xf]
    %v7276 = vld [vmem:[#allocation13 + $0x63c] sm:$0xff]
    %v7277 = vld [vmem:[#allocation13 + $0x644] sm:$0xff]
    %v7278 = vld [vmem:[#allocation13 + $0x64c] sm:$0xff]
    %v7279 = vld [vmem:[#allocation13 + $0x654] sm:$0xf]
    %v7280 = vld [vmem:[#allocation13 + $0x658] sm:$0xff]
    %v7281 = vld [vmem:[#allocation13 + $0x660] sm:$0xff]
    %v7282 = vld [vmem:[#allocation13 + $0x668] sm:$0xff]
    %v7283 = vld [vmem:[#allocation13 + $0x670] sm:$0xf]
    %v7284 = vld [vmem:[#allocation13 + $0x674] sm:$0xff]
    %v7285 = vld [vmem:[#allocation13 + $0x67c] sm:$0xff]
    %v7286 = vld [vmem:[#allocation13 + $0x684] sm:$0xff]
    %v7287 = vld [vmem:[#allocation13 + $0x68c] sm:$0xf]
    %v7288 = vld [vmem:[#allocation13 + $0x690] sm:$0xff]
    %v7289 = vld [vmem:[#allocation13 + $0x698] sm:$0xff]
    %v7290 = vld [vmem:[#allocation13 + $0x6a0] sm:$0xff]
    %v7291 = vld [vmem:[#allocation13 + $0x6a8] sm:$0xf]
    %v7292 = vld [vmem:[#allocation13 + $0x6ac] sm:$0xff]
    %v7293 = vld [vmem:[#allocation13 + $0x6b4] sm:$0xff]
    %v7294 = vld [vmem:[#allocation13 + $0x6bc] sm:$0xff]
    %v7295 = vld [vmem:[#allocation13 + $0x6c4] sm:$0xf]
    %v7296 = vld [vmem:[#allocation13 + $0x6c8] sm:$0xff]
    %v7297 = vld [vmem:[#allocation13 + $0x6d0] sm:$0xff]
    %v7298 = vld [vmem:[#allocation13 + $0x6d8] sm:$0xff]
    %v7299 = vld [vmem:[#allocation13 + $0x6e0] sm:$0xf]
    %v7300 = vld [vmem:[#allocation13 + $0x6e4] sm:$0xff]
    %v7301 = vld [vmem:[#allocation13 + $0x6ec] sm:$0xff]
    %v7302 = vld [vmem:[#allocation13 + $0x6f4] sm:$0xff]
    %v7303 = vld [vmem:[#allocation13 + $0x6fc] sm:$0xf]
    %v7304 = vld [vmem:[#allocation13 + $0x700] sm:$0xff]
    %v7305 = vld [vmem:[#allocation13 + $0x708] sm:$0xff]
    %v7306 = vld [vmem:[#allocation13 + $0x710] sm:$0xff]
    %v7307 = vld [vmem:[#allocation13 + $0x718] sm:$0xf]
    %v7308 = vld [vmem:[#allocation13 + $0x71c] sm:$0xff]
    %v7309 = vld [vmem:[#allocation13 + $0x724] sm:$0xff]
    %v7310 = vld [vmem:[#allocation13 + $0x72c] sm:$0xff]
    %v7311 = vld [vmem:[#allocation13 + $0x734] sm:$0xf]
    %v7312 = vld [vmem:[#allocation13 + $0x738] sm:$0xff]
    %v7313 = vld [vmem:[#allocation13 + $0x740] sm:$0xff]
    %v7314 = vld [vmem:[#allocation13 + $0x748] sm:$0xff]
    %v7315 = vld [vmem:[#allocation13 + $0x750] sm:$0xf]
    %v7316 = vld [vmem:[#allocation13 + $0x754] sm:$0xff]
    %v7317 = vld [vmem:[#allocation13 + $0x75c] sm:$0xff]
    %v7318 = vld [vmem:[#allocation13 + $0x764] sm:$0xff]
    %v7319 = vld [vmem:[#allocation13 + $0x76c] sm:$0xf]
    %v7320 = vld [vmem:[#allocation13 + $0x770] sm:$0xff]
    %v7321 = vld [vmem:[#allocation13 + $0x778] sm:$0xff]
    %v7322 = vld [vmem:[#allocation13 + $0x780] sm:$0xff]
    %v7323 = vld [vmem:[#allocation13 + $0x788] sm:$0xf]
    %v7324 = vld [vmem:[#allocation13 + $0x78c] sm:$0xff]
    %v7325 = vld [vmem:[#allocation13 + $0x794] sm:$0xff]
    %v7326 = vld [vmem:[#allocation13 + $0x79c] sm:$0xff]
    %v7327 = vld [vmem:[#allocation13 + $0x7a4] sm:$0xf]
    %v7328 = vld [vmem:[#allocation13 + $0x7a8] sm:$0xff]
    %v7329 = vld [vmem:[#allocation13 + $0x7b0] sm:$0xff]
    %v7330 = vld [vmem:[#allocation13 + $0x7b8] sm:$0xff]
    %v7331 = vld [vmem:[#allocation13 + $0x7c0] sm:$0xf]
    %v7332 = vld [vmem:[#allocation13 + $0x7c4] sm:$0xff]
    %v7333 = vld [vmem:[#allocation13 + $0x7cc] sm:$0xff]
    %v7334 = vld [vmem:[#allocation13 + $0x7d4] sm:$0xff]
    %v7335 = vld [vmem:[#allocation13 + $0x7dc] sm:$0xf]
    %v7336 = vld [vmem:[#allocation13 + $0x7e0] sm:$0xff]
    %v7337 = vld [vmem:[#allocation13 + $0x7e8] sm:$0xff]
    %v7338 = vld [vmem:[#allocation13 + $0x7f0] sm:$0xff]
    %v7339 = vld [vmem:[#allocation13 + $0x7f8] sm:$0xf]
    %v7340 = vld [vmem:[#allocation13 + $0x7fc] sm:$0xff]
    %v7341 = vld [vmem:[#allocation13 + $0x804] sm:$0xff]
    %v7342 = vld [vmem:[#allocation13 + $0x80c] sm:$0xff]
    %v7343 = vld [vmem:[#allocation13 + $0x814] sm:$0xf]
    %v7344 = vld [vmem:[#allocation13 + $0x818] sm:$0xff]
    %v7345 = vld [vmem:[#allocation13 + $0x820] sm:$0xff]
    %v7346 = vld [vmem:[#allocation13 + $0x828] sm:$0xff]
    %v7347 = vld [vmem:[#allocation13 + $0x830] sm:$0xf]
    %v7348 = vld [vmem:[#allocation13 + $0x834] sm:$0xff]
    %v7349 = vld [vmem:[#allocation13 + $0x83c] sm:$0xff]
    %v7350 = vld [vmem:[#allocation13 + $0x844] sm:$0xff]
    %v7351 = vld [vmem:[#allocation13 + $0x84c] sm:$0xf]
    %v7352 = vld [vmem:[#allocation13 + $0x850] sm:$0xff]
    %v7353 = vld [vmem:[#allocation13 + $0x858] sm:$0xff]
    %v7354 = vld [vmem:[#allocation13 + $0x860] sm:$0xff]
    %v7355 = vld [vmem:[#allocation13 + $0x868] sm:$0xf]
    %v7356 = vld [vmem:[#allocation13 + $0x86c] sm:$0xff]
    %v7357 = vld [vmem:[#allocation13 + $0x874] sm:$0xff]
    %v7358 = vld [vmem:[#allocation13 + $0x87c] sm:$0xff]
    %v7359 = vld [vmem:[#allocation13 + $0x884] sm:$0xf]
    %v7360 = vld [vmem:[#allocation13 + $0x888] sm:$0xff]
    %v7361 = vld [vmem:[#allocation13 + $0x890] sm:$0xff]
    %v7362 = vld [vmem:[#allocation13 + $0x898] sm:$0xff]
    %v7363 = vld [vmem:[#allocation13 + $0x8a0] sm:$0xf]
    %v7364 = vld [vmem:[#allocation13 + $0x8a4] sm:$0xff]
    %v7365 = vld [vmem:[#allocation13 + $0x8ac] sm:$0xff]
    %v7366 = vld [vmem:[#allocation13 + $0x8b4] sm:$0xff]
    %v7367 = vld [vmem:[#allocation13 + $0x8bc] sm:$0xf]
    %v7368 = vld [vmem:[#allocation13 + $0x8c0] sm:$0xff]
    %v7369 = vld [vmem:[#allocation13 + $0x8c8] sm:$0xff]
    %v7370 = vld [vmem:[#allocation13 + $0x8d0] sm:$0xff]
    %v7371 = vld [vmem:[#allocation13 + $0x8d8] sm:$0xf]
    %v7372 = vld [vmem:[#allocation13 + $0x8dc] sm:$0xff]
    %v7373 = vld [vmem:[#allocation13 + $0x8e4] sm:$0xff]
    %v7374 = vld [vmem:[#allocation13 + $0x8ec] sm:$0xff]
    %v7375 = vld [vmem:[#allocation13 + $0x8f4] sm:$0xf]
    %v7376 = vld [vmem:[#allocation13 + $0x8f8] sm:$0xff]
    %v7377 = vld [vmem:[#allocation13 + $0x900] sm:$0xff]
    %v7378 = vld [vmem:[#allocation13 + $0x908] sm:$0xff]
    %v7379 = vld [vmem:[#allocation13 + $0x910] sm:$0xf]
    %v7380 = vld [vmem:[#allocation13 + $0x914] sm:$0xff]
    %v7381 = vld [vmem:[#allocation13 + $0x91c] sm:$0xff]
    %v7382 = vld [vmem:[#allocation13 + $0x924] sm:$0xff]
    %v7383 = vld [vmem:[#allocation13 + $0x92c] sm:$0xf]
    %v7384 = vld [vmem:[#allocation13 + $0x930] sm:$0xff]
    %v7385 = vld [vmem:[#allocation13 + $0x938] sm:$0xff]
    %v7386 = vld [vmem:[#allocation13 + $0x940] sm:$0xff]
    %v7387 = vld [vmem:[#allocation13 + $0x948] sm:$0xf]
    %v7388 = vld [vmem:[#allocation13 + $0x94c] sm:$0xff]
    %v7389 = vld [vmem:[#allocation13 + $0x954] sm:$0xff]
    %v7390 = vld [vmem:[#allocation13 + $0x95c] sm:$0xff]
    %v7391 = vld [vmem:[#allocation13 + $0x964] sm:$0xf]
    %v7392 = vld [vmem:[#allocation13 + $0x968] sm:$0xff]
    %v7393 = vld [vmem:[#allocation13 + $0x970] sm:$0xff]
    %v7394 = vld [vmem:[#allocation13 + $0x978] sm:$0xff]
    %v7395 = vld [vmem:[#allocation13 + $0x980] sm:$0xf]
    %v7396 = vld [vmem:[#allocation13 + $0x984] sm:$0xff]
    %v7397 = vld [vmem:[#allocation13 + $0x98c] sm:$0xff]
    %v7398 = vld [vmem:[#allocation13 + $0x994] sm:$0xff]
    %v7399 = vld [vmem:[#allocation13 + $0x99c] sm:$0xf]
    %v7400 = vld [vmem:[#allocation13 + $0x9a0] sm:$0xff]
    %v7401 = vld [vmem:[#allocation13 + $0x9a8] sm:$0xff]
    %v7402 = vld [vmem:[#allocation13 + $0x9b0] sm:$0xff]
    %v7403 = vld [vmem:[#allocation13 + $0x9b8] sm:$0xf]
    %v7404 = vld [vmem:[#allocation13 + $0x9bc] sm:$0xff]
    %v7405 = vld [vmem:[#allocation13 + $0x9c4] sm:$0xff]
    %v7406 = vld [vmem:[#allocation13 + $0x9cc] sm:$0xff]
    %v7407 = vld [vmem:[#allocation13 + $0x9d4] sm:$0xf]
    %v7408 = vld [vmem:[#allocation13 + $0x9d8] sm:$0xff]
    %v7409 = vld [vmem:[#allocation13 + $0x9e0] sm:$0xff]
    %v7410 = vld [vmem:[#allocation13 + $0x9e8] sm:$0xff]
    %v7411 = vld [vmem:[#allocation13 + $0x9f0] sm:$0xf]
    %v7412 = vld [vmem:[#allocation13 + $0x9f4] sm:$0xff]
    %v7413 = vld [vmem:[#allocation13 + $0x9fc] sm:$0xff]
    %v7414 = vld [vmem:[#allocation13 + $0xa04] sm:$0xff]
    %v7415 = vld [vmem:[#allocation13 + $0xa0c] sm:$0xf]
    %v7416 = vld [vmem:[#allocation13 + $0xa10] sm:$0xff]
    %v7417 = vld [vmem:[#allocation13 + $0xa18] sm:$0xff]
    %v7418 = vld [vmem:[#allocation13 + $0xa20] sm:$0xff]
    %v7419 = vld [vmem:[#allocation13 + $0xa28] sm:$0xf]
    %v7420 = vld [vmem:[#allocation13 + $0xa2c] sm:$0xff]
    %v7421 = vld [vmem:[#allocation13 + $0xa34] sm:$0xff]
    %v7422 = vld [vmem:[#allocation13 + $0xa3c] sm:$0xff]
    %v7423 = vld [vmem:[#allocation13 + $0xa44] sm:$0xf]
    %v7424 = vld [vmem:[#allocation13 + $0xa48] sm:$0xff]
    %v7425 = vld [vmem:[#allocation13 + $0xa50] sm:$0xff]
    %v7426 = vld [vmem:[#allocation13 + $0xa58] sm:$0xff]
    %v7427 = vld [vmem:[#allocation13 + $0xa60] sm:$0xf]
    %v7428 = vld [vmem:[#allocation13 + $0xa64] sm:$0xff]
    %v7429 = vld [vmem:[#allocation13 + $0xa6c] sm:$0xff]
    %v7430 = vld [vmem:[#allocation13 + $0xa74] sm:$0xff]
    %v7431 = vld [vmem:[#allocation13 + $0xa7c] sm:$0xf]
    %v7432 = vld [vmem:[#allocation13 + $0xa80] sm:$0xff]
    %v7433 = vld [vmem:[#allocation13 + $0xa88] sm:$0xff]
    %v7434 = vld [vmem:[#allocation13 + $0xa90] sm:$0xff]
    %v7435 = vld [vmem:[#allocation13 + $0xa98] sm:$0xf]
    %v7436 = vld [vmem:[#allocation13 + $0xa9c] sm:$0xff]
    %v7437 = vld [vmem:[#allocation13 + $0xaa4] sm:$0xff]
    %v7438 = vld [vmem:[#allocation13 + $0xaac] sm:$0xff]
    %v7439 = vld [vmem:[#allocation13 + $0xab4] sm:$0xf]
    %v7440 = vld [vmem:[#allocation13 + $0xab8] sm:$0xff]
    %v7441 = vld [vmem:[#allocation13 + $0xac0] sm:$0xff]
    %v7442 = vld [vmem:[#allocation13 + $0xac8] sm:$0xff]
    %v7443 = vld [vmem:[#allocation13 + $0xad0] sm:$0xf]
    %v7444 = vld [vmem:[#allocation13 + $0xad4] sm:$0xff]
    %v7445 = vld [vmem:[#allocation13 + $0xadc] sm:$0xff]
    %v7446 = vld [vmem:[#allocation13 + $0xae4] sm:$0xff]
    %v7447 = vld [vmem:[#allocation13 + $0xaec] sm:$0xf]
    %v7448 = vld [vmem:[#allocation13 + $0xaf0] sm:$0xff]
    %v7449 = vld [vmem:[#allocation13 + $0xaf8] sm:$0xff]
    %v7450 = vld [vmem:[#allocation13 + $0xb00] sm:$0xff]
    %v7451 = vld [vmem:[#allocation13 + $0xb08] sm:$0xf]
    %v7452 = vld [vmem:[#allocation13 + $0xb0c] sm:$0xff]
    %v7453 = vld [vmem:[#allocation13 + $0xb14] sm:$0xff]
    %v7454 = vld [vmem:[#allocation13 + $0xb1c] sm:$0xff]
    %v7455 = vld [vmem:[#allocation13 + $0xb24] sm:$0xf]
    %v7456 = vld [vmem:[#allocation13 + $0xb28] sm:$0xff]
    %v7457 = vld [vmem:[#allocation13 + $0xb30] sm:$0xff]
    %v7458 = vld [vmem:[#allocation13 + $0xb38] sm:$0xff]
    %v7459 = vld [vmem:[#allocation13 + $0xb40] sm:$0xf]
    %v7460 = vld [vmem:[#allocation13 + $0xb44] sm:$0xff]
    %v7461 = vld [vmem:[#allocation13 + $0xb4c] sm:$0xff]
    %v7462 = vld [vmem:[#allocation13 + $0xb54] sm:$0xff]
    %v7463 = vld [vmem:[#allocation13 + $0xb5c] sm:$0xf]
    %v7464 = vld [vmem:[#allocation13 + $0xb60] sm:$0xff]
    %v7465 = vld [vmem:[#allocation13 + $0xb68] sm:$0xff]
    %v7466 = vld [vmem:[#allocation13 + $0xb70] sm:$0xff]
    %v7467 = vld [vmem:[#allocation13 + $0xb78] sm:$0xf]
    %v7468 = vld [vmem:[#allocation13 + $0xb7c] sm:$0xff]
    %v7469 = vld [vmem:[#allocation13 + $0xb84] sm:$0xff]
    %v7470 = vld [vmem:[#allocation13 + $0xb8c] sm:$0xff]
    %v7471 = vld [vmem:[#allocation13 + $0xb94] sm:$0xf]
    %v7472 = vld [vmem:[#allocation13 + $0xb98] sm:$0xff]
    %v7473 = vld [vmem:[#allocation13 + $0xba0] sm:$0xff]
    %v7474 = vld [vmem:[#allocation13 + $0xba8] sm:$0xff]
    %v7475 = vld [vmem:[#allocation13 + $0xbb0] sm:$0xf]
    %v7476 = vld [vmem:[#allocation13 + $0xbb4] sm:$0xff]
    %v7477 = vld [vmem:[#allocation13 + $0xbbc] sm:$0xff]
    %v7478 = vld [vmem:[#allocation13 + $0xbc4] sm:$0xff]
    %v7479 = vld [vmem:[#allocation13 + $0xbcc] sm:$0xf]
    %v7480 = vld [vmem:[#allocation13 + $0xbd0] sm:$0xff]
    %v7481 = vld [vmem:[#allocation13 + $0xbd8] sm:$0xff]
    %v7482 = vld [vmem:[#allocation13 + $0xbe0] sm:$0xff]
    %v7483 = vld [vmem:[#allocation13 + $0xbe8] sm:$0xf]
    %v7484 = vld [vmem:[#allocation13 + $0xbec] sm:$0xff]
    %v7485 = vld [vmem:[#allocation13 + $0xbf4] sm:$0xff]
    %v7486 = vld [vmem:[#allocation13 + $0xbfc] sm:$0xff]
    %v7487 = vld [vmem:[#allocation13 + $0xc04] sm:$0xf]
    %v7488 = vld [vmem:[#allocation13 + $0xc08] sm:$0xff]
    %v7489 = vld [vmem:[#allocation13 + $0xc10] sm:$0xff]
    %v7490 = vld [vmem:[#allocation13 + $0xc18] sm:$0xff]
    %v7491 = vld [vmem:[#allocation13 + $0xc20] sm:$0xf]
    %v7492 = vld [vmem:[#allocation13 + $0xc24] sm:$0xff]
    %v7493 = vld [vmem:[#allocation13 + $0xc2c] sm:$0xff]
    %v7494 = vld [vmem:[#allocation13 + $0xc34] sm:$0xff]
    %v7495 = vld [vmem:[#allocation13 + $0xc3c] sm:$0xf]
    %v7496 = vld [vmem:[#allocation13 + $0xc40] sm:$0xff]
    %v7497 = vld [vmem:[#allocation13 + $0xc48] sm:$0xff]
    %v7498 = vld [vmem:[#allocation13 + $0xc50] sm:$0xff]
    %v7499 = vld [vmem:[#allocation13 + $0xc58] sm:$0xf]
    %v7500 = vld [vmem:[#allocation13 + $0xc5c] sm:$0xff]
    %v7501 = vld [vmem:[#allocation13 + $0xc64] sm:$0xff]
    %v7502 = vld [vmem:[#allocation13 + $0xc6c] sm:$0xff]
    %v7503 = vld [vmem:[#allocation13 + $0xc74] sm:$0xf]
    %v7504 = vld [vmem:[#allocation13 + $0xc78] sm:$0xff]
    %v7505 = vld [vmem:[#allocation13 + $0xc80] sm:$0xff]
    %v7506 = vld [vmem:[#allocation13 + $0xc88] sm:$0xff]
    %v7507 = vld [vmem:[#allocation13 + $0xc90] sm:$0xf]
    %v7508 = vld [vmem:[#allocation13 + $0xc94] sm:$0xff]
    %v7509 = vld [vmem:[#allocation13 + $0xc9c] sm:$0xff]
    %v7510 = vld [vmem:[#allocation13 + $0xca4] sm:$0xff]
    %v7511 = vld [vmem:[#allocation13 + $0xcac] sm:$0xf]
    %v7512 = vld [vmem:[#allocation13 + $0xcb0] sm:$0xff]
    %v7513 = vld [vmem:[#allocation13 + $0xcb8] sm:$0xff]
    %v7514 = vld [vmem:[#allocation13 + $0xcc0] sm:$0xff]
    %v7515 = vld [vmem:[#allocation13 + $0xcc8] sm:$0xf]
    %v7516 = vld [vmem:[#allocation13 + $0xccc] sm:$0xff]
    %v7517 = vld [vmem:[#allocation13 + $0xcd4] sm:$0xff]
    %v7518 = vld [vmem:[#allocation13 + $0xcdc] sm:$0xff]
    %v7519 = vld [vmem:[#allocation13 + $0xce4] sm:$0xf]
    %v7520 = vld [vmem:[#allocation13 + $0xce8] sm:$0xff]
    %v7521 = vld [vmem:[#allocation13 + $0xcf0] sm:$0xff]
    %v7522 = vld [vmem:[#allocation13 + $0xcf8] sm:$0xff]
    %v7523 = vld [vmem:[#allocation13 + $0xd00] sm:$0xf]
    %v7524 = vld [vmem:[#allocation13 + $0xd04] sm:$0xff]
    %v7525 = vld [vmem:[#allocation13 + $0xd0c] sm:$0xff]
    %v7526 = vld [vmem:[#allocation13 + $0xd14] sm:$0xff]
    %v7527 = vld [vmem:[#allocation13 + $0xd1c] sm:$0xf]
    %v7528 = vld [vmem:[#allocation13 + $0xd20] sm:$0xff]
    %v7529 = vld [vmem:[#allocation13 + $0xd28] sm:$0xff]
    %v7530 = vld [vmem:[#allocation13 + $0xd30] sm:$0xff]
    %v7531 = vld [vmem:[#allocation13 + $0xd38] sm:$0xf]
    %v7532 = vld [vmem:[#allocation13 + $0xd3c] sm:$0xff]
    %v7533 = vld [vmem:[#allocation13 + $0xd44] sm:$0xff]
    %v7534 = vld [vmem:[#allocation13 + $0xd4c] sm:$0xff]
    %v7535 = vld [vmem:[#allocation13 + $0xd54] sm:$0xf]
    %v7536 = vld [vmem:[#allocation13 + $0xd58] sm:$0xff]
    %v7537 = vld [vmem:[#allocation13 + $0xd60] sm:$0xff]
    %v7538 = vld [vmem:[#allocation13 + $0xd68] sm:$0xff]
    %v7539 = vld [vmem:[#allocation13 + $0xd70] sm:$0xf]
    %v7540 = vld [vmem:[#allocation13 + $0xd74] sm:$0xff]
    %v7541 = vld [vmem:[#allocation13 + $0xd7c] sm:$0xff]
    %v7542 = vld [vmem:[#allocation13 + $0xd84] sm:$0xff]
    %v7543 = vld [vmem:[#allocation13 + $0xd8c] sm:$0xf]
    %v7544 = vld [vmem:[#allocation13 + $0xd90] sm:$0xff]
    %v7545 = vld [vmem:[#allocation13 + $0xd98] sm:$0xff]
    %v7546 = vld [vmem:[#allocation13 + $0xda0] sm:$0xff]
    %v7547 = vld [vmem:[#allocation13 + $0xda8] sm:$0xf]
    %v7548 = vld [vmem:[#allocation13 + $0xdac] sm:$0xff]
    %v7549 = vld [vmem:[#allocation13 + $0xdb4] sm:$0xff]
    %v7550 = vld [vmem:[#allocation13 + $0xdbc] sm:$0xff]
    %v7551 = vld [vmem:[#allocation13 + $0xdc4] sm:$0xf]
    %v7552 = vld [vmem:[#allocation13 + $0xdc8] sm:$0xff]
    %v7553 = vld [vmem:[#allocation13 + $0xdd0] sm:$0xff]
    %v7554 = vld [vmem:[#allocation13 + $0xdd8] sm:$0xff]
    %v7555 = vld [vmem:[#allocation13 + $0xde0] sm:$0xf]
    %v7556 = vld [vmem:[#allocation13 + $0xde4] sm:$0xff]
    %v7557 = vld [vmem:[#allocation13 + $0xdec] sm:$0xff]
    %v7558 = vld [vmem:[#allocation13 + $0xdf4] sm:$0xff]
    %v7559 = vld [vmem:[#allocation13 + $0xdfc] sm:$0xf]
    %v7560 = vld [vmem:[#allocation13 + $0xe00] sm:$0xff]
    %v7561 = vld [vmem:[#allocation13 + $0xe08] sm:$0xff]
    %v7562 = vld [vmem:[#allocation13 + $0xe10] sm:$0xff]
    %v7563 = vld [vmem:[#allocation13 + $0xe18] sm:$0xf]
    %v7564 = vld [vmem:[#allocation13 + $0xe1c] sm:$0xff]
    %v7565 = vld [vmem:[#allocation13 + $0xe24] sm:$0xff]
    %v7566 = vld [vmem:[#allocation13 + $0xe2c] sm:$0xff]
    %v7567 = vld [vmem:[#allocation13 + $0xe34] sm:$0xf]
    %v7568 = vld [vmem:[#allocation13 + $0xe38] sm:$0xff]
    %v7569 = vld [vmem:[#allocation13 + $0xe40] sm:$0xff]
    %v7570 = vld [vmem:[#allocation13 + $0xe48] sm:$0xff]
    %v7571 = vld [vmem:[#allocation13 + $0xe50] sm:$0xf]
    %v7572 = vld [vmem:[#allocation13 + $0xe54] sm:$0xff]
    %v7573 = vld [vmem:[#allocation13 + $0xe5c] sm:$0xff]
    %v7574 = vld [vmem:[#allocation13 + $0xe64] sm:$0xff]
    %v7575 = vld [vmem:[#allocation13 + $0xe6c] sm:$0xf]
    %v7576 = vld [vmem:[#allocation13 + $0xe70] sm:$0xff]
    %v7577 = vld [vmem:[#allocation13 + $0xe78] sm:$0xff]
    %v7578 = vld [vmem:[#allocation13 + $0xe80] sm:$0xff]
    %v7579 = vld [vmem:[#allocation13 + $0xe88] sm:$0xf]
    %v7580 = vld [vmem:[#allocation13 + $0xe8c] sm:$0xff]
    %v7581 = vld [vmem:[#allocation13 + $0xe94] sm:$0xff]
    %v7582 = vld [vmem:[#allocation13 + $0xe9c] sm:$0xff]
    %v7583 = vld [vmem:[#allocation13 + $0xea4] sm:$0xf]
    %v7584 = vld [vmem:[#allocation13 + $0xea8] sm:$0xff]
    %v7585 = vld [vmem:[#allocation13 + $0xeb0] sm:$0xff]
    %v7586 = vld [vmem:[#allocation13 + $0xeb8] sm:$0xff]
    %v7587 = vld [vmem:[#allocation13 + $0xec0] sm:$0xf]
    %v7588 = vld [vmem:[#allocation13 + $0xec4] sm:$0xff]
    %v7589 = vld [vmem:[#allocation13 + $0xecc] sm:$0xff]
    %v7590 = vld [vmem:[#allocation13 + $0xed4] sm:$0xff]
    %v7591 = vld [vmem:[#allocation13 + $0xedc] sm:$0xf]
    %v7592 = vld [vmem:[#allocation13 + $0xee0] sm:$0xff]
    %v7593 = vld [vmem:[#allocation13 + $0xee8] sm:$0xff]
    %v7594 = vld [vmem:[#allocation13 + $0xef0] sm:$0xff]
    %v7595 = vld [vmem:[#allocation13 + $0xef8] sm:$0xf]
    %v7596 = vld [vmem:[#allocation13 + $0xefc] sm:$0xff]
    %v7597 = vld [vmem:[#allocation13 + $0xf04] sm:$0xff]
    %v7598 = vld [vmem:[#allocation13 + $0xf0c] sm:$0xff]
    %v7599 = vld [vmem:[#allocation13 + $0xf14] sm:$0xf]
    %v7600 = vld [vmem:[#allocation13 + $0xf18] sm:$0xff]
    %v7601 = vld [vmem:[#allocation13 + $0xf20] sm:$0xff]
    %v7602 = vld [vmem:[#allocation13 + $0xf28] sm:$0xff]
    %v7603 = vld [vmem:[#allocation13 + $0xf30] sm:$0xf]
    %v7604 = vld [vmem:[#allocation13 + $0xf34] sm:$0xff]
    %v7605 = vld [vmem:[#allocation13 + $0xf3c] sm:$0xff]
    %v7606 = vld [vmem:[#allocation13 + $0xf44] sm:$0xff]
    %v7607 = vld [vmem:[#allocation13 + $0xf4c] sm:$0xf]
    %v7608 = vld [vmem:[#allocation13 + $0xf50] sm:$0xff]
    %v7609 = vld [vmem:[#allocation13 + $0xf58] sm:$0xff]
    %v7610 = vld [vmem:[#allocation13 + $0xf60] sm:$0xff]
    %v7611 = vld [vmem:[#allocation13 + $0xf68] sm:$0xf]
    %v7612 = vld [vmem:[#allocation13 + $0xf6c] sm:$0xff]
    %v7613 = vld [vmem:[#allocation13 + $0xf74] sm:$0xff]
    %v7614 = vld [vmem:[#allocation13 + $0xf7c] sm:$0xff]
    %v7615 = vld [vmem:[#allocation13 + $0xf84] sm:$0xf]
    %v7616 = vld [vmem:[#allocation13 + $0xf88] sm:$0xff]
    %v7617 = vld [vmem:[#allocation13 + $0xf90] sm:$0xff]
    %v7618 = vld [vmem:[#allocation13 + $0xf98] sm:$0xff]
    %v7619 = vld [vmem:[#allocation13 + $0xfa0] sm:$0xf]
    %v7620 = vld [vmem:[#allocation13 + $0xfa4] sm:$0xff]
    %v7621 = vld [vmem:[#allocation13 + $0xfac] sm:$0xff]
    %v7622 = vld [vmem:[#allocation13 + $0xfb4] sm:$0xff]
    %v7623 = vld [vmem:[#allocation13 + $0xfbc] sm:$0xf]
    %v7624 = vld [vmem:[#allocation13 + $0xfc0] sm:$0xff]
    %v7625 = vld [vmem:[#allocation13 + $0xfc8] sm:$0xff]
    %v7626 = vld [vmem:[#allocation13 + $0xfd0] sm:$0xff]
    %v7627 = vld [vmem:[#allocation13 + $0xfd8] sm:$0xf]
    %v7628 = vld [vmem:[#allocation13 + $0xfdc] sm:$0xff]
    %v7629 = vld [vmem:[#allocation13 + $0xfe4] sm:$0xff]
    %v7630 = vld [vmem:[#allocation13 + $0xfec] sm:$0xff]
    %v7631 = vld [vmem:[#allocation13 + $0xff4] sm:$0xf]
    %v7632 = vld [vmem:[#allocation13 + $0xff8] sm:$0xff]
    %v7633 = vld [vmem:[#allocation13 + $0x1000] sm:$0xff]
    %v7634 = vld [vmem:[#allocation13 + $0x1008] sm:$0xff]
    %v7635 = vld [vmem:[#allocation13 + $0x1010] sm:$0xf]
    %v7636 = vld [vmem:[#allocation13 + $0x1014] sm:$0xff]
    %v7637 = vld [vmem:[#allocation13 + $0x101c] sm:$0xff]
    %v7638 = vld [vmem:[#allocation13 + $0x1024] sm:$0xff]
    %v7639 = vld [vmem:[#allocation13 + $0x102c] sm:$0xf]
    %v7640 = vld [vmem:[#allocation13 + $0x1030] sm:$0xff]
    %v7641 = vld [vmem:[#allocation13 + $0x1038] sm:$0xff]
    %v7642 = vld [vmem:[#allocation13 + $0x1040] sm:$0xff]
    %v7643 = vld [vmem:[#allocation13 + $0x1048] sm:$0xf]
    %v7644 = vld [vmem:[#allocation13 + $0x104c] sm:$0xff]
    %v7645 = vld [vmem:[#allocation13 + $0x1054] sm:$0xff]
    %v7646 = vld [vmem:[#allocation13 + $0x105c] sm:$0xff]
    %v7647 = vld [vmem:[#allocation13 + $0x1064] sm:$0xf]
    %v7648 = vld [vmem:[#allocation13 + $0x1068] sm:$0xff]
    %v7649 = vld [vmem:[#allocation13 + $0x1070] sm:$0xff]
    %v7650 = vld [vmem:[#allocation13 + $0x1078] sm:$0xff]
    %v7651 = vld [vmem:[#allocation13 + $0x1080] sm:$0xf]
    %v7652 = vld [vmem:[#allocation13 + $0x1084] sm:$0xff]
    %v7653 = vld [vmem:[#allocation13 + $0x108c] sm:$0xff]
    %v7654 = vld [vmem:[#allocation13 + $0x1094] sm:$0xff]
    %v7655 = vld [vmem:[#allocation13 + $0x109c] sm:$0xf]
    %v7656 = vld [vmem:[#allocation13 + $0x10a0] sm:$0xff]
    %v7657 = vld [vmem:[#allocation13 + $0x10a8] sm:$0xff]
    %v7658 = vld [vmem:[#allocation13 + $0x10b0] sm:$0xff]
    %v7659 = vld [vmem:[#allocation13 + $0x10b8] sm:$0xf]
    %v7660 = vld [vmem:[#allocation13 + $0x10bc] sm:$0xff]
    %v7661 = vld [vmem:[#allocation13 + $0x10c4] sm:$0xff]
    %v7662 = vld [vmem:[#allocation13 + $0x10cc] sm:$0xff]
    %v7663 = vld [vmem:[#allocation13 + $0x10d4] sm:$0xf]
    %v7664 = vld [vmem:[#allocation13 + $0x10d8] sm:$0xff]
    %v7665 = vld [vmem:[#allocation13 + $0x10e0] sm:$0xff]
    %v7666 = vld [vmem:[#allocation13 + $0x10e8] sm:$0xff]
    %v7667 = vld [vmem:[#allocation13 + $0x10f0] sm:$0xf]
    %v7668 = vld [vmem:[#allocation13 + $0x10f4] sm:$0xff]
    %v7669 = vld [vmem:[#allocation13 + $0x10fc] sm:$0xff]
    %v7670 = vld [vmem:[#allocation13 + $0x1104] sm:$0xff]
    %v7671 = vld [vmem:[#allocation13 + $0x110c] sm:$0xf]
    %v7672 = vld [vmem:[#allocation13 + $0x1110] sm:$0xff]
    %v7673 = vld [vmem:[#allocation13 + $0x1118] sm:$0xff]
    %v7674 = vld [vmem:[#allocation13 + $0x1120] sm:$0xff]
    %v7675 = vld [vmem:[#allocation13 + $0x1128] sm:$0xf]
    %v7676 = vld [vmem:[#allocation13 + $0x112c] sm:$0xff]
    %v7677 = vld [vmem:[#allocation13 + $0x1134] sm:$0xff]
    %v7678 = vld [vmem:[#allocation13 + $0x113c] sm:$0xff]
    %v7679 = vld [vmem:[#allocation13 + $0x1144] sm:$0xf]
    %v7680 = vld [vmem:[#allocation13 + $0x1148] sm:$0xff]
    %v7681 = vld [vmem:[#allocation13 + $0x1150] sm:$0xff]
    %v7682 = vld [vmem:[#allocation13 + $0x1158] sm:$0xff]
    %v7683 = vld [vmem:[#allocation13 + $0x1160] sm:$0xf]
    %v7684 = vld [vmem:[#allocation13 + $0x1164] sm:$0xff]
    %v7685 = vld [vmem:[#allocation13 + $0x116c] sm:$0xff]
    %v7686 = vld [vmem:[#allocation13 + $0x1174] sm:$0xff]
    %v7687 = vld [vmem:[#allocation13 + $0x117c] sm:$0xf]
    %v7688 = vld [vmem:[#allocation15] sm:$0xff]
    %v7690 = vlaneseq
    %v7691 = vshrl.u32 %v7690, 7
    %v7692 = vsub.s32 0, %v7691
    %v7693 = vrot.slane %v7688, %v7692
    %v7694 = vlaneseq
    %v7695 = vshrl.u32 %v7694, 7
    %v7696 = vsub.s32 1, %v7695
    %v7697 = vrot.slane %v7688, %v7696
    %v7698 = vlaneseq
    %v7699 = vshrl.u32 %v7698, 7
    %v7700 = vsub.s32 2, %v7699
    %v7701 = vrot.slane %v7688, %v7700
    %v7702 = vlaneseq
    %v7703 = vshrl.u32 %v7702, 7
    %v7704 = vsub.s32 3, %v7703
    %v7705 = vrot.slane %v7688, %v7704
    %v7706 = vlaneseq
    %v7707 = vshrl.u32 %v7706, 7
    %v7708 = vsub.s32 4, %v7707
    %v7709 = vrot.slane %v7688, %v7708
    %v7710 = vlaneseq
    %v7711 = vshrl.u32 %v7710, 7
    %v7712 = vsub.s32 5, %v7711
    %v7713 = vrot.slane %v7688, %v7712
    %v7714 = vlaneseq
    %v7715 = vshrl.u32 %v7714, 7
    %v7716 = vsub.s32 6, %v7715
    %v7717 = vrot.slane %v7688, %v7716
    %v7735 = vunpack.c.l.b16 %v7038
    %v7736 = vunpack.c.h.b16 %v7038
    %v7737 = vunpack.c.l.b16 %v7039
    %v7738 = vunpack.c.h.b16 %v7039
    %v7739 = vunpack.c.l.b16 %v7040
    %v7740 = vunpack.c.h.b16 %v7040
    %v7741 = vunpack.c.l.b16 %v7041
    %v7742 = vunpack.c.h.b16 %v7041
    %v7743 = vunpack.c.l.b16 %v7042
    %v7744 = vunpack.c.h.b16 %v7042
    %v7745 = vunpack.c.l.b16 %v7043
    %v7746 = vunpack.c.h.b16 %v7043
    %v7747 = vunpack.c.l.b16 %v7044
    %v7748 = vunpack.c.h.b16 %v7044
    %v7749 = vunpack.c.l.b16 %v7045
    %v7750 = vunpack.c.h.b16 %v7045
    %v7751 = vunpack.c.l.b16 %v7046
    %v7752 = vunpack.c.h.b16 %v7046
    %v7753 = vunpack.c.l.b16 %v7047
    %v7754 = vunpack.c.h.b16 %v7047
    %v7755 = vpack.c.b16 %v7745, %v7735
    %v7756 = vpack.c.b16 %v7746, %v7736
    %v7757 = vpack.c.b16 %v7747, %v7737
    %v7758 = vpack.c.b16 %v7748, %v7738
    %v7759 = vpack.c.b16 %v7749, %v7739
    %v7760 = vpack.c.b16 %v7750, %v7740
    %v7761 = vpack.c.b16 %v7751, %v7741
    %v7762 = vpack.c.b16 %v7752, %v7742
    %v7763 = vpack.c.b16 %v7753, %v7743
    %v7764 = vpack.c.b16 %v7754, %v7744
    %v8415 = vunpack.c.l.b16 %v7048
    %v8416 = vunpack.c.h.b16 %v7048
    %v8417 = vunpack.c.l.b16 %v7049
    %v8418 = vunpack.c.h.b16 %v7049
    %v8419 = vunpack.c.l.b16 %v7050
    %v8420 = vunpack.c.h.b16 %v7050
    %v8421 = vunpack.c.l.b16 %v7051
    %v8422 = vunpack.c.l.b16 %v7052
    %v8423 = vunpack.c.h.b16 %v7052
    %v8424 = vunpack.c.l.b16 %v7053
    %v8425 = vunpack.c.h.b16 %v7053
    %v8426 = vunpack.c.l.b16 %v7054
    %v8427 = vunpack.c.h.b16 %v7054
    %v8428 = vunpack.c.l.b16 %v7055
    %v8429 = vunpack.c.l.b16 %v7056
    %v8430 = vunpack.c.h.b16 %v7056
    %v8431 = vunpack.c.l.b16 %v7057
    %v8432 = vunpack.c.h.b16 %v7057
    %v8433 = vunpack.c.l.b16 %v7058
    %v8434 = vunpack.c.h.b16 %v7058
    %v8435 = vunpack.c.l.b16 %v7059
    %v8436 = vunpack.c.l.b16 %v7060
    %v8437 = vunpack.c.h.b16 %v7060
    %v8438 = vunpack.c.l.b16 %v7061
    %v8439 = vunpack.c.h.b16 %v7061
    %v8440 = vunpack.c.l.b16 %v7062
    %v8441 = vunpack.c.h.b16 %v7062
    %v8442 = vunpack.c.l.b16 %v7063
    %v8443 = vunpack.c.l.b16 %v7064
    %v8444 = vunpack.c.h.b16 %v7064
    %v8445 = vunpack.c.l.b16 %v7065
    %v8446 = vunpack.c.h.b16 %v7065
    %v8447 = vunpack.c.l.b16 %v7066
    %v8448 = vunpack.c.h.b16 %v7066
    %v8449 = vunpack.c.l.b16 %v7067
    %v8450 = vunpack.c.l.b16 %v7068
    %v8451 = vunpack.c.h.b16 %v7068
    %v8452 = vunpack.c.l.b16 %v7069
    %v8453 = vunpack.c.h.b16 %v7069
    %v8454 = vunpack.c.l.b16 %v7070
    %v8455 = vunpack.c.h.b16 %v7070
    %v8456 = vunpack.c.l.b16 %v7071
    %v8457 = vunpack.c.l.b16 %v7072
    %v8458 = vunpack.c.h.b16 %v7072
    %v8459 = vunpack.c.l.b16 %v7073
    %v8460 = vunpack.c.h.b16 %v7073
    %v8461 = vunpack.c.l.b16 %v7074
    %v8462 = vunpack.c.h.b16 %v7074
    %v8463 = vunpack.c.l.b16 %v7075
    %v8464 = vunpack.c.l.b16 %v7076
    %v8465 = vunpack.c.h.b16 %v7076
    %v8466 = vunpack.c.l.b16 %v7077
    %v8467 = vunpack.c.h.b16 %v7077
    %v8468 = vunpack.c.l.b16 %v7078
    %v8469 = vunpack.c.h.b16 %v7078
    %v8470 = vunpack.c.l.b16 %v7079
    %v8471 = vunpack.c.l.b16 %v7080
    %v8472 = vunpack.c.h.b16 %v7080
    %v8473 = vunpack.c.l.b16 %v7081
    %v8474 = vunpack.c.h.b16 %v7081
    %v8475 = vunpack.c.l.b16 %v7082
    %v8476 = vunpack.c.h.b16 %v7082
    %v8477 = vunpack.c.l.b16 %v7083
    %v8478 = vunpack.c.l.b16 %v7084
    %v8479 = vunpack.c.h.b16 %v7084
    %v8480 = vunpack.c.l.b16 %v7085
    %v8481 = vunpack.c.h.b16 %v7085
    %v8482 = vunpack.c.l.b16 %v7086
    %v8483 = vunpack.c.h.b16 %v7086
    %v8484 = vunpack.c.l.b16 %v7087
    %v8485 = vunpack.c.l.b16 %v7088
    %v8486 = vunpack.c.h.b16 %v7088
    %v8487 = vunpack.c.l.b16 %v7089
    %v8488 = vunpack.c.h.b16 %v7089
    %v8489 = vunpack.c.l.b16 %v7090
    %v8490 = vunpack.c.h.b16 %v7090
    %v8491 = vunpack.c.l.b16 %v7091
    %v8492 = vunpack.c.l.b16 %v7092
    %v8493 = vunpack.c.h.b16 %v7092
    %v8494 = vunpack.c.l.b16 %v7093
    %v8495 = vunpack.c.h.b16 %v7093
    %v8496 = vunpack.c.l.b16 %v7094
    %v8497 = vunpack.c.h.b16 %v7094
    %v8498 = vunpack.c.l.b16 %v7095
    %v8499 = vunpack.c.l.b16 %v7096
    %v8500 = vunpack.c.h.b16 %v7096
    %v8501 = vunpack.c.l.b16 %v7097
    %v8502 = vunpack.c.h.b16 %v7097
    %v8503 = vunpack.c.l.b16 %v7098
    %v8504 = vunpack.c.h.b16 %v7098
    %v8505 = vunpack.c.l.b16 %v7099
    %v8506 = vunpack.c.l.b16 %v7100
    %v8507 = vunpack.c.h.b16 %v7100
    %v8508 = vunpack.c.l.b16 %v7101
    %v8509 = vunpack.c.h.b16 %v7101
    %v8510 = vunpack.c.l.b16 %v7102
    %v8511 = vunpack.c.h.b16 %v7102
    %v8512 = vunpack.c.l.b16 %v7103
    %v8513 = vunpack.c.l.b16 %v7104
    %v8514 = vunpack.c.h.b16 %v7104
    %v8515 = vunpack.c.l.b16 %v7105
    %v8516 = vunpack.c.h.b16 %v7105
    %v8517 = vunpack.c.l.b16 %v7106
    %v8518 = vunpack.c.h.b16 %v7106
    %v8519 = vunpack.c.l.b16 %v7107
    %v8520 = vunpack.c.l.b16 %v7108
    %v8521 = vunpack.c.h.b16 %v7108
    %v8522 = vunpack.c.l.b16 %v7109
    %v8523 = vunpack.c.h.b16 %v7109
    %v8524 = vunpack.c.l.b16 %v7110
    %v8525 = vunpack.c.h.b16 %v7110
    %v8526 = vunpack.c.l.b16 %v7111
    %v8527 = vunpack.c.l.b16 %v7112
    %v8528 = vunpack.c.h.b16 %v7112
    %v8529 = vunpack.c.l.b16 %v7113
    %v8530 = vunpack.c.h.b16 %v7113
    %v8531 = vunpack.c.l.b16 %v7114
    %v8532 = vunpack.c.h.b16 %v7114
    %v8533 = vunpack.c.l.b16 %v7115
    %v8534 = vunpack.c.l.b16 %v7116
    %v8535 = vunpack.c.h.b16 %v7116
    %v8536 = vunpack.c.l.b16 %v7117
    %v8537 = vunpack.c.h.b16 %v7117
    %v8538 = vunpack.c.l.b16 %v7118
    %v8539 = vunpack.c.h.b16 %v7118
    %v8540 = vunpack.c.l.b16 %v7119
    %v8541 = vunpack.c.l.b16 %v7120
    %v8542 = vunpack.c.h.b16 %v7120
    %v8543 = vunpack.c.l.b16 %v7121
    %v8544 = vunpack.c.h.b16 %v7121
    %v8545 = vunpack.c.l.b16 %v7122
    %v8546 = vunpack.c.h.b16 %v7122
    %v8547 = vunpack.c.l.b16 %v7123
    %v8548 = vunpack.c.l.b16 %v7124
    %v8549 = vunpack.c.h.b16 %v7124
    %v8550 = vunpack.c.l.b16 %v7125
    %v8551 = vunpack.c.h.b16 %v7125
    %v8552 = vunpack.c.l.b16 %v7126
    %v8553 = vunpack.c.h.b16 %v7126
    %v8554 = vunpack.c.l.b16 %v7127
    %v8555 = vunpack.c.l.b16 %v7128
    %v8556 = vunpack.c.h.b16 %v7128
    %v8557 = vunpack.c.l.b16 %v7129
    %v8558 = vunpack.c.h.b16 %v7129
    %v8559 = vunpack.c.l.b16 %v7130
    %v8560 = vunpack.c.h.b16 %v7130
    %v8561 = vunpack.c.l.b16 %v7131
    %v8562 = vunpack.c.l.b16 %v7132
    %v8563 = vunpack.c.h.b16 %v7132
    %v8564 = vunpack.c.l.b16 %v7133
    %v8565 = vunpack.c.h.b16 %v7133
    %v8566 = vunpack.c.l.b16 %v7134
    %v8567 = vunpack.c.h.b16 %v7134
    %v8568 = vunpack.c.l.b16 %v7135
    %v8569 = vunpack.c.l.b16 %v7136
    %v8570 = vunpack.c.h.b16 %v7136
    %v8571 = vunpack.c.l.b16 %v7137
    %v8572 = vunpack.c.h.b16 %v7137
    %v8573 = vunpack.c.l.b16 %v7138
    %v8574 = vunpack.c.h.b16 %v7138
    %v8575 = vunpack.c.l.b16 %v7139
    %v8576 = vunpack.c.l.b16 %v7140
    %v8577 = vunpack.c.h.b16 %v7140
    %v8578 = vunpack.c.l.b16 %v7141
    %v8579 = vunpack.c.h.b16 %v7141
    %v8580 = vunpack.c.l.b16 %v7142
    %v8581 = vunpack.c.h.b16 %v7142
    %v8582 = vunpack.c.l.b16 %v7143
    %v8583 = vunpack.c.l.b16 %v7144
    %v8584 = vunpack.c.h.b16 %v7144
    %v8585 = vunpack.c.l.b16 %v7145
    %v8586 = vunpack.c.h.b16 %v7145
    %v8587 = vunpack.c.l.b16 %v7146
    %v8588 = vunpack.c.h.b16 %v7146
    %v8589 = vunpack.c.l.b16 %v7147
    %v8590 = vunpack.c.l.b16 %v7148
    %v8591 = vunpack.c.h.b16 %v7148
    %v8592 = vunpack.c.l.b16 %v7149
    %v8593 = vunpack.c.h.b16 %v7149
    %v8594 = vunpack.c.l.b16 %v7150
    %v8595 = vunpack.c.h.b16 %v7150
    %v8596 = vunpack.c.l.b16 %v7151
    %v8597 = vunpack.c.l.b16 %v7152
    %v8598 = vunpack.c.h.b16 %v7152
    %v8599 = vunpack.c.l.b16 %v7153
    %v8600 = vunpack.c.h.b16 %v7153
    %v8601 = vunpack.c.l.b16 %v7154
    %v8602 = vunpack.c.h.b16 %v7154
    %v8603 = vunpack.c.l.b16 %v7155
    %v8604 = vunpack.c.l.b16 %v7156
    %v8605 = vunpack.c.h.b16 %v7156
    %v8606 = vunpack.c.l.b16 %v7157
    %v8607 = vunpack.c.h.b16 %v7157
    %v8608 = vunpack.c.l.b16 %v7158
    %v8609 = vunpack.c.h.b16 %v7158
    %v8610 = vunpack.c.l.b16 %v7159
    %v8611 = vunpack.c.l.b16 %v7160
    %v8612 = vunpack.c.h.b16 %v7160
    %v8613 = vunpack.c.l.b16 %v7161
    %v8614 = vunpack.c.h.b16 %v7161
    %v8615 = vunpack.c.l.b16 %v7162
    %v8616 = vunpack.c.h.b16 %v7162
    %v8617 = vunpack.c.l.b16 %v7163
    %v8618 = vunpack.c.l.b16 %v7164
    %v8619 = vunpack.c.h.b16 %v7164
    %v8620 = vunpack.c.l.b16 %v7165
    %v8621 = vunpack.c.h.b16 %v7165
    %v8622 = vunpack.c.l.b16 %v7166
    %v8623 = vunpack.c.h.b16 %v7166
    %v8624 = vunpack.c.l.b16 %v7167
    %v8625 = vunpack.c.l.b16 %v7168
    %v8626 = vunpack.c.h.b16 %v7168
    %v8627 = vunpack.c.l.b16 %v7169
    %v8628 = vunpack.c.h.b16 %v7169
    %v8629 = vunpack.c.l.b16 %v7170
    %v8630 = vunpack.c.h.b16 %v7170
    %v8631 = vunpack.c.l.b16 %v7171
    %v8632 = vunpack.c.l.b16 %v7172
    %v8633 = vunpack.c.h.b16 %v7172
    %v8634 = vunpack.c.l.b16 %v7173
    %v8635 = vunpack.c.h.b16 %v7173
    %v8636 = vunpack.c.l.b16 %v7174
    %v8637 = vunpack.c.h.b16 %v7174
    %v8638 = vunpack.c.l.b16 %v7175
    %v8639 = vunpack.c.l.b16 %v7176
    %v8640 = vunpack.c.h.b16 %v7176
    %v8641 = vunpack.c.l.b16 %v7177
    %v8642 = vunpack.c.h.b16 %v7177
    %v8643 = vunpack.c.l.b16 %v7178
    %v8644 = vunpack.c.h.b16 %v7178
    %v8645 = vunpack.c.l.b16 %v7179
    %v8646 = vunpack.c.l.b16 %v7180
    %v8647 = vunpack.c.h.b16 %v7180
    %v8648 = vunpack.c.l.b16 %v7181
    %v8649 = vunpack.c.h.b16 %v7181
    %v8650 = vunpack.c.l.b16 %v7182
    %v8651 = vunpack.c.h.b16 %v7182
    %v8652 = vunpack.c.l.b16 %v7183
    %v8653 = vunpack.c.l.b16 %v7184
    %v8654 = vunpack.c.h.b16 %v7184
    %v8655 = vunpack.c.l.b16 %v7185
    %v8656 = vunpack.c.h.b16 %v7185
    %v8657 = vunpack.c.l.b16 %v7186
    %v8658 = vunpack.c.h.b16 %v7186
    %v8659 = vunpack.c.l.b16 %v7187
    %v8660 = vunpack.c.l.b16 %v7188
    %v8661 = vunpack.c.h.b16 %v7188
    %v8662 = vunpack.c.l.b16 %v7189
    %v8663 = vunpack.c.h.b16 %v7189
    %v8664 = vunpack.c.l.b16 %v7190
    %v8665 = vunpack.c.h.b16 %v7190
    %v8666 = vunpack.c.l.b16 %v7191
    %v8667 = vunpack.c.l.b16 %v7192
    %v8668 = vunpack.c.h.b16 %v7192
    %v8669 = vunpack.c.l.b16 %v7193
    %v8670 = vunpack.c.h.b16 %v7193
    %v8671 = vunpack.c.l.b16 %v7194
    %v8672 = vunpack.c.h.b16 %v7194
    %v8673 = vunpack.c.l.b16 %v7195
    %v8674 = vunpack.c.l.b16 %v7196
    %v8675 = vunpack.c.h.b16 %v7196
    %v8676 = vunpack.c.l.b16 %v7197
    %v8677 = vunpack.c.h.b16 %v7197
    %v8678 = vunpack.c.l.b16 %v7198
    %v8679 = vunpack.c.h.b16 %v7198
    %v8680 = vunpack.c.l.b16 %v7199
    %v8681 = vunpack.c.l.b16 %v7200
    %v8682 = vunpack.c.h.b16 %v7200
    %v8683 = vunpack.c.l.b16 %v7201
    %v8684 = vunpack.c.h.b16 %v7201
    %v8685 = vunpack.c.l.b16 %v7202
    %v8686 = vunpack.c.h.b16 %v7202
    %v8687 = vunpack.c.l.b16 %v7203
    %v8688 = vunpack.c.l.b16 %v7204
    %v8689 = vunpack.c.h.b16 %v7204
    %v8690 = vunpack.c.l.b16 %v7205
    %v8691 = vunpack.c.h.b16 %v7205
    %v8692 = vunpack.c.l.b16 %v7206
    %v8693 = vunpack.c.h.b16 %v7206
    %v8694 = vunpack.c.l.b16 %v7207
    %v8695 = vunpack.c.l.b16 %v7208
    %v8696 = vunpack.c.h.b16 %v7208
    %v8697 = vunpack.c.l.b16 %v7209
    %v8698 = vunpack.c.h.b16 %v7209
    %v8699 = vunpack.c.l.b16 %v7210
    %v8700 = vunpack.c.h.b16 %v7210
    %v8701 = vunpack.c.l.b16 %v7211
    %v8702 = vunpack.c.l.b16 %v7212
    %v8703 = vunpack.c.h.b16 %v7212
    %v8704 = vunpack.c.l.b16 %v7213
    %v8705 = vunpack.c.h.b16 %v7213
    %v8706 = vunpack.c.l.b16 %v7214
    %v8707 = vunpack.c.h.b16 %v7214
    %v8708 = vunpack.c.l.b16 %v7215
    %v8709 = vunpack.c.l.b16 %v7216
    %v8710 = vunpack.c.h.b16 %v7216
    %v8711 = vunpack.c.l.b16 %v7217
    %v8712 = vunpack.c.h.b16 %v7217
    %v8713 = vunpack.c.l.b16 %v7218
    %v8714 = vunpack.c.h.b16 %v7218
    %v8715 = vunpack.c.l.b16 %v7219
    %v8716 = vunpack.c.l.b16 %v7220
    %v8717 = vunpack.c.h.b16 %v7220
    %v8718 = vunpack.c.l.b16 %v7221
    %v8719 = vunpack.c.h.b16 %v7221
    %v8720 = vunpack.c.l.b16 %v7222
    %v8721 = vunpack.c.h.b16 %v7222
    %v8722 = vunpack.c.l.b16 %v7223
    %v8723 = vunpack.c.l.b16 %v7224
    %v8724 = vunpack.c.h.b16 %v7224
    %v8725 = vunpack.c.l.b16 %v7225
    %v8726 = vunpack.c.h.b16 %v7225
    %v8727 = vunpack.c.l.b16 %v7226
    %v8728 = vunpack.c.h.b16 %v7226
    %v8729 = vunpack.c.l.b16 %v7227
    %v8730 = vunpack.c.l.b16 %v7228
    %v8731 = vunpack.c.h.b16 %v7228
    %v8732 = vunpack.c.l.b16 %v7229
    %v8733 = vunpack.c.h.b16 %v7229
    %v8734 = vunpack.c.l.b16 %v7230
    %v8735 = vunpack.c.h.b16 %v7230
    %v8736 = vunpack.c.l.b16 %v7231
    %v8737 = vunpack.c.l.b16 %v7232
    %v8738 = vunpack.c.h.b16 %v7232
    %v8739 = vunpack.c.l.b16 %v7233
    %v8740 = vunpack.c.h.b16 %v7233
    %v8741 = vunpack.c.l.b16 %v7234
    %v8742 = vunpack.c.h.b16 %v7234
    %v8743 = vunpack.c.l.b16 %v7235
    %v8744 = vunpack.c.l.b16 %v7236
    %v8745 = vunpack.c.h.b16 %v7236
    %v8746 = vunpack.c.l.b16 %v7237
    %v8747 = vunpack.c.h.b16 %v7237
    %v8748 = vunpack.c.l.b16 %v7238
    %v8749 = vunpack.c.h.b16 %v7238
    %v8750 = vunpack.c.l.b16 %v7239
    %v8751 = vunpack.c.l.b16 %v7240
    %v8752 = vunpack.c.h.b16 %v7240
    %v8753 = vunpack.c.l.b16 %v7241
    %v8754 = vunpack.c.h.b16 %v7241
    %v8755 = vunpack.c.l.b16 %v7242
    %v8756 = vunpack.c.h.b16 %v7242
    %v8757 = vunpack.c.l.b16 %v7243
    %v8758 = vunpack.c.l.b16 %v7244
    %v8759 = vunpack.c.h.b16 %v7244
    %v8760 = vunpack.c.l.b16 %v7245
    %v8761 = vunpack.c.h.b16 %v7245
    %v8762 = vunpack.c.l.b16 %v7246
    %v8763 = vunpack.c.h.b16 %v7246
    %v8764 = vunpack.c.l.b16 %v7247
    %v8765 = vunpack.c.l.b16 %v7248
    %v8766 = vunpack.c.h.b16 %v7248
    %v8767 = vunpack.c.l.b16 %v7249
    %v8768 = vunpack.c.h.b16 %v7249
    %v8769 = vunpack.c.l.b16 %v7250
    %v8770 = vunpack.c.h.b16 %v7250
    %v8771 = vunpack.c.l.b16 %v7251
    %v8772 = vunpack.c.l.b16 %v7252
    %v8773 = vunpack.c.h.b16 %v7252
    %v8774 = vunpack.c.l.b16 %v7253
    %v8775 = vunpack.c.h.b16 %v7253
    %v8776 = vunpack.c.l.b16 %v7254
    %v8777 = vunpack.c.h.b16 %v7254
    %v8778 = vunpack.c.l.b16 %v7255
    %v8779 = vunpack.c.l.b16 %v7256
    %v8780 = vunpack.c.h.b16 %v7256
    %v8781 = vunpack.c.l.b16 %v7257
    %v8782 = vunpack.c.h.b16 %v7257
    %v8783 = vunpack.c.l.b16 %v7258
    %v8784 = vunpack.c.h.b16 %v7258
    %v8785 = vunpack.c.l.b16 %v7259
    %v8786 = vunpack.c.l.b16 %v7260
    %v8787 = vunpack.c.h.b16 %v7260
    %v8788 = vunpack.c.l.b16 %v7261
    %v8789 = vunpack.c.h.b16 %v7261
    %v8790 = vunpack.c.l.b16 %v7262
    %v8791 = vunpack.c.h.b16 %v7262
    %v8792 = vunpack.c.l.b16 %v7263
    %v8793 = vunpack.c.l.b16 %v7264
    %v8794 = vunpack.c.h.b16 %v7264
    %v8795 = vunpack.c.l.b16 %v7265
    %v8796 = vunpack.c.h.b16 %v7265
    %v8797 = vunpack.c.l.b16 %v7266
    %v8798 = vunpack.c.h.b16 %v7266
    %v8799 = vunpack.c.l.b16 %v7267
    %v8800 = vunpack.c.l.b16 %v7268
    %v8801 = vunpack.c.h.b16 %v7268
    %v8802 = vunpack.c.l.b16 %v7269
    %v8803 = vunpack.c.h.b16 %v7269
    %v8804 = vunpack.c.l.b16 %v7270
    %v8805 = vunpack.c.h.b16 %v7270
    %v8806 = vunpack.c.l.b16 %v7271
    %v8807 = vunpack.c.l.b16 %v7272
    %v8808 = vunpack.c.h.b16 %v7272
    %v8809 = vunpack.c.l.b16 %v7273
    %v8810 = vunpack.c.h.b16 %v7273
    %v8811 = vunpack.c.l.b16 %v7274
    %v8812 = vunpack.c.h.b16 %v7274
    %v8813 = vunpack.c.l.b16 %v7275
    %v8814 = vunpack.c.l.b16 %v7276
    %v8815 = vunpack.c.h.b16 %v7276
    %v8816 = vunpack.c.l.b16 %v7277
    %v8817 = vunpack.c.h.b16 %v7277
    %v8818 = vunpack.c.l.b16 %v7278
    %v8819 = vunpack.c.h.b16 %v7278
    %v8820 = vunpack.c.l.b16 %v7279
    %v8821 = vunpack.c.l.b16 %v7280
    %v8822 = vunpack.c.h.b16 %v7280
    %v8823 = vunpack.c.l.b16 %v7281
    %v8824 = vunpack.c.h.b16 %v7281
    %v8825 = vunpack.c.l.b16 %v7282
    %v8826 = vunpack.c.h.b16 %v7282
    %v8827 = vunpack.c.l.b16 %v7283
    %v8828 = vunpack.c.l.b16 %v7284
    %v8829 = vunpack.c.h.b16 %v7284
    %v8830 = vunpack.c.l.b16 %v7285
    %v8831 = vunpack.c.h.b16 %v7285
    %v8832 = vunpack.c.l.b16 %v7286
    %v8833 = vunpack.c.h.b16 %v7286
    %v8834 = vunpack.c.l.b16 %v7287
    %v8835 = vunpack.c.l.b16 %v7288
    %v8836 = vunpack.c.h.b16 %v7288
    %v8837 = vunpack.c.l.b16 %v7289
    %v8838 = vunpack.c.h.b16 %v7289
    %v8839 = vunpack.c.l.b16 %v7290
    %v8840 = vunpack.c.h.b16 %v7290
    %v8841 = vunpack.c.l.b16 %v7291
    %v8842 = vunpack.c.l.b16 %v7292
    %v8843 = vunpack.c.h.b16 %v7292
    %v8844 = vunpack.c.l.b16 %v7293
    %v8845 = vunpack.c.h.b16 %v7293
    %v8846 = vunpack.c.l.b16 %v7294
    %v8847 = vunpack.c.h.b16 %v7294
    %v8848 = vunpack.c.l.b16 %v7295
    %v8849 = vunpack.c.l.b16 %v7296
    %v8850 = vunpack.c.h.b16 %v7296
    %v8851 = vunpack.c.l.b16 %v7297
    %v8852 = vunpack.c.h.b16 %v7297
    %v8853 = vunpack.c.l.b16 %v7298
    %v8854 = vunpack.c.h.b16 %v7298
    %v8855 = vunpack.c.l.b16 %v7299
    %v8856 = vunpack.c.l.b16 %v7300
    %v8857 = vunpack.c.h.b16 %v7300
    %v8858 = vunpack.c.l.b16 %v7301
    %v8859 = vunpack.c.h.b16 %v7301
    %v8860 = vunpack.c.l.b16 %v7302
    %v8861 = vunpack.c.h.b16 %v7302
    %v8862 = vunpack.c.l.b16 %v7303
    %v8863 = vunpack.c.l.b16 %v7304
    %v8864 = vunpack.c.h.b16 %v7304
    %v8865 = vunpack.c.l.b16 %v7305
    %v8866 = vunpack.c.h.b16 %v7305
    %v8867 = vunpack.c.l.b16 %v7306
    %v8868 = vunpack.c.h.b16 %v7306
    %v8869 = vunpack.c.l.b16 %v7307
    %v8870 = vunpack.c.l.b16 %v7308
    %v8871 = vunpack.c.h.b16 %v7308
    %v8872 = vunpack.c.l.b16 %v7309
    %v8873 = vunpack.c.h.b16 %v7309
    %v8874 = vunpack.c.l.b16 %v7310
    %v8875 = vunpack.c.h.b16 %v7310
    %v8876 = vunpack.c.l.b16 %v7311
    %v8877 = vunpack.c.l.b16 %v7312
    %v8878 = vunpack.c.h.b16 %v7312
    %v8879 = vunpack.c.l.b16 %v7313
    %v8880 = vunpack.c.h.b16 %v7313
    %v8881 = vunpack.c.l.b16 %v7314
    %v8882 = vunpack.c.h.b16 %v7314
    %v8883 = vunpack.c.l.b16 %v7315
    %v8884 = vunpack.c.l.b16 %v7316
    %v8885 = vunpack.c.h.b16 %v7316
    %v8886 = vunpack.c.l.b16 %v7317
    %v8887 = vunpack.c.h.b16 %v7317
    %v8888 = vunpack.c.l.b16 %v7318
    %v8889 = vunpack.c.h.b16 %v7318
    %v8890 = vunpack.c.l.b16 %v7319
    %v8891 = vunpack.c.l.b16 %v7320
    %v8892 = vunpack.c.h.b16 %v7320
    %v8893 = vunpack.c.l.b16 %v7321
    %v8894 = vunpack.c.h.b16 %v7321
    %v8895 = vunpack.c.l.b16 %v7322
    %v8896 = vunpack.c.h.b16 %v7322
    %v8897 = vunpack.c.l.b16 %v7323
    %v8898 = vunpack.c.l.b16 %v7324
    %v8899 = vunpack.c.h.b16 %v7324
    %v8900 = vunpack.c.l.b16 %v7325
    %v8901 = vunpack.c.h.b16 %v7325
    %v8902 = vunpack.c.l.b16 %v7326
    %v8903 = vunpack.c.h.b16 %v7326
    %v8904 = vunpack.c.l.b16 %v7327
    %v8905 = vunpack.c.l.b16 %v7328
    %v8906 = vunpack.c.h.b16 %v7328
    %v8907 = vunpack.c.l.b16 %v7329
    %v8908 = vunpack.c.h.b16 %v7329
    %v8909 = vunpack.c.l.b16 %v7330
    %v8910 = vunpack.c.h.b16 %v7330
    %v8911 = vunpack.c.l.b16 %v7331
    %v8912 = vunpack.c.l.b16 %v7332
    %v8913 = vunpack.c.h.b16 %v7332
    %v8914 = vunpack.c.l.b16 %v7333
    %v8915 = vunpack.c.h.b16 %v7333
    %v8916 = vunpack.c.l.b16 %v7334
    %v8917 = vunpack.c.h.b16 %v7334
    %v8918 = vunpack.c.l.b16 %v7335
    %v8919 = vunpack.c.l.b16 %v7336
    %v8920 = vunpack.c.h.b16 %v7336
    %v8921 = vunpack.c.l.b16 %v7337
    %v8922 = vunpack.c.h.b16 %v7337
    %v8923 = vunpack.c.l.b16 %v7338
    %v8924 = vunpack.c.h.b16 %v7338
    %v8925 = vunpack.c.l.b16 %v7339
    %v8926 = vunpack.c.l.b16 %v7340
    %v8927 = vunpack.c.h.b16 %v7340
    %v8928 = vunpack.c.l.b16 %v7341
    %v8929 = vunpack.c.h.b16 %v7341
    %v8930 = vunpack.c.l.b16 %v7342
    %v8931 = vunpack.c.h.b16 %v7342
    %v8932 = vunpack.c.l.b16 %v7343
    %v8933 = vunpack.c.l.b16 %v7344
    %v8934 = vunpack.c.h.b16 %v7344
    %v8935 = vunpack.c.l.b16 %v7345
    %v8936 = vunpack.c.h.b16 %v7345
    %v8937 = vunpack.c.l.b16 %v7346
    %v8938 = vunpack.c.h.b16 %v7346
    %v8939 = vunpack.c.l.b16 %v7347
    %v8940 = vunpack.c.l.b16 %v7348
    %v8941 = vunpack.c.h.b16 %v7348
    %v8942 = vunpack.c.l.b16 %v7349
    %v8943 = vunpack.c.h.b16 %v7349
    %v8944 = vunpack.c.l.b16 %v7350
    %v8945 = vunpack.c.h.b16 %v7350
    %v8946 = vunpack.c.l.b16 %v7351
    %v8947 = vunpack.c.l.b16 %v7352
    %v8948 = vunpack.c.h.b16 %v7352
    %v8949 = vunpack.c.l.b16 %v7353
    %v8950 = vunpack.c.h.b16 %v7353
    %v8951 = vunpack.c.l.b16 %v7354
    %v8952 = vunpack.c.h.b16 %v7354
    %v8953 = vunpack.c.l.b16 %v7355
    %v8954 = vunpack.c.l.b16 %v7356
    %v8955 = vunpack.c.h.b16 %v7356
    %v8956 = vunpack.c.l.b16 %v7357
    %v8957 = vunpack.c.h.b16 %v7357
    %v8958 = vunpack.c.l.b16 %v7358
    %v8959 = vunpack.c.h.b16 %v7358
    %v8960 = vunpack.c.l.b16 %v7359
    %v8961 = vunpack.c.l.b16 %v7360
    %v8962 = vunpack.c.h.b16 %v7360
    %v8963 = vunpack.c.l.b16 %v7361
    %v8964 = vunpack.c.h.b16 %v7361
    %v8965 = vunpack.c.l.b16 %v7362
    %v8966 = vunpack.c.h.b16 %v7362
    %v8967 = vunpack.c.l.b16 %v7363
    %v8968 = vunpack.c.l.b16 %v7364
    %v8969 = vunpack.c.h.b16 %v7364
    %v8970 = vunpack.c.l.b16 %v7365
    %v8971 = vunpack.c.h.b16 %v7365
    %v8972 = vunpack.c.l.b16 %v7366
    %v8973 = vunpack.c.h.b16 %v7366
    %v8974 = vunpack.c.l.b16 %v7367
    %v8975 = vunpack.c.l.b16 %v7368
    %v8976 = vunpack.c.h.b16 %v7368
    %v8977 = vunpack.c.l.b16 %v7369
    %v8978 = vunpack.c.h.b16 %v7369
    %v8979 = vunpack.c.l.b16 %v7370
    %v8980 = vunpack.c.h.b16 %v7370
    %v8981 = vunpack.c.l.b16 %v7371
    %v8982 = vunpack.c.l.b16 %v7372
    %v8983 = vunpack.c.h.b16 %v7372
    %v8984 = vunpack.c.l.b16 %v7373
    %v8985 = vunpack.c.h.b16 %v7373
    %v8986 = vunpack.c.l.b16 %v7374
    %v8987 = vunpack.c.h.b16 %v7374
    %v8988 = vunpack.c.l.b16 %v7375
    %v8989 = vunpack.c.l.b16 %v7376
    %v8990 = vunpack.c.h.b16 %v7376
    %v8991 = vunpack.c.l.b16 %v7377
    %v8992 = vunpack.c.h.b16 %v7377
    %v8993 = vunpack.c.l.b16 %v7378
    %v8994 = vunpack.c.h.b16 %v7378
    %v8995 = vunpack.c.l.b16 %v7379
    %v8996 = vunpack.c.l.b16 %v7380
    %v8997 = vunpack.c.h.b16 %v7380
    %v8998 = vunpack.c.l.b16 %v7381
    %v8999 = vunpack.c.h.b16 %v7381
    %v9000 = vunpack.c.l.b16 %v7382
    %v9001 = vunpack.c.h.b16 %v7382
    %v9002 = vunpack.c.l.b16 %v7383
    %v9003 = vunpack.c.l.b16 %v7384
    %v9004 = vunpack.c.h.b16 %v7384
    %v9005 = vunpack.c.l.b16 %v7385
    %v9006 = vunpack.c.h.b16 %v7385
    %v9007 = vunpack.c.l.b16 %v7386
    %v9008 = vunpack.c.h.b16 %v7386
    %v9009 = vunpack.c.l.b16 %v7387
    %v9010 = vunpack.c.l.b16 %v7388
    %v9011 = vunpack.c.h.b16 %v7388
    %v9012 = vunpack.c.l.b16 %v7389
    %v9013 = vunpack.c.h.b16 %v7389
    %v9014 = vunpack.c.l.b16 %v7390
    %v9015 = vunpack.c.h.b16 %v7390
    %v9016 = vunpack.c.l.b16 %v7391
    %v9017 = vunpack.c.l.b16 %v7392
    %v9018 = vunpack.c.h.b16 %v7392
    %v9019 = vunpack.c.l.b16 %v7393
    %v9020 = vunpack.c.h.b16 %v7393
    %v9021 = vunpack.c.l.b16 %v7394
    %v9022 = vunpack.c.h.b16 %v7394
    %v9023 = vunpack.c.l.b16 %v7395
    %v9024 = vunpack.c.l.b16 %v7396
    %v9025 = vunpack.c.h.b16 %v7396
    %v9026 = vunpack.c.l.b16 %v7397
    %v9027 = vunpack.c.h.b16 %v7397
    %v9028 = vunpack.c.l.b16 %v7398
    %v9029 = vunpack.c.h.b16 %v7398
    %v9030 = vunpack.c.l.b16 %v7399
    %v9031 = vunpack.c.l.b16 %v7400
    %v9032 = vunpack.c.h.b16 %v7400
    %v9033 = vunpack.c.l.b16 %v7401
    %v9034 = vunpack.c.h.b16 %v7401
    %v9035 = vunpack.c.l.b16 %v7402
    %v9036 = vunpack.c.h.b16 %v7402
    %v9037 = vunpack.c.l.b16 %v7403
    %v9038 = vunpack.c.l.b16 %v7404
    %v9039 = vunpack.c.h.b16 %v7404
    %v9040 = vunpack.c.l.b16 %v7405
    %v9041 = vunpack.c.h.b16 %v7405
    %v9042 = vunpack.c.l.b16 %v7406
    %v9043 = vunpack.c.h.b16 %v7406
    %v9044 = vunpack.c.l.b16 %v7407
    %v9045 = vunpack.c.l.b16 %v7408
    %v9046 = vunpack.c.h.b16 %v7408
    %v9047 = vunpack.c.l.b16 %v7409
    %v9048 = vunpack.c.h.b16 %v7409
    %v9049 = vunpack.c.l.b16 %v7410
    %v9050 = vunpack.c.h.b16 %v7410
    %v9051 = vunpack.c.l.b16 %v7411
    %v9052 = vunpack.c.l.b16 %v7412
    %v9053 = vunpack.c.h.b16 %v7412
    %v9054 = vunpack.c.l.b16 %v7413
    %v9055 = vunpack.c.h.b16 %v7413
    %v9056 = vunpack.c.l.b16 %v7414
    %v9057 = vunpack.c.h.b16 %v7414
    %v9058 = vunpack.c.l.b16 %v7415
    %v9059 = vunpack.c.l.b16 %v7416
    %v9060 = vunpack.c.h.b16 %v7416
    %v9061 = vunpack.c.l.b16 %v7417
    %v9062 = vunpack.c.h.b16 %v7417
    %v9063 = vunpack.c.l.b16 %v7418
    %v9064 = vunpack.c.h.b16 %v7418
    %v9065 = vunpack.c.l.b16 %v7419
    %v9066 = vunpack.c.l.b16 %v7420
    %v9067 = vunpack.c.h.b16 %v7420
    %v9068 = vunpack.c.l.b16 %v7421
    %v9069 = vunpack.c.h.b16 %v7421
    %v9070 = vunpack.c.l.b16 %v7422
    %v9071 = vunpack.c.h.b16 %v7422
    %v9072 = vunpack.c.l.b16 %v7423
    %v9073 = vunpack.c.l.b16 %v7424
    %v9074 = vunpack.c.h.b16 %v7424
    %v9075 = vunpack.c.l.b16 %v7425
    %v9076 = vunpack.c.h.b16 %v7425
    %v9077 = vunpack.c.l.b16 %v7426
    %v9078 = vunpack.c.h.b16 %v7426
    %v9079 = vunpack.c.l.b16 %v7427
    %v9080 = vunpack.c.l.b16 %v7428
    %v9081 = vunpack.c.h.b16 %v7428
    %v9082 = vunpack.c.l.b16 %v7429
    %v9083 = vunpack.c.h.b16 %v7429
    %v9084 = vunpack.c.l.b16 %v7430
    %v9085 = vunpack.c.h.b16 %v7430
    %v9086 = vunpack.c.l.b16 %v7431
    %v9087 = vunpack.c.l.b16 %v7432
    %v9088 = vunpack.c.h.b16 %v7432
    %v9089 = vunpack.c.l.b16 %v7433
    %v9090 = vunpack.c.h.b16 %v7433
    %v9091 = vunpack.c.l.b16 %v7434
    %v9092 = vunpack.c.h.b16 %v7434
    %v9093 = vunpack.c.l.b16 %v7435
    %v9094 = vunpack.c.l.b16 %v7436
    %v9095 = vunpack.c.h.b16 %v7436
    %v9096 = vunpack.c.l.b16 %v7437
    %v9097 = vunpack.c.h.b16 %v7437
    %v9098 = vunpack.c.l.b16 %v7438
    %v9099 = vunpack.c.h.b16 %v7438
    %v9100 = vunpack.c.l.b16 %v7439
    %v9101 = vunpack.c.l.b16 %v7440
    %v9102 = vunpack.c.h.b16 %v7440
    %v9103 = vunpack.c.l.b16 %v7441
    %v9104 = vunpack.c.h.b16 %v7441
    %v9105 = vunpack.c.l.b16 %v7442
    %v9106 = vunpack.c.h.b16 %v7442
    %v9107 = vunpack.c.l.b16 %v7443
    %v9108 = vunpack.c.l.b16 %v7444
    %v9109 = vunpack.c.h.b16 %v7444
    %v9110 = vunpack.c.l.b16 %v7445
    %v9111 = vunpack.c.h.b16 %v7445
    %v9112 = vunpack.c.l.b16 %v7446
    %v9113 = vunpack.c.h.b16 %v7446
    %v9114 = vunpack.c.l.b16 %v7447
    %v9115 = vunpack.c.l.b16 %v7448
    %v9116 = vunpack.c.h.b16 %v7448
    %v9117 = vunpack.c.l.b16 %v7449
    %v9118 = vunpack.c.h.b16 %v7449
    %v9119 = vunpack.c.l.b16 %v7450
    %v9120 = vunpack.c.h.b16 %v7450
    %v9121 = vunpack.c.l.b16 %v7451
    %v9122 = vunpack.c.l.b16 %v7452
    %v9123 = vunpack.c.h.b16 %v7452
    %v9124 = vunpack.c.l.b16 %v7453
    %v9125 = vunpack.c.h.b16 %v7453
    %v9126 = vunpack.c.l.b16 %v7454
    %v9127 = vunpack.c.h.b16 %v7454
    %v9128 = vunpack.c.l.b16 %v7455
    %v9129 = vunpack.c.l.b16 %v7456
    %v9130 = vunpack.c.h.b16 %v7456
    %v9131 = vunpack.c.l.b16 %v7457
    %v9132 = vunpack.c.h.b16 %v7457
    %v9133 = vunpack.c.l.b16 %v7458
    %v9134 = vunpack.c.h.b16 %v7458
    %v9135 = vunpack.c.l.b16 %v7459
    %v9136 = vunpack.c.l.b16 %v7460
    %v9137 = vunpack.c.h.b16 %v7460
    %v9138 = vunpack.c.l.b16 %v7461
    %v9139 = vunpack.c.h.b16 %v7461
    %v9140 = vunpack.c.l.b16 %v7462
    %v9141 = vunpack.c.h.b16 %v7462
    %v9142 = vunpack.c.l.b16 %v7463
    %v9143 = vunpack.c.l.b16 %v7464
    %v9144 = vunpack.c.h.b16 %v7464
    %v9145 = vunpack.c.l.b16 %v7465
    %v9146 = vunpack.c.h.b16 %v7465
    %v9147 = vunpack.c.l.b16 %v7466
    %v9148 = vunpack.c.h.b16 %v7466
    %v9149 = vunpack.c.l.b16 %v7467
    %v9150 = vunpack.c.l.b16 %v7468
    %v9151 = vunpack.c.h.b16 %v7468
    %v9152 = vunpack.c.l.b16 %v7469
    %v9153 = vunpack.c.h.b16 %v7469
    %v9154 = vunpack.c.l.b16 %v7470
    %v9155 = vunpack.c.h.b16 %v7470
    %v9156 = vunpack.c.l.b16 %v7471
    %v9157 = vunpack.c.l.b16 %v7472
    %v9158 = vunpack.c.h.b16 %v7472
    %v9159 = vunpack.c.l.b16 %v7473
    %v9160 = vunpack.c.h.b16 %v7473
    %v9161 = vunpack.c.l.b16 %v7474
    %v9162 = vunpack.c.h.b16 %v7474
    %v9163 = vunpack.c.l.b16 %v7475
    %v9164 = vunpack.c.l.b16 %v7476
    %v9165 = vunpack.c.h.b16 %v7476
    %v9166 = vunpack.c.l.b16 %v7477
    %v9167 = vunpack.c.h.b16 %v7477
    %v9168 = vunpack.c.l.b16 %v7478
    %v9169 = vunpack.c.h.b16 %v7478
    %v9170 = vunpack.c.l.b16 %v7479
    %v9171 = vunpack.c.l.b16 %v7480
    %v9172 = vunpack.c.h.b16 %v7480
    %v9173 = vunpack.c.l.b16 %v7481
    %v9174 = vunpack.c.h.b16 %v7481
    %v9175 = vunpack.c.l.b16 %v7482
    %v9176 = vunpack.c.h.b16 %v7482
    %v9177 = vunpack.c.l.b16 %v7483
    %v9178 = vunpack.c.l.b16 %v7484
    %v9179 = vunpack.c.h.b16 %v7484
    %v9180 = vunpack.c.l.b16 %v7485
    %v9181 = vunpack.c.h.b16 %v7485
    %v9182 = vunpack.c.l.b16 %v7486
    %v9183 = vunpack.c.h.b16 %v7486
    %v9184 = vunpack.c.l.b16 %v7487
    %v9185 = vunpack.c.l.b16 %v7488
    %v9186 = vunpack.c.h.b16 %v7488
    %v9187 = vunpack.c.l.b16 %v7489
    %v9188 = vunpack.c.h.b16 %v7489
    %v9189 = vunpack.c.l.b16 %v7490
    %v9190 = vunpack.c.h.b16 %v7490
    %v9191 = vunpack.c.l.b16 %v7491
    %v9192 = vunpack.c.l.b16 %v7492
    %v9193 = vunpack.c.h.b16 %v7492
    %v9194 = vunpack.c.l.b16 %v7493
    %v9195 = vunpack.c.h.b16 %v7493
    %v9196 = vunpack.c.l.b16 %v7494
    %v9197 = vunpack.c.h.b16 %v7494
    %v9198 = vunpack.c.l.b16 %v7495
    %v9199 = vunpack.c.l.b16 %v7496
    %v9200 = vunpack.c.h.b16 %v7496
    %v9201 = vunpack.c.l.b16 %v7497
    %v9202 = vunpack.c.h.b16 %v7497
    %v9203 = vunpack.c.l.b16 %v7498
    %v9204 = vunpack.c.h.b16 %v7498
    %v9205 = vunpack.c.l.b16 %v7499
    %v9206 = vunpack.c.l.b16 %v7500
    %v9207 = vunpack.c.h.b16 %v7500
    %v9208 = vunpack.c.l.b16 %v7501
    %v9209 = vunpack.c.h.b16 %v7501
    %v9210 = vunpack.c.l.b16 %v7502
    %v9211 = vunpack.c.h.b16 %v7502
    %v9212 = vunpack.c.l.b16 %v7503
    %v9213 = vunpack.c.l.b16 %v7504
    %v9214 = vunpack.c.h.b16 %v7504
    %v9215 = vunpack.c.l.b16 %v7505
    %v9216 = vunpack.c.h.b16 %v7505
    %v9217 = vunpack.c.l.b16 %v7506
    %v9218 = vunpack.c.h.b16 %v7506
    %v9219 = vunpack.c.l.b16 %v7507
    %v9220 = vunpack.c.l.b16 %v7508
    %v9221 = vunpack.c.h.b16 %v7508
    %v9222 = vunpack.c.l.b16 %v7509
    %v9223 = vunpack.c.h.b16 %v7509
    %v9224 = vunpack.c.l.b16 %v7510
    %v9225 = vunpack.c.h.b16 %v7510
    %v9226 = vunpack.c.l.b16 %v7511
    %v9227 = vunpack.c.l.b16 %v7512
    %v9228 = vunpack.c.h.b16 %v7512
    %v9229 = vunpack.c.l.b16 %v7513
    %v9230 = vunpack.c.h.b16 %v7513
    %v9231 = vunpack.c.l.b16 %v7514
    %v9232 = vunpack.c.h.b16 %v7514
    %v9233 = vunpack.c.l.b16 %v7515
    %v9234 = vunpack.c.l.b16 %v7516
    %v9235 = vunpack.c.h.b16 %v7516
    %v9236 = vunpack.c.l.b16 %v7517
    %v9237 = vunpack.c.h.b16 %v7517
    %v9238 = vunpack.c.l.b16 %v7518
    %v9239 = vunpack.c.h.b16 %v7518
    %v9240 = vunpack.c.l.b16 %v7519
    %v9241 = vunpack.c.l.b16 %v7520
    %v9242 = vunpack.c.h.b16 %v7520
    %v9243 = vunpack.c.l.b16 %v7521
    %v9244 = vunpack.c.h.b16 %v7521
    %v9245 = vunpack.c.l.b16 %v7522
    %v9246 = vunpack.c.h.b16 %v7522
    %v9247 = vunpack.c.l.b16 %v7523
    %v9248 = vunpack.c.l.b16 %v7524
    %v9249 = vunpack.c.h.b16 %v7524
    %v9250 = vunpack.c.l.b16 %v7525
    %v9251 = vunpack.c.h.b16 %v7525
    %v9252 = vunpack.c.l.b16 %v7526
    %v9253 = vunpack.c.h.b16 %v7526
    %v9254 = vunpack.c.l.b16 %v7527
    %v9255 = vunpack.c.l.b16 %v7528
    %v9256 = vunpack.c.h.b16 %v7528
    %v9257 = vunpack.c.l.b16 %v7529
    %v9258 = vunpack.c.h.b16 %v7529
    %v9259 = vunpack.c.l.b16 %v7530
    %v9260 = vunpack.c.h.b16 %v7530
    %v9261 = vunpack.c.l.b16 %v7531
    %v9262 = vunpack.c.l.b16 %v7532
    %v9263 = vunpack.c.h.b16 %v7532
    %v9264 = vunpack.c.l.b16 %v7533
    %v9265 = vunpack.c.h.b16 %v7533
    %v9266 = vunpack.c.l.b16 %v7534
    %v9267 = vunpack.c.h.b16 %v7534
    %v9268 = vunpack.c.l.b16 %v7535
    %v9269 = vunpack.c.l.b16 %v7536
    %v9270 = vunpack.c.h.b16 %v7536
    %v9271 = vunpack.c.l.b16 %v7537
    %v9272 = vunpack.c.h.b16 %v7537
    %v9273 = vunpack.c.l.b16 %v7538
    %v9274 = vunpack.c.h.b16 %v7538
    %v9275 = vunpack.c.l.b16 %v7539
    %v9276 = vunpack.c.l.b16 %v7540
    %v9277 = vunpack.c.h.b16 %v7540
    %v9278 = vunpack.c.l.b16 %v7541
    %v9279 = vunpack.c.h.b16 %v7541
    %v9280 = vunpack.c.l.b16 %v7542
    %v9281 = vunpack.c.h.b16 %v7542
    %v9282 = vunpack.c.l.b16 %v7543
    %v9283 = vunpack.c.l.b16 %v7544
    %v9284 = vunpack.c.h.b16 %v7544
    %v9285 = vunpack.c.l.b16 %v7545
    %v9286 = vunpack.c.h.b16 %v7545
    %v9287 = vunpack.c.l.b16 %v7546
    %v9288 = vunpack.c.h.b16 %v7546
    %v9289 = vunpack.c.l.b16 %v7547
    %v9290 = vunpack.c.l.b16 %v7548
    %v9291 = vunpack.c.h.b16 %v7548
    %v9292 = vunpack.c.l.b16 %v7549
    %v9293 = vunpack.c.h.b16 %v7549
    %v9294 = vunpack.c.l.b16 %v7550
    %v9295 = vunpack.c.h.b16 %v7550
    %v9296 = vunpack.c.l.b16 %v7551
    %v9297 = vunpack.c.l.b16 %v7552
    %v9298 = vunpack.c.h.b16 %v7552
    %v9299 = vunpack.c.l.b16 %v7553
    %v9300 = vunpack.c.h.b16 %v7553
    %v9301 = vunpack.c.l.b16 %v7554
    %v9302 = vunpack.c.h.b16 %v7554
    %v9303 = vunpack.c.l.b16 %v7555
    %v9304 = vunpack.c.l.b16 %v7556
    %v9305 = vunpack.c.h.b16 %v7556
    %v9306 = vunpack.c.l.b16 %v7557
    %v9307 = vunpack.c.h.b16 %v7557
    %v9308 = vunpack.c.l.b16 %v7558
    %v9309 = vunpack.c.h.b16 %v7558
    %v9310 = vunpack.c.l.b16 %v7559
    %v9311 = vunpack.c.l.b16 %v7560
    %v9312 = vunpack.c.h.b16 %v7560
    %v9313 = vunpack.c.l.b16 %v7561
    %v9314 = vunpack.c.h.b16 %v7561
    %v9315 = vunpack.c.l.b16 %v7562
    %v9316 = vunpack.c.h.b16 %v7562
    %v9317 = vunpack.c.l.b16 %v7563
    %v9318 = vunpack.c.l.b16 %v7564
    %v9319 = vunpack.c.h.b16 %v7564
    %v9320 = vunpack.c.l.b16 %v7565
    %v9321 = vunpack.c.h.b16 %v7565
    %v9322 = vunpack.c.l.b16 %v7566
    %v9323 = vunpack.c.h.b16 %v7566
    %v9324 = vunpack.c.l.b16 %v7567
    %v9325 = vunpack.c.l.b16 %v7568
    %v9326 = vunpack.c.h.b16 %v7568
    %v9327 = vunpack.c.l.b16 %v7569
    %v9328 = vunpack.c.h.b16 %v7569
    %v9329 = vunpack.c.l.b16 %v7570
    %v9330 = vunpack.c.h.b16 %v7570
    %v9331 = vunpack.c.l.b16 %v7571
    %v9332 = vunpack.c.l.b16 %v7572
    %v9333 = vunpack.c.h.b16 %v7572
    %v9334 = vunpack.c.l.b16 %v7573
    %v9335 = vunpack.c.h.b16 %v7573
    %v9336 = vunpack.c.l.b16 %v7574
    %v9337 = vunpack.c.h.b16 %v7574
    %v9338 = vunpack.c.l.b16 %v7575
    %v9339 = vunpack.c.l.b16 %v7576
    %v9340 = vunpack.c.h.b16 %v7576
    %v9341 = vunpack.c.l.b16 %v7577
    %v9342 = vunpack.c.h.b16 %v7577
    %v9343 = vunpack.c.l.b16 %v7578
    %v9344 = vunpack.c.h.b16 %v7578
    %v9345 = vunpack.c.l.b16 %v7579
    %v9346 = vunpack.c.l.b16 %v7580
    %v9347 = vunpack.c.h.b16 %v7580
    %v9348 = vunpack.c.l.b16 %v7581
    %v9349 = vunpack.c.h.b16 %v7581
    %v9350 = vunpack.c.l.b16 %v7582
    %v9351 = vunpack.c.h.b16 %v7582
    %v9352 = vunpack.c.l.b16 %v7583
    %v9353 = vunpack.c.l.b16 %v7584
    %v9354 = vunpack.c.h.b16 %v7584
    %v9355 = vunpack.c.l.b16 %v7585
    %v9356 = vunpack.c.h.b16 %v7585
    %v9357 = vunpack.c.l.b16 %v7586
    %v9358 = vunpack.c.h.b16 %v7586
    %v9359 = vunpack.c.l.b16 %v7587
    %v9360 = vunpack.c.l.b16 %v7588
    %v9361 = vunpack.c.h.b16 %v7588
    %v9362 = vunpack.c.l.b16 %v7589
    %v9363 = vunpack.c.h.b16 %v7589
    %v9364 = vunpack.c.l.b16 %v7590
    %v9365 = vunpack.c.h.b16 %v7590
    %v9366 = vunpack.c.l.b16 %v7591
    %v9367 = vunpack.c.l.b16 %v7592
    %v9368 = vunpack.c.h.b16 %v7592
    %v9369 = vunpack.c.l.b16 %v7593
    %v9370 = vunpack.c.h.b16 %v7593
    %v9371 = vunpack.c.l.b16 %v7594
    %v9372 = vunpack.c.h.b16 %v7594
    %v9373 = vunpack.c.l.b16 %v7595
    %v9374 = vunpack.c.l.b16 %v7596
    %v9375 = vunpack.c.h.b16 %v7596
    %v9376 = vunpack.c.l.b16 %v7597
    %v9377 = vunpack.c.h.b16 %v7597
    %v9378 = vunpack.c.l.b16 %v7598
    %v9379 = vunpack.c.h.b16 %v7598
    %v9380 = vunpack.c.l.b16 %v7599
    %v9381 = vunpack.c.l.b16 %v7600
    %v9382 = vunpack.c.h.b16 %v7600
    %v9383 = vunpack.c.l.b16 %v7601
    %v9384 = vunpack.c.h.b16 %v7601
    %v9385 = vunpack.c.l.b16 %v7602
    %v9386 = vunpack.c.h.b16 %v7602
    %v9387 = vunpack.c.l.b16 %v7603
    %v9388 = vunpack.c.l.b16 %v7604
    %v9389 = vunpack.c.h.b16 %v7604
    %v9390 = vunpack.c.l.b16 %v7605
    %v9391 = vunpack.c.h.b16 %v7605
    %v9392 = vunpack.c.l.b16 %v7606
    %v9393 = vunpack.c.h.b16 %v7606
    %v9394 = vunpack.c.l.b16 %v7607
    %v9395 = vunpack.c.l.b16 %v7608
    %v9396 = vunpack.c.h.b16 %v7608
    %v9397 = vunpack.c.l.b16 %v7609
    %v9398 = vunpack.c.h.b16 %v7609
    %v9399 = vunpack.c.l.b16 %v7610
    %v9400 = vunpack.c.h.b16 %v7610
    %v9401 = vunpack.c.l.b16 %v7611
    %v9402 = vunpack.c.l.b16 %v7612
    %v9403 = vunpack.c.h.b16 %v7612
    %v9404 = vunpack.c.l.b16 %v7613
    %v9405 = vunpack.c.h.b16 %v7613
    %v9406 = vunpack.c.l.b16 %v7614
    %v9407 = vunpack.c.h.b16 %v7614
    %v9408 = vunpack.c.l.b16 %v7615
    %v9409 = vunpack.c.l.b16 %v7616
    %v9410 = vunpack.c.h.b16 %v7616
    %v9411 = vunpack.c.l.b16 %v7617
    %v9412 = vunpack.c.h.b16 %v7617
    %v9413 = vunpack.c.l.b16 %v7618
    %v9414 = vunpack.c.h.b16 %v7618
    %v9415 = vunpack.c.l.b16 %v7619
    %v9416 = vunpack.c.l.b16 %v7620
    %v9417 = vunpack.c.h.b16 %v7620
    %v9418 = vunpack.c.l.b16 %v7621
    %v9419 = vunpack.c.h.b16 %v7621
    %v9420 = vunpack.c.l.b16 %v7622
    %v9421 = vunpack.c.h.b16 %v7622
    %v9422 = vunpack.c.l.b16 %v7623
    %v9423 = vunpack.c.l.b16 %v7624
    %v9424 = vunpack.c.h.b16 %v7624
    %v9425 = vunpack.c.l.b16 %v7625
    %v9426 = vunpack.c.h.b16 %v7625
    %v9427 = vunpack.c.l.b16 %v7626
    %v9428 = vunpack.c.h.b16 %v7626
    %v9429 = vunpack.c.l.b16 %v7627
    %v9430 = vunpack.c.l.b16 %v7628
    %v9431 = vunpack.c.h.b16 %v7628
    %v9432 = vunpack.c.l.b16 %v7629
    %v9433 = vunpack.c.h.b16 %v7629
    %v9434 = vunpack.c.l.b16 %v7630
    %v9435 = vunpack.c.h.b16 %v7630
    %v9436 = vunpack.c.l.b16 %v7631
    %v9437 = vunpack.c.l.b16 %v7632
    %v9438 = vunpack.c.h.b16 %v7632
    %v9439 = vunpack.c.l.b16 %v7633
    %v9440 = vunpack.c.h.b16 %v7633
    %v9441 = vunpack.c.l.b16 %v7634
    %v9442 = vunpack.c.h.b16 %v7634
    %v9443 = vunpack.c.l.b16 %v7635
    %v9444 = vunpack.c.l.b16 %v7636
    %v9445 = vunpack.c.h.b16 %v7636
    %v9446 = vunpack.c.l.b16 %v7637
    %v9447 = vunpack.c.h.b16 %v7637
    %v9448 = vunpack.c.l.b16 %v7638
    %v9449 = vunpack.c.h.b16 %v7638
    %v9450 = vunpack.c.l.b16 %v7639
    %v9451 = vunpack.c.l.b16 %v7640
    %v9452 = vunpack.c.h.b16 %v7640
    %v9453 = vunpack.c.l.b16 %v7641
    %v9454 = vunpack.c.h.b16 %v7641
    %v9455 = vunpack.c.l.b16 %v7642
    %v9456 = vunpack.c.h.b16 %v7642
    %v9457 = vunpack.c.l.b16 %v7643
    %v9458 = vunpack.c.l.b16 %v7644
    %v9459 = vunpack.c.h.b16 %v7644
    %v9460 = vunpack.c.l.b16 %v7645
    %v9461 = vunpack.c.h.b16 %v7645
    %v9462 = vunpack.c.l.b16 %v7646
    %v9463 = vunpack.c.h.b16 %v7646
    %v9464 = vunpack.c.l.b16 %v7647
    %v9465 = vunpack.c.l.b16 %v7648
    %v9466 = vunpack.c.h.b16 %v7648
    %v9467 = vunpack.c.l.b16 %v7649
    %v9468 = vunpack.c.h.b16 %v7649
    %v9469 = vunpack.c.l.b16 %v7650
    %v9470 = vunpack.c.h.b16 %v7650
    %v9471 = vunpack.c.l.b16 %v7651
    %v9472 = vunpack.c.l.b16 %v7652
    %v9473 = vunpack.c.h.b16 %v7652
    %v9474 = vunpack.c.l.b16 %v7653
    %v9475 = vunpack.c.h.b16 %v7653
    %v9476 = vunpack.c.l.b16 %v7654
    %v9477 = vunpack.c.h.b16 %v7654
    %v9478 = vunpack.c.l.b16 %v7655
    %v9479 = vunpack.c.l.b16 %v7656
    %v9480 = vunpack.c.h.b16 %v7656
    %v9481 = vunpack.c.l.b16 %v7657
    %v9482 = vunpack.c.h.b16 %v7657
    %v9483 = vunpack.c.l.b16 %v7658
    %v9484 = vunpack.c.h.b16 %v7658
    %v9485 = vunpack.c.l.b16 %v7659
    %v9486 = vunpack.c.l.b16 %v7660
    %v9487 = vunpack.c.h.b16 %v7660
    %v9488 = vunpack.c.l.b16 %v7661
    %v9489 = vunpack.c.h.b16 %v7661
    %v9490 = vunpack.c.l.b16 %v7662
    %v9491 = vunpack.c.h.b16 %v7662
    %v9492 = vunpack.c.l.b16 %v7663
    %v9493 = vunpack.c.l.b16 %v7664
    %v9494 = vunpack.c.h.b16 %v7664
    %v9495 = vunpack.c.l.b16 %v7665
    %v9496 = vunpack.c.h.b16 %v7665
    %v9497 = vunpack.c.l.b16 %v7666
    %v9498 = vunpack.c.h.b16 %v7666
    %v9499 = vunpack.c.l.b16 %v7667
    %v9500 = vunpack.c.l.b16 %v7668
    %v9501 = vunpack.c.h.b16 %v7668
    %v9502 = vunpack.c.l.b16 %v7669
    %v9503 = vunpack.c.h.b16 %v7669
    %v9504 = vunpack.c.l.b16 %v7670
    %v9505 = vunpack.c.h.b16 %v7670
    %v9506 = vunpack.c.l.b16 %v7671
    %v9507 = vunpack.c.l.b16 %v7672
    %v9508 = vunpack.c.h.b16 %v7672
    %v9509 = vunpack.c.l.b16 %v7673
    %v9510 = vunpack.c.h.b16 %v7673
    %v9511 = vunpack.c.l.b16 %v7674
    %v9512 = vunpack.c.h.b16 %v7674
    %v9513 = vunpack.c.l.b16 %v7675
    %v9514 = vunpack.c.l.b16 %v7676
    %v9515 = vunpack.c.h.b16 %v7676
    %v9516 = vunpack.c.l.b16 %v7677
    %v9517 = vunpack.c.h.b16 %v7677
    %v9518 = vunpack.c.l.b16 %v7678
    %v9519 = vunpack.c.h.b16 %v7678
    %v9520 = vunpack.c.l.b16 %v7679
    %v9521 = vunpack.c.l.b16 %v7680
    %v9522 = vunpack.c.h.b16 %v7680
    %v9523 = vunpack.c.l.b16 %v7681
    %v9524 = vunpack.c.h.b16 %v7681
    %v9525 = vunpack.c.l.b16 %v7682
    %v9526 = vunpack.c.h.b16 %v7682
    %v9527 = vunpack.c.l.b16 %v7683
    %v9528 = vunpack.c.l.b16 %v7684
    %v9529 = vunpack.c.h.b16 %v7684
    %v9530 = vunpack.c.l.b16 %v7685
    %v9531 = vunpack.c.h.b16 %v7685
    %v9532 = vunpack.c.l.b16 %v7686
    %v9533 = vunpack.c.h.b16 %v7686
    %v9534 = vunpack.c.l.b16 %v7687
    %v9535 = vpack.c.b16 %v8422, %v8415
    %v9536 = vpack.c.b16 %v8423, %v8416
    %v9537 = vpack.c.b16 %v8424, %v8417
    %v9538 = vpack.c.b16 %v8425, %v8418
    %v9539 = vpack.c.b16 %v8426, %v8419
    %v9540 = vpack.c.b16 %v8427, %v8420
    %v9541 = vpack.c.b16 %v8428, %v8421
    %v9542 = vpack.c.b16 %v8436, %v8429
    %v9543 = vpack.c.b16 %v8437, %v8430
    %v9544 = vpack.c.b16 %v8438, %v8431
    %v9545 = vpack.c.b16 %v8439, %v8432
    %v9546 = vpack.c.b16 %v8440, %v8433
    %v9547 = vpack.c.b16 %v8441, %v8434
    %v9548 = vpack.c.b16 %v8442, %v8435
    %v9549 = vpack.c.b16 %v8450, %v8443
    %v9550 = vpack.c.b16 %v8451, %v8444
    %v9551 = vpack.c.b16 %v8452, %v8445
    %v9552 = vpack.c.b16 %v8453, %v8446
    %v9553 = vpack.c.b16 %v8454, %v8447
    %v9554 = vpack.c.b16 %v8455, %v8448
    %v9555 = vpack.c.b16 %v8456, %v8449
    %v9556 = vpack.c.b16 %v8464, %v8457
    %v9557 = vpack.c.b16 %v8465, %v8458
    %v9558 = vpack.c.b16 %v8466, %v8459
    %v9559 = vpack.c.b16 %v8467, %v8460
    %v9560 = vpack.c.b16 %v8468, %v8461
    %v9561 = vpack.c.b16 %v8469, %v8462
    %v9562 = vpack.c.b16 %v8470, %v8463
    %v9563 = vpack.c.b16 %v8478, %v8471
    %v9564 = vpack.c.b16 %v8479, %v8472
    %v9565 = vpack.c.b16 %v8480, %v8473
    %v9566 = vpack.c.b16 %v8481, %v8474
    %v9567 = vpack.c.b16 %v8482, %v8475
    %v9568 = vpack.c.b16 %v8483, %v8476
    %v9569 = vpack.c.b16 %v8484, %v8477
    %v9570 = vpack.c.b16 %v8492, %v8485
    %v9571 = vpack.c.b16 %v8493, %v8486
    %v9572 = vpack.c.b16 %v8494, %v8487
    %v9573 = vpack.c.b16 %v8495, %v8488
    %v9574 = vpack.c.b16 %v8496, %v8489
    %v9575 = vpack.c.b16 %v8497, %v8490
    %v9576 = vpack.c.b16 %v8498, %v8491
    %v9577 = vpack.c.b16 %v8506, %v8499
    %v9578 = vpack.c.b16 %v8507, %v8500
    %v9579 = vpack.c.b16 %v8508, %v8501
    %v9580 = vpack.c.b16 %v8509, %v8502
    %v9581 = vpack.c.b16 %v8510, %v8503
    %v9582 = vpack.c.b16 %v8511, %v8504
    %v9583 = vpack.c.b16 %v8512, %v8505
    %v9584 = vpack.c.b16 %v8520, %v8513
    %v9585 = vpack.c.b16 %v8521, %v8514
    %v9586 = vpack.c.b16 %v8522, %v8515
    %v9587 = vpack.c.b16 %v8523, %v8516
    %v9588 = vpack.c.b16 %v8524, %v8517
    %v9589 = vpack.c.b16 %v8525, %v8518
    %v9590 = vpack.c.b16 %v8526, %v8519
    %v9591 = vpack.c.b16 %v8534, %v8527
    %v9592 = vpack.c.b16 %v8535, %v8528
    %v9593 = vpack.c.b16 %v8536, %v8529
    %v9594 = vpack.c.b16 %v8537, %v8530
    %v9595 = vpack.c.b16 %v8538, %v8531
    %v9596 = vpack.c.b16 %v8539, %v8532
    %v9597 = vpack.c.b16 %v8540, %v8533
    %v9598 = vpack.c.b16 %v8548, %v8541
    %v9599 = vpack.c.b16 %v8549, %v8542
    %v9600 = vpack.c.b16 %v8550, %v8543
    %v9601 = vpack.c.b16 %v8551, %v8544
    %v9602 = vpack.c.b16 %v8552, %v8545
    %v9603 = vpack.c.b16 %v8553, %v8546
    %v9604 = vpack.c.b16 %v8554, %v8547
    %v9605 = vpack.c.b16 %v8562, %v8555
    %v9606 = vpack.c.b16 %v8563, %v8556
    %v9607 = vpack.c.b16 %v8564, %v8557
    %v9608 = vpack.c.b16 %v8565, %v8558
    %v9609 = vpack.c.b16 %v8566, %v8559
    %v9610 = vpack.c.b16 %v8567, %v8560
    %v9611 = vpack.c.b16 %v8568, %v8561
    %v9612 = vpack.c.b16 %v8576, %v8569
    %v9613 = vpack.c.b16 %v8577, %v8570
    %v9614 = vpack.c.b16 %v8578, %v8571
    %v9615 = vpack.c.b16 %v8579, %v8572
    %v9616 = vpack.c.b16 %v8580, %v8573
    %v9617 = vpack.c.b16 %v8581, %v8574
    %v9618 = vpack.c.b16 %v8582, %v8575
    %v9619 = vpack.c.b16 %v8590, %v8583
    %v9620 = vpack.c.b16 %v8591, %v8584
    %v9621 = vpack.c.b16 %v8592, %v8585
    %v9622 = vpack.c.b16 %v8593, %v8586
    %v9623 = vpack.c.b16 %v8594, %v8587
    %v9624 = vpack.c.b16 %v8595, %v8588
    %v9625 = vpack.c.b16 %v8596, %v8589
    %v9626 = vpack.c.b16 %v8604, %v8597
    %v9627 = vpack.c.b16 %v8605, %v8598
    %v9628 = vpack.c.b16 %v8606, %v8599
    %v9629 = vpack.c.b16 %v8607, %v8600
    %v9630 = vpack.c.b16 %v8608, %v8601
    %v9631 = vpack.c.b16 %v8609, %v8602
    %v9632 = vpack.c.b16 %v8610, %v8603
    %v9633 = vpack.c.b16 %v8618, %v8611
    %v9634 = vpack.c.b16 %v8619, %v8612
    %v9635 = vpack.c.b16 %v8620, %v8613
    %v9636 = vpack.c.b16 %v8621, %v8614
    %v9637 = vpack.c.b16 %v8622, %v8615
    %v9638 = vpack.c.b16 %v8623, %v8616
    %v9639 = vpack.c.b16 %v8624, %v8617
    %v9640 = vpack.c.b16 %v8632, %v8625
    %v9641 = vpack.c.b16 %v8633, %v8626
    %v9642 = vpack.c.b16 %v8634, %v8627
    %v9643 = vpack.c.b16 %v8635, %v8628
    %v9644 = vpack.c.b16 %v8636, %v8629
    %v9645 = vpack.c.b16 %v8637, %v8630
    %v9646 = vpack.c.b16 %v8638, %v8631
    %v9647 = vpack.c.b16 %v8646, %v8639
    %v9648 = vpack.c.b16 %v8647, %v8640
    %v9649 = vpack.c.b16 %v8648, %v8641
    %v9650 = vpack.c.b16 %v8649, %v8642
    %v9651 = vpack.c.b16 %v8650, %v8643
    %v9652 = vpack.c.b16 %v8651, %v8644
    %v9653 = vpack.c.b16 %v8652, %v8645
    %v9654 = vpack.c.b16 %v8660, %v8653
    %v9655 = vpack.c.b16 %v8661, %v8654
    %v9656 = vpack.c.b16 %v8662, %v8655
    %v9657 = vpack.c.b16 %v8663, %v8656
    %v9658 = vpack.c.b16 %v8664, %v8657
    %v9659 = vpack.c.b16 %v8665, %v8658
    %v9660 = vpack.c.b16 %v8666, %v8659
    %v9661 = vpack.c.b16 %v8674, %v8667
    %v9662 = vpack.c.b16 %v8675, %v8668
    %v9663 = vpack.c.b16 %v8676, %v8669
    %v9664 = vpack.c.b16 %v8677, %v8670
    %v9665 = vpack.c.b16 %v8678, %v8671
    %v9666 = vpack.c.b16 %v8679, %v8672
    %v9667 = vpack.c.b16 %v8680, %v8673
    %v9668 = vpack.c.b16 %v8688, %v8681
    %v9669 = vpack.c.b16 %v8689, %v8682
    %v9670 = vpack.c.b16 %v8690, %v8683
    %v9671 = vpack.c.b16 %v8691, %v8684
    %v9672 = vpack.c.b16 %v8692, %v8685
    %v9673 = vpack.c.b16 %v8693, %v8686
    %v9674 = vpack.c.b16 %v8694, %v8687
    %v9675 = vpack.c.b16 %v8702, %v8695
    %v9676 = vpack.c.b16 %v8703, %v8696
    %v9677 = vpack.c.b16 %v8704, %v8697
    %v9678 = vpack.c.b16 %v8705, %v8698
    %v9679 = vpack.c.b16 %v8706, %v8699
    %v9680 = vpack.c.b16 %v8707, %v8700
    %v9681 = vpack.c.b16 %v8708, %v8701
    %v9682 = vpack.c.b16 %v8716, %v8709
    %v9683 = vpack.c.b16 %v8717, %v8710
    %v9684 = vpack.c.b16 %v8718, %v8711
    %v9685 = vpack.c.b16 %v8719, %v8712
    %v9686 = vpack.c.b16 %v8720, %v8713
    %v9687 = vpack.c.b16 %v8721, %v8714
    %v9688 = vpack.c.b16 %v8722, %v8715
    %v9689 = vpack.c.b16 %v8730, %v8723
    %v9690 = vpack.c.b16 %v8731, %v8724
    %v9691 = vpack.c.b16 %v8732, %v8725
    %v9692 = vpack.c.b16 %v8733, %v8726
    %v9693 = vpack.c.b16 %v8734, %v8727
    %v9694 = vpack.c.b16 %v8735, %v8728
    %v9695 = vpack.c.b16 %v8736, %v8729
    %v9696 = vpack.c.b16 %v8744, %v8737
    %v9697 = vpack.c.b16 %v8745, %v8738
    %v9698 = vpack.c.b16 %v8746, %v8739
    %v9699 = vpack.c.b16 %v8747, %v8740
    %v9700 = vpack.c.b16 %v8748, %v8741
    %v9701 = vpack.c.b16 %v8749, %v8742
    %v9702 = vpack.c.b16 %v8750, %v8743
    %v9703 = vpack.c.b16 %v8758, %v8751
    %v9704 = vpack.c.b16 %v8759, %v8752
    %v9705 = vpack.c.b16 %v8760, %v8753
    %v9706 = vpack.c.b16 %v8761, %v8754
    %v9707 = vpack.c.b16 %v8762, %v8755
    %v9708 = vpack.c.b16 %v8763, %v8756
    %v9709 = vpack.c.b16 %v8764, %v8757
    %v9710 = vpack.c.b16 %v8772, %v8765
    %v9711 = vpack.c.b16 %v8773, %v8766
    %v9712 = vpack.c.b16 %v8774, %v8767
    %v9713 = vpack.c.b16 %v8775, %v8768
    %v9714 = vpack.c.b16 %v8776, %v8769
    %v9715 = vpack.c.b16 %v8777, %v8770
    %v9716 = vpack.c.b16 %v8778, %v8771
    %v9717 = vpack.c.b16 %v8786, %v8779
    %v9718 = vpack.c.b16 %v8787, %v8780
    %v9719 = vpack.c.b16 %v8788, %v8781
    %v9720 = vpack.c.b16 %v8789, %v8782
    %v9721 = vpack.c.b16 %v8790, %v8783
    %v9722 = vpack.c.b16 %v8791, %v8784
    %v9723 = vpack.c.b16 %v8792, %v8785
    %v9724 = vpack.c.b16 %v8800, %v8793
    %v9725 = vpack.c.b16 %v8801, %v8794
    %v9726 = vpack.c.b16 %v8802, %v8795
    %v9727 = vpack.c.b16 %v8803, %v8796
    %v9728 = vpack.c.b16 %v8804, %v8797
    %v9729 = vpack.c.b16 %v8805, %v8798
    %v9730 = vpack.c.b16 %v8806, %v8799
    %v9731 = vpack.c.b16 %v8814, %v8807
    %v9732 = vpack.c.b16 %v8815, %v8808
    %v9733 = vpack.c.b16 %v8816, %v8809
    %v9734 = vpack.c.b16 %v8817, %v8810
    %v9735 = vpack.c.b16 %v8818, %v8811
    %v9736 = vpack.c.b16 %v8819, %v8812
    %v9737 = vpack.c.b16 %v8820, %v8813
    %v9738 = vpack.c.b16 %v8828, %v8821
    %v9739 = vpack.c.b16 %v8829, %v8822
    %v9740 = vpack.c.b16 %v8830, %v8823
    %v9741 = vpack.c.b16 %v8831, %v8824
    %v9742 = vpack.c.b16 %v8832, %v8825
    %v9743 = vpack.c.b16 %v8833, %v8826
    %v9744 = vpack.c.b16 %v8834, %v8827
    %v9745 = vpack.c.b16 %v8842, %v8835
    %v9746 = vpack.c.b16 %v8843, %v8836
    %v9747 = vpack.c.b16 %v8844, %v8837
    %v9748 = vpack.c.b16 %v8845, %v8838
    %v9749 = vpack.c.b16 %v8846, %v8839
    %v9750 = vpack.c.b16 %v8847, %v8840
    %v9751 = vpack.c.b16 %v8848, %v8841
    %v9752 = vpack.c.b16 %v8856, %v8849
    %v9753 = vpack.c.b16 %v8857, %v8850
    %v9754 = vpack.c.b16 %v8858, %v8851
    %v9755 = vpack.c.b16 %v8859, %v8852
    %v9756 = vpack.c.b16 %v8860, %v8853
    %v9757 = vpack.c.b16 %v8861, %v8854
    %v9758 = vpack.c.b16 %v8862, %v8855
    %v9759 = vpack.c.b16 %v8870, %v8863
    %v9760 = vpack.c.b16 %v8871, %v8864
    %v9761 = vpack.c.b16 %v8872, %v8865
    %v9762 = vpack.c.b16 %v8873, %v8866
    %v9763 = vpack.c.b16 %v8874, %v8867
    %v9764 = vpack.c.b16 %v8875, %v8868
    %v9765 = vpack.c.b16 %v8876, %v8869
    %v9766 = vpack.c.b16 %v8884, %v8877
    %v9767 = vpack.c.b16 %v8885, %v8878
    %v9768 = vpack.c.b16 %v8886, %v8879
    %v9769 = vpack.c.b16 %v8887, %v8880
    %v9770 = vpack.c.b16 %v8888, %v8881
    %v9771 = vpack.c.b16 %v8889, %v8882
    %v9772 = vpack.c.b16 %v8890, %v8883
    %v9773 = vpack.c.b16 %v8898, %v8891
    %v9774 = vpack.c.b16 %v8899, %v8892
    %v9775 = vpack.c.b16 %v8900, %v8893
    %v9776 = vpack.c.b16 %v8901, %v8894
    %v9777 = vpack.c.b16 %v8902, %v8895
    %v9778 = vpack.c.b16 %v8903, %v8896
    %v9779 = vpack.c.b16 %v8904, %v8897
    %v9780 = vpack.c.b16 %v8912, %v8905
    %v9781 = vpack.c.b16 %v8913, %v8906
    %v9782 = vpack.c.b16 %v8914, %v8907
    %v9783 = vpack.c.b16 %v8915, %v8908
    %v9784 = vpack.c.b16 %v8916, %v8909
    %v9785 = vpack.c.b16 %v8917, %v8910
    %v9786 = vpack.c.b16 %v8918, %v8911
    %v9787 = vpack.c.b16 %v8926, %v8919
    %v9788 = vpack.c.b16 %v8927, %v8920
    %v9789 = vpack.c.b16 %v8928, %v8921
    %v9790 = vpack.c.b16 %v8929, %v8922
    %v9791 = vpack.c.b16 %v8930, %v8923
    %v9792 = vpack.c.b16 %v8931, %v8924
    %v9793 = vpack.c.b16 %v8932, %v8925
    %v9794 = vpack.c.b16 %v8940, %v8933
    %v9795 = vpack.c.b16 %v8941, %v8934
    %v9796 = vpack.c.b16 %v8942, %v8935
    %v9797 = vpack.c.b16 %v8943, %v8936
    %v9798 = vpack.c.b16 %v8944, %v8937
    %v9799 = vpack.c.b16 %v8945, %v8938
    %v9800 = vpack.c.b16 %v8946, %v8939
    %v9801 = vpack.c.b16 %v8954, %v8947
    %v9802 = vpack.c.b16 %v8955, %v8948
    %v9803 = vpack.c.b16 %v8956, %v8949
    %v9804 = vpack.c.b16 %v8957, %v8950
    %v9805 = vpack.c.b16 %v8958, %v8951
    %v9806 = vpack.c.b16 %v8959, %v8952
    %v9807 = vpack.c.b16 %v8960, %v8953
    %v9808 = vpack.c.b16 %v8968, %v8961
    %v9809 = vpack.c.b16 %v8969, %v8962
    %v9810 = vpack.c.b16 %v8970, %v8963
    %v9811 = vpack.c.b16 %v8971, %v8964
    %v9812 = vpack.c.b16 %v8972, %v8965
    %v9813 = vpack.c.b16 %v8973, %v8966
    %v9814 = vpack.c.b16 %v8974, %v8967
    %v9815 = vpack.c.b16 %v8982, %v8975
    %v9816 = vpack.c.b16 %v8983, %v8976
    %v9817 = vpack.c.b16 %v8984, %v8977
    %v9818 = vpack.c.b16 %v8985, %v8978
    %v9819 = vpack.c.b16 %v8986, %v8979
    %v9820 = vpack.c.b16 %v8987, %v8980
    %v9821 = vpack.c.b16 %v8988, %v8981
    %v9822 = vpack.c.b16 %v8996, %v8989
    %v9823 = vpack.c.b16 %v8997, %v8990
    %v9824 = vpack.c.b16 %v8998, %v8991
    %v9825 = vpack.c.b16 %v8999, %v8992
    %v9826 = vpack.c.b16 %v9000, %v8993
    %v9827 = vpack.c.b16 %v9001, %v8994
    %v9828 = vpack.c.b16 %v9002, %v8995
    %v9829 = vpack.c.b16 %v9010, %v9003
    %v9830 = vpack.c.b16 %v9011, %v9004
    %v9831 = vpack.c.b16 %v9012, %v9005
    %v9832 = vpack.c.b16 %v9013, %v9006
    %v9833 = vpack.c.b16 %v9014, %v9007
    %v9834 = vpack.c.b16 %v9015, %v9008
    %v9835 = vpack.c.b16 %v9016, %v9009
    %v9836 = vpack.c.b16 %v9024, %v9017
    %v9837 = vpack.c.b16 %v9025, %v9018
    %v9838 = vpack.c.b16 %v9026, %v9019
    %v9839 = vpack.c.b16 %v9027, %v9020
    %v9840 = vpack.c.b16 %v9028, %v9021
    %v9841 = vpack.c.b16 %v9029, %v9022
    %v9842 = vpack.c.b16 %v9030, %v9023
    %v9843 = vpack.c.b16 %v9038, %v9031
    %v9844 = vpack.c.b16 %v9039, %v9032
    %v9845 = vpack.c.b16 %v9040, %v9033
    %v9846 = vpack.c.b16 %v9041, %v9034
    %v9847 = vpack.c.b16 %v9042, %v9035
    %v9848 = vpack.c.b16 %v9043, %v9036
    %v9849 = vpack.c.b16 %v9044, %v9037
    %v9850 = vpack.c.b16 %v9052, %v9045
    %v9851 = vpack.c.b16 %v9053, %v9046
    %v9852 = vpack.c.b16 %v9054, %v9047
    %v9853 = vpack.c.b16 %v9055, %v9048
    %v9854 = vpack.c.b16 %v9056, %v9049
    %v9855 = vpack.c.b16 %v9057, %v9050
    %v9856 = vpack.c.b16 %v9058, %v9051
    %v9857 = vpack.c.b16 %v9066, %v9059
    %v9858 = vpack.c.b16 %v9067, %v9060
    %v9859 = vpack.c.b16 %v9068, %v9061
    %v9860 = vpack.c.b16 %v9069, %v9062
    %v9861 = vpack.c.b16 %v9070, %v9063
    %v9862 = vpack.c.b16 %v9071, %v9064
    %v9863 = vpack.c.b16 %v9072, %v9065
    %v9864 = vpack.c.b16 %v9080, %v9073
    %v9865 = vpack.c.b16 %v9081, %v9074
    %v9866 = vpack.c.b16 %v9082, %v9075
    %v9867 = vpack.c.b16 %v9083, %v9076
    %v9868 = vpack.c.b16 %v9084, %v9077
    %v9869 = vpack.c.b16 %v9085, %v9078
    %v9870 = vpack.c.b16 %v9086, %v9079
    %v9871 = vpack.c.b16 %v9094, %v9087
    %v9872 = vpack.c.b16 %v9095, %v9088
    %v9873 = vpack.c.b16 %v9096, %v9089
    %v9874 = vpack.c.b16 %v9097, %v9090
    %v9875 = vpack.c.b16 %v9098, %v9091
    %v9876 = vpack.c.b16 %v9099, %v9092
    %v9877 = vpack.c.b16 %v9100, %v9093
    %v9878 = vpack.c.b16 %v9108, %v9101
    %v9879 = vpack.c.b16 %v9109, %v9102
    %v9880 = vpack.c.b16 %v9110, %v9103
    %v9881 = vpack.c.b16 %v9111, %v9104
    %v9882 = vpack.c.b16 %v9112, %v9105
    %v9883 = vpack.c.b16 %v9113, %v9106
    %v9884 = vpack.c.b16 %v9114, %v9107
    %v9885 = vpack.c.b16 %v9122, %v9115
    %v9886 = vpack.c.b16 %v9123, %v9116
    %v9887 = vpack.c.b16 %v9124, %v9117
    %v9888 = vpack.c.b16 %v9125, %v9118
    %v9889 = vpack.c.b16 %v9126, %v9119
    %v9890 = vpack.c.b16 %v9127, %v9120
    %v9891 = vpack.c.b16 %v9128, %v9121
    %v9892 = vpack.c.b16 %v9136, %v9129
    %v9893 = vpack.c.b16 %v9137, %v9130
    %v9894 = vpack.c.b16 %v9138, %v9131
    %v9895 = vpack.c.b16 %v9139, %v9132
    %v9896 = vpack.c.b16 %v9140, %v9133
    %v9897 = vpack.c.b16 %v9141, %v9134
    %v9898 = vpack.c.b16 %v9142, %v9135
    %v9899 = vpack.c.b16 %v9150, %v9143
    %v9900 = vpack.c.b16 %v9151, %v9144
    %v9901 = vpack.c.b16 %v9152, %v9145
    %v9902 = vpack.c.b16 %v9153, %v9146
    %v9903 = vpack.c.b16 %v9154, %v9147
    %v9904 = vpack.c.b16 %v9155, %v9148
    %v9905 = vpack.c.b16 %v9156, %v9149
    %v9906 = vpack.c.b16 %v9164, %v9157
    %v9907 = vpack.c.b16 %v9165, %v9158
    %v9908 = vpack.c.b16 %v9166, %v9159
    %v9909 = vpack.c.b16 %v9167, %v9160
    %v9910 = vpack.c.b16 %v9168, %v9161
    %v9911 = vpack.c.b16 %v9169, %v9162
    %v9912 = vpack.c.b16 %v9170, %v9163
    %v9913 = vpack.c.b16 %v9178, %v9171
    %v9914 = vpack.c.b16 %v9179, %v9172
    %v9915 = vpack.c.b16 %v9180, %v9173
    %v9916 = vpack.c.b16 %v9181, %v9174
    %v9917 = vpack.c.b16 %v9182, %v9175
    %v9918 = vpack.c.b16 %v9183, %v9176
    %v9919 = vpack.c.b16 %v9184, %v9177
    %v9920 = vpack.c.b16 %v9192, %v9185
    %v9921 = vpack.c.b16 %v9193, %v9186
    %v9922 = vpack.c.b16 %v9194, %v9187
    %v9923 = vpack.c.b16 %v9195, %v9188
    %v9924 = vpack.c.b16 %v9196, %v9189
    %v9925 = vpack.c.b16 %v9197, %v9190
    %v9926 = vpack.c.b16 %v9198, %v9191
    %v9927 = vpack.c.b16 %v9206, %v9199
    %v9928 = vpack.c.b16 %v9207, %v9200
    %v9929 = vpack.c.b16 %v9208, %v9201
    %v9930 = vpack.c.b16 %v9209, %v9202
    %v9931 = vpack.c.b16 %v9210, %v9203
    %v9932 = vpack.c.b16 %v9211, %v9204
    %v9933 = vpack.c.b16 %v9212, %v9205
    %v9934 = vpack.c.b16 %v9220, %v9213
    %v9935 = vpack.c.b16 %v9221, %v9214
    %v9936 = vpack.c.b16 %v9222, %v9215
    %v9937 = vpack.c.b16 %v9223, %v9216
    %v9938 = vpack.c.b16 %v9224, %v9217
    %v9939 = vpack.c.b16 %v9225, %v9218
    %v9940 = vpack.c.b16 %v9226, %v9219
    %v9941 = vpack.c.b16 %v9234, %v9227
    %v9942 = vpack.c.b16 %v9235, %v9228
    %v9943 = vpack.c.b16 %v9236, %v9229
    %v9944 = vpack.c.b16 %v9237, %v9230
    %v9945 = vpack.c.b16 %v9238, %v9231
    %v9946 = vpack.c.b16 %v9239, %v9232
    %v9947 = vpack.c.b16 %v9240, %v9233
    %v9948 = vpack.c.b16 %v9248, %v9241
    %v9949 = vpack.c.b16 %v9249, %v9242
    %v9950 = vpack.c.b16 %v9250, %v9243
    %v9951 = vpack.c.b16 %v9251, %v9244
    %v9952 = vpack.c.b16 %v9252, %v9245
    %v9953 = vpack.c.b16 %v9253, %v9246
    %v9954 = vpack.c.b16 %v9254, %v9247
    %v9955 = vpack.c.b16 %v9262, %v9255
    %v9956 = vpack.c.b16 %v9263, %v9256
    %v9957 = vpack.c.b16 %v9264, %v9257
    %v9958 = vpack.c.b16 %v9265, %v9258
    %v9959 = vpack.c.b16 %v9266, %v9259
    %v9960 = vpack.c.b16 %v9267, %v9260
    %v9961 = vpack.c.b16 %v9268, %v9261
    %v9962 = vpack.c.b16 %v9276, %v9269
    %v9963 = vpack.c.b16 %v9277, %v9270
    %v9964 = vpack.c.b16 %v9278, %v9271
    %v9965 = vpack.c.b16 %v9279, %v9272
    %v9966 = vpack.c.b16 %v9280, %v9273
    %v9967 = vpack.c.b16 %v9281, %v9274
    %v9968 = vpack.c.b16 %v9282, %v9275
    %v9969 = vpack.c.b16 %v9290, %v9283
    %v9970 = vpack.c.b16 %v9291, %v9284
    %v9971 = vpack.c.b16 %v9292, %v9285
    %v9972 = vpack.c.b16 %v9293, %v9286
    %v9973 = vpack.c.b16 %v9294, %v9287
    %v9974 = vpack.c.b16 %v9295, %v9288
    %v9975 = vpack.c.b16 %v9296, %v9289
    %v9976 = vpack.c.b16 %v9304, %v9297
    %v9977 = vpack.c.b16 %v9305, %v9298
    %v9978 = vpack.c.b16 %v9306, %v9299
    %v9979 = vpack.c.b16 %v9307, %v9300
    %v9980 = vpack.c.b16 %v9308, %v9301
    %v9981 = vpack.c.b16 %v9309, %v9302
    %v9982 = vpack.c.b16 %v9310, %v9303
    %v9983 = vpack.c.b16 %v9318, %v9311
    %v9984 = vpack.c.b16 %v9319, %v9312
    %v9985 = vpack.c.b16 %v9320, %v9313
    %v9986 = vpack.c.b16 %v9321, %v9314
    %v9987 = vpack.c.b16 %v9322, %v9315
    %v9988 = vpack.c.b16 %v9323, %v9316
    %v9989 = vpack.c.b16 %v9324, %v9317
    %v9990 = vpack.c.b16 %v9332, %v9325
    %v9991 = vpack.c.b16 %v9333, %v9326
    %v9992 = vpack.c.b16 %v9334, %v9327
    %v9993 = vpack.c.b16 %v9335, %v9328
    %v9994 = vpack.c.b16 %v9336, %v9329
    %v9995 = vpack.c.b16 %v9337, %v9330
    %v9996 = vpack.c.b16 %v9338, %v9331
    %v9997 = vpack.c.b16 %v9346, %v9339
    %v9998 = vpack.c.b16 %v9347, %v9340
    %v9999 = vpack.c.b16 %v9348, %v9341
    %v10000 = vpack.c.b16 %v9349, %v9342
    %v10001 = vpack.c.b16 %v9350, %v9343
    %v10002 = vpack.c.b16 %v9351, %v9344
    %v10003 = vpack.c.b16 %v9352, %v9345
    %v10004 = vpack.c.b16 %v9360, %v9353
    %v10005 = vpack.c.b16 %v9361, %v9354
    %v10006 = vpack.c.b16 %v9362, %v9355
    %v10007 = vpack.c.b16 %v9363, %v9356
    %v10008 = vpack.c.b16 %v9364, %v9357
    %v10009 = vpack.c.b16 %v9365, %v9358
    %v10010 = vpack.c.b16 %v9366, %v9359
    %v10011 = vpack.c.b16 %v9374, %v9367
    %v10012 = vpack.c.b16 %v9375, %v9368
    %v10013 = vpack.c.b16 %v9376, %v9369
    %v10014 = vpack.c.b16 %v9377, %v9370
    %v10015 = vpack.c.b16 %v9378, %v9371
    %v10016 = vpack.c.b16 %v9379, %v9372
    %v10017 = vpack.c.b16 %v9380, %v9373
    %v10018 = vpack.c.b16 %v9388, %v9381
    %v10019 = vpack.c.b16 %v9389, %v9382
    %v10020 = vpack.c.b16 %v9390, %v9383
    %v10021 = vpack.c.b16 %v9391, %v9384
    %v10022 = vpack.c.b16 %v9392, %v9385
    %v10023 = vpack.c.b16 %v9393, %v9386
    %v10024 = vpack.c.b16 %v9394, %v9387
    %v10025 = vpack.c.b16 %v9402, %v9395
    %v10026 = vpack.c.b16 %v9403, %v9396
    %v10027 = vpack.c.b16 %v9404, %v9397
    %v10028 = vpack.c.b16 %v9405, %v9398
    %v10029 = vpack.c.b16 %v9406, %v9399
    %v10030 = vpack.c.b16 %v9407, %v9400
    %v10031 = vpack.c.b16 %v9408, %v9401
    %v10032 = vpack.c.b16 %v9416, %v9409
    %v10033 = vpack.c.b16 %v9417, %v9410
    %v10034 = vpack.c.b16 %v9418, %v9411
    %v10035 = vpack.c.b16 %v9419, %v9412
    %v10036 = vpack.c.b16 %v9420, %v9413
    %v10037 = vpack.c.b16 %v9421, %v9414
    %v10038 = vpack.c.b16 %v9422, %v9415
    %v10039 = vpack.c.b16 %v9430, %v9423
    %v10040 = vpack.c.b16 %v9431, %v9424
    %v10041 = vpack.c.b16 %v9432, %v9425
    %v10042 = vpack.c.b16 %v9433, %v9426
    %v10043 = vpack.c.b16 %v9434, %v9427
    %v10044 = vpack.c.b16 %v9435, %v9428
    %v10045 = vpack.c.b16 %v9436, %v9429
    %v10046 = vpack.c.b16 %v9444, %v9437
    %v10047 = vpack.c.b16 %v9445, %v9438
    %v10048 = vpack.c.b16 %v9446, %v9439
    %v10049 = vpack.c.b16 %v9447, %v9440
    %v10050 = vpack.c.b16 %v9448, %v9441
    %v10051 = vpack.c.b16 %v9449, %v9442
    %v10052 = vpack.c.b16 %v9450, %v9443
    %v10053 = vpack.c.b16 %v9458, %v9451
    %v10054 = vpack.c.b16 %v9459, %v9452
    %v10055 = vpack.c.b16 %v9460, %v9453
    %v10056 = vpack.c.b16 %v9461, %v9454
    %v10057 = vpack.c.b16 %v9462, %v9455
    %v10058 = vpack.c.b16 %v9463, %v9456
    %v10059 = vpack.c.b16 %v9464, %v9457
    %v10060 = vpack.c.b16 %v9472, %v9465
    %v10061 = vpack.c.b16 %v9473, %v9466
    %v10062 = vpack.c.b16 %v9474, %v9467
    %v10063 = vpack.c.b16 %v9475, %v9468
    %v10064 = vpack.c.b16 %v9476, %v9469
    %v10065 = vpack.c.b16 %v9477, %v9470
    %v10066 = vpack.c.b16 %v9478, %v9471
    %v10067 = vpack.c.b16 %v9486, %v9479
    %v10068 = vpack.c.b16 %v9487, %v9480
    %v10069 = vpack.c.b16 %v9488, %v9481
    %v10070 = vpack.c.b16 %v9489, %v9482
    %v10071 = vpack.c.b16 %v9490, %v9483
    %v10072 = vpack.c.b16 %v9491, %v9484
    %v10073 = vpack.c.b16 %v9492, %v9485
    %v10074 = vpack.c.b16 %v9500, %v9493
    %v10075 = vpack.c.b16 %v9501, %v9494
    %v10076 = vpack.c.b16 %v9502, %v9495
    %v10077 = vpack.c.b16 %v9503, %v9496
    %v10078 = vpack.c.b16 %v9504, %v9497
    %v10079 = vpack.c.b16 %v9505, %v9498
    %v10080 = vpack.c.b16 %v9506, %v9499
    %v10081 = vpack.c.b16 %v9514, %v9507
    %v10082 = vpack.c.b16 %v9515, %v9508
    %v10083 = vpack.c.b16 %v9516, %v9509
    %v10084 = vpack.c.b16 %v9517, %v9510
    %v10085 = vpack.c.b16 %v9518, %v9511
    %v10086 = vpack.c.b16 %v9519, %v9512
    %v10087 = vpack.c.b16 %v9520, %v9513
    %v10088 = vpack.c.b16 %v9528, %v9521
    %v10089 = vpack.c.b16 %v9529, %v9522
    %v10090 = vpack.c.b16 %v9530, %v9523
    %v10091 = vpack.c.b16 %v9531, %v9524
    %v10092 = vpack.c.b16 %v9532, %v9525
    %v10093 = vpack.c.b16 %v9533, %v9526
    %v10094 = vpack.c.b16 %v9534, %v9527
    %10655 = vmatprep.subr.bf16.mxu0 %v9585
    %10656 = vmatpush1.bf16.msra.mxu0 %v9584
    %10657 = vmatprep.subr.bf16.mxu0 %v9578
    %10658 = vmatpush1.bf16.msra.mxu0 %v9577
    %10659 = vmatprep.subr.bf16.mxu0 %v9571
    %10660 = vmatpush1.bf16.msra.mxu0 %v9570
    %10661 = vmatprep.subr.bf16.mxu0 %v9564
    %10662 = vmatpush1.bf16.msra.mxu0 %v9563
    %10663 = vmatprep.subr.bf16.mxu0 %v9557
    %10664 = vmatpush1.bf16.msra.mxu0 %v9556
    %10665 = vmatprep.subr.bf16.mxu0 %v9550
    %10666 = vmatpush1.bf16.msra.mxu0 %v9549
    %10667 = vmatprep.subr.bf16.mxu0 %v9543
    %10668 = vmatpush1.bf16.msra.mxu0 %v9542
    %10669 = vmatprep.subr.bf16.mxu0 %v9536
    %10670 = vmatpush1.bf16.msra.mxu0 %v9535
    %10671 = vmatprep.subr.bf16.mxu0 %v9641
    %10672 = vmatpush2.bf16.msra.mxu0 %v9640
    %10673 = vmatprep.subr.bf16.mxu0 %v9634
    %10674 = vmatpush2.bf16.msra.mxu0 %v9633
    %10675 = vmatprep.subr.bf16.mxu0 %v9627
    %10676 = vmatpush2.bf16.msra.mxu0 %v9626
    %10677 = vmatprep.subr.bf16.mxu0 %v9620
    %10678 = vmatpush2.bf16.msra.mxu0 %v9619
    %10679 = vmatprep.subr.bf16.mxu0 %v9613
    %10680 = vmatpush2.bf16.msra.mxu0 %v9612
    %10681 = vmatprep.subr.bf16.mxu0 %v9606
    %10682 = vmatpush2.bf16.msra.mxu0 %v9605
    %10683 = vmatprep.subr.bf16.mxu0 %v9599
    %10684 = vmatpush2.bf16.msra.mxu0 %v9598
    %10685 = vmatprep.subr.bf16.mxu0 %v9592
    %10686 = vmatpush2.bf16.msra.mxu0 %v9591
    %10687 = vmatprep.mubr.bf16.mxu0 %v7756
    %10688 = vmatmul.mubr.bf16.gmra.mxu0 %v7755
    %v10689 = vpop.f32.mrf.mxu0
    %v10690 = vadd.f32 %v7693, %v10689
    %v10691 = vpop.f32.mrf.mxu0
    %v10692 = vadd.f32 %v7697, %v10691
    %v10693 = vpop.f32.mrf.mxu0
    %v10694 = vadd.f32 %v7693, %v10693
    %v10695 = vpop.f32.mrf.mxu0
    %v10696 = vadd.f32 %v7697, %v10695
    %10697 = vdwg.mxu0
    %10698 = vmatprep.subr.bf16.mxu0 %v9697
    %10699 = vmatpush1.bf16.msra.mxu0 %v9696
    %10700 = vmatprep.subr.bf16.mxu0 %v9690
    %10701 = vmatpush1.bf16.msra.mxu0 %v9689
    %10702 = vmatprep.subr.bf16.mxu0 %v9683
    %10703 = vmatpush1.bf16.msra.mxu0 %v9682
    %10704 = vmatprep.subr.bf16.mxu0 %v9676
    %10705 = vmatpush1.bf16.msra.mxu0 %v9675
    %10706 = vmatprep.subr.bf16.mxu0 %v9669
    %10707 = vmatpush1.bf16.msra.mxu0 %v9668
    %10708 = vmatprep.subr.bf16.mxu0 %v9662
    %10709 = vmatpush1.bf16.msra.mxu0 %v9661
    %10710 = vmatprep.subr.bf16.mxu0 %v9655
    %10711 = vmatpush1.bf16.msra.mxu0 %v9654
    %10712 = vmatprep.subr.bf16.mxu0 %v9648
    %10713 = vmatpush1.bf16.msra.mxu0 %v9647
    %10714 = vmatprep.subr.bf16.mxu0 %v9753
    %10715 = vmatpush2.bf16.msra.mxu0 %v9752
    %10716 = vmatprep.subr.bf16.mxu0 %v9746
    %10717 = vmatpush2.bf16.msra.mxu0 %v9745
    %10718 = vmatprep.subr.bf16.mxu0 %v9739
    %10719 = vmatpush2.bf16.msra.mxu0 %v9738
    %10720 = vmatprep.subr.bf16.mxu0 %v9732
    %10721 = vmatpush2.bf16.msra.mxu0 %v9731
    %10722 = vmatprep.subr.bf16.mxu0 %v9725
    %10723 = vmatpush2.bf16.msra.mxu0 %v9724
    %10724 = vmatprep.subr.bf16.mxu0 %v9718
    %10725 = vmatpush2.bf16.msra.mxu0 %v9717
    %10726 = vmatprep.subr.bf16.mxu0 %v9711
    %10727 = vmatpush2.bf16.msra.mxu0 %v9710
    %10728 = vmatprep.subr.bf16.mxu0 %v9704
    %10729 = vmatpush2.bf16.msra.mxu0 %v9703
    %10730 = vmatprep.mubr.bf16.mxu0 %v7758
    %10731 = vmatmul.mubr.bf16.gmra.mxu0 %v7757
    %v10732 = vpop.f32.mrf.mxu0
    %v10733 = vadd.f32 %v10690, %v10732
    %v10734 = vpop.f32.mrf.mxu0
    %v10735 = vadd.f32 %v10692, %v10734
    %v10736 = vpop.f32.mrf.mxu0
    %v10737 = vadd.f32 %v10694, %v10736
    %v10738 = vpop.f32.mrf.mxu0
    %v10739 = vadd.f32 %v10696, %v10738
    %10740 = vdwg.mxu0
    %10741 = vmatprep.subr.bf16.mxu0 %v9809
    %10742 = vmatpush1.bf16.msra.mxu0 %v9808
    %10743 = vmatprep.subr.bf16.mxu0 %v9802
    %10744 = vmatpush1.bf16.msra.mxu0 %v9801
    %10745 = vmatprep.subr.bf16.mxu0 %v9795
    %10746 = vmatpush1.bf16.msra.mxu0 %v9794
    %10747 = vmatprep.subr.bf16.mxu0 %v9788
    %10748 = vmatpush1.bf16.msra.mxu0 %v9787
    %10749 = vmatprep.subr.bf16.mxu0 %v9781
    %10750 = vmatpush1.bf16.msra.mxu0 %v9780
    %10751 = vmatprep.subr.bf16.mxu0 %v9774
    %10752 = vmatpush1.bf16.msra.mxu0 %v9773
    %10753 = vmatprep.subr.bf16.mxu0 %v9767
    %10754 = vmatpush1.bf16.msra.mxu0 %v9766
    %10755 = vmatprep.subr.bf16.mxu0 %v9760
    %10756 = vmatpush1.bf16.msra.mxu0 %v9759
    %10757 = vmatprep.subr.bf16.mxu0 %v9865
    %10758 = vmatpush2.bf16.msra.mxu0 %v9864
    %10759 = vmatprep.subr.bf16.mxu0 %v9858
    %10760 = vmatpush2.bf16.msra.mxu0 %v9857
    %10761 = vmatprep.subr.bf16.mxu0 %v9851
    %10762 = vmatpush2.bf16.msra.mxu0 %v9850
    %10763 = vmatprep.subr.bf16.mxu0 %v9844
    %10764 = vmatpush2.bf16.msra.mxu0 %v9843
    %10765 = vmatprep.subr.bf16.mxu0 %v9837
    %10766 = vmatpush2.bf16.msra.mxu0 %v9836
    %10767 = vmatprep.subr.bf16.mxu0 %v9830
    %10768 = vmatpush2.bf16.msra.mxu0 %v9829
    %10769 = vmatprep.subr.bf16.mxu0 %v9823
    %10770 = vmatpush2.bf16.msra.mxu0 %v9822
    %10771 = vmatprep.subr.bf16.mxu0 %v9816
    %10772 = vmatpush2.bf16.msra.mxu0 %v9815
    %10773 = vmatprep.mubr.bf16.mxu0 %v7760
    %10774 = vmatmul.mubr.bf16.gmra.mxu0 %v7759
    %v10775 = vpop.f32.mrf.mxu0
    %v10776 = vadd.f32 %v10733, %v10775
    %v10777 = vpop.f32.mrf.mxu0
    %v10778 = vadd.f32 %v10735, %v10777
    %v10779 = vpop.f32.mrf.mxu0
    %v10780 = vadd.f32 %v10737, %v10779
    %v10781 = vpop.f32.mrf.mxu0
    %v10782 = vadd.f32 %v10739, %v10781
    %10783 = vdwg.mxu0
    %10784 = vmatprep.subr.bf16.mxu0 %v9921
    %10785 = vmatpush1.bf16.msra.mxu0 %v9920
    %10786 = vmatprep.subr.bf16.mxu0 %v9914
    %10787 = vmatpush1.bf16.msra.mxu0 %v9913
    %10788 = vmatprep.subr.bf16.mxu0 %v9907
    %10789 = vmatpush1.bf16.msra.mxu0 %v9906
    %10790 = vmatprep.subr.bf16.mxu0 %v9900
    %10791 = vmatpush1.bf16.msra.mxu0 %v9899
    %10792 = vmatprep.subr.bf16.mxu0 %v9893
    %10793 = vmatpush1.bf16.msra.mxu0 %v9892
    %10794 = vmatprep.subr.bf16.mxu0 %v9886
    %10795 = vmatpush1.bf16.msra.mxu0 %v9885
    %10796 = vmatprep.subr.bf16.mxu0 %v9879
    %10797 = vmatpush1.bf16.msra.mxu0 %v9878
    %10798 = vmatprep.subr.bf16.mxu0 %v9872
    %10799 = vmatpush1.bf16.msra.mxu0 %v9871
    %10800 = vmatprep.subr.bf16.mxu0 %v9977
    %10801 = vmatpush2.bf16.msra.mxu0 %v9976
    %10802 = vmatprep.subr.bf16.mxu0 %v9970
    %10803 = vmatpush2.bf16.msra.mxu0 %v9969
    %10804 = vmatprep.subr.bf16.mxu0 %v9963
    %10805 = vmatpush2.bf16.msra.mxu0 %v9962
    %10806 = vmatprep.subr.bf16.mxu0 %v9956
    %10807 = vmatpush2.bf16.msra.mxu0 %v9955
    %10808 = vmatprep.subr.bf16.mxu0 %v9949
    %10809 = vmatpush2.bf16.msra.mxu0 %v9948
    %10810 = vmatprep.subr.bf16.mxu0 %v9942
    %10811 = vmatpush2.bf16.msra.mxu0 %v9941
    %10812 = vmatprep.subr.bf16.mxu0 %v9935
    %10813 = vmatpush2.bf16.msra.mxu0 %v9934
    %10814 = vmatprep.subr.bf16.mxu0 %v9928
    %10815 = vmatpush2.bf16.msra.mxu0 %v9927
    %10816 = vmatprep.mubr.bf16.mxu0 %v7762
    %10817 = vmatmul.mubr.bf16.gmra.mxu0 %v7761
    %v10818 = vpop.f32.mrf.mxu0
    %v10819 = vadd.f32 %v10776, %v10818
    %v10820 = vpop.f32.mrf.mxu0
    %v10821 = vadd.f32 %v10778, %v10820
    %v10822 = vpop.f32.mrf.mxu0
    %v10823 = vadd.f32 %v10780, %v10822
    %v10824 = vpop.f32.mrf.mxu0
    %v10825 = vadd.f32 %v10782, %v10824
    %10826 = vdwg.mxu0
    %10827 = vmatprep.subr.bf16.mxu0 %v10033
    %10828 = vmatpush1.bf16.msra.mxu0 %v10032
    %10829 = vmatprep.subr.bf16.mxu0 %v10026
    %10830 = vmatpush1.bf16.msra.mxu0 %v10025
    %10831 = vmatprep.subr.bf16.mxu0 %v10019
    %10832 = vmatpush1.bf16.msra.mxu0 %v10018
    %10833 = vmatprep.subr.bf16.mxu0 %v10012
    %10834 = vmatpush1.bf16.msra.mxu0 %v10011
    %10835 = vmatprep.subr.bf16.mxu0 %v10005
    %10836 = vmatpush1.bf16.msra.mxu0 %v10004
    %10837 = vmatprep.subr.bf16.mxu0 %v9998
    %10838 = vmatpush1.bf16.msra.mxu0 %v9997
    %10839 = vmatprep.subr.bf16.mxu0 %v9991
    %10840 = vmatpush1.bf16.msra.mxu0 %v9990
    %10841 = vmatprep.subr.bf16.mxu0 %v9984
    %10842 = vmatpush1.bf16.msra.mxu0 %v9983
    %10843 = vmatprep.subr.bf16.mxu0 %v10089
    %10844 = vmatpush2.bf16.msra.mxu0 %v10088
    %10845 = vmatprep.subr.bf16.mxu0 %v10082
    %10846 = vmatpush2.bf16.msra.mxu0 %v10081
    %10847 = vmatprep.subr.bf16.mxu0 %v10075
    %10848 = vmatpush2.bf16.msra.mxu0 %v10074
    %10849 = vmatprep.subr.bf16.mxu0 %v10068
    %10850 = vmatpush2.bf16.msra.mxu0 %v10067
    %10851 = vmatprep.subr.bf16.mxu0 %v10061
    %10852 = vmatpush2.bf16.msra.mxu0 %v10060
    %10853 = vmatprep.subr.bf16.mxu0 %v10054
    %10854 = vmatpush2.bf16.msra.mxu0 %v10053
    %10855 = vmatprep.subr.bf16.mxu0 %v10047
    %10856 = vmatpush2.bf16.msra.mxu0 %v10046
    %10857 = vmatprep.subr.bf16.mxu0 %v10040
    %10858 = vmatpush2.bf16.msra.mxu0 %v10039
    %10859 = vmatprep.mubr.bf16.mxu0 %v7764
    %10860 = vmatmul.mubr.bf16.gmra.mxu0 %v7763
    %v10861 = vpop.f32.mrf.mxu0
    %v10862 = vadd.f32 %v10819, %v10861
    %v10863 = vpop.f32.mrf.mxu0
    %v10864 = vadd.f32 %v10821, %v10863
    %v10865 = vpop.f32.mrf.mxu0
    %v10866 = vadd.f32 %v10823, %v10865
    %v10867 = vpop.f32.mrf.mxu0
    %v10868 = vadd.f32 %v10825, %v10867
    %10869 = vdwg.mxu0
    %10870 = vmatprep.subr.bf16.mxu0 %v9587
    %10871 = vmatpush1.bf16.msra.mxu0 %v9586
    %10872 = vmatprep.subr.bf16.mxu0 %v9580
    %10873 = vmatpush1.bf16.msra.mxu0 %v9579
    %10874 = vmatprep.subr.bf16.mxu0 %v9573
    %10875 = vmatpush1.bf16.msra.mxu0 %v9572
    %10876 = vmatprep.subr.bf16.mxu0 %v9566
    %10877 = vmatpush1.bf16.msra.mxu0 %v9565
    %10878 = vmatprep.subr.bf16.mxu0 %v9559
    %10879 = vmatpush1.bf16.msra.mxu0 %v9558
    %10880 = vmatprep.subr.bf16.mxu0 %v9552
    %10881 = vmatpush1.bf16.msra.mxu0 %v9551
    %10882 = vmatprep.subr.bf16.mxu0 %v9545
    %10883 = vmatpush1.bf16.msra.mxu0 %v9544
    %10884 = vmatprep.subr.bf16.mxu0 %v9538
    %10885 = vmatpush1.bf16.msra.mxu0 %v9537
    %10886 = vmatprep.subr.bf16.mxu0 %v9643
    %10887 = vmatpush2.bf16.msra.mxu0 %v9642
    %10888 = vmatprep.subr.bf16.mxu0 %v9636
    %10889 = vmatpush2.bf16.msra.mxu0 %v9635
    %10890 = vmatprep.subr.bf16.mxu0 %v9629
    %10891 = vmatpush2.bf16.msra.mxu0 %v9628
    %10892 = vmatprep.subr.bf16.mxu0 %v9622
    %10893 = vmatpush2.bf16.msra.mxu0 %v9621
    %10894 = vmatprep.subr.bf16.mxu0 %v9615
    %10895 = vmatpush2.bf16.msra.mxu0 %v9614
    %10896 = vmatprep.subr.bf16.mxu0 %v9608
    %10897 = vmatpush2.bf16.msra.mxu0 %v9607
    %10898 = vmatprep.subr.bf16.mxu0 %v9601
    %10899 = vmatpush2.bf16.msra.mxu0 %v9600
    %10900 = vmatprep.subr.bf16.mxu0 %v9594
    %10901 = vmatpush2.bf16.msra.mxu0 %v9593
    %10902 = vmatprep.mubr.bf16.mxu0 %v7756
    %10903 = vmatmul.mubr.bf16.gmra.mxu0 %v7755
    %v10904 = vpop.f32.mrf.mxu0
    %v10905 = vadd.f32 %v7701, %v10904
    %v10906 = vpop.f32.mrf.mxu0
    %v10907 = vadd.f32 %v7705, %v10906
    %v10908 = vpop.f32.mrf.mxu0
    %v10909 = vadd.f32 %v7701, %v10908
    %v10910 = vpop.f32.mrf.mxu0
    %v10911 = vadd.f32 %v7705, %v10910
    %10912 = vdwg.mxu0
    %10913 = vmatprep.subr.bf16.mxu0 %v9699
    %10914 = vmatpush1.bf16.msra.mxu0 %v9698
    %10915 = vmatprep.subr.bf16.mxu0 %v9692
    %10916 = vmatpush1.bf16.msra.mxu0 %v9691
    %10917 = vmatprep.subr.bf16.mxu0 %v9685
    %10918 = vmatpush1.bf16.msra.mxu0 %v9684
    %10919 = vmatprep.subr.bf16.mxu0 %v9678
    %10920 = vmatpush1.bf16.msra.mxu0 %v9677
    %10921 = vmatprep.subr.bf16.mxu0 %v9671
    %10922 = vmatpush1.bf16.msra.mxu0 %v9670
    %10923 = vmatprep.subr.bf16.mxu0 %v9664
    %10924 = vmatpush1.bf16.msra.mxu0 %v9663
    %10925 = vmatprep.subr.bf16.mxu0 %v9657
    %10926 = vmatpush1.bf16.msra.mxu0 %v9656
    %10927 = vmatprep.subr.bf16.mxu0 %v9650
    %10928 = vmatpush1.bf16.msra.mxu0 %v9649
    %10929 = vmatprep.subr.bf16.mxu0 %v9755
    %10930 = vmatpush2.bf16.msra.mxu0 %v9754
    %10931 = vmatprep.subr.bf16.mxu0 %v9748
    %10932 = vmatpush2.bf16.msra.mxu0 %v9747
    %10933 = vmatprep.subr.bf16.mxu0 %v9741
    %10934 = vmatpush2.bf16.msra.mxu0 %v9740
    %10935 = vmatprep.subr.bf16.mxu0 %v9734
    %10936 = vmatpush2.bf16.msra.mxu0 %v9733
    %10937 = vmatprep.subr.bf16.mxu0 %v9727
    %10938 = vmatpush2.bf16.msra.mxu0 %v9726
    %10939 = vmatprep.subr.bf16.mxu0 %v9720
    %10940 = vmatpush2.bf16.msra.mxu0 %v9719
    %10941 = vmatprep.subr.bf16.mxu0 %v9713
    %10942 = vmatpush2.bf16.msra.mxu0 %v9712
    %10943 = vmatprep.subr.bf16.mxu0 %v9706
    %10944 = vmatpush2.bf16.msra.mxu0 %v9705
    %10945 = vmatprep.mubr.bf16.mxu0 %v7758
    %10946 = vmatmul.mubr.bf16.gmra.mxu0 %v7757
    %v10947 = vpop.f32.mrf.mxu0
    %v10948 = vadd.f32 %v10905, %v10947
    %v10949 = vpop.f32.mrf.mxu0
    %v10950 = vadd.f32 %v10907, %v10949
    %v10951 = vpop.f32.mrf.mxu0
    %v10952 = vadd.f32 %v10909, %v10951
    %v10953 = vpop.f32.mrf.mxu0
    %v10954 = vadd.f32 %v10911, %v10953
    %10955 = vdwg.mxu0
    %10956 = vmatprep.subr.bf16.mxu0 %v9811
    %10957 = vmatpush1.bf16.msra.mxu0 %v9810
    %10958 = vmatprep.subr.bf16.mxu0 %v9804
    %10959 = vmatpush1.bf16.msra.mxu0 %v9803
    %10960 = vmatprep.subr.bf16.mxu0 %v9797
    %10961 = vmatpush1.bf16.msra.mxu0 %v9796
    %10962 = vmatprep.subr.bf16.mxu0 %v9790
    %10963 = vmatpush1.bf16.msra.mxu0 %v9789
    %10964 = vmatprep.subr.bf16.mxu0 %v9783
    %10965 = vmatpush1.bf16.msra.mxu0 %v9782
    %10966 = vmatprep.subr.bf16.mxu0 %v9776
    %10967 = vmatpush1.bf16.msra.mxu0 %v9775
    %10968 = vmatprep.subr.bf16.mxu0 %v9769
    %10969 = vmatpush1.bf16.msra.mxu0 %v9768
    %10970 = vmatprep.subr.bf16.mxu0 %v9762
    %10971 = vmatpush1.bf16.msra.mxu0 %v9761
    %10972 = vmatprep.subr.bf16.mxu0 %v9867
    %10973 = vmatpush2.bf16.msra.mxu0 %v9866
    %10974 = vmatprep.subr.bf16.mxu0 %v9860
    %10975 = vmatpush2.bf16.msra.mxu0 %v9859
    %10976 = vmatprep.subr.bf16.mxu0 %v9853
    %10977 = vmatpush2.bf16.msra.mxu0 %v9852
    %10978 = vmatprep.subr.bf16.mxu0 %v9846
    %10979 = vmatpush2.bf16.msra.mxu0 %v9845
    %10980 = vmatprep.subr.bf16.mxu0 %v9839
    %10981 = vmatpush2.bf16.msra.mxu0 %v9838
    %10982 = vmatprep.subr.bf16.mxu0 %v9832
    %10983 = vmatpush2.bf16.msra.mxu0 %v9831
    %10984 = vmatprep.subr.bf16.mxu0 %v9825
    %10985 = vmatpush2.bf16.msra.mxu0 %v9824
    %10986 = vmatprep.subr.bf16.mxu0 %v9818
    %10987 = vmatpush2.bf16.msra.mxu0 %v9817
    %10988 = vmatprep.mubr.bf16.mxu0 %v7760
    %10989 = vmatmul.mubr.bf16.gmra.mxu0 %v7759
    %v10990 = vpop.f32.mrf.mxu0
    %v10991 = vadd.f32 %v10948, %v10990
    %v10992 = vpop.f32.mrf.mxu0
    %v10993 = vadd.f32 %v10950, %v10992
    %v10994 = vpop.f32.mrf.mxu0
    %v10995 = vadd.f32 %v10952, %v10994
    %v10996 = vpop.f32.mrf.mxu0
    %v10997 = vadd.f32 %v10954, %v10996
    %10998 = vdwg.mxu0
    %10999 = vmatprep.subr.bf16.mxu0 %v9923
    %11000 = vmatpush1.bf16.msra.mxu0 %v9922
    %11001 = vmatprep.subr.bf16.mxu0 %v9916
    %11002 = vmatpush1.bf16.msra.mxu0 %v9915
    %11003 = vmatprep.subr.bf16.mxu0 %v9909
    %11004 = vmatpush1.bf16.msra.mxu0 %v9908
    %11005 = vmatprep.subr.bf16.mxu0 %v9902
    %11006 = vmatpush1.bf16.msra.mxu0 %v9901
    %11007 = vmatprep.subr.bf16.mxu0 %v9895
    %11008 = vmatpush1.bf16.msra.mxu0 %v9894
    %11009 = vmatprep.subr.bf16.mxu0 %v9888
    %11010 = vmatpush1.bf16.msra.mxu0 %v9887
    %11011 = vmatprep.subr.bf16.mxu0 %v9881
    %11012 = vmatpush1.bf16.msra.mxu0 %v9880
    %11013 = vmatprep.subr.bf16.mxu0 %v9874
    %11014 = vmatpush1.bf16.msra.mxu0 %v9873
    %11015 = vmatprep.subr.bf16.mxu0 %v9979
    %11016 = vmatpush2.bf16.msra.mxu0 %v9978
    %11017 = vmatprep.subr.bf16.mxu0 %v9972
    %11018 = vmatpush2.bf16.msra.mxu0 %v9971
    %11019 = vmatprep.subr.bf16.mxu0 %v9965
    %11020 = vmatpush2.bf16.msra.mxu0 %v9964
    %11021 = vmatprep.subr.bf16.mxu0 %v9958
    %11022 = vmatpush2.bf16.msra.mxu0 %v9957
    %11023 = vmatprep.subr.bf16.mxu0 %v9951
    %11024 = vmatpush2.bf16.msra.mxu0 %v9950
    %11025 = vmatprep.subr.bf16.mxu0 %v9944
    %11026 = vmatpush2.bf16.msra.mxu0 %v9943
    %11027 = vmatprep.subr.bf16.mxu0 %v9937
    %11028 = vmatpush2.bf16.msra.mxu0 %v9936
    %11029 = vmatprep.subr.bf16.mxu0 %v9930
    %11030 = vmatpush2.bf16.msra.mxu0 %v9929
    %11031 = vmatprep.mubr.bf16.mxu0 %v7762
    %11032 = vmatmul.mubr.bf16.gmra.mxu0 %v7761
    %v11033 = vpop.f32.mrf.mxu0
    %v11034 = vadd.f32 %v10991, %v11033
    %v11035 = vpop.f32.mrf.mxu0
    %v11036 = vadd.f32 %v10993, %v11035
    %v11037 = vpop.f32.mrf.mxu0
    %v11038 = vadd.f32 %v10995, %v11037
    %v11039 = vpop.f32.mrf.mxu0
    %v11040 = vadd.f32 %v10997, %v11039
    %11041 = vdwg.mxu0
    %11042 = vmatprep.subr.bf16.mxu0 %v10035
    %11043 = vmatpush1.bf16.msra.mxu0 %v10034
    %11044 = vmatprep.subr.bf16.mxu0 %v10028
    %11045 = vmatpush1.bf16.msra.mxu0 %v10027
    %11046 = vmatprep.subr.bf16.mxu0 %v10021
    %11047 = vmatpush1.bf16.msra.mxu0 %v10020
    %11048 = vmatprep.subr.bf16.mxu0 %v10014
    %11049 = vmatpush1.bf16.msra.mxu0 %v10013
    %11050 = vmatprep.subr.bf16.mxu0 %v10007
    %11051 = vmatpush1.bf16.msra.mxu0 %v10006
    %11052 = vmatprep.subr.bf16.mxu0 %v10000
    %11053 = vmatpush1.bf16.msra.mxu0 %v9999
    %11054 = vmatprep.subr.bf16.mxu0 %v9993
    %11055 = vmatpush1.bf16.msra.mxu0 %v9992
    %11056 = vmatprep.subr.bf16.mxu0 %v9986
    %11057 = vmatpush1.bf16.msra.mxu0 %v9985
    %11058 = vmatprep.subr.bf16.mxu0 %v10091
    %11059 = vmatpush2.bf16.msra.mxu0 %v10090
    %11060 = vmatprep.subr.bf16.mxu0 %v10084
    %11061 = vmatpush2.bf16.msra.mxu0 %v10083
    %11062 = vmatprep.subr.bf16.mxu0 %v10077
    %11063 = vmatpush2.bf16.msra.mxu0 %v10076
    %11064 = vmatprep.subr.bf16.mxu0 %v10070
    %11065 = vmatpush2.bf16.msra.mxu0 %v10069
    %11066 = vmatprep.subr.bf16.mxu0 %v10063
    %11067 = vmatpush2.bf16.msra.mxu0 %v10062
    %11068 = vmatprep.subr.bf16.mxu0 %v10056
    %11069 = vmatpush2.bf16.msra.mxu0 %v10055
    %11070 = vmatprep.subr.bf16.mxu0 %v10049
    %11071 = vmatpush2.bf16.msra.mxu0 %v10048
    %11072 = vmatprep.subr.bf16.mxu0 %v10042
    %11073 = vmatpush2.bf16.msra.mxu0 %v10041
    %11074 = vmatprep.mubr.bf16.mxu0 %v7764
    %11075 = vmatmul.mubr.bf16.gmra.mxu0 %v7763
    %v11076 = vpop.f32.mrf.mxu0
    %v11077 = vadd.f32 %v11034, %v11076
    %v11078 = vpop.f32.mrf.mxu0
    %v11079 = vadd.f32 %v11036, %v11078
    %v11080 = vpop.f32.mrf.mxu0
    %v11081 = vadd.f32 %v11038, %v11080
    %v11082 = vpop.f32.mrf.mxu0
    %v11083 = vadd.f32 %v11040, %v11082
    %11084 = vdwg.mxu0
    %11085 = vmatprep.subr.bf16.mxu0 %v9589
    %11086 = vmatpush1.bf16.msra.mxu0 %v9588
    %11087 = vmatprep.subr.bf16.mxu0 %v9582
    %11088 = vmatpush1.bf16.msra.mxu0 %v9581
    %11089 = vmatprep.subr.bf16.mxu0 %v9575
    %11090 = vmatpush1.bf16.msra.mxu0 %v9574
    %11091 = vmatprep.subr.bf16.mxu0 %v9568
    %11092 = vmatpush1.bf16.msra.mxu0 %v9567
    %11093 = vmatprep.subr.bf16.mxu0 %v9561
    %11094 = vmatpush1.bf16.msra.mxu0 %v9560
    %11095 = vmatprep.subr.bf16.mxu0 %v9554
    %11096 = vmatpush1.bf16.msra.mxu0 %v9553
    %11097 = vmatprep.subr.bf16.mxu0 %v9547
    %11098 = vmatpush1.bf16.msra.mxu0 %v9546
    %11099 = vmatprep.subr.bf16.mxu0 %v9540
    %11100 = vmatpush1.bf16.msra.mxu0 %v9539
    %11101 = vmatprep.subr.bf16.mxu0 %v9645
    %11102 = vmatpush2.bf16.msra.mxu0 %v9644
    %11103 = vmatprep.subr.bf16.mxu0 %v9638
    %11104 = vmatpush2.bf16.msra.mxu0 %v9637
    %11105 = vmatprep.subr.bf16.mxu0 %v9631
    %11106 = vmatpush2.bf16.msra.mxu0 %v9630
    %11107 = vmatprep.subr.bf16.mxu0 %v9624
    %11108 = vmatpush2.bf16.msra.mxu0 %v9623
    %11109 = vmatprep.subr.bf16.mxu0 %v9617
    %11110 = vmatpush2.bf16.msra.mxu0 %v9616
    %11111 = vmatprep.subr.bf16.mxu0 %v9610
    %11112 = vmatpush2.bf16.msra.mxu0 %v9609
    %11113 = vmatprep.subr.bf16.mxu0 %v9603
    %11114 = vmatpush2.bf16.msra.mxu0 %v9602
    %11115 = vmatprep.subr.bf16.mxu0 %v9596
    %11116 = vmatpush2.bf16.msra.mxu0 %v9595
    %11117 = vmatprep.mubr.bf16.mxu0 %v7756
    %11118 = vmatmul.mubr.bf16.gmra.mxu0 %v7755
    %v11119 = vpop.f32.mrf.mxu0
    %v11120 = vadd.f32 %v7709, %v11119
    %v11121 = vpop.f32.mrf.mxu0
    %v11122 = vadd.f32 %v7713, %v11121
    %v11123 = vpop.f32.mrf.mxu0
    %v11124 = vadd.f32 %v7709, %v11123
    %v11125 = vpop.f32.mrf.mxu0
    %v11126 = vadd.f32 %v7713, %v11125
    %11127 = vdwg.mxu0
    %11128 = vmatprep.subr.bf16.mxu0 %v9701
    %11129 = vmatpush1.bf16.msra.mxu0 %v9700
    %11130 = vmatprep.subr.bf16.mxu0 %v9694
    %11131 = vmatpush1.bf16.msra.mxu0 %v9693
    %11132 = vmatprep.subr.bf16.mxu0 %v9687
    %11133 = vmatpush1.bf16.msra.mxu0 %v9686
    %11134 = vmatprep.subr.bf16.mxu0 %v9680
    %11135 = vmatpush1.bf16.msra.mxu0 %v9679
    %11136 = vmatprep.subr.bf16.mxu0 %v9673
    %11137 = vmatpush1.bf16.msra.mxu0 %v9672
    %11138 = vmatprep.subr.bf16.mxu0 %v9666
    %11139 = vmatpush1.bf16.msra.mxu0 %v9665
    %11140 = vmatprep.subr.bf16.mxu0 %v9659
    %11141 = vmatpush1.bf16.msra.mxu0 %v9658
    %11142 = vmatprep.subr.bf16.mxu0 %v9652
    %11143 = vmatpush1.bf16.msra.mxu0 %v9651
    %11144 = vmatprep.subr.bf16.mxu0 %v9757
    %11145 = vmatpush2.bf16.msra.mxu0 %v9756
    %11146 = vmatprep.subr.bf16.mxu0 %v9750
    %11147 = vmatpush2.bf16.msra.mxu0 %v9749
    %11148 = vmatprep.subr.bf16.mxu0 %v9743
    %11149 = vmatpush2.bf16.msra.mxu0 %v9742
    %11150 = vmatprep.subr.bf16.mxu0 %v9736
    %11151 = vmatpush2.bf16.msra.mxu0 %v9735
    %11152 = vmatprep.subr.bf16.mxu0 %v9729
    %11153 = vmatpush2.bf16.msra.mxu0 %v9728
    %11154 = vmatprep.subr.bf16.mxu0 %v9722
    %11155 = vmatpush2.bf16.msra.mxu0 %v9721
    %11156 = vmatprep.subr.bf16.mxu0 %v9715
    %11157 = vmatpush2.bf16.msra.mxu0 %v9714
    %11158 = vmatprep.subr.bf16.mxu0 %v9708
    %11159 = vmatpush2.bf16.msra.mxu0 %v9707
    %11160 = vmatprep.mubr.bf16.mxu0 %v7758
    %11161 = vmatmul.mubr.bf16.gmra.mxu0 %v7757
    %v11162 = vpop.f32.mrf.mxu0
    %v11163 = vadd.f32 %v11120, %v11162
    %v11164 = vpop.f32.mrf.mxu0
    %v11165 = vadd.f32 %v11122, %v11164
    %v11166 = vpop.f32.mrf.mxu0
    %v11167 = vadd.f32 %v11124, %v11166
    %v11168 = vpop.f32.mrf.mxu0
    %v11169 = vadd.f32 %v11126, %v11168
    %11170 = vdwg.mxu0
    %11171 = vmatprep.subr.bf16.mxu0 %v9813
    %11172 = vmatpush1.bf16.msra.mxu0 %v9812
    %11173 = vmatprep.subr.bf16.mxu0 %v9806
    %11174 = vmatpush1.bf16.msra.mxu0 %v9805
    %11175 = vmatprep.subr.bf16.mxu0 %v9799
    %11176 = vmatpush1.bf16.msra.mxu0 %v9798
    %11177 = vmatprep.subr.bf16.mxu0 %v9792
    %11178 = vmatpush1.bf16.msra.mxu0 %v9791
    %11179 = vmatprep.subr.bf16.mxu0 %v9785
    %11180 = vmatpush1.bf16.msra.mxu0 %v9784
    %11181 = vmatprep.subr.bf16.mxu0 %v9778
    %11182 = vmatpush1.bf16.msra.mxu0 %v9777
    %11183 = vmatprep.subr.bf16.mxu0 %v9771
    %11184 = vmatpush1.bf16.msra.mxu0 %v9770
    %11185 = vmatprep.subr.bf16.mxu0 %v9764
    %11186 = vmatpush1.bf16.msra.mxu0 %v9763
    %11187 = vmatprep.subr.bf16.mxu0 %v9869
    %11188 = vmatpush2.bf16.msra.mxu0 %v9868
    %11189 = vmatprep.subr.bf16.mxu0 %v9862
    %11190 = vmatpush2.bf16.msra.mxu0 %v9861
    %11191 = vmatprep.subr.bf16.mxu0 %v9855
    %11192 = vmatpush2.bf16.msra.mxu0 %v9854
    %11193 = vmatprep.subr.bf16.mxu0 %v9848
    %11194 = vmatpush2.bf16.msra.mxu0 %v9847
    %11195 = vmatprep.subr.bf16.mxu0 %v9841
    %11196 = vmatpush2.bf16.msra.mxu0 %v9840
    %11197 = vmatprep.subr.bf16.mxu0 %v9834
    %11198 = vmatpush2.bf16.msra.mxu0 %v9833
    %11199 = vmatprep.subr.bf16.mxu0 %v9827
    %11200 = vmatpush2.bf16.msra.mxu0 %v9826
    %11201 = vmatprep.subr.bf16.mxu0 %v9820
    %11202 = vmatpush2.bf16.msra.mxu0 %v9819
    %11203 = vmatprep.mubr.bf16.mxu0 %v7760
    %11204 = vmatmul.mubr.bf16.gmra.mxu0 %v7759
    %v11205 = vpop.f32.mrf.mxu0
    %v11206 = vadd.f32 %v11163, %v11205
    %v11207 = vpop.f32.mrf.mxu0
    %v11208 = vadd.f32 %v11165, %v11207
    %v11209 = vpop.f32.mrf.mxu0
    %v11210 = vadd.f32 %v11167, %v11209
    %v11211 = vpop.f32.mrf.mxu0
    %v11212 = vadd.f32 %v11169, %v11211
    %11213 = vdwg.mxu0
    %11214 = vmatprep.subr.bf16.mxu0 %v9925
    %11215 = vmatpush1.bf16.msra.mxu0 %v9924
    %11216 = vmatprep.subr.bf16.mxu0 %v9918
    %11217 = vmatpush1.bf16.msra.mxu0 %v9917
    %11218 = vmatprep.subr.bf16.mxu0 %v9911
    %11219 = vmatpush1.bf16.msra.mxu0 %v9910
    %11220 = vmatprep.subr.bf16.mxu0 %v9904
    %11221 = vmatpush1.bf16.msra.mxu0 %v9903
    %11222 = vmatprep.subr.bf16.mxu0 %v9897
    %11223 = vmatpush1.bf16.msra.mxu0 %v9896
    %11224 = vmatprep.subr.bf16.mxu0 %v9890
    %11225 = vmatpush1.bf16.msra.mxu0 %v9889
    %11226 = vmatprep.subr.bf16.mxu0 %v9883
    %11227 = vmatpush1.bf16.msra.mxu0 %v9882
    %11228 = vmatprep.subr.bf16.mxu0 %v9876
    %11229 = vmatpush1.bf16.msra.mxu0 %v9875
    %11230 = vmatprep.subr.bf16.mxu0 %v9981
    %11231 = vmatpush2.bf16.msra.mxu0 %v9980
    %11232 = vmatprep.subr.bf16.mxu0 %v9974
    %11233 = vmatpush2.bf16.msra.mxu0 %v9973
    %11234 = vmatprep.subr.bf16.mxu0 %v9967
    %11235 = vmatpush2.bf16.msra.mxu0 %v9966
    %11236 = vmatprep.subr.bf16.mxu0 %v9960
    %11237 = vmatpush2.bf16.msra.mxu0 %v9959
    %11238 = vmatprep.subr.bf16.mxu0 %v9953
    %11239 = vmatpush2.bf16.msra.mxu0 %v9952
    %11240 = vmatprep.subr.bf16.mxu0 %v9946
    %11241 = vmatpush2.bf16.msra.mxu0 %v9945
    %11242 = vmatprep.subr.bf16.mxu0 %v9939
    %11243 = vmatpush2.bf16.msra.mxu0 %v9938
    %11244 = vmatprep.subr.bf16.mxu0 %v9932
    %11245 = vmatpush2.bf16.msra.mxu0 %v9931
    %11246 = vmatprep.mubr.bf16.mxu0 %v7762
    %11247 = vmatmul.mubr.bf16.gmra.mxu0 %v7761
    %v11248 = vpop.f32.mrf.mxu0
    %v11249 = vadd.f32 %v11206, %v11248
    %v11250 = vpop.f32.mrf.mxu0
    %v11251 = vadd.f32 %v11208, %v11250
    %v11252 = vpop.f32.mrf.mxu0
    %v11253 = vadd.f32 %v11210, %v11252
    %v11254 = vpop.f32.mrf.mxu0
    %v11255 = vadd.f32 %v11212, %v11254
    %11256 = vdwg.mxu0
    %11257 = vmatprep.subr.bf16.mxu0 %v10037
    %11258 = vmatpush1.bf16.msra.mxu0 %v10036
    %11259 = vmatprep.subr.bf16.mxu0 %v10030
    %11260 = vmatpush1.bf16.msra.mxu0 %v10029
    %11261 = vmatprep.subr.bf16.mxu0 %v10023
    %11262 = vmatpush1.bf16.msra.mxu0 %v10022
    %11263 = vmatprep.subr.bf16.mxu0 %v10016
    %11264 = vmatpush1.bf16.msra.mxu0 %v10015
    %11265 = vmatprep.subr.bf16.mxu0 %v10009
    %11266 = vmatpush1.bf16.msra.mxu0 %v10008
    %11267 = vmatprep.subr.bf16.mxu0 %v10002
    %11268 = vmatpush1.bf16.msra.mxu0 %v10001
    %11269 = vmatprep.subr.bf16.mxu0 %v9995
    %11270 = vmatpush1.bf16.msra.mxu0 %v9994
    %11271 = vmatprep.subr.bf16.mxu0 %v9988
    %11272 = vmatpush1.bf16.msra.mxu0 %v9987
    %11273 = vmatprep.subr.bf16.mxu0 %v10093
    %11274 = vmatpush2.bf16.msra.mxu0 %v10092
    %11275 = vmatprep.subr.bf16.mxu0 %v10086
    %11276 = vmatpush2.bf16.msra.mxu0 %v10085
    %11277 = vmatprep.subr.bf16.mxu0 %v10079
    %11278 = vmatpush2.bf16.msra.mxu0 %v10078
    %11279 = vmatprep.subr.bf16.mxu0 %v10072
    %11280 = vmatpush2.bf16.msra.mxu0 %v10071
    %11281 = vmatprep.subr.bf16.mxu0 %v10065
    %11282 = vmatpush2.bf16.msra.mxu0 %v10064
    %11283 = vmatprep.subr.bf16.mxu0 %v10058
    %11284 = vmatpush2.bf16.msra.mxu0 %v10057
    %11285 = vmatprep.subr.bf16.mxu0 %v10051
    %11286 = vmatpush2.bf16.msra.mxu0 %v10050
    %11287 = vmatprep.subr.bf16.mxu0 %v10044
    %11288 = vmatpush2.bf16.msra.mxu0 %v10043
    %11289 = vmatprep.mubr.bf16.mxu0 %v7764
    %11290 = vmatmul.mubr.bf16.gmra.mxu0 %v7763
    %v11291 = vpop.f32.mrf.mxu0
    %v11292 = vadd.f32 %v11249, %v11291
    %v11293 = vpop.f32.mrf.mxu0
    %v11294 = vadd.f32 %v11251, %v11293
    %v11295 = vpop.f32.mrf.mxu0
    %v11296 = vadd.f32 %v11253, %v11295
    %v11297 = vpop.f32.mrf.mxu0
    %v11298 = vadd.f32 %v11255, %v11297
    %11299 = vdwg.mxu0
    %11300 = vmatprep.subr.bf16.mxu0 0
    %11301 = vmatpush1.bf16.msra.mxu0 %v9590
    %11302 = vmatprep.subr.bf16.mxu0 0
    %11303 = vmatpush1.bf16.msra.mxu0 %v9583
    %11304 = vmatprep.subr.bf16.mxu0 0
    %11305 = vmatpush1.bf16.msra.mxu0 %v9576
    %11306 = vmatprep.subr.bf16.mxu0 0
    %11307 = vmatpush1.bf16.msra.mxu0 %v9569
    %11308 = vmatprep.subr.bf16.mxu0 0
    %11309 = vmatpush1.bf16.msra.mxu0 %v9562
    %11310 = vmatprep.subr.bf16.mxu0 0
    %11311 = vmatpush1.bf16.msra.mxu0 %v9555
    %11312 = vmatprep.subr.bf16.mxu0 0
    %11313 = vmatpush1.bf16.msra.mxu0 %v9548
    %11314 = vmatprep.subr.bf16.mxu0 0
    %11315 = vmatpush1.bf16.msra.mxu0 %v9541
    %11316 = vmatprep.subr.bf16.mxu0 0
    %11317 = vmatpush2.bf16.msra.mxu0 %v9646
    %11318 = vmatprep.subr.bf16.mxu0 0
    %11319 = vmatpush2.bf16.msra.mxu0 %v9639
    %11320 = vmatprep.subr.bf16.mxu0 0
    %11321 = vmatpush2.bf16.msra.mxu0 %v9632
    %11322 = vmatprep.subr.bf16.mxu0 0
    %11323 = vmatpush2.bf16.msra.mxu0 %v9625
    %11324 = vmatprep.subr.bf16.mxu0 0
    %11325 = vmatpush2.bf16.msra.mxu0 %v9618
    %11326 = vmatprep.subr.bf16.mxu0 0
    %11327 = vmatpush2.bf16.msra.mxu0 %v9611
    %11328 = vmatprep.subr.bf16.mxu0 0
    %11329 = vmatpush2.bf16.msra.mxu0 %v9604
    %11330 = vmatprep.subr.bf16.mxu0 0
    %11331 = vmatpush2.bf16.msra.mxu0 %v9597
    %11332 = vmatprep.mubr.bf16.mxu0 %v7756
    %11333 = vmatmul.mubr.bf16.gmra.mxu0 %v7755
    %v11334 = vpop.f32.mrf.mxu0
    %v11335 = vadd.f32 %v7717, %v11334
    %v11336 = vpop.f32.mrf.mxu0
    %v11337 = vpop.f32.mrf.mxu0
    %v11338 = vadd.f32 %v7717, %v11337
    %v11339 = vpop.f32.mrf.mxu0
    %11340 = vdwg.mxu0
    %11341 = vmatprep.subr.bf16.mxu0 0
    %11342 = vmatpush1.bf16.msra.mxu0 %v9702
    %11343 = vmatprep.subr.bf16.mxu0 0
    %11344 = vmatpush1.bf16.msra.mxu0 %v9695
    %11345 = vmatprep.subr.bf16.mxu0 0
    %11346 = vmatpush1.bf16.msra.mxu0 %v9688
    %11347 = vmatprep.subr.bf16.mxu0 0
    %11348 = vmatpush1.bf16.msra.mxu0 %v9681
    %11349 = vmatprep.subr.bf16.mxu0 0
    %11350 = vmatpush1.bf16.msra.mxu0 %v9674
    %11351 = vmatprep.subr.bf16.mxu0 0
    %11352 = vmatpush1.bf16.msra.mxu0 %v9667
    %11353 = vmatprep.subr.bf16.mxu0 0
    %11354 = vmatpush1.bf16.msra.mxu0 %v9660
    %11355 = vmatprep.subr.bf16.mxu0 0
    %11356 = vmatpush1.bf16.msra.mxu0 %v9653
    %11357 = vmatprep.subr.bf16.mxu0 0
    %11358 = vmatpush2.bf16.msra.mxu0 %v9758
    %11359 = vmatprep.subr.bf16.mxu0 0
    %11360 = vmatpush2.bf16.msra.mxu0 %v9751
    %11361 = vmatprep.subr.bf16.mxu0 0
    %11362 = vmatpush2.bf16.msra.mxu0 %v9744
    %11363 = vmatprep.subr.bf16.mxu0 0
    %11364 = vmatpush2.bf16.msra.mxu0 %v9737
    %11365 = vmatprep.subr.bf16.mxu0 0
    %11366 = vmatpush2.bf16.msra.mxu0 %v9730
    %11367 = vmatprep.subr.bf16.mxu0 0
    %11368 = vmatpush2.bf16.msra.mxu0 %v9723
    %11369 = vmatprep.subr.bf16.mxu0 0
    %11370 = vmatpush2.bf16.msra.mxu0 %v9716
    %11371 = vmatprep.subr.bf16.mxu0 0
    %11372 = vmatpush2.bf16.msra.mxu0 %v9709
    %11373 = vmatprep.mubr.bf16.mxu0 %v7758
    %11374 = vmatmul.mubr.bf16.gmra.mxu0 %v7757
    %v11375 = vpop.f32.mrf.mxu0
    %v11376 = vadd.f32 %v11335, %v11375
    %v11377 = vpop.f32.mrf.mxu0
    %v11378 = vpop.f32.mrf.mxu0
    %v11379 = vadd.f32 %v11338, %v11378
    %v11380 = vpop.f32.mrf.mxu0
    %11381 = vdwg.mxu0
    %11382 = vmatprep.subr.bf16.mxu0 0
    %11383 = vmatpush1.bf16.msra.mxu0 %v9814
    %11384 = vmatprep.subr.bf16.mxu0 0
    %11385 = vmatpush1.bf16.msra.mxu0 %v9807
    %11386 = vmatprep.subr.bf16.mxu0 0
    %11387 = vmatpush1.bf16.msra.mxu0 %v9800
    %11388 = vmatprep.subr.bf16.mxu0 0
    %11389 = vmatpush1.bf16.msra.mxu0 %v9793
    %11390 = vmatprep.subr.bf16.mxu0 0
    %11391 = vmatpush1.bf16.msra.mxu0 %v9786
    %11392 = vmatprep.subr.bf16.mxu0 0
    %11393 = vmatpush1.bf16.msra.mxu0 %v9779
    %11394 = vmatprep.subr.bf16.mxu0 0
    %11395 = vmatpush1.bf16.msra.mxu0 %v9772
    %11396 = vmatprep.subr.bf16.mxu0 0
    %11397 = vmatpush1.bf16.msra.mxu0 %v9765
    %11398 = vmatprep.subr.bf16.mxu0 0
    %11399 = vmatpush2.bf16.msra.mxu0 %v9870
    %11400 = vmatprep.subr.bf16.mxu0 0
    %11401 = vmatpush2.bf16.msra.mxu0 %v9863
    %11402 = vmatprep.subr.bf16.mxu0 0
    %11403 = vmatpush2.bf16.msra.mxu0 %v9856
    %11404 = vmatprep.subr.bf16.mxu0 0
    %11405 = vmatpush2.bf16.msra.mxu0 %v9849
    %11406 = vmatprep.subr.bf16.mxu0 0
    %11407 = vmatpush2.bf16.msra.mxu0 %v9842
    %11408 = vmatprep.subr.bf16.mxu0 0
    %11409 = vmatpush2.bf16.msra.mxu0 %v9835
    %11410 = vmatprep.subr.bf16.mxu0 0
    %11411 = vmatpush2.bf16.msra.mxu0 %v9828
    %11412 = vmatprep.subr.bf16.mxu0 0
    %11413 = vmatpush2.bf16.msra.mxu0 %v9821
    %11414 = vmatprep.mubr.bf16.mxu0 %v7760
    %11415 = vmatmul.mubr.bf16.gmra.mxu0 %v7759
    %v11416 = vpop.f32.mrf.mxu0
    %v11417 = vadd.f32 %v11376, %v11416
    %v11418 = vpop.f32.mrf.mxu0
    %v11419 = vpop.f32.mrf.mxu0
    %v11420 = vadd.f32 %v11379, %v11419
    %v11421 = vpop.f32.mrf.mxu0
    %11422 = vdwg.mxu0
    %11423 = vmatprep.subr.bf16.mxu0 0
    %11424 = vmatpush1.bf16.msra.mxu0 %v9926
    %11425 = vmatprep.subr.bf16.mxu0 0
    %11426 = vmatpush1.bf16.msra.mxu0 %v9919
    %11427 = vmatprep.subr.bf16.mxu0 0
    %11428 = vmatpush1.bf16.msra.mxu0 %v9912
    %11429 = vmatprep.subr.bf16.mxu0 0
    %11430 = vmatpush1.bf16.msra.mxu0 %v9905
    %11431 = vmatprep.subr.bf16.mxu0 0
    %11432 = vmatpush1.bf16.msra.mxu0 %v9898
    %11433 = vmatprep.subr.bf16.mxu0 0
    %11434 = vmatpush1.bf16.msra.mxu0 %v9891
    %11435 = vmatprep.subr.bf16.mxu0 0
    %11436 = vmatpush1.bf16.msra.mxu0 %v9884
    %11437 = vmatprep.subr.bf16.mxu0 0
    %11438 = vmatpush1.bf16.msra.mxu0 %v9877
    %11439 = vmatprep.subr.bf16.mxu0 0
    %11440 = vmatpush2.bf16.msra.mxu0 %v9982
    %11441 = vmatprep.subr.bf16.mxu0 0
    %11442 = vmatpush2.bf16.msra.mxu0 %v9975
    %11443 = vmatprep.subr.bf16.mxu0 0
    %11444 = vmatpush2.bf16.msra.mxu0 %v9968
    %11445 = vmatprep.subr.bf16.mxu0 0
    %11446 = vmatpush2.bf16.msra.mxu0 %v9961
    %11447 = vmatprep.subr.bf16.mxu0 0
    %11448 = vmatpush2.bf16.msra.mxu0 %v9954
    %11449 = vmatprep.subr.bf16.mxu0 0
    %11450 = vmatpush2.bf16.msra.mxu0 %v9947
    %11451 = vmatprep.subr.bf16.mxu0 0
    %11452 = vmatpush2.bf16.msra.mxu0 %v9940
    %11453 = vmatprep.subr.bf16.mxu0 0
    %11454 = vmatpush2.bf16.msra.mxu0 %v9933
    %11455 = vmatprep.mubr.bf16.mxu0 %v7762
    %11456 = vmatmul.mubr.bf16.gmra.mxu0 %v7761
    %v11457 = vpop.f32.mrf.mxu0
    %v11458 = vadd.f32 %v11417, %v11457
    %v11459 = vpop.f32.mrf.mxu0
    %v11460 = vpop.f32.mrf.mxu0
    %v11461 = vadd.f32 %v11420, %v11460
    %v11462 = vpop.f32.mrf.mxu0
    %11463 = vdwg.mxu0
    %11464 = vmatprep.subr.bf16.mxu0 0
    %11465 = vmatpush1.bf16.msra.mxu0 %v10038
    %11466 = vmatprep.subr.bf16.mxu0 0
    %11467 = vmatpush1.bf16.msra.mxu0 %v10031
    %11468 = vmatprep.subr.bf16.mxu0 0
    %11469 = vmatpush1.bf16.msra.mxu0 %v10024
    %11470 = vmatprep.subr.bf16.mxu0 0
    %11471 = vmatpush1.bf16.msra.mxu0 %v10017
    %11472 = vmatprep.subr.bf16.mxu0 0
    %11473 = vmatpush1.bf16.msra.mxu0 %v10010
    %11474 = vmatprep.subr.bf16.mxu0 0
    %11475 = vmatpush1.bf16.msra.mxu0 %v10003
    %11476 = vmatprep.subr.bf16.mxu0 0
    %11477 = vmatpush1.bf16.msra.mxu0 %v9996
    %11478 = vmatprep.subr.bf16.mxu0 0
    %11479 = vmatpush1.bf16.msra.mxu0 %v9989
    %11480 = vmatprep.subr.bf16.mxu0 0
    %11481 = vmatpush2.bf16.msra.mxu0 %v10094
    %11482 = vmatprep.subr.bf16.mxu0 0
    %11483 = vmatpush2.bf16.msra.mxu0 %v10087
    %11484 = vmatprep.subr.bf16.mxu0 0
    %11485 = vmatpush2.bf16.msra.mxu0 %v10080
    %11486 = vmatprep.subr.bf16.mxu0 0
    %11487 = vmatpush2.bf16.msra.mxu0 %v10073
    %11488 = vmatprep.subr.bf16.mxu0 0
    %11489 = vmatpush2.bf16.msra.mxu0 %v10066
    %11490 = vmatprep.subr.bf16.mxu0 0
    %11491 = vmatpush2.bf16.msra.mxu0 %v10059
    %11492 = vmatprep.subr.bf16.mxu0 0
    %11493 = vmatpush2.bf16.msra.mxu0 %v10052
    %11494 = vmatprep.subr.bf16.mxu0 0
    %11495 = vmatpush2.bf16.msra.mxu0 %v10045
    %11496 = vmatprep.mubr.bf16.mxu0 %v7764
    %11497 = vmatmul.mubr.bf16.gmra.mxu0 %v7763
    %v11498 = vpop.f32.mrf.mxu0
    %v11499 = vadd.f32 %v11458, %v11498
    %v11500 = vpop.f32.mrf.mxu0
    %v11501 = vpop.f32.mrf.mxu0
    %v11502 = vadd.f32 %v11461, %v11501
    %v11503 = vpop.f32.mrf.mxu0
    %11504 = vdwg.mxu0
    %v11505 = vtanh.pop %v10862
    %v11506 = vtanh.pop %v10864
    %v11507 = vtanh.pop %v11077
    %v11508 = vtanh.pop %v11079
    %v11509 = vtanh.pop %v11292
    %v11510 = vtanh.pop %v11294
    %v11511 = vtanh.pop %v11499
    %v11512 = vtanh.pop %v10866
    %v11513 = vtanh.pop %v10868
    %v11514 = vtanh.pop %v11081
    %v11515 = vtanh.pop %v11083
    %v11516 = vtanh.pop %v11296
    %v11517 = vtanh.pop %v11298
    %v11518 = vtanh.pop %v11502
    %11519 = vst [vmem:[#allocation16] sm:$0xff] %v11505
    %11520 = vst [vmem:[#allocation16 + $0x8] sm:$0xff] %v11506
    %11521 = vst [vmem:[#allocation16 + $0x10] sm:$0xff] %v11507
    %11522 = vst [vmem:[#allocation16 + $0x18] sm:$0xff] %v11508
    %11523 = vst [vmem:[#allocation16 + $0x20] sm:$0xff] %v11509
    %11524 = vst [vmem:[#allocation16 + $0x28] sm:$0xff] %v11510
    %11525 = vst [vmem:[#allocation16 + $0x30] sm:$0xff] %v11511
    %11526 = vst [vmem:[#allocation16 + $0x38] sm:$0xff] %v11512
    %11527 = vst [vmem:[#allocation16 + $0x40] sm:$0xff] %v11513
    %11528 = vst [vmem:[#allocation16 + $0x48] sm:$0xff] %v11514
    %11529 = vst [vmem:[#allocation16 + $0x50] sm:$0xff] %v11515
    %11530 = vst [vmem:[#allocation16 + $0x58] sm:$0xff] %v11516
    %11531 = vst [vmem:[#allocation16 + $0x60] sm:$0xff] %v11517
    %11532 = vst [vmem:[#allocation16 + $0x68] sm:$0xff] %v11518
    // Predicated region
    $region58: #{_generator_pallas.1} parent=1 // pred_check
      _
    $region59: #{_generator_pallas.1} parent=1 // pred_check_branch
      %11534 = sbr.rel (0) target = $region61
    $region60: #{_generator_pallas.1} parent=1 // pred_region
      %s11536 = ssub.s32 1792, 1792
      %11537 = vsyncadd [#allocation6], %s11536
      %s11538 = sshll.u32 [#allocation16], 4
      %s11539 = int_to_ptr.vmem [resolvable:$true] %s11538
      %11544 = dma.vmem_to_hbm [thread:$0]  %s11539, 1792, %s7, [#allocation6], 896, 896, 56
    $region61: #{_generator_pallas.1} parent=1 // pred_fallthru
      _
    // Predicated region
    $region62: #{_generator_pallas.1} parent=1 // pred_check
      _
    $region63: #{_generator_pallas.1} parent=1 // pred_check_branch
      %11546 = sbr.rel (0) target = $region65
    $region64: #{_generator_pallas.1} parent=1 // pred_region
      %11547 = dma.done [#allocation6], 1792
    $region65: #{_generator_pallas.1} parent=1 // pred_fallthru
      _
    %11548 = vsyncpa [#allocation5], 1
    %11549 = vsyncpa [#allocation8], 1
    %11550 = vsyncpa [#allocation11], 1
    %11551 = vsyncpa [#allocation14], 1
    %11552 = vsyncpa [#allocation6], 1

</llo_original>
